<compile_context>
chip_gen: v6e
topology: v6e:2x2x1
jax: 0.10.0
libtpu: 0.0.40
codegen_flags: <defaults>
</compile_context>

<pallas_src>
import functools
import math

import jax
import jax.numpy as jnp
from jax.experimental import pallas as pl
from jax.experimental.pallas import tpu as pltpu


def _full_spec(shape):
    nd = len(shape)
    return pl.BlockSpec(shape, lambda *_, _nd=nd: (0,) * _nd)


# ---------------------------------------------------------------------------
# Encoder kernel: full bidirectional LSTM recurrence in ONE invocation.
#   emb_ref : [S*B, E]   time-major flattened source embeddings
#   len_ref : [B, 1]     int32 source lengths (mask built in-kernel)
#   w_in    : [E, 8H]    input projection, cols 0:4H fwd gates (i,f,g,o),
#                        cols 4H:8H bwd gates
#   whh_f/b : [H, 4H]    recurrent weights per direction (no block-diag zeros)
#   wh_*/wc_*: [H, H]    fc_hidden / fc_cell split per direction
# Outputs: enc_f [B,S,H], enc_b [B,S,H], dec_h0 [B,H], dec_c0 [B,H]
# ---------------------------------------------------------------------------
def _encoder_kernel(emb_ref, len_ref, w_in_ref, b_in_ref,
                    whh_f_ref, whh_b_ref,
                    wh_f_ref, wh_b_ref, wc_f_ref, wc_b_ref, bh_ref, bc_ref,
                    encf_ref, encb_ref, h0_ref, c0_ref, *, B, S, H):
    # hoisted input projection for the whole sequence, both directions
    gates = (jnp.dot(emb_ref[...], w_in_ref[...],
                     preferred_element_type=jnp.float32) + b_in_ref[...])
    lens = len_ref[...]                                        # [B, 1] int32

    h_f = jnp.zeros((B, H), jnp.float32)
    c_f = jnp.zeros((B, H), jnp.float32)
    h_b = jnp.zeros((B, H), jnp.float32)
    c_b = jnp.zeros((B, H), jnp.float32)

    def cell(pre, h, c, w_hh):
        g = pre + jnp.dot(h, w_hh, preferred_element_type=jnp.float32)
        i = jax.nn.sigmoid(g[:, 0:H])
        f = jax.nn.sigmoid(g[:, H:2 * H])
        gg = jnp.tanh(g[:, 2 * H:3 * H])
        o = jax.nn.sigmoid(g[:, 3 * H:4 * H])
        c_new = f * c + i * gg
        h_new = o * jnp.tanh(c_new)
        return h_new, c_new

    # fully unrolled time loop: S is a small static shape, all slices static
    for t in range(S):
        tb = S - 1 - t
        # ---- forward direction consumes time t ----
        hf_new, cf_new = cell(gates[t * B:(t + 1) * B, 0:4 * H],
                              h_f, c_f, whh_f_ref[...])
        v_f = t < lens                                         # [B, 1] bool
        h_f = jnp.where(v_f, hf_new, h_f)                      # freeze past len
        c_f = jnp.where(v_f, cf_new, c_f)
        encf_ref[:, t:t + 1, :] = jnp.where(v_f, hf_new, 0.0)[:, None, :]
        # ---- backward direction consumes time S-1-t ----
        hb_new, cb_new = cell(gates[tb * B:(tb + 1) * B, 4 * H:8 * H],
                              h_b, c_b, whh_b_ref[...])
        v_b = tb < lens
        h_b = jnp.where(v_b, hb_new, h_b)
        c_b = jnp.where(v_b, cb_new, c_b)
        encb_ref[:, tb:tb + 1, :] = jnp.where(v_b, hb_new, 0.0)[:, None, :]

    # fused fc_hidden / fc_cell, split per direction (no concat, no zero blocks)
    h0_ref[...] = jnp.tanh(
        jnp.dot(h_f, wh_f_ref[...], preferred_element_type=jnp.float32)
        + jnp.dot(h_b, wh_b_ref[...], preferred_element_type=jnp.float32)
        + bh_ref[...])
    c0_ref[...] = jnp.tanh(
        jnp.dot(c_f, wc_f_ref[...], preferred_element_type=jnp.float32)
        + jnp.dot(c_b, wc_b_ref[...], preferred_element_type=jnp.float32)
        + bc_ref[...])


def encoder_forward(emb_flat, lens, p, B, S, H):
    kern = functools.partial(_encoder_kernel, B=B, S=S, H=H)
    out_shape = [
        jax.ShapeDtypeStruct((B, S, H), jnp.float32),   # forward hidden seq
        jax.ShapeDtypeStruct((B, S, H), jnp.float32),   # backward hidden seq
        jax.ShapeDtypeStruct((B, H), jnp.float32),      # decoder h0
        jax.ShapeDtypeStruct((B, H), jnp.float32),      # decoder c0
    ]
    ins = (emb_flat, lens, p["enc_w_in"], p["enc_b_in"],
           p["enc_whh_f"], p["enc_whh_b"],
           p["enc_wh_f"], p["enc_wh_b"], p["enc_wc_f"], p["enc_wc_b"],
           p["enc_b_h"], p["enc_b_c"])
    return pl.pallas_call(
        kern,
        grid=(1,),
        in_specs=[_full_spec(x.shape) for x in ins],
        out_specs=[_full_spec(s.shape) for s in out_shape],
        out_shape=out_shape,
        compiler_params=pltpu.CompilerParams(dimension_semantics=("arbitrary",)),
    )(*ins)


# ---------------------------------------------------------------------------
# Decoder kernel: attention + LSTM cell + fc_out for ALL target steps in ONE
# invocation.  Per-step outputs are written to lane-dense (VP=128) / tiny
# VMEM-resident blocks and DMA'd back once.
# ---------------------------------------------------------------------------
def _decoder_kernel(h0_ref, c0_ref, emb_ref, encf_ref, encb_ref, len_ref,
                    wef_ref, web_ref, bed_ref, wd_ref, wa_ref, ba_ref,
                    wie_ref, bi_ref, wicf_ref, wicb_ref, whh_ref,
                    woh_ref, wocf_ref, wocb_ref, woe_ref, bo_ref,
                    pred_ref, attn_ref, *, B, S, H, Tm1):
    enc_f = encf_ref[...]                                      # [B, S, H]
    enc_b = encb_ref[...]                                      # [B, S, H]
    A = wd_ref.shape[1]

    # hoisted: encoder_attn(enc_outputs) with both attention Linear biases folded
    enc_proj = (jnp.dot(enc_f.reshape(B * S, H), wef_ref[...],
                        preferred_element_type=jnp.float32)
                + jnp.dot(enc_b.reshape(B * S, H), web_ref[...],
                          preferred_element_type=jnp.float32)
                + bed_ref[...]).reshape(B, S, A)               # [B, S, A]

    # hoisted: embedding side of the decoder-LSTM input projection, all steps
    emb = emb_ref[...]                                         # [Tm1*B, De]
    eg = (jnp.dot(emb, wie_ref[...], preferred_element_type=jnp.float32)
          + bi_ref[...])                                       # [Tm1*B, 4H]

    # source padding mask built in-kernel from lengths (no HBM mask tensor)
    src_pos = jax.lax.broadcasted_iota(jnp.int32, (B, S), 1)
    valid = src_pos < len_ref[...]                             # [B, S] bool

    h = h0_ref[...]                                            # [B, H]
    c = c0_ref[...]
    wa = wa_ref[...]                                           # [1, A]
    for t in range(Tm1):               # fully unrolled, teacher forcing fixed on
        # ---- additive attention (VPU/XLU score reduce, lane-dense softmax) ----
        dec_proj = jnp.dot(h, wd_ref[...], preferred_element_type=jnp.float32)
        energy = jnp.tanh(enc_proj + dec_proj[:, None, :])     # [B, S, A]
        scores = jnp.sum(energy * wa[None, :, :], axis=-1) + ba_ref[...]
        scores = jnp.where(valid, scores, -10000000000.0)
        m = jnp.max(scores, axis=-1, keepdims=True)
        e = jnp.exp(scores - m)
        attn = e / jnp.sum(e, axis=-1, keepdims=True)          # [B, S]
        ctx_f = jnp.sum(attn[:, :, None] * enc_f, axis=1)      # [B, H]
        ctx_b = jnp.sum(attn[:, :, None] * enc_b, axis=1)      # [B, H]

        # ---- decoder LSTM cell (split matmuls: no lane-boundary concat) ----
        gates = (eg[t * B:(t + 1) * B, :]
                 + jnp.dot(ctx_f, wicf_ref[...], preferred_element_type=jnp.float32)
                 + jnp.dot(ctx_b, wicb_ref[...], preferred_element_type=jnp.float32)
                 + jnp.dot(h, whh_ref[...], preferred_element_type=jnp.float32))
        i = jax.nn.sigmoid(gates[:, 0:H])
        f = jax.nn.sigmoid(gates[:, H:2 * H])
        g = jnp.tanh(gates[:, 2 * H:3 * H])
        o = jax.nn.sigmoid(gates[:, 3 * H:4 * H])
        c = f * c + i * g
        h = o * jnp.tanh(c)

        # ---- fc_out (split matmuls; lane-dense padded vocab width) ----
        pred = (jnp.dot(h, woh_ref[...], preferred_element_type=jnp.float32)
                + jnp.dot(ctx_f, wocf_ref[...], preferred_element_type=jnp.float32)
                + jnp.dot(ctx_b, wocb_ref[...], preferred_element_type=jnp.float32)
                + jnp.dot(emb[t * B:(t + 1) * B, :], woe_ref[...],
                          preferred_element_type=jnp.float32)
                + bo_ref[...])
        pred_ref[:, t:t + 1, :] = pred[:, None, :]
        attn_ref[:, t:t + 1, :] = attn[:, None, :]


def decoder_forward(h0, c0, emb_flat, enc_f, enc_b, lens, p, B, S, H, Tm1, VP):
    kern = functools.partial(_decoder_kernel, B=B, S=S, H=H, Tm1=Tm1)
    out_shape = [
        jax.ShapeDtypeStruct((B, Tm1, VP), jnp.float32),
        jax.ShapeDtypeStruct((B, Tm1, S), jnp.float32),
    ]
    ins = (h0, c0, emb_flat, enc_f, enc_b, lens,
           p["attn_we_f"], p["attn_we_b"], p["attn_b_ed"],
           p["attn_wd"], p["attn_wa"], p["attn_ba"],
           p["dec_w_in_emb"], p["dec_b_in"],
           p["dec_w_in_cf"], p["dec_w_in_cb"], p["dec_w_hh"],
           p["w_out_h"], p["w_out_cf"], p["w_out_cb"], p["w_out_e"], p["b_out"])
    return pl.pallas_call(
        kern,
        grid=(1,),
        in_specs=[_full_spec(x.shape) for x in ins],
        out_specs=[_full_spec(s.shape) for s in out_shape],
        out_shape=out_shape,
        compiler_params=pltpu.CompilerParams(dimension_semantics=("arbitrary",)),
    )(*ins)


# ---------------------------------------------------------------------------
# Full model forward (jit'd; only embedding gathers + reshapes left in XLA)
# ---------------------------------------------------------------------------
@functools.partial(jax.jit, static_argnames=("dec_vocab",))
def attention_seq2seq_forward(src, src_lengths, trg, params, *, dec_vocab):
    B, S = src.shape
    T = trg.shape[1]
    Tm1 = T - 1
    H = params["dec_w_hh"].shape[0]
    VP = params["b_out"].shape[1]

    lens = src_lengths.reshape(B, 1).astype(jnp.int32)

    # embedding gathers stay in XLA; fed time-major & row-flat so the kernels
    # only need static 2-D row slices per step.
    emb_src = params["enc_emb"][src.T].reshape(S * B, -1)          # [S*B, Eemb]
    enc_f, enc_b, h0, c0 = encoder_forward(emb_src, lens, params, B, S, H)

    # TODO(synk): teacher forcing fixed "on"; argmax feedback would need an
    #             in-kernel embedding gather.
    emb_trg = params["dec_emb"][trg[:, :Tm1].T].reshape(Tm1 * B, -1)  # [Tm1*B, demb]
    preds, attns = decoder_forward(h0, c0, emb_trg, enc_f, enc_b, lens,
                                   params, B, S, H, Tm1, VP)
    return preds[:, :, :dec_vocab], attns


# ---------------------------------------------------------------------------
# Deterministic parameter init (shapes follow the PyTorch module), pre-split /
# pre-transposed into the layouts the kernels consume.
# ---------------------------------------------------------------------------
def _xavier(key, shape):
    fan_out, fan_in = shape
    limit = math.sqrt(6.0 / (fan_in + fan_out))
    return jax.random.uniform(key, shape, jnp.float32, -limit, limit)


def init_params(key, enc_vocab, dec_vocab, enc_emb_dim, dec_emb_dim, H, A, v_pad):
    keys = iter(jax.random.split(key, 64))
    nk = lambda: next(keys)

    def unif(shape, a=0.1):
        return jax.random.uniform(nk(), shape, jnp.float32, -a, a)

    def lstm_raw(in_dim):
        w_ih = _xavier(nk(), (4 * H, in_dim))
        w_hh = _xavier(nk(), (4 * H, H))
        b = unif((4 * H,)) + unif((4 * H,))          # b_ih + b_hh folded
        return w_ih, w_hh, b

    p = {}
    # ---------------- encoder ----------------
    p["enc_emb"] = _xavier(nk(), (enc_vocab, enc_emb_dim))
    w_ih_f, w_hh_f, b_f = lstm_raw(enc_emb_dim)                 # forward dir
    w_ih_b, w_hh_b, b_b = lstm_raw(enc_emb_dim)                 # backward dir
    p["enc_w_in"] = jnp.concatenate([w_ih_f.T, w_ih_b.T], axis=1)   # [E, 8H]
    p["enc_b_in"] = jnp.concatenate([b_f, b_b]).reshape(1, 8 * H)
    p["enc_whh_f"] = w_hh_f.T                                   # [H, 4H]
    p["enc_whh_b"] = w_hh_b.T
    fc_h_w = _xavier(nk(), (H, 2 * H)); fc_h_b = unif((H,))
    fc_c_w = _xavier(nk(), (H, 2 * H)); fc_c_b = unif((H,))
    p["enc_wh_f"] = fc_h_w[:, :H].T
    p["enc_wh_b"] = fc_h_w[:, H:].T
    p["enc_wc_f"] = fc_c_w[:, :H].T
    p["enc_wc_b"] = fc_c_w[:, H:].T
    p["enc_b_h"] = fc_h_b.reshape(1, H)
    p["enc_b_c"] = fc_c_b.reshape(1, H)

    # ---------------- decoder ----------------
    p["dec_emb"] = _xavier(nk(), (dec_vocab, dec_emb_dim))
    we = _xavier(nk(), (A, 2 * H)); be = unif((A,))
    wd = _xavier(nk(), (A, H)); bd = unif((A,))
    wa = _xavier(nk(), (1, A)); ba = unif((1,))
    p["attn_we_f"] = we[:, :H].T                     # [H, A]  (fwd enc half)
    p["attn_we_b"] = we[:, H:].T                     # [H, A]  (bwd enc half)
    p["attn_b_ed"] = (be + bd).reshape(1, A)         # both attn biases folded
    p["attn_wd"] = wd.T                              # [H, A]
    p["attn_wa"] = wa                                # [1, A]
    p["attn_ba"] = ba.reshape(1, 1)

    w_ih_d, w_hh_d, b_d = lstm_raw(dec_emb_dim + 2 * H)
    p["dec_w_in_emb"] = w_ih_d[:, :dec_emb_dim].T                      # [demb, 4H]
    p["dec_w_in_cf"] = w_ih_d[:, dec_emb_dim:dec_emb_dim + H].T        # [H, 4H]
    p["dec_w_in_cb"] = w_ih_d[:, dec_emb_dim + H:].T                   # [H, 4H]
    p["dec_w_hh"] = w_hh_d.T                                           # [H, 4H]
    p["dec_b_in"] = b_d.reshape(1, 4 * H)

    w_out = _xavier(nk(), (dec_vocab, H + 2 * H + dec_emb_dim))
    b_out = unif((dec_vocab,))

    def pad_cols(w_t):
        out = jnp.zeros((w_t.shape[0], v_pad), jnp.float32)
        return out.at[:, :dec_vocab].set(w_t)

    p["w_out_h"] = pad_cols(w_out[:, :H].T)                 # [H, VP]
    p["w_out_cf"] = pad_cols(w_out[:, H:2 * H].T)           # [H, VP]
    p["w_out_cb"] = pad_cols(w_out[:, 2 * H:3 * H].T)       # [H, VP]
    p["w_out_e"] = pad_cols(w_out[:, 3 * H:].T)             # [demb, VP]
    p["b_out"] = jnp.zeros((1, v_pad), jnp.float32).at[0, :dec_vocab].set(b_out)
    return p


# ---------------------------------------------------------------------------
if __name__ == "__main__":
    ENC_VOCAB, DEC_VOCAB = 20, 20
    ENC_EMB = DEC_EMB = 16
    H, A = 32, 32
    B, S, T = 2, 8, 6
    V_PAD = ((DEC_VOCAB + 127) // 128) * 128      # lane-dense fc_out width

    key = jax.random.PRNGKey(0)
    pkey, skey, tkey = jax.random.split(key, 3)
    params = init_params(pkey, ENC_VOCAB, DEC_VOCAB, ENC_EMB, DEC_EMB, H, A, V_PAD)

    src = jax.random.randint(skey, (B, S), 0, ENC_VOCAB, dtype=jnp.int32)
    trg = jax.random.randint(tkey, (B, T), 0, DEC_VOCAB, dtype=jnp.int32)
    src_lengths = jnp.array([S, S - 2], dtype=jnp.int32)   # max length == src_len

    outputs, attentions = attention_seq2seq_forward(src, src_lengths, trg, params,
                                                    dec_vocab=DEC_VOCAB)
    jax.block_until_ready((outputs, attentions))

    assert outputs.shape == (B, T - 1, DEC_VOCAB), outputs.shape
    assert attentions.shape == (B, T - 1, S), attentions.shape
    assert bool(jnp.all(jnp.isfinite(outputs)))
    # attention rows sum to 1
    assert bool(jnp.allclose(jnp.sum(attentions, axis=-1), 1.0, atol=1e-5))
    print("KERNEL_OK")
</pallas_src>

<mosaic_0001>
module attributes {stable_mosaic.version = 11 : i64} {
  func.func @_decoder_kernel(%arg0: i32, %arg1: memref<2x32xf32, #tpu.memory_space<vmem>>, %arg2: memref<2x32xf32, #tpu.memory_space<vmem>>, %arg3: memref<10x16xf32, #tpu.memory_space<vmem>>, %arg4: memref<2x8x32xf32, #tpu.memory_space<vmem>>, %arg5: memref<2x8x32xf32, #tpu.memory_space<vmem>>, %arg6: memref<2x1xi32, #tpu.memory_space<vmem>>, %arg7: memref<32x32xf32, #tpu.memory_space<vmem>>, %arg8: memref<32x32xf32, #tpu.memory_space<vmem>>, %arg9: memref<1x32xf32, #tpu.memory_space<vmem>>, %arg10: memref<32x32xf32, #tpu.memory_space<vmem>>, %arg11: memref<1x32xf32, #tpu.memory_space<vmem>>, %arg12: memref<1x1xf32, #tpu.memory_space<vmem>>, %arg13: memref<16x128xf32, #tpu.memory_space<vmem>>, %arg14: memref<1x128xf32, #tpu.memory_space<vmem>>, %arg15: memref<32x128xf32, #tpu.memory_space<vmem>>, %arg16: memref<32x128xf32, #tpu.memory_space<vmem>>, %arg17: memref<32x128xf32, #tpu.memory_space<vmem>>, %arg18: memref<32x128xf32, #tpu.memory_space<vmem>>, %arg19: memref<32x128xf32, #tpu.memory_space<vmem>>, %arg20: memref<32x128xf32, #tpu.memory_space<vmem>>, %arg21: memref<16x128xf32, #tpu.memory_space<vmem>>, %arg22: memref<1x128xf32, #tpu.memory_space<vmem>>, %arg23: memref<2x5x128xf32, #tpu.memory_space<vmem>>, %arg24: memref<2x5x8xf32, #tpu.memory_space<vmem>>) attributes {dimension_semantics = [#tpu.dimension_semantics<arbitrary>], iteration_bounds = array<i64: 1>, scalar_prefetch = 0 : i64, scratch_operands = 0 : i64, tpu.core_type = #tpu.core_type<tc>, window_params = [{pipeline_mode = #tpu.pipeline_mode<synchronous>, transform_indices = @transform_0, window_bounds = array<i64: 2, 32>}, {pipeline_mode = #tpu.pipeline_mode<synchronous>, transform_indices = @transform_1, window_bounds = array<i64: 2, 32>}, {pipeline_mode = #tpu.pipeline_mode<synchronous>, transform_indices = @transform_2, window_bounds = array<i64: 10, 16>}, {pipeline_mode = #tpu.pipeline_mode<synchronous>, transform_indices = @transform_3, window_bounds = array<i64: 2, 8, 32>}, {pipeline_mode = #tpu.pipeline_mode<synchronous>, transform_indices = @transform_4, window_bounds = array<i64: 2, 8, 32>}, {pipeline_mode = #tpu.pipeline_mode<synchronous>, transform_indices = @transform_5, window_bounds = array<i64: 2, 1>}, {pipeline_mode = #tpu.pipeline_mode<synchronous>, transform_indices = @transform_6, window_bounds = array<i64: 32, 32>}, {pipeline_mode = #tpu.pipeline_mode<synchronous>, transform_indices = @transform_7, window_bounds = array<i64: 32, 32>}, {pipeline_mode = #tpu.pipeline_mode<synchronous>, transform_indices = @transform_8, window_bounds = array<i64: 1, 32>}, {pipeline_mode = #tpu.pipeline_mode<synchronous>, transform_indices = @transform_9, window_bounds = array<i64: 32, 32>}, {pipeline_mode = #tpu.pipeline_mode<synchronous>, transform_indices = @transform_10, window_bounds = array<i64: 1, 32>}, {pipeline_mode = #tpu.pipeline_mode<synchronous>, transform_indices = @transform_11, window_bounds = array<i64: 1, 1>}, {pipeline_mode = #tpu.pipeline_mode<synchronous>, transform_indices = @transform_12, window_bounds = array<i64: 16, 128>}, {pipeline_mode = #tpu.pipeline_mode<synchronous>, transform_indices = @transform_13, window_bounds = array<i64: 1, 128>}, {pipeline_mode = #tpu.pipeline_mode<synchronous>, transform_indices = @transform_14, window_bounds = array<i64: 32, 128>}, {pipeline_mode = #tpu.pipeline_mode<synchronous>, transform_indices = @transform_15, window_bounds = array<i64: 32, 128>}, {pipeline_mode = #tpu.pipeline_mode<synchronous>, transform_indices = @transform_16, window_bounds = array<i64: 32, 128>}, {pipeline_mode = #tpu.pipeline_mode<synchronous>, transform_indices = @transform_17, window_bounds = array<i64: 32, 128>}, {pipeline_mode = #tpu.pipeline_mode<synchronous>, transform_indices = @transform_18, window_bounds = array<i64: 32, 128>}, {pipeline_mode = #tpu.pipeline_mode<synchronous>, transform_indices = @transform_19, window_bounds = array<i64: 32, 128>}, {pipeline_mode = #tpu.pipeline_mode<synchronous>, transform_indices = @transform_20, window_bounds = array<i64: 16, 128>}, {pipeline_mode = #tpu.pipeline_mode<synchronous>, transform_indices = @transform_21, window_bounds = array<i64: 1, 128>}, {pipeline_mode = #tpu.pipeline_mode<synchronous>, transform_indices = @transform_22, window_bounds = array<i64: 2, 5, 128>}, {pipeline_mode = #tpu.pipeline_mode<synchronous>, transform_indices = @transform_23, window_bounds = array<i64: 2, 5, 8>}]} {
    %c0 = arith.constant 0 : index
    %c0_0 = arith.constant 0 : index
    %c0_1 = arith.constant 0 : index
    %0 = vector.load %arg4[%c0, %c0_0, %c0_1] : memref<2x8x32xf32, #tpu.memory_space<vmem>>, vector<2x8x32xf32>
    %c0_2 = arith.constant 0 : index
    %c0_3 = arith.constant 0 : index
    %c0_4 = arith.constant 0 : index
    %1 = vector.load %arg5[%c0_2, %c0_3, %c0_4] : memref<2x8x32xf32, #tpu.memory_space<vmem>>, vector<2x8x32xf32>
    %2 = vector.shape_cast %0 : vector<2x8x32xf32> to vector<16x32xf32>
    %c0_5 = arith.constant 0 : index
    %c0_6 = arith.constant 0 : index
    %3 = vector.load %arg7[%c0_5, %c0_6] : memref<32x32xf32, #tpu.memory_space<vmem>>, vector<32x32xf32>
    %cst = arith.constant dense<0.000000e+00> : vector<16x32xf32>
    %4 = tpu.matmul %2, %3, %cst {dimension_numbers = #tpu.dot_dimension_numbers<[1], [0], [0], [1], [0, 0, 1, 1], [], []>} : vector<16x32xf32>, vector<32x32xf32>, vector<16x32xf32> -> vector<16x32xf32>
    %5 = vector.shape_cast %1 : vector<2x8x32xf32> to vector<16x32xf32>
    %c0_7 = arith.constant 0 : index
    %c0_8 = arith.constant 0 : index
    %6 = vector.load %arg8[%c0_7, %c0_8] : memref<32x32xf32, #tpu.memory_space<vmem>>, vector<32x32xf32>
    %cst_9 = arith.constant dense<0.000000e+00> : vector<16x32xf32>
    %7 = tpu.matmul %5, %6, %cst_9 {dimension_numbers = #tpu.dot_dimension_numbers<[1], [0], [0], [1], [0, 0, 1, 1], [], []>} : vector<16x32xf32>, vector<32x32xf32>, vector<16x32xf32> -> vector<16x32xf32>
    %8 = arith.addf %4, %7 : vector<16x32xf32>
    %c0_10 = arith.constant 0 : index
    %c0_11 = arith.constant 0 : index
    %9 = vector.load %arg9[%c0_10, %c0_11] : memref<1x32xf32, #tpu.memory_space<vmem>>, vector<1x32xf32>
    %10 = vector.broadcast %9 : vector<1x32xf32> to vector<16x32xf32>
    %11 = arith.addf %8, %10 : vector<16x32xf32>
    %12 = vector.shape_cast %11 : vector<16x32xf32> to vector<2x8x32xf32>
    %c0_12 = arith.constant 0 : index
    %c0_13 = arith.constant 0 : index
    %13 = vector.load %arg3[%c0_12, %c0_13] : memref<10x16xf32, #tpu.memory_space<vmem>>, vector<10x16xf32>
    %c0_14 = arith.constant 0 : index
    %c0_15 = arith.constant 0 : index
    %14 = vector.load %arg13[%c0_14, %c0_15] : memref<16x128xf32, #tpu.memory_space<vmem>>, vector<16x128xf32>
    %cst_16 = arith.constant dense<0.000000e+00> : vector<10x128xf32>
    %15 = tpu.matmul %13, %14, %cst_16 {dimension_numbers = #tpu.dot_dimension_numbers<[1], [0], [0], [1], [0, 0, 1, 1], [], []>} : vector<10x16xf32>, vector<16x128xf32>, vector<10x128xf32> -> vector<10x128xf32>
    %c0_17 = arith.constant 0 : index
    %c0_18 = arith.constant 0 : index
    %16 = vector.load %arg14[%c0_17, %c0_18] : memref<1x128xf32, #tpu.memory_space<vmem>>, vector<1x128xf32>
    %17 = vector.broadcast %16 : vector<1x128xf32> to vector<10x128xf32>
    %18 = arith.addf %15, %17 : vector<10x128xf32>
    %19 = tpu.iota {dimensions = array<i32: 1>} : vector<2x8xi32>
    %c0_19 = arith.constant 0 : index
    %c0_20 = arith.constant 0 : index
    %20 = vector.load %arg6[%c0_19, %c0_20] : memref<2x1xi32, #tpu.memory_space<vmem>>, vector<2x1xi32>
    %21 = vector.broadcast %20 : vector<2x1xi32> to vector<2x8xi32>
    %22 = arith.cmpi slt, %19, %21 : vector<2x8xi32>
    %c0_21 = arith.constant 0 : index
    %c0_22 = arith.constant 0 : index
    %23 = vector.load %arg1[%c0_21, %c0_22] : memref<2x32xf32, #tpu.memory_space<vmem>>, vector<2x32xf32>
    %c0_23 = arith.constant 0 : index
    %c0_24 = arith.constant 0 : index
    %24 = vector.load %arg2[%c0_23, %c0_24] : memref<2x32xf32, #tpu.memory_space<vmem>>, vector<2x32xf32>
    %c0_25 = arith.constant 0 : index
    %c0_26 = arith.constant 0 : index
    %25 = vector.load %arg11[%c0_25, %c0_26] : memref<1x32xf32, #tpu.memory_space<vmem>>, vector<1x32xf32>
    %c0_27 = arith.constant 0 : index
    %c0_28 = arith.constant 0 : index
    %26 = vector.load %arg10[%c0_27, %c0_28] : memref<32x32xf32, #tpu.memory_space<vmem>>, vector<32x32xf32>
    %cst_29 = arith.constant dense<0.000000e+00> : vector<2x32xf32>
    %27 = tpu.matmul %23, %26, %cst_29 {dimension_numbers = #tpu.dot_dimension_numbers<[1], [0], [0], [1], [0, 0, 1, 1], [], []>} : vector<2x32xf32>, vector<32x32xf32>, vector<2x32xf32> -> vector<2x32xf32>
    %28 = vector.shape_cast %27 : vector<2x32xf32> to vector<2x1x32xf32>
    %29 = vector.broadcast %28 : vector<2x1x32xf32> to vector<2x8x32xf32>
    %30 = arith.addf %12, %29 : vector<2x8x32xf32>
    %31 = math.tanh %30 : vector<2x8x32xf32>
    %32 = vector.shape_cast %25 : vector<1x32xf32> to vector<1x1x32xf32>
    %33 = vector.broadcast %32 : vector<1x1x32xf32> to vector<2x8x32xf32>
    %34 = arith.mulf %31, %33 : vector<2x8x32xf32>
    %cst_30 = arith.constant dense<0.000000e+00> : vector<2x8xf32>
    %35 = vector.multi_reduction <add>, %34, %cst_30 [2] : vector<2x8x32xf32> to vector<2x8xf32>
    %c0_31 = arith.constant 0 : index
    %c0_32 = arith.constant 0 : index
    %36 = vector.load %arg12[%c0_31, %c0_32] : memref<1x1xf32, #tpu.memory_space<vmem>>, vector<1x1xf32>
    %37 = vector.broadcast %36 : vector<1x1xf32> to vector<2x8xf32>
    %38 = arith.addf %35, %37 : vector<2x8xf32>
    %cst_33 = arith.constant -1.000000e+10 : f32
    %39 = vector.broadcast %cst_33 : f32 to vector<2x8xf32>
    %40 = arith.select %22, %38, %39 : vector<2x8xi1>, vector<2x8xf32>
    %cst_34 = arith.constant dense<0xFF800000> : vector<2xf32>
    %41 = vector.multi_reduction <maximumf>, %40, %cst_34 [1] : vector<2x8xf32> to vector<2xf32>
    %42 = vector.shape_cast %41 : vector<2xf32> to vector<2x1xf32>
    %43 = vector.broadcast %42 : vector<2x1xf32> to vector<2x8xf32>
    %44 = arith.subf %40, %43 : vector<2x8xf32>
    %45 = math.exp %44 : vector<2x8xf32>
    %cst_35 = arith.constant dense<0.000000e+00> : vector<2xf32>
    %46 = vector.multi_reduction <add>, %45, %cst_35 [1] : vector<2x8xf32> to vector<2xf32>
    %47 = vector.shape_cast %46 : vector<2xf32> to vector<2x1xf32>
    %48 = vector.broadcast %47 : vector<2x1xf32> to vector<2x8xf32>
    %49 = arith.divf %45, %48 : vector<2x8xf32>
    %50 = vector.shape_cast %49 : vector<2x8xf32> to vector<2x8x1xf32>
    %51 = vector.broadcast %50 : vector<2x8x1xf32> to vector<2x8x32xf32>
    %52 = arith.mulf %51, %0 : vector<2x8x32xf32>
    %cst_36 = arith.constant dense<0.000000e+00> : vector<2x32xf32>
    %53 = vector.multi_reduction <add>, %52, %cst_36 [1] : vector<2x8x32xf32> to vector<2x32xf32>
    %54 = vector.shape_cast %49 : vector<2x8xf32> to vector<2x8x1xf32>
    %55 = vector.broadcast %54 : vector<2x8x1xf32> to vector<2x8x32xf32>
    %56 = arith.mulf %55, %1 : vector<2x8x32xf32>
    %cst_37 = arith.constant dense<0.000000e+00> : vector<2x32xf32>
    %57 = vector.multi_reduction <add>, %56, %cst_37 [1] : vector<2x8x32xf32> to vector<2x32xf32>
    %58 = vector.extract_strided_slice %18 {offsets = [0, 0], sizes = [2, 128], strides = [1, 1]} : vector<10x128xf32> to vector<2x128xf32>
    %c0_38 = arith.constant 0 : index
    %c0_39 = arith.constant 0 : index
    %59 = vector.load %arg15[%c0_38, %c0_39] : memref<32x128xf32, #tpu.memory_space<vmem>>, vector<32x128xf32>
    %cst_40 = arith.constant dense<0.000000e+00> : vector<2x128xf32>
    %60 = tpu.matmul %53, %59, %cst_40 {dimension_numbers = #tpu.dot_dimension_numbers<[1], [0], [0], [1], [0, 0, 1, 1], [], []>} : vector<2x32xf32>, vector<32x128xf32>, vector<2x128xf32> -> vector<2x128xf32>
    %61 = arith.addf %58, %60 : vector<2x128xf32>
    %c0_41 = arith.constant 0 : index
    %c0_42 = arith.constant 0 : index
    %62 = vector.load %arg16[%c0_41, %c0_42] : memref<32x128xf32, #tpu.memory_space<vmem>>, vector<32x128xf32>
    %cst_43 = arith.constant dense<0.000000e+00> : vector<2x128xf32>
    %63 = tpu.matmul %57, %62, %cst_43 {dimension_numbers = #tpu.dot_dimension_numbers<[1], [0], [0], [1], [0, 0, 1, 1], [], []>} : vector<2x32xf32>, vector<32x128xf32>, vector<2x128xf32> -> vector<2x128xf32>
    %64 = arith.addf %61, %63 : vector<2x128xf32>
    %c0_44 = arith.constant 0 : index
    %c0_45 = arith.constant 0 : index
    %65 = vector.load %arg17[%c0_44, %c0_45] : memref<32x128xf32, #tpu.memory_space<vmem>>, vector<32x128xf32>
    %cst_46 = arith.constant dense<0.000000e+00> : vector<2x128xf32>
    %66 = tpu.matmul %23, %65, %cst_46 {dimension_numbers = #tpu.dot_dimension_numbers<[1], [0], [0], [1], [0, 0, 1, 1], [], []>} : vector<2x32xf32>, vector<32x128xf32>, vector<2x128xf32> -> vector<2x128xf32>
    %67 = arith.addf %64, %66 : vector<2x128xf32>
    %68 = vector.extract_strided_slice %67 {offsets = [0, 0], sizes = [2, 32], strides = [1, 1]} : vector<2x128xf32> to vector<2x32xf32>
    %69 = arith.negf %68 : vector<2x32xf32>
    %70 = math.exp %69 : vector<2x32xf32>
    %cst_47 = arith.constant 1.000000e+00 : f32
    %71 = vector.broadcast %cst_47 : f32 to vector<2x32xf32>
    %72 = arith.addf %71, %70 : vector<2x32xf32>
    %73 = arith.divf %71, %72 : vector<2x32xf32>
    %74 = vector.extract_strided_slice %67 {offsets = [0, 32], sizes = [2, 32], strides = [1, 1]} : vector<2x128xf32> to vector<2x32xf32>
    %75 = arith.negf %74 : vector<2x32xf32>
    %76 = math.exp %75 : vector<2x32xf32>
    %cst_48 = arith.constant 1.000000e+00 : f32
    %77 = vector.broadcast %cst_48 : f32 to vector<2x32xf32>
    %78 = arith.addf %77, %76 : vector<2x32xf32>
    %79 = arith.divf %77, %78 : vector<2x32xf32>
    %80 = vector.extract_strided_slice %67 {offsets = [0, 64], sizes = [2, 32], strides = [1, 1]} : vector<2x128xf32> to vector<2x32xf32>
    %81 = math.tanh %80 : vector<2x32xf32>
    %82 = vector.extract_strided_slice %67 {offsets = [0, 96], sizes = [2, 32], strides = [1, 1]} : vector<2x128xf32> to vector<2x32xf32>
    %83 = arith.negf %82 : vector<2x32xf32>
    %84 = math.exp %83 : vector<2x32xf32>
    %cst_49 = arith.constant 1.000000e+00 : f32
    %85 = vector.broadcast %cst_49 : f32 to vector<2x32xf32>
    %86 = arith.addf %85, %84 : vector<2x32xf32>
    %87 = arith.divf %85, %86 : vector<2x32xf32>
    %88 = arith.mulf %79, %24 : vector<2x32xf32>
    %89 = arith.mulf %73, %81 : vector<2x32xf32>
    %90 = arith.addf %88, %89 : vector<2x32xf32>
    %91 = math.tanh %90 : vector<2x32xf32>
    %92 = arith.mulf %87, %91 : vector<2x32xf32>
    %c0_50 = arith.constant 0 : index
    %c0_51 = arith.constant 0 : index
    %93 = vector.load %arg18[%c0_50, %c0_51] : memref<32x128xf32, #tpu.memory_space<vmem>>, vector<32x128xf32>
    %cst_52 = arith.constant dense<0.000000e+00> : vector<2x128xf32>
    %94 = tpu.matmul %92, %93, %cst_52 {dimension_numbers = #tpu.dot_dimension_numbers<[1], [0], [0], [1], [0, 0, 1, 1], [], []>} : vector<2x32xf32>, vector<32x128xf32>, vector<2x128xf32> -> vector<2x128xf32>
    %c0_53 = arith.constant 0 : index
    %c0_54 = arith.constant 0 : index
    %95 = vector.load %arg19[%c0_53, %c0_54] : memref<32x128xf32, #tpu.memory_space<vmem>>, vector<32x128xf32>
    %cst_55 = arith.constant dense<0.000000e+00> : vector<2x128xf32>
    %96 = tpu.matmul %53, %95, %cst_55 {dimension_numbers = #tpu.dot_dimension_numbers<[1], [0], [0], [1], [0, 0, 1, 1], [], []>} : vector<2x32xf32>, vector<32x128xf32>, vector<2x128xf32> -> vector<2x128xf32>
    %97 = arith.addf %94, %96 : vector<2x128xf32>
    %c0_56 = arith.constant 0 : index
    %c0_57 = arith.constant 0 : index
    %98 = vector.load %arg20[%c0_56, %c0_57] : memref<32x128xf32, #tpu.memory_space<vmem>>, vector<32x128xf32>
    %cst_58 = arith.constant dense<0.000000e+00> : vector<2x128xf32>
    %99 = tpu.matmul %57, %98, %cst_58 {dimension_numbers = #tpu.dot_dimension_numbers<[1], [0], [0], [1], [0, 0, 1, 1], [], []>} : vector<2x32xf32>, vector<32x128xf32>, vector<2x128xf32> -> vector<2x128xf32>
    %100 = arith.addf %97, %99 : vector<2x128xf32>
    %101 = vector.extract_strided_slice %13 {offsets = [0, 0], sizes = [2, 16], strides = [1, 1]} : vector<10x16xf32> to vector<2x16xf32>
    %c0_59 = arith.constant 0 : index
    %c0_60 = arith.constant 0 : index
    %102 = vector.load %arg21[%c0_59, %c0_60] : memref<16x128xf32, #tpu.memory_space<vmem>>, vector<16x128xf32>
    %cst_61 = arith.constant dense<0.000000e+00> : vector<2x128xf32>
    %103 = tpu.matmul %101, %102, %cst_61 {dimension_numbers = #tpu.dot_dimension_numbers<[1], [0], [0], [1], [0, 0, 1, 1], [], []>} : vector<2x16xf32>, vector<16x128xf32>, vector<2x128xf32> -> vector<2x128xf32>
    %104 = arith.addf %100, %103 : vector<2x128xf32>
    %c0_62 = arith.constant 0 : index
    %c0_63 = arith.constant 0 : index
    %105 = vector.load %arg22[%c0_62, %c0_63] : memref<1x128xf32, #tpu.memory_space<vmem>>, vector<1x128xf32>
    %106 = vector.broadcast %105 : vector<1x128xf32> to vector<2x128xf32>
    %107 = arith.addf %104, %106 : vector<2x128xf32>
    %108 = vector.shape_cast %107 : vector<2x128xf32> to vector<2x1x128xf32>
    %c0_64 = arith.constant 0 : index
    %c0_65 = arith.constant 0 : index
    %c0_66 = arith.constant 0 : index
    %109 = vector.load %arg23[%c0_64, %c0_65, %c0_66] : memref<2x5x128xf32, #tpu.memory_space<vmem>>, vector<2x1x128xf32>
    tpu.vector_store %arg23[%c0_64, %c0_65, %c0_66], %108 {strides = array<i32>} : memref<2x5x128xf32, #tpu.memory_space<vmem>>, vector<2x1x128xf32>,
    %110 = vector.shape_cast %49 : vector<2x8xf32> to vector<2x1x8xf32>
    %c0_67 = arith.constant 0 : index
    %c0_68 = arith.constant 0 : index
    %c0_69 = arith.constant 0 : index
    %111 = vector.load %arg24[%c0_67, %c0_68, %c0_69] : memref<2x5x8xf32, #tpu.memory_space<vmem>>, vector<2x1x8xf32>
    tpu.vector_store %arg24[%c0_67, %c0_68, %c0_69], %110 {strides = array<i32>} : memref<2x5x8xf32, #tpu.memory_space<vmem>>, vector<2x1x8xf32>,
    %c0_70 = arith.constant 0 : index
    %c0_71 = arith.constant 0 : index
    %112 = vector.load %arg10[%c0_70, %c0_71] : memref<32x32xf32, #tpu.memory_space<vmem>>, vector<32x32xf32>
    %cst_72 = arith.constant dense<0.000000e+00> : vector<2x32xf32>
    %113 = tpu.matmul %92, %112, %cst_72 {dimension_numbers = #tpu.dot_dimension_numbers<[1], [0], [0], [1], [0, 0, 1, 1], [], []>} : vector<2x32xf32>, vector<32x32xf32>, vector<2x32xf32> -> vector<2x32xf32>
    %114 = vector.shape_cast %113 : vector<2x32xf32> to vector<2x1x32xf32>
    %115 = vector.broadcast %114 : vector<2x1x32xf32> to vector<2x8x32xf32>
    %116 = arith.addf %12, %115 : vector<2x8x32xf32>
    %117 = math.tanh %116 : vector<2x8x32xf32>
    %118 = vector.shape_cast %25 : vector<1x32xf32> to vector<1x1x32xf32>
    %119 = vector.broadcast %118 : vector<1x1x32xf32> to vector<2x8x32xf32>
    %120 = arith.mulf %117, %119 : vector<2x8x32xf32>
    %cst_73 = arith.constant dense<0.000000e+00> : vector<2x8xf32>
    %121 = vector.multi_reduction <add>, %120, %cst_73 [2] : vector<2x8x32xf32> to vector<2x8xf32>
    %c0_74 = arith.constant 0 : index
    %c0_75 = arith.constant 0 : index
    %122 = vector.load %arg12[%c0_74, %c0_75] : memref<1x1xf32, #tpu.memory_space<vmem>>, vector<1x1xf32>
    %123 = vector.broadcast %122 : vector<1x1xf32> to vector<2x8xf32>
    %124 = arith.addf %121, %123 : vector<2x8xf32>
    %cst_76 = arith.constant -1.000000e+10 : f32
    %125 = vector.broadcast %cst_76 : f32 to vector<2x8xf32>
    %126 = arith.select %22, %124, %125 : vector<2x8xi1>, vector<2x8xf32>
    %cst_77 = arith.constant dense<0xFF800000> : vector<2xf32>
    %127 = vector.multi_reduction <maximumf>, %126, %cst_77 [1] : vector<2x8xf32> to vector<2xf32>
    %128 = vector.shape_cast %127 : vector<2xf32> to vector<2x1xf32>
    %129 = vector.broadcast %128 : vector<2x1xf32> to vector<2x8xf32>
    %130 = arith.subf %126, %129 : vector<2x8xf32>
    %131 = math.exp %130 : vector<2x8xf32>
    %cst_78 = arith.constant dense<0.000000e+00> : vector<2xf32>
    %132 = vector.multi_reduction <add>, %131, %cst_78 [1] : vector<2x8xf32> to vector<2xf32>
    %133 = vector.shape_cast %132 : vector<2xf32> to vector<2x1xf32>
    %134 = vector.broadcast %133 : vector<2x1xf32> to vector<2x8xf32>
    %135 = arith.divf %131, %134 : vector<2x8xf32>
    %136 = vector.shape_cast %135 : vector<2x8xf32> to vector<2x8x1xf32>
    %137 = vector.broadcast %136 : vector<2x8x1xf32> to vector<2x8x32xf32>
    %138 = arith.mulf %137, %0 : vector<2x8x32xf32>
    %cst_79 = arith.constant dense<0.000000e+00> : vector<2x32xf32>
    %139 = vector.multi_reduction <add>, %138, %cst_79 [1] : vector<2x8x32xf32> to vector<2x32xf32>
    %140 = vector.shape_cast %135 : vector<2x8xf32> to vector<2x8x1xf32>
    %141 = vector.broadcast %140 : vector<2x8x1xf32> to vector<2x8x32xf32>
    %142 = arith.mulf %141, %1 : vector<2x8x32xf32>
    %cst_80 = arith.constant dense<0.000000e+00> : vector<2x32xf32>
    %143 = vector.multi_reduction <add>, %142, %cst_80 [1] : vector<2x8x32xf32> to vector<2x32xf32>
    %144 = vector.extract_strided_slice %18 {offsets = [2, 0], sizes = [2, 128], strides = [1, 1]} : vector<10x128xf32> to vector<2x128xf32>
    %c0_81 = arith.constant 0 : index
    %c0_82 = arith.constant 0 : index
    %145 = vector.load %arg15[%c0_81, %c0_82] : memref<32x128xf32, #tpu.memory_space<vmem>>, vector<32x128xf32>
    %cst_83 = arith.constant dense<0.000000e+00> : vector<2x128xf32>
    %146 = tpu.matmul %139, %145, %cst_83 {dimension_numbers = #tpu.dot_dimension_numbers<[1], [0], [0], [1], [0, 0, 1, 1], [], []>} : vector<2x32xf32>, vector<32x128xf32>, vector<2x128xf32> -> vector<2x128xf32>
    %147 = arith.addf %144, %146 : vector<2x128xf32>
    %c0_84 = arith.constant 0 : index
    %c0_85 = arith.constant 0 : index
    %148 = vector.load %arg16[%c0_84, %c0_85] : memref<32x128xf32, #tpu.memory_space<vmem>>, vector<32x128xf32>
    %cst_86 = arith.constant dense<0.000000e+00> : vector<2x128xf32>
    %149 = tpu.matmul %143, %148, %cst_86 {dimension_numbers = #tpu.dot_dimension_numbers<[1], [0], [0], [1], [0, 0, 1, 1], [], []>} : vector<2x32xf32>, vector<32x128xf32>, vector<2x128xf32> -> vector<2x128xf32>
    %150 = arith.addf %147, %149 : vector<2x128xf32>
    %c0_87 = arith.constant 0 : index
    %c0_88 = arith.constant 0 : index
    %151 = vector.load %arg17[%c0_87, %c0_88] : memref<32x128xf32, #tpu.memory_space<vmem>>, vector<32x128xf32>
    %cst_89 = arith.constant dense<0.000000e+00> : vector<2x128xf32>
    %152 = tpu.matmul %92, %151, %cst_89 {dimension_numbers = #tpu.dot_dimension_numbers<[1], [0], [0], [1], [0, 0, 1, 1], [], []>} : vector<2x32xf32>, vector<32x128xf32>, vector<2x128xf32> -> vector<2x128xf32>
    %153 = arith.addf %150, %152 : vector<2x128xf32>
    %154 = vector.extract_strided_slice %153 {offsets = [0, 0], sizes = [2, 32], strides = [1, 1]} : vector<2x128xf32> to vector<2x32xf32>
    %155 = arith.negf %154 : vector<2x32xf32>
    %156 = math.exp %155 : vector<2x32xf32>
    %cst_90 = arith.constant 1.000000e+00 : f32
    %157 = vector.broadcast %cst_90 : f32 to vector<2x32xf32>
    %158 = arith.addf %157, %156 : vector<2x32xf32>
    %159 = arith.divf %157, %158 : vector<2x32xf32>
    %160 = vector.extract_strided_slice %153 {offsets = [0, 32], sizes = [2, 32], strides = [1, 1]} : vector<2x128xf32> to vector<2x32xf32>
    %161 = arith.negf %160 : vector<2x32xf32>
    %162 = math.exp %161 : vector<2x32xf32>
    %cst_91 = arith.constant 1.000000e+00 : f32
    %163 = vector.broadcast %cst_91 : f32 to vector<2x32xf32>
    %164 = arith.addf %163, %162 : vector<2x32xf32>
    %165 = arith.divf %163, %164 : vector<2x32xf32>
    %166 = vector.extract_strided_slice %153 {offsets = [0, 64], sizes = [2, 32], strides = [1, 1]} : vector<2x128xf32> to vector<2x32xf32>
    %167 = math.tanh %166 : vector<2x32xf32>
    %168 = vector.extract_strided_slice %153 {offsets = [0, 96], sizes = [2, 32], strides = [1, 1]} : vector<2x128xf32> to vector<2x32xf32>
    %169 = arith.negf %168 : vector<2x32xf32>
    %170 = math.exp %169 : vector<2x32xf32>
    %cst_92 = arith.constant 1.000000e+00 : f32
    %171 = vector.broadcast %cst_92 : f32 to vector<2x32xf32>
    %172 = arith.addf %171, %170 : vector<2x32xf32>
    %173 = arith.divf %171, %172 : vector<2x32xf32>
    %174 = arith.mulf %165, %90 : vector<2x32xf32>
    %175 = arith.mulf %159, %167 : vector<2x32xf32>
    %176 = arith.addf %174, %175 : vector<2x32xf32>
    %177 = math.tanh %176 : vector<2x32xf32>
    %178 = arith.mulf %173, %177 : vector<2x32xf32>
    %c0_93 = arith.constant 0 : index
    %c0_94 = arith.constant 0 : index
    %179 = vector.load %arg18[%c0_93, %c0_94] : memref<32x128xf32, #tpu.memory_space<vmem>>, vector<32x128xf32>
    %cst_95 = arith.constant dense<0.000000e+00> : vector<2x128xf32>
    %180 = tpu.matmul %178, %179, %cst_95 {dimension_numbers = #tpu.dot_dimension_numbers<[1], [0], [0], [1], [0, 0, 1, 1], [], []>} : vector<2x32xf32>, vector<32x128xf32>, vector<2x128xf32> -> vector<2x128xf32>
    %c0_96 = arith.constant 0 : index
    %c0_97 = arith.constant 0 : index
    %181 = vector.load %arg19[%c0_96, %c0_97] : memref<32x128xf32, #tpu.memory_space<vmem>>, vector<32x128xf32>
    %cst_98 = arith.constant dense<0.000000e+00> : vector<2x128xf32>
    %182 = tpu.matmul %139, %181, %cst_98 {dimension_numbers = #tpu.dot_dimension_numbers<[1], [0], [0], [1], [0, 0, 1, 1], [], []>} : vector<2x32xf32>, vector<32x128xf32>, vector<2x128xf32> -> vector<2x128xf32>
    %183 = arith.addf %180, %182 : vector<2x128xf32>
    %c0_99 = arith.constant 0 : index
    %c0_100 = arith.constant 0 : index
    %184 = vector.load %arg20[%c0_99, %c0_100] : memref<32x128xf32, #tpu.memory_space<vmem>>, vector<32x128xf32>
    %cst_101 = arith.constant dense<0.000000e+00> : vector<2x128xf32>
    %185 = tpu.matmul %143, %184, %cst_101 {dimension_numbers = #tpu.dot_dimension_numbers<[1], [0], [0], [1], [0, 0, 1, 1], [], []>} : vector<2x32xf32>, vector<32x128xf32>, vector<2x128xf32> -> vector<2x128xf32>
    %186 = arith.addf %183, %185 : vector<2x128xf32>
    %187 = vector.extract_strided_slice %13 {offsets = [2, 0], sizes = [2, 16], strides = [1, 1]} : vector<10x16xf32> to vector<2x16xf32>
    %c0_102 = arith.constant 0 : index
    %c0_103 = arith.constant 0 : index
    %188 = vector.load %arg21[%c0_102, %c0_103] : memref<16x128xf32, #tpu.memory_space<vmem>>, vector<16x128xf32>
    %cst_104 = arith.constant dense<0.000000e+00> : vector<2x128xf32>
    %189 = tpu.matmul %187, %188, %cst_104 {dimension_numbers = #tpu.dot_dimension_numbers<[1], [0], [0], [1], [0, 0, 1, 1], [], []>} : vector<2x16xf32>, vector<16x128xf32>, vector<2x128xf32> -> vector<2x128xf32>
    %190 = arith.addf %186, %189 : vector<2x128xf32>
    %c0_105 = arith.constant 0 : index
    %c0_106 = arith.constant 0 : index
    %191 = vector.load %arg22[%c0_105, %c0_106] : memref<1x128xf32, #tpu.memory_space<vmem>>, vector<1x128xf32>
    %192 = vector.broadcast %191 : vector<1x128xf32> to vector<2x128xf32>
    %193 = arith.addf %190, %192 : vector<2x128xf32>
    %194 = vector.shape_cast %193 : vector<2x128xf32> to vector<2x1x128xf32>
    %c0_107 = arith.constant 0 : index
    %c1 = arith.constant 1 : index
    %c0_108 = arith.constant 0 : index
    %195 = vector.load %arg23[%c0_107, %c1, %c0_108] : memref<2x5x128xf32, #tpu.memory_space<vmem>>, vector<2x1x128xf32>
    tpu.vector_store %arg23[%c0_107, %c1, %c0_108], %194 {strides = array<i32>} : memref<2x5x128xf32, #tpu.memory_space<vmem>>, vector<2x1x128xf32>,
    %196 = vector.shape_cast %135 : vector<2x8xf32> to vector<2x1x8xf32>
    %c0_109 = arith.constant 0 : index
    %c1_110 = arith.constant 1 : index
    %c0_111 = arith.constant 0 : index
    %197 = vector.load %arg24[%c0_109, %c1_110, %c0_111] : memref<2x5x8xf32, #tpu.memory_space<vmem>>, vector<2x1x8xf32>
    tpu.vector_store %arg24[%c0_109, %c1_110, %c0_111], %196 {strides = array<i32>} : memref<2x5x8xf32, #tpu.memory_space<vmem>>, vector<2x1x8xf32>,
    %c0_112 = arith.constant 0 : index
    %c0_113 = arith.constant 0 : index
    %198 = vector.load %arg10[%c0_112, %c0_113] : memref<32x32xf32, #tpu.memory_space<vmem>>, vector<32x32xf32>
    %cst_114 = arith.constant dense<0.000000e+00> : vector<2x32xf32>
    %199 = tpu.matmul %178, %198, %cst_114 {dimension_numbers = #tpu.dot_dimension_numbers<[1], [0], [0], [1], [0, 0, 1, 1], [], []>} : vector<2x32xf32>, vector<32x32xf32>, vector<2x32xf32> -> vector<2x32xf32>
    %200 = vector.shape_cast %199 : vector<2x32xf32> to vector<2x1x32xf32>
    %201 = vector.broadcast %200 : vector<2x1x32xf32> to vector<2x8x32xf32>
    %202 = arith.addf %12, %201 : vector<2x8x32xf32>
    %203 = math.tanh %202 : vector<2x8x32xf32>
    %204 = vector.shape_cast %25 : vector<1x32xf32> to vector<1x1x32xf32>
    %205 = vector.broadcast %204 : vector<1x1x32xf32> to vector<2x8x32xf32>
    %206 = arith.mulf %203, %205 : vector<2x8x32xf32>
    %cst_115 = arith.constant dense<0.000000e+00> : vector<2x8xf32>
    %207 = vector.multi_reduction <add>, %206, %cst_115 [2] : vector<2x8x32xf32> to vector<2x8xf32>
    %c0_116 = arith.constant 0 : index
    %c0_117 = arith.constant 0 : index
    %208 = vector.load %arg12[%c0_116, %c0_117] : memref<1x1xf32, #tpu.memory_space<vmem>>, vector<1x1xf32>
    %209 = vector.broadcast %208 : vector<1x1xf32> to vector<2x8xf32>
    %210 = arith.addf %207, %209 : vector<2x8xf32>
    %cst_118 = arith.constant -1.000000e+10 : f32
    %211 = vector.broadcast %cst_118 : f32 to vector<2x8xf32>
    %212 = arith.select %22, %210, %211 : vector<2x8xi1>, vector<2x8xf32>
    %cst_119 = arith.constant dense<0xFF800000> : vector<2xf32>
    %213 = vector.multi_reduction <maximumf>, %212, %cst_119 [1] : vector<2x8xf32> to vector<2xf32>
    %214 = vector.shape_cast %213 : vector<2xf32> to vector<2x1xf32>
    %215 = vector.broadcast %214 : vector<2x1xf32> to vector<2x8xf32>
    %216 = arith.subf %212, %215 : vector<2x8xf32>
    %217 = math.exp %216 : vector<2x8xf32>
    %cst_120 = arith.constant dense<0.000000e+00> : vector<2xf32>
    %218 = vector.multi_reduction <add>, %217, %cst_120 [1] : vector<2x8xf32> to vector<2xf32>
    %219 = vector.shape_cast %218 : vector<2xf32> to vector<2x1xf32>
    %220 = vector.broadcast %219 : vector<2x1xf32> to vector<2x8xf32>
    %221 = arith.divf %217, %220 : vector<2x8xf32>
    %222 = vector.shape_cast %221 : vector<2x8xf32> to vector<2x8x1xf32>
    %223 = vector.broadcast %222 : vector<2x8x1xf32> to vector<2x8x32xf32>
    %224 = arith.mulf %223, %0 : vector<2x8x32xf32>
    %cst_121 = arith.constant dense<0.000000e+00> : vector<2x32xf32>
    %225 = vector.multi_reduction <add>, %224, %cst_121 [1] : vector<2x8x32xf32> to vector<2x32xf32>
    %226 = vector.shape_cast %221 : vector<2x8xf32> to vector<2x8x1xf32>
    %227 = vector.broadcast %226 : vector<2x8x1xf32> to vector<2x8x32xf32>
    %228 = arith.mulf %227, %1 : vector<2x8x32xf32>
    %cst_122 = arith.constant dense<0.000000e+00> : vector<2x32xf32>
    %229 = vector.multi_reduction <add>, %228, %cst_122 [1] : vector<2x8x32xf32> to vector<2x32xf32>
    %230 = vector.extract_strided_slice %18 {offsets = [4, 0], sizes = [2, 128], strides = [1, 1]} : vector<10x128xf32> to vector<2x128xf32>
    %c0_123 = arith.constant 0 : index
    %c0_124 = arith.constant 0 : index
    %231 = vector.load %arg15[%c0_123, %c0_124] : memref<32x128xf32, #tpu.memory_space<vmem>>, vector<32x128xf32>
    %cst_125 = arith.constant dense<0.000000e+00> : vector<2x128xf32>
    %232 = tpu.matmul %225, %231, %cst_125 {dimension_numbers = #tpu.dot_dimension_numbers<[1], [0], [0], [1], [0, 0, 1, 1], [], []>} : vector<2x32xf32>, vector<32x128xf32>, vector<2x128xf32> -> vector<2x128xf32>
    %233 = arith.addf %230, %232 : vector<2x128xf32>
    %c0_126 = arith.constant 0 : index
    %c0_127 = arith.constant 0 : index
    %234 = vector.load %arg16[%c0_126, %c0_127] : memref<32x128xf32, #tpu.memory_space<vmem>>, vector<32x128xf32>
    %cst_128 = arith.constant dense<0.000000e+00> : vector<2x128xf32>
    %235 = tpu.matmul %229, %234, %cst_128 {dimension_numbers = #tpu.dot_dimension_numbers<[1], [0], [0], [1], [0, 0, 1, 1], [], []>} : vector<2x32xf32>, vector<32x128xf32>, vector<2x128xf32> -> vector<2x128xf32>
    %236 = arith.addf %233, %235 : vector<2x128xf32>
    %c0_129 = arith.constant 0 : index
    %c0_130 = arith.constant 0 : index
    %237 = vector.load %arg17[%c0_129, %c0_130] : memref<32x128xf32, #tpu.memory_space<vmem>>, vector<32x128xf32>
    %cst_131 = arith.constant dense<0.000000e+00> : vector<2x128xf32>
    %238 = tpu.matmul %178, %237, %cst_131 {dimension_numbers = #tpu.dot_dimension_numbers<[1], [0], [0], [1], [0, 0, 1, 1], [], []>} : vector<2x32xf32>, vector<32x128xf32>, vector<2x128xf32> -> vector<2x128xf32>
    %239 = arith.addf %236, %238 : vector<2x128xf32>
    %240 = vector.extract_strided_slice %239 {offsets = [0, 0], sizes = [2, 32], strides = [1, 1]} : vector<2x128xf32> to vector<2x32xf32>
    %241 = arith.negf %240 : vector<2x32xf32>
    %242 = math.exp %241 : vector<2x32xf32>
    %cst_132 = arith.constant 1.000000e+00 : f32
    %243 = vector.broadcast %cst_132 : f32 to vector<2x32xf32>
    %244 = arith.addf %243, %242 : vector<2x32xf32>
    %245 = arith.divf %243, %244 : vector<2x32xf32>
    %246 = vector.extract_strided_slice %239 {offsets = [0, 32], sizes = [2, 32], strides = [1, 1]} : vector<2x128xf32> to vector<2x32xf32>
    %247 = arith.negf %246 : vector<2x32xf32>
    %248 = math.exp %247 : vector<2x32xf32>
    %cst_133 = arith.constant 1.000000e+00 : f32
    %249 = vector.broadcast %cst_133 : f32 to vector<2x32xf32>
    %250 = arith.addf %249, %248 : vector<2x32xf32>
    %251 = arith.divf %249, %250 : vector<2x32xf32>
    %252 = vector.extract_strided_slice %239 {offsets = [0, 64], sizes = [2, 32], strides = [1, 1]} : vector<2x128xf32> to vector<2x32xf32>
    %253 = math.tanh %252 : vector<2x32xf32>
    %254 = vector.extract_strided_slice %239 {offsets = [0, 96], sizes = [2, 32], strides = [1, 1]} : vector<2x128xf32> to vector<2x32xf32>
    %255 = arith.negf %254 : vector<2x32xf32>
    %256 = math.exp %255 : vector<2x32xf32>
    %cst_134 = arith.constant 1.000000e+00 : f32
    %257 = vector.broadcast %cst_134 : f32 to vector<2x32xf32>
    %258 = arith.addf %257, %256 : vector<2x32xf32>
    %259 = arith.divf %257, %258 : vector<2x32xf32>
    %260 = arith.mulf %251, %176 : vector<2x32xf32>
    %261 = arith.mulf %245, %253 : vector<2x32xf32>
    %262 = arith.addf %260, %261 : vector<2x32xf32>
    %263 = math.tanh %262 : vector<2x32xf32>
    %264 = arith.mulf %259, %263 : vector<2x32xf32>
    %c0_135 = arith.constant 0 : index
    %c0_136 = arith.constant 0 : index
    %265 = vector.load %arg18[%c0_135, %c0_136] : memref<32x128xf32, #tpu.memory_space<vmem>>, vector<32x128xf32>
    %cst_137 = arith.constant dense<0.000000e+00> : vector<2x128xf32>
    %266 = tpu.matmul %264, %265, %cst_137 {dimension_numbers = #tpu.dot_dimension_numbers<[1], [0], [0], [1], [0, 0, 1, 1], [], []>} : vector<2x32xf32>, vector<32x128xf32>, vector<2x128xf32> -> vector<2x128xf32>
    %c0_138 = arith.constant 0 : index
    %c0_139 = arith.constant 0 : index
    %267 = vector.load %arg19[%c0_138, %c0_139] : memref<32x128xf32, #tpu.memory_space<vmem>>, vector<32x128xf32>
    %cst_140 = arith.constant dense<0.000000e+00> : vector<2x128xf32>
    %268 = tpu.matmul %225, %267, %cst_140 {dimension_numbers = #tpu.dot_dimension_numbers<[1], [0], [0], [1], [0, 0, 1, 1], [], []>} : vector<2x32xf32>, vector<32x128xf32>, vector<2x128xf32> -> vector<2x128xf32>
    %269 = arith.addf %266, %268 : vector<2x128xf32>
    %c0_141 = arith.constant 0 : index
    %c0_142 = arith.constant 0 : index
    %270 = vector.load %arg20[%c0_141, %c0_142] : memref<32x128xf32, #tpu.memory_space<vmem>>, vector<32x128xf32>
    %cst_143 = arith.constant dense<0.000000e+00> : vector<2x128xf32>
    %271 = tpu.matmul %229, %270, %cst_143 {dimension_numbers = #tpu.dot_dimension_numbers<[1], [0], [0], [1], [0, 0, 1, 1], [], []>} : vector<2x32xf32>, vector<32x128xf32>, vector<2x128xf32> -> vector<2x128xf32>
    %272 = arith.addf %269, %271 : vector<2x128xf32>
    %273 = vector.extract_strided_slice %13 {offsets = [4, 0], sizes = [2, 16], strides = [1, 1]} : vector<10x16xf32> to vector<2x16xf32>
    %c0_144 = arith.constant 0 : index
    %c0_145 = arith.constant 0 : index
    %274 = vector.load %arg21[%c0_144, %c0_145] : memref<16x128xf32, #tpu.memory_space<vmem>>, vector<16x128xf32>
    %cst_146 = arith.constant dense<0.000000e+00> : vector<2x128xf32>
    %275 = tpu.matmul %273, %274, %cst_146 {dimension_numbers = #tpu.dot_dimension_numbers<[1], [0], [0], [1], [0, 0, 1, 1], [], []>} : vector<2x16xf32>, vector<16x128xf32>, vector<2x128xf32> -> vector<2x128xf32>
    %276 = arith.addf %272, %275 : vector<2x128xf32>
    %c0_147 = arith.constant 0 : index
    %c0_148 = arith.constant 0 : index
    %277 = vector.load %arg22[%c0_147, %c0_148] : memref<1x128xf32, #tpu.memory_space<vmem>>, vector<1x128xf32>
    %278 = vector.broadcast %277 : vector<1x128xf32> to vector<2x128xf32>
    %279 = arith.addf %276, %278 : vector<2x128xf32>
    %280 = vector.shape_cast %279 : vector<2x128xf32> to vector<2x1x128xf32>
    %c0_149 = arith.constant 0 : index
    %c2 = arith.constant 2 : index
    %c0_150 = arith.constant 0 : index
    %281 = vector.load %arg23[%c0_149, %c2, %c0_150] : memref<2x5x128xf32, #tpu.memory_space<vmem>>, vector<2x1x128xf32>
    tpu.vector_store %arg23[%c0_149, %c2, %c0_150], %280 {strides = array<i32>} : memref<2x5x128xf32, #tpu.memory_space<vmem>>, vector<2x1x128xf32>,
    %282 = vector.shape_cast %221 : vector<2x8xf32> to vector<2x1x8xf32>
    %c0_151 = arith.constant 0 : index
    %c2_152 = arith.constant 2 : index
    %c0_153 = arith.constant 0 : index
    %283 = vector.load %arg24[%c0_151, %c2_152, %c0_153] : memref<2x5x8xf32, #tpu.memory_space<vmem>>, vector<2x1x8xf32>
    tpu.vector_store %arg24[%c0_151, %c2_152, %c0_153], %282 {strides = array<i32>} : memref<2x5x8xf32, #tpu.memory_space<vmem>>, vector<2x1x8xf32>,
    %c0_154 = arith.constant 0 : index
    %c0_155 = arith.constant 0 : index
    %284 = vector.load %arg10[%c0_154, %c0_155] : memref<32x32xf32, #tpu.memory_space<vmem>>, vector<32x32xf32>
    %cst_156 = arith.constant dense<0.000000e+00> : vector<2x32xf32>
    %285 = tpu.matmul %264, %284, %cst_156 {dimension_numbers = #tpu.dot_dimension_numbers<[1], [0], [0], [1], [0, 0, 1, 1], [], []>} : vector<2x32xf32>, vector<32x32xf32>, vector<2x32xf32> -> vector<2x32xf32>
    %286 = vector.shape_cast %285 : vector<2x32xf32> to vector<2x1x32xf32>
    %287 = vector.broadcast %286 : vector<2x1x32xf32> to vector<2x8x32xf32>
    %288 = arith.addf %12, %287 : vector<2x8x32xf32>
    %289 = math.tanh %288 : vector<2x8x32xf32>
    %290 = vector.shape_cast %25 : vector<1x32xf32> to vector<1x1x32xf32>
    %291 = vector.broadcast %290 : vector<1x1x32xf32> to vector<2x8x32xf32>
    %292 = arith.mulf %289, %291 : vector<2x8x32xf32>
    %cst_157 = arith.constant dense<0.000000e+00> : vector<2x8xf32>
    %293 = vector.multi_reduction <add>, %292, %cst_157 [2] : vector<2x8x32xf32> to vector<2x8xf32>
    %c0_158 = arith.constant 0 : index
    %c0_159 = arith.constant 0 : index
    %294 = vector.load %arg12[%c0_158, %c0_159] : memref<1x1xf32, #tpu.memory_space<vmem>>, vector<1x1xf32>
    %295 = vector.broadcast %294 : vector<1x1xf32> to vector<2x8xf32>
    %296 = arith.addf %293, %295 : vector<2x8xf32>
    %cst_160 = arith.constant -1.000000e+10 : f32
    %297 = vector.broadcast %cst_160 : f32 to vector<2x8xf32>
    %298 = arith.select %22, %296, %297 : vector<2x8xi1>, vector<2x8xf32>
    %cst_161 = arith.constant dense<0xFF800000> : vector<2xf32>
    %299 = vector.multi_reduction <maximumf>, %298, %cst_161 [1] : vector<2x8xf32> to vector<2xf32>
    %300 = vector.shape_cast %299 : vector<2xf32> to vector<2x1xf32>
    %301 = vector.broadcast %300 : vector<2x1xf32> to vector<2x8xf32>
    %302 = arith.subf %298, %301 : vector<2x8xf32>
    %303 = math.exp %302 : vector<2x8xf32>
    %cst_162 = arith.constant dense<0.000000e+00> : vector<2xf32>
    %304 = vector.multi_reduction <add>, %303, %cst_162 [1] : vector<2x8xf32> to vector<2xf32>
    %305 = vector.shape_cast %304 : vector<2xf32> to vector<2x1xf32>
    %306 = vector.broadcast %305 : vector<2x1xf32> to vector<2x8xf32>
    %307 = arith.divf %303, %306 : vector<2x8xf32>
    %308 = vector.shape_cast %307 : vector<2x8xf32> to vector<2x8x1xf32>
    %309 = vector.broadcast %308 : vector<2x8x1xf32> to vector<2x8x32xf32>
    %310 = arith.mulf %309, %0 : vector<2x8x32xf32>
    %cst_163 = arith.constant dense<0.000000e+00> : vector<2x32xf32>
    %311 = vector.multi_reduction <add>, %310, %cst_163 [1] : vector<2x8x32xf32> to vector<2x32xf32>
    %312 = vector.shape_cast %307 : vector<2x8xf32> to vector<2x8x1xf32>
    %313 = vector.broadcast %312 : vector<2x8x1xf32> to vector<2x8x32xf32>
    %314 = arith.mulf %313, %1 : vector<2x8x32xf32>
    %cst_164 = arith.constant dense<0.000000e+00> : vector<2x32xf32>
    %315 = vector.multi_reduction <add>, %314, %cst_164 [1] : vector<2x8x32xf32> to vector<2x32xf32>
    %316 = vector.extract_strided_slice %18 {offsets = [6, 0], sizes = [2, 128], strides = [1, 1]} : vector<10x128xf32> to vector<2x128xf32>
    %c0_165 = arith.constant 0 : index
    %c0_166 = arith.constant 0 : index
    %317 = vector.load %arg15[%c0_165, %c0_166] : memref<32x128xf32, #tpu.memory_space<vmem>>, vector<32x128xf32>
    %cst_167 = arith.constant dense<0.000000e+00> : vector<2x128xf32>
    %318 = tpu.matmul %311, %317, %cst_167 {dimension_numbers = #tpu.dot_dimension_numbers<[1], [0], [0], [1], [0, 0, 1, 1], [], []>} : vector<2x32xf32>, vector<32x128xf32>, vector<2x128xf32> -> vector<2x128xf32>
    %319 = arith.addf %316, %318 : vector<2x128xf32>
    %c0_168 = arith.constant 0 : index
    %c0_169 = arith.constant 0 : index
    %320 = vector.load %arg16[%c0_168, %c0_169] : memref<32x128xf32, #tpu.memory_space<vmem>>, vector<32x128xf32>
    %cst_170 = arith.constant dense<0.000000e+00> : vector<2x128xf32>
    %321 = tpu.matmul %315, %320, %cst_170 {dimension_numbers = #tpu.dot_dimension_numbers<[1], [0], [0], [1], [0, 0, 1, 1], [], []>} : vector<2x32xf32>, vector<32x128xf32>, vector<2x128xf32> -> vector<2x128xf32>
    %322 = arith.addf %319, %321 : vector<2x128xf32>
    %c0_171 = arith.constant 0 : index
    %c0_172 = arith.constant 0 : index
    %323 = vector.load %arg17[%c0_171, %c0_172] : memref<32x128xf32, #tpu.memory_space<vmem>>, vector<32x128xf32>
    %cst_173 = arith.constant dense<0.000000e+00> : vector<2x128xf32>
    %324 = tpu.matmul %264, %323, %cst_173 {dimension_numbers = #tpu.dot_dimension_numbers<[1], [0], [0], [1], [0, 0, 1, 1], [], []>} : vector<2x32xf32>, vector<32x128xf32>, vector<2x128xf32> -> vector<2x128xf32>
    %325 = arith.addf %322, %324 : vector<2x128xf32>
    %326 = vector.extract_strided_slice %325 {offsets = [0, 0], sizes = [2, 32], strides = [1, 1]} : vector<2x128xf32> to vector<2x32xf32>
    %327 = arith.negf %326 : vector<2x32xf32>
    %328 = math.exp %327 : vector<2x32xf32>
    %cst_174 = arith.constant 1.000000e+00 : f32
    %329 = vector.broadcast %cst_174 : f32 to vector<2x32xf32>
    %330 = arith.addf %329, %328 : vector<2x32xf32>
    %331 = arith.divf %329, %330 : vector<2x32xf32>
    %332 = vector.extract_strided_slice %325 {offsets = [0, 32], sizes = [2, 32], strides = [1, 1]} : vector<2x128xf32> to vector<2x32xf32>
    %333 = arith.negf %332 : vector<2x32xf32>
    %334 = math.exp %333 : vector<2x32xf32>
    %cst_175 = arith.constant 1.000000e+00 : f32
    %335 = vector.broadcast %cst_175 : f32 to vector<2x32xf32>
    %336 = arith.addf %335, %334 : vector<2x32xf32>
    %337 = arith.divf %335, %336 : vector<2x32xf32>
    %338 = vector.extract_strided_slice %325 {offsets = [0, 64], sizes = [2, 32], strides = [1, 1]} : vector<2x128xf32> to vector<2x32xf32>
    %339 = math.tanh %338 : vector<2x32xf32>
    %340 = vector.extract_strided_slice %325 {offsets = [0, 96], sizes = [2, 32], strides = [1, 1]} : vector<2x128xf32> to vector<2x32xf32>
    %341 = arith.negf %340 : vector<2x32xf32>
    %342 = math.exp %341 : vector<2x32xf32>
    %cst_176 = arith.constant 1.000000e+00 : f32
    %343 = vector.broadcast %cst_176 : f32 to vector<2x32xf32>
    %344 = arith.addf %343, %342 : vector<2x32xf32>
    %345 = arith.divf %343, %344 : vector<2x32xf32>
    %346 = arith.mulf %337, %262 : vector<2x32xf32>
    %347 = arith.mulf %331, %339 : vector<2x32xf32>
    %348 = arith.addf %346, %347 : vector<2x32xf32>
    %349 = math.tanh %348 : vector<2x32xf32>
    %350 = arith.mulf %345, %349 : vector<2x32xf32>
    %c0_177 = arith.constant 0 : index
    %c0_178 = arith.constant 0 : index
    %351 = vector.load %arg18[%c0_177, %c0_178] : memref<32x128xf32, #tpu.memory_space<vmem>>, vector<32x128xf32>
    %cst_179 = arith.constant dense<0.000000e+00> : vector<2x128xf32>
    %352 = tpu.matmul %350, %351, %cst_179 {dimension_numbers = #tpu.dot_dimension_numbers<[1], [0], [0], [1], [0, 0, 1, 1], [], []>} : vector<2x32xf32>, vector<32x128xf32>, vector<2x128xf32> -> vector<2x128xf32>
    %c0_180 = arith.constant 0 : index
    %c0_181 = arith.constant 0 : index
    %353 = vector.load %arg19[%c0_180, %c0_181] : memref<32x128xf32, #tpu.memory_space<vmem>>, vector<32x128xf32>
    %cst_182 = arith.constant dense<0.000000e+00> : vector<2x128xf32>
    %354 = tpu.matmul %311, %353, %cst_182 {dimension_numbers = #tpu.dot_dimension_numbers<[1], [0], [0], [1], [0, 0, 1, 1], [], []>} : vector<2x32xf32>, vector<32x128xf32>, vector<2x128xf32> -> vector<2x128xf32>
    %355 = arith.addf %352, %354 : vector<2x128xf32>
    %c0_183 = arith.constant 0 : index
    %c0_184 = arith.constant 0 : index
    %356 = vector.load %arg20[%c0_183, %c0_184] : memref<32x128xf32, #tpu.memory_space<vmem>>, vector<32x128xf32>
    %cst_185 = arith.constant dense<0.000000e+00> : vector<2x128xf32>
    %357 = tpu.matmul %315, %356, %cst_185 {dimension_numbers = #tpu.dot_dimension_numbers<[1], [0], [0], [1], [0, 0, 1, 1], [], []>} : vector<2x32xf32>, vector<32x128xf32>, vector<2x128xf32> -> vector<2x128xf32>
    %358 = arith.addf %355, %357 : vector<2x128xf32>
    %359 = vector.extract_strided_slice %13 {offsets = [6, 0], sizes = [2, 16], strides = [1, 1]} : vector<10x16xf32> to vector<2x16xf32>
    %c0_186 = arith.constant 0 : index
    %c0_187 = arith.constant 0 : index
    %360 = vector.load %arg21[%c0_186, %c0_187] : memref<16x128xf32, #tpu.memory_space<vmem>>, vector<16x128xf32>
    %cst_188 = arith.constant dense<0.000000e+00> : vector<2x128xf32>
    %361 = tpu.matmul %359, %360, %cst_188 {dimension_numbers = #tpu.dot_dimension_numbers<[1], [0], [0], [1], [0, 0, 1, 1], [], []>} : vector<2x16xf32>, vector<16x128xf32>, vector<2x128xf32> -> vector<2x128xf32>
    %362 = arith.addf %358, %361 : vector<2x128xf32>
    %c0_189 = arith.constant 0 : index
    %c0_190 = arith.constant 0 : index
    %363 = vector.load %arg22[%c0_189, %c0_190] : memref<1x128xf32, #tpu.memory_space<vmem>>, vector<1x128xf32>
    %364 = vector.broadcast %363 : vector<1x128xf32> to vector<2x128xf32>
    %365 = arith.addf %362, %364 : vector<2x128xf32>
    %366 = vector.shape_cast %365 : vector<2x128xf32> to vector<2x1x128xf32>
    %c0_191 = arith.constant 0 : index
    %c3 = arith.constant 3 : index
    %c0_192 = arith.constant 0 : index
    %367 = vector.load %arg23[%c0_191, %c3, %c0_192] : memref<2x5x128xf32, #tpu.memory_space<vmem>>, vector<2x1x128xf32>
    tpu.vector_store %arg23[%c0_191, %c3, %c0_192], %366 {strides = array<i32>} : memref<2x5x128xf32, #tpu.memory_space<vmem>>, vector<2x1x128xf32>,
    %368 = vector.shape_cast %307 : vector<2x8xf32> to vector<2x1x8xf32>
    %c0_193 = arith.constant 0 : index
    %c3_194 = arith.constant 3 : index
    %c0_195 = arith.constant 0 : index
    %369 = vector.load %arg24[%c0_193, %c3_194, %c0_195] : memref<2x5x8xf32, #tpu.memory_space<vmem>>, vector<2x1x8xf32>
    tpu.vector_store %arg24[%c0_193, %c3_194, %c0_195], %368 {strides = array<i32>} : memref<2x5x8xf32, #tpu.memory_space<vmem>>, vector<2x1x8xf32>,
    %c0_196 = arith.constant 0 : index
    %c0_197 = arith.constant 0 : index
    %370 = vector.load %arg10[%c0_196, %c0_197] : memref<32x32xf32, #tpu.memory_space<vmem>>, vector<32x32xf32>
    %cst_198 = arith.constant dense<0.000000e+00> : vector<2x32xf32>
    %371 = tpu.matmul %350, %370, %cst_198 {dimension_numbers = #tpu.dot_dimension_numbers<[1], [0], [0], [1], [0, 0, 1, 1], [], []>} : vector<2x32xf32>, vector<32x32xf32>, vector<2x32xf32> -> vector<2x32xf32>
    %372 = vector.shape_cast %371 : vector<2x32xf32> to vector<2x1x32xf32>
    %373 = vector.broadcast %372 : vector<2x1x32xf32> to vector<2x8x32xf32>
    %374 = arith.addf %12, %373 : vector<2x8x32xf32>
    %375 = math.tanh %374 : vector<2x8x32xf32>
    %376 = vector.shape_cast %25 : vector<1x32xf32> to vector<1x1x32xf32>
    %377 = vector.broadcast %376 : vector<1x1x32xf32> to vector<2x8x32xf32>
    %378 = arith.mulf %375, %377 : vector<2x8x32xf32>
    %cst_199 = arith.constant dense<0.000000e+00> : vector<2x8xf32>
    %379 = vector.multi_reduction <add>, %378, %cst_199 [2] : vector<2x8x32xf32> to vector<2x8xf32>
    %c0_200 = arith.constant 0 : index
    %c0_201 = arith.constant 0 : index
    %380 = vector.load %arg12[%c0_200, %c0_201] : memref<1x1xf32, #tpu.memory_space<vmem>>, vector<1x1xf32>
    %381 = vector.broadcast %380 : vector<1x1xf32> to vector<2x8xf32>
    %382 = arith.addf %379, %381 : vector<2x8xf32>
    %cst_202 = arith.constant -1.000000e+10 : f32
    %383 = vector.broadcast %cst_202 : f32 to vector<2x8xf32>
    %384 = arith.select %22, %382, %383 : vector<2x8xi1>, vector<2x8xf32>
    %cst_203 = arith.constant dense<0xFF800000> : vector<2xf32>
    %385 = vector.multi_reduction <maximumf>, %384, %cst_203 [1] : vector<2x8xf32> to vector<2xf32>
    %386 = vector.shape_cast %385 : vector<2xf32> to vector<2x1xf32>
    %387 = vector.broadcast %386 : vector<2x1xf32> to vector<2x8xf32>
    %388 = arith.subf %384, %387 : vector<2x8xf32>
    %389 = math.exp %388 : vector<2x8xf32>
    %cst_204 = arith.constant dense<0.000000e+00> : vector<2xf32>
    %390 = vector.multi_reduction <add>, %389, %cst_204 [1] : vector<2x8xf32> to vector<2xf32>
    %391 = vector.shape_cast %390 : vector<2xf32> to vector<2x1xf32>
    %392 = vector.broadcast %391 : vector<2x1xf32> to vector<2x8xf32>
    %393 = arith.divf %389, %392 : vector<2x8xf32>
    %394 = vector.shape_cast %393 : vector<2x8xf32> to vector<2x8x1xf32>
    %395 = vector.broadcast %394 : vector<2x8x1xf32> to vector<2x8x32xf32>
    %396 = arith.mulf %395, %0 : vector<2x8x32xf32>
    %cst_205 = arith.constant dense<0.000000e+00> : vector<2x32xf32>
    %397 = vector.multi_reduction <add>, %396, %cst_205 [1] : vector<2x8x32xf32> to vector<2x32xf32>
    %398 = vector.shape_cast %393 : vector<2x8xf32> to vector<2x8x1xf32>
    %399 = vector.broadcast %398 : vector<2x8x1xf32> to vector<2x8x32xf32>
    %400 = arith.mulf %399, %1 : vector<2x8x32xf32>
    %cst_206 = arith.constant dense<0.000000e+00> : vector<2x32xf32>
    %401 = vector.multi_reduction <add>, %400, %cst_206 [1] : vector<2x8x32xf32> to vector<2x32xf32>
    %402 = vector.extract_strided_slice %18 {offsets = [8, 0], sizes = [2, 128], strides = [1, 1]} : vector<10x128xf32> to vector<2x128xf32>
    %c0_207 = arith.constant 0 : index
    %c0_208 = arith.constant 0 : index
    %403 = vector.load %arg15[%c0_207, %c0_208] : memref<32x128xf32, #tpu.memory_space<vmem>>, vector<32x128xf32>
    %cst_209 = arith.constant dense<0.000000e+00> : vector<2x128xf32>
    %404 = tpu.matmul %397, %403, %cst_209 {dimension_numbers = #tpu.dot_dimension_numbers<[1], [0], [0], [1], [0, 0, 1, 1], [], []>} : vector<2x32xf32>, vector<32x128xf32>, vector<2x128xf32> -> vector<2x128xf32>
    %405 = arith.addf %402, %404 : vector<2x128xf32>
    %c0_210 = arith.constant 0 : index
    %c0_211 = arith.constant 0 : index
    %406 = vector.load %arg16[%c0_210, %c0_211] : memref<32x128xf32, #tpu.memory_space<vmem>>, vector<32x128xf32>
    %cst_212 = arith.constant dense<0.000000e+00> : vector<2x128xf32>
    %407 = tpu.matmul %401, %406, %cst_212 {dimension_numbers = #tpu.dot_dimension_numbers<[1], [0], [0], [1], [0, 0, 1, 1], [], []>} : vector<2x32xf32>, vector<32x128xf32>, vector<2x128xf32> -> vector<2x128xf32>
    %408 = arith.addf %405, %407 : vector<2x128xf32>
    %c0_213 = arith.constant 0 : index
    %c0_214 = arith.constant 0 : index
    %409 = vector.load %arg17[%c0_213, %c0_214] : memref<32x128xf32, #tpu.memory_space<vmem>>, vector<32x128xf32>
    %cst_215 = arith.constant dense<0.000000e+00> : vector<2x128xf32>
    %410 = tpu.matmul %350, %409, %cst_215 {dimension_numbers = #tpu.dot_dimension_numbers<[1], [0], [0], [1], [0, 0, 1, 1], [], []>} : vector<2x32xf32>, vector<32x128xf32>, vector<2x128xf32> -> vector<2x128xf32>
    %411 = arith.addf %408, %410 : vector<2x128xf32>
    %412 = vector.extract_strided_slice %411 {offsets = [0, 0], sizes = [2, 32], strides = [1, 1]} : vector<2x128xf32> to vector<2x32xf32>
    %413 = arith.negf %412 : vector<2x32xf32>
    %414 = math.exp %413 : vector<2x32xf32>
    %cst_216 = arith.constant 1.000000e+00 : f32
    %415 = vector.broadcast %cst_216 : f32 to vector<2x32xf32>
    %416 = arith.addf %415, %414 : vector<2x32xf32>
    %417 = arith.divf %415, %416 : vector<2x32xf32>
    %418 = vector.extract_strided_slice %411 {offsets = [0, 32], sizes = [2, 32], strides = [1, 1]} : vector<2x128xf32> to vector<2x32xf32>
    %419 = arith.negf %418 : vector<2x32xf32>
    %420 = math.exp %419 : vector<2x32xf32>
    %cst_217 = arith.constant 1.000000e+00 : f32
    %421 = vector.broadcast %cst_217 : f32 to vector<2x32xf32>
    %422 = arith.addf %421, %420 : vector<2x32xf32>
    %423 = arith.divf %421, %422 : vector<2x32xf32>
    %424 = vector.extract_strided_slice %411 {offsets = [0, 64], sizes = [2, 32], strides = [1, 1]} : vector<2x128xf32> to vector<2x32xf32>
    %425 = math.tanh %424 : vector<2x32xf32>
    %426 = vector.extract_strided_slice %411 {offsets = [0, 96], sizes = [2, 32], strides = [1, 1]} : vector<2x128xf32> to vector<2x32xf32>
    %427 = arith.negf %426 : vector<2x32xf32>
    %428 = math.exp %427 : vector<2x32xf32>
    %cst_218 = arith.constant 1.000000e+00 : f32
    %429 = vector.broadcast %cst_218 : f32 to vector<2x32xf32>
    %430 = arith.addf %429, %428 : vector<2x32xf32>
    %431 = arith.divf %429, %430 : vector<2x32xf32>
    %432 = arith.mulf %423, %348 : vector<2x32xf32>
    %433 = arith.mulf %417, %425 : vector<2x32xf32>
    %434 = arith.addf %432, %433 : vector<2x32xf32>
    %435 = math.tanh %434 : vector<2x32xf32>
    %436 = arith.mulf %431, %435 : vector<2x32xf32>
    %c0_219 = arith.constant 0 : index
    %c0_220 = arith.constant 0 : index
    %437 = vector.load %arg18[%c0_219, %c0_220] : memref<32x128xf32, #tpu.memory_space<vmem>>, vector<32x128xf32>
    %cst_221 = arith.constant dense<0.000000e+00> : vector<2x128xf32>
    %438 = tpu.matmul %436, %437, %cst_221 {dimension_numbers = #tpu.dot_dimension_numbers<[1], [0], [0], [1], [0, 0, 1, 1], [], []>} : vector<2x32xf32>, vector<32x128xf32>, vector<2x128xf32> -> vector<2x128xf32>
    %c0_222 = arith.constant 0 : index
    %c0_223 = arith.constant 0 : index
    %439 = vector.load %arg19[%c0_222, %c0_223] : memref<32x128xf32, #tpu.memory_space<vmem>>, vector<32x128xf32>
    %cst_224 = arith.constant dense<0.000000e+00> : vector<2x128xf32>
    %440 = tpu.matmul %397, %439, %cst_224 {dimension_numbers = #tpu.dot_dimension_numbers<[1], [0], [0], [1], [0, 0, 1, 1], [], []>} : vector<2x32xf32>, vector<32x128xf32>, vector<2x128xf32> -> vector<2x128xf32>
    %441 = arith.addf %438, %440 : vector<2x128xf32>
    %c0_225 = arith.constant 0 : index
    %c0_226 = arith.constant 0 : index
    %442 = vector.load %arg20[%c0_225, %c0_226] : memref<32x128xf32, #tpu.memory_space<vmem>>, vector<32x128xf32>
    %cst_227 = arith.constant dense<0.000000e+00> : vector<2x128xf32>
    %443 = tpu.matmul %401, %442, %cst_227 {dimension_numbers = #tpu.dot_dimension_numbers<[1], [0], [0], [1], [0, 0, 1, 1], [], []>} : vector<2x32xf32>, vector<32x128xf32>, vector<2x128xf32> -> vector<2x128xf32>
    %444 = arith.addf %441, %443 : vector<2x128xf32>
    %445 = vector.extract_strided_slice %13 {offsets = [8, 0], sizes = [2, 16], strides = [1, 1]} : vector<10x16xf32> to vector<2x16xf32>
    %c0_228 = arith.constant 0 : index
    %c0_229 = arith.constant 0 : index
    %446 = vector.load %arg21[%c0_228, %c0_229] : memref<16x128xf32, #tpu.memory_space<vmem>>, vector<16x128xf32>
    %cst_230 = arith.constant dense<0.000000e+00> : vector<2x128xf32>
    %447 = tpu.matmul %445, %446, %cst_230 {dimension_numbers = #tpu.dot_dimension_numbers<[1], [0], [0], [1], [0, 0, 1, 1], [], []>} : vector<2x16xf32>, vector<16x128xf32>, vector<2x128xf32> -> vector<2x128xf32>
    %448 = arith.addf %444, %447 : vector<2x128xf32>
    %c0_231 = arith.constant 0 : index
    %c0_232 = arith.constant 0 : index
    %449 = vector.load %arg22[%c0_231, %c0_232] : memref<1x128xf32, #tpu.memory_space<vmem>>, vector<1x128xf32>
    %450 = vector.broadcast %449 : vector<1x128xf32> to vector<2x128xf32>
    %451 = arith.addf %448, %450 : vector<2x128xf32>
    %452 = vector.shape_cast %451 : vector<2x128xf32> to vector<2x1x128xf32>
    %c0_233 = arith.constant 0 : index
    %c4 = arith.constant 4 : index
    %c0_234 = arith.constant 0 : index
    %453 = vector.load %arg23[%c0_233, %c4, %c0_234] : memref<2x5x128xf32, #tpu.memory_space<vmem>>, vector<2x1x128xf32>
    tpu.vector_store %arg23[%c0_233, %c4, %c0_234], %452 {strides = array<i32>} : memref<2x5x128xf32, #tpu.memory_space<vmem>>, vector<2x1x128xf32>,
    %454 = vector.shape_cast %393 : vector<2x8xf32> to vector<2x1x8xf32>
    %c0_235 = arith.constant 0 : index
    %c4_236 = arith.constant 4 : index
    %c0_237 = arith.constant 0 : index
    %455 = vector.load %arg24[%c0_235, %c4_236, %c0_237] : memref<2x5x8xf32, #tpu.memory_space<vmem>>, vector<2x1x8xf32>
    tpu.vector_store %arg24[%c0_235, %c4_236, %c0_237], %454 {strides = array<i32>} : memref<2x5x8xf32, #tpu.memory_space<vmem>>, vector<2x1x8xf32>,
    return
  }
  func.func @transform_0(%arg0: i32) -> (i32, i32) {
    %c0_i32 = arith.constant 0 : i32
    %c0_i32_0 = arith.constant 0 : i32
    %c0_i32_1 = arith.constant 0 : i32
    return %c0_i32, %c0_i32_0 : i32, i32
  }
  func.func @transform_1(%arg0: i32) -> (i32, i32) {
    %c0_i32 = arith.constant 0 : i32
    %c0_i32_0 = arith.constant 0 : i32
    %c0_i32_1 = arith.constant 0 : i32
    return %c0_i32, %c0_i32_0 : i32, i32
  }
  func.func @transform_2(%arg0: i32) -> (i32, i32) {
    %c0_i32 = arith.constant 0 : i32
    %c0_i32_0 = arith.constant 0 : i32
    %c0_i32_1 = arith.constant 0 : i32
    return %c0_i32, %c0_i32_0 : i32, i32
  }
  func.func @transform_3(%arg0: i32) -> (i32, i32, i32) {
    %c0_i32 = arith.constant 0 : i32
    %c0_i32_0 = arith.constant 0 : i32
    %c0_i32_1 = arith.constant 0 : i32
    %c0_i32_2 = arith.constant 0 : i32
    return %c0_i32, %c0_i32_0, %c0_i32_1 : i32, i32, i32
  }
  func.func @transform_4(%arg0: i32) -> (i32, i32, i32) {
    %c0_i32 = arith.constant 0 : i32
    %c0_i32_0 = arith.constant 0 : i32
    %c0_i32_1 = arith.constant 0 : i32
    %c0_i32_2 = arith.constant 0 : i32
    return %c0_i32, %c0_i32_0, %c0_i32_1 : i32, i32, i32
  }
  func.func @transform_5(%arg0: i32) -> (i32, i32) {
    %c0_i32 = arith.constant 0 : i32
    %c0_i32_0 = arith.constant 0 : i32
    %c0_i32_1 = arith.constant 0 : i32
    return %c0_i32, %c0_i32_0 : i32, i32
  }
  func.func @transform_6(%arg0: i32) -> (i32, i32) {
    %c0_i32 = arith.constant 0 : i32
    %c0_i32_0 = arith.constant 0 : i32
    %c0_i32_1 = arith.constant 0 : i32
    return %c0_i32, %c0_i32_0 : i32, i32
  }
  func.func @transform_7(%arg0: i32) -> (i32, i32) {
    %c0_i32 = arith.constant 0 : i32
    %c0_i32_0 = arith.constant 0 : i32
    %c0_i32_1 = arith.constant 0 : i32
    return %c0_i32, %c0_i32_0 : i32, i32
  }
  func.func @transform_8(%arg0: i32) -> (i32, i32) {
    %c0_i32 = arith.constant 0 : i32
    %c0_i32_0 = arith.constant 0 : i32
    %c0_i32_1 = arith.constant 0 : i32
    return %c0_i32, %c0_i32_0 : i32, i32
  }
  func.func @transform_9(%arg0: i32) -> (i32, i32) {
    %c0_i32 = arith.constant 0 : i32
    %c0_i32_0 = arith.constant 0 : i32
    %c0_i32_1 = arith.constant 0 : i32
    return %c0_i32, %c0_i32_0 : i32, i32
  }
  func.func @transform_10(%arg0: i32) -> (i32, i32) {
    %c0_i32 = arith.constant 0 : i32
    %c0_i32_0 = arith.constant 0 : i32
    %c0_i32_1 = arith.constant 0 : i32
    return %c0_i32, %c0_i32_0 : i32, i32
  }
  func.func @transform_11(%arg0: i32) -> (i32, i32) {
    %c0_i32 = arith.constant 0 : i32
    %c0_i32_0 = arith.constant 0 : i32
    %c0_i32_1 = arith.constant 0 : i32
    return %c0_i32, %c0_i32_0 : i32, i32
  }
  func.func @transform_12(%arg0: i32) -> (i32, i32) {
    %c0_i32 = arith.constant 0 : i32
    %c0_i32_0 = arith.constant 0 : i32
    %c0_i32_1 = arith.constant 0 : i32
    return %c0_i32, %c0_i32_0 : i32, i32
  }
  func.func @transform_13(%arg0: i32) -> (i32, i32) {
    %c0_i32 = arith.constant 0 : i32
    %c0_i32_0 = arith.constant 0 : i32
    %c0_i32_1 = arith.constant 0 : i32
    return %c0_i32, %c0_i32_0 : i32, i32
  }
  func.func @transform_14(%arg0: i32) -> (i32, i32) {
    %c0_i32 = arith.constant 0 : i32
    %c0_i32_0 = arith.constant 0 : i32
    %c0_i32_1 = arith.constant 0 : i32
    return %c0_i32, %c0_i32_0 : i32, i32
  }
  func.func @transform_15(%arg0: i32) -> (i32, i32) {
    %c0_i32 = arith.constant 0 : i32
    %c0_i32_0 = arith.constant 0 : i32
    %c0_i32_1 = arith.constant 0 : i32
    return %c0_i32, %c0_i32_0 : i32, i32
  }
  func.func @transform_16(%arg0: i32) -> (i32, i32) {
    %c0_i32 = arith.constant 0 : i32
    %c0_i32_0 = arith.constant 0 : i32
    %c0_i32_1 = arith.constant 0 : i32
    return %c0_i32, %c0_i32_0 : i32, i32
  }
  func.func @transform_17(%arg0: i32) -> (i32, i32) {
    %c0_i32 = arith.constant 0 : i32
    %c0_i32_0 = arith.constant 0 : i32
    %c0_i32_1 = arith.constant 0 : i32
    return %c0_i32, %c0_i32_0 : i32, i32
  }
  func.func @transform_18(%arg0: i32) -> (i32, i32) {
    %c0_i32 = arith.constant 0 : i32
    %c0_i32_0 = arith.constant 0 : i32
    %c0_i32_1 = arith.constant 0 : i32
    return %c0_i32, %c0_i32_0 : i32, i32
  }
  func.func @transform_19(%arg0: i32) -> (i32, i32) {
    %c0_i32 = arith.constant 0 : i32
    %c0_i32_0 = arith.constant 0 : i32
    %c0_i32_1 = arith.constant 0 : i32
    return %c0_i32, %c0_i32_0 : i32, i32
  }
  func.func @transform_20(%arg0: i32) -> (i32, i32) {
    %c0_i32 = arith.constant 0 : i32
    %c0_i32_0 = arith.constant 0 : i32
    %c0_i32_1 = arith.constant 0 : i32
    return %c0_i32, %c0_i32_0 : i32, i32
  }
  func.func @transform_21(%arg0: i32) -> (i32, i32) {
    %c0_i32 = arith.constant 0 : i32
    %c0_i32_0 = arith.constant 0 : i32
    %c0_i32_1 = arith.constant 0 : i32
    return %c0_i32, %c0_i32_0 : i32, i32
  }
  func.func @transform_22(%arg0: i32) -> (i32, i32, i32) {
    %c0_i32 = arith.constant 0 : i32
    %c0_i32_0 = arith.constant 0 : i32
    %c0_i32_1 = arith.constant 0 : i32
    %c0_i32_2 = arith.constant 0 : i32
    return %c0_i32, %c0_i32_0, %c0_i32_1 : i32, i32, i32
  }
  func.func @transform_23(%arg0: i32) -> (i32, i32, i32) {
    %c0_i32 = arith.constant 0 : i32
    %c0_i32_0 = arith.constant 0 : i32
    %c0_i32_1 = arith.constant 0 : i32
    %c0_i32_2 = arith.constant 0 : i32
    return %c0_i32, %c0_i32_0, %c0_i32_1 : i32, i32, i32
  }
}

module attributes {stable_mosaic.version = 11 : i64} {
  func.func @_encoder_kernel(%arg0: i32, %arg1: memref<16x16xf32, #tpu.memory_space<vmem>>, %arg2: memref<2x1xi32, #tpu.memory_space<vmem>>, %arg3: memref<16x256xf32, #tpu.memory_space<vmem>>, %arg4: memref<1x256xf32, #tpu.memory_space<vmem>>, %arg5: memref<32x128xf32, #tpu.memory_space<vmem>>, %arg6: memref<32x128xf32, #tpu.memory_space<vmem>>, %arg7: memref<32x32xf32, #tpu.memory_space<vmem>>, %arg8: memref<32x32xf32, #tpu.memory_space<vmem>>, %arg9: memref<32x32xf32, #tpu.memory_space<vmem>>, %arg10: memref<32x32xf32, #tpu.memory_space<vmem>>, %arg11: memref<1x32xf32, #tpu.memory_space<vmem>>, %arg12: memref<1x32xf32, #tpu.memory_space<vmem>>, %arg13: memref<2x8x32xf32, #tpu.memory_space<vmem>>, %arg14: memref<2x8x32xf32, #tpu.memory_space<vmem>>, %arg15: memref<2x32xf32, #tpu.memory_space<vmem>>, %arg16: memref<2x32xf32, #tpu.memory_space<vmem>>) attributes {dimension_semantics = [#tpu.dimension_semantics<arbitrary>], iteration_bounds = array<i64: 1>, scalar_prefetch = 0 : i64, scratch_operands = 0 : i64, tpu.core_type = #tpu.core_type<tc>, window_params = [{pipeline_mode = #tpu.pipeline_mode<synchronous>, transform_indices = @transform_0, window_bounds = array<i64: 16, 16>}, {pipeline_mode = #tpu.pipeline_mode<synchronous>, transform_indices = @transform_1, window_bounds = array<i64: 2, 1>}, {pipeline_mode = #tpu.pipeline_mode<synchronous>, transform_indices = @transform_2, window_bounds = array<i64: 16, 256>}, {pipeline_mode = #tpu.pipeline_mode<synchronous>, transform_indices = @transform_3, window_bounds = array<i64: 1, 256>}, {pipeline_mode = #tpu.pipeline_mode<synchronous>, transform_indices = @transform_4, window_bounds = array<i64: 32, 128>}, {pipeline_mode = #tpu.pipeline_mode<synchronous>, transform_indices = @transform_5, window_bounds = array<i64: 32, 128>}, {pipeline_mode = #tpu.pipeline_mode<synchronous>, transform_indices = @transform_6, window_bounds = array<i64: 32, 32>}, {pipeline_mode = #tpu.pipeline_mode<synchronous>, transform_indices = @transform_7, window_bounds = array<i64: 32, 32>}, {pipeline_mode = #tpu.pipeline_mode<synchronous>, transform_indices = @transform_8, window_bounds = array<i64: 32, 32>}, {pipeline_mode = #tpu.pipeline_mode<synchronous>, transform_indices = @transform_9, window_bounds = array<i64: 32, 32>}, {pipeline_mode = #tpu.pipeline_mode<synchronous>, transform_indices = @transform_10, window_bounds = array<i64: 1, 32>}, {pipeline_mode = #tpu.pipeline_mode<synchronous>, transform_indices = @transform_11, window_bounds = array<i64: 1, 32>}, {pipeline_mode = #tpu.pipeline_mode<synchronous>, transform_indices = @transform_12, window_bounds = array<i64: 2, 8, 32>}, {pipeline_mode = #tpu.pipeline_mode<synchronous>, transform_indices = @transform_13, window_bounds = array<i64: 2, 8, 32>}, {pipeline_mode = #tpu.pipeline_mode<synchronous>, transform_indices = @transform_14, window_bounds = array<i64: 2, 32>}, {pipeline_mode = #tpu.pipeline_mode<synchronous>, transform_indices = @transform_15, window_bounds = array<i64: 2, 32>}]} {
    %c0 = arith.constant 0 : index
    %c0_0 = arith.constant 0 : index
    %0 = vector.load %arg1[%c0, %c0_0] : memref<16x16xf32, #tpu.memory_space<vmem>>, vector<16x16xf32>
    %c0_1 = arith.constant 0 : index
    %c0_2 = arith.constant 0 : index
    %1 = vector.load %arg3[%c0_1, %c0_2] : memref<16x256xf32, #tpu.memory_space<vmem>>, vector<16x256xf32>
    %cst = arith.constant dense<0.000000e+00> : vector<16x256xf32>
    %2 = tpu.matmul %0, %1, %cst {dimension_numbers = #tpu.dot_dimension_numbers<[1], [0], [0], [1], [0, 0, 1, 1], [], []>} : vector<16x16xf32>, vector<16x256xf32>, vector<16x256xf32> -> vector<16x256xf32>
    %c0_3 = arith.constant 0 : index
    %c0_4 = arith.constant 0 : index
    %3 = vector.load %arg4[%c0_3, %c0_4] : memref<1x256xf32, #tpu.memory_space<vmem>>, vector<1x256xf32>
    %4 = vector.broadcast %3 : vector<1x256xf32> to vector<16x256xf32>
    %5 = arith.addf %2, %4 : vector<16x256xf32>
    %c0_5 = arith.constant 0 : index
    %c0_6 = arith.constant 0 : index
    %6 = vector.load %arg2[%c0_5, %c0_6] : memref<2x1xi32, #tpu.memory_space<vmem>>, vector<2x1xi32>
    %cst_7 = arith.constant 0.000000e+00 : f32
    %7 = vector.broadcast %cst_7 : f32 to vector<2x32xf32>
    %cst_8 = arith.constant 0.000000e+00 : f32
    %8 = vector.broadcast %cst_8 : f32 to vector<2x32xf32>
    %cst_9 = arith.constant 0.000000e+00 : f32
    %9 = vector.broadcast %cst_9 : f32 to vector<2x32xf32>
    %cst_10 = arith.constant 0.000000e+00 : f32
    %10 = vector.broadcast %cst_10 : f32 to vector<2x32xf32>
    %11 = vector.extract_strided_slice %5 {offsets = [0, 0], sizes = [2, 128], strides = [1, 1]} : vector<16x256xf32> to vector<2x128xf32>
    %c0_11 = arith.constant 0 : index
    %c0_12 = arith.constant 0 : index
    %12 = vector.load %arg5[%c0_11, %c0_12] : memref<32x128xf32, #tpu.memory_space<vmem>>, vector<32x128xf32>
    %cst_13 = arith.constant dense<0.000000e+00> : vector<2x128xf32>
    %13 = tpu.matmul %7, %12, %cst_13 {dimension_numbers = #tpu.dot_dimension_numbers<[1], [0], [0], [1], [0, 0, 1, 1], [], []>} : vector<2x32xf32>, vector<32x128xf32>, vector<2x128xf32> -> vector<2x128xf32>
    %14 = arith.addf %11, %13 : vector<2x128xf32>
    %15 = vector.extract_strided_slice %14 {offsets = [0, 0], sizes = [2, 32], strides = [1, 1]} : vector<2x128xf32> to vector<2x32xf32>
    %16 = arith.negf %15 : vector<2x32xf32>
    %17 = math.exp %16 : vector<2x32xf32>
    %cst_14 = arith.constant 1.000000e+00 : f32
    %18 = vector.broadcast %cst_14 : f32 to vector<2x32xf32>
    %19 = arith.addf %18, %17 : vector<2x32xf32>
    %20 = arith.divf %18, %19 : vector<2x32xf32>
    %21 = vector.extract_strided_slice %14 {offsets = [0, 32], sizes = [2, 32], strides = [1, 1]} : vector<2x128xf32> to vector<2x32xf32>
    %22 = arith.negf %21 : vector<2x32xf32>
    %23 = math.exp %22 : vector<2x32xf32>
    %cst_15 = arith.constant 1.000000e+00 : f32
    %24 = vector.broadcast %cst_15 : f32 to vector<2x32xf32>
    %25 = arith.addf %24, %23 : vector<2x32xf32>
    %26 = arith.divf %24, %25 : vector<2x32xf32>
    %27 = vector.extract_strided_slice %14 {offsets = [0, 64], sizes = [2, 32], strides = [1, 1]} : vector<2x128xf32> to vector<2x32xf32>
    %28 = math.tanh %27 : vector<2x32xf32>
    %29 = vector.extract_strided_slice %14 {offsets = [0, 96], sizes = [2, 32], strides = [1, 1]} : vector<2x128xf32> to vector<2x32xf32>
    %30 = arith.negf %29 : vector<2x32xf32>
    %31 = math.exp %30 : vector<2x32xf32>
    %cst_16 = arith.constant 1.000000e+00 : f32
    %32 = vector.broadcast %cst_16 : f32 to vector<2x32xf32>
    %33 = arith.addf %32, %31 : vector<2x32xf32>
    %34 = arith.divf %32, %33 : vector<2x32xf32>
    %35 = arith.mulf %26, %8 : vector<2x32xf32>
    %36 = arith.mulf %20, %28 : vector<2x32xf32>
    %37 = arith.addf %35, %36 : vector<2x32xf32>
    %38 = math.tanh %37 : vector<2x32xf32>
    %39 = arith.mulf %34, %38 : vector<2x32xf32>
    %c0_i32 = arith.constant 0 : i32
    %40 = vector.broadcast %c0_i32 : i32 to vector<2x1xi32>
    %41 = arith.cmpi sgt, %6, %40 : vector<2x1xi32>
    %42 = vector.shape_cast %41 : vector<2x1xi1> to vector<2x1xi1>
    %43 = vector.broadcast %42 : vector<2x1xi1> to vector<2x32xi1>
    %44 = arith.select %43, %39, %7 : vector<2x32xi1>, vector<2x32xf32>
    %45 = vector.shape_cast %41 : vector<2x1xi1> to vector<2x1xi1>
    %46 = vector.broadcast %45 : vector<2x1xi1> to vector<2x32xi1>
    %47 = arith.select %46, %37, %8 : vector<2x32xi1>, vector<2x32xf32>
    %cst_17 = arith.constant 0.000000e+00 : f32
    %48 = vector.shape_cast %41 : vector<2x1xi1> to vector<2x1xi1>
    %49 = vector.broadcast %48 : vector<2x1xi1> to vector<2x32xi1>
    %50 = vector.broadcast %cst_17 : f32 to vector<2x32xf32>
    %51 = arith.select %49, %39, %50 : vector<2x32xi1>, vector<2x32xf32>
    %52 = vector.shape_cast %51 : vector<2x32xf32> to vector<2x1x32xf32>
    %c0_18 = arith.constant 0 : index
    %c0_19 = arith.constant 0 : index
    %c0_20 = arith.constant 0 : index
    %53 = vector.load %arg13[%c0_18, %c0_19, %c0_20] : memref<2x8x32xf32, #tpu.memory_space<vmem>>, vector<2x1x32xf32>
    tpu.vector_store %arg13[%c0_18, %c0_19, %c0_20], %52 {strides = array<i32>} : memref<2x8x32xf32, #tpu.memory_space<vmem>>, vector<2x1x32xf32>,
    %54 = vector.extract_strided_slice %5 {offsets = [14, 128], sizes = [2, 128], strides = [1, 1]} : vector<16x256xf32> to vector<2x128xf32>
    %c0_21 = arith.constant 0 : index
    %c0_22 = arith.constant 0 : index
    %55 = vector.load %arg6[%c0_21, %c0_22] : memref<32x128xf32, #tpu.memory_space<vmem>>, vector<32x128xf32>
    %cst_23 = arith.constant dense<0.000000e+00> : vector<2x128xf32>
    %56 = tpu.matmul %9, %55, %cst_23 {dimension_numbers = #tpu.dot_dimension_numbers<[1], [0], [0], [1], [0, 0, 1, 1], [], []>} : vector<2x32xf32>, vector<32x128xf32>, vector<2x128xf32> -> vector<2x128xf32>
    %57 = arith.addf %54, %56 : vector<2x128xf32>
    %58 = vector.extract_strided_slice %57 {offsets = [0, 0], sizes = [2, 32], strides = [1, 1]} : vector<2x128xf32> to vector<2x32xf32>
    %59 = arith.negf %58 : vector<2x32xf32>
    %60 = math.exp %59 : vector<2x32xf32>
    %cst_24 = arith.constant 1.000000e+00 : f32
    %61 = vector.broadcast %cst_24 : f32 to vector<2x32xf32>
    %62 = arith.addf %61, %60 : vector<2x32xf32>
    %63 = arith.divf %61, %62 : vector<2x32xf32>
    %64 = vector.extract_strided_slice %57 {offsets = [0, 32], sizes = [2, 32], strides = [1, 1]} : vector<2x128xf32> to vector<2x32xf32>
    %65 = arith.negf %64 : vector<2x32xf32>
    %66 = math.exp %65 : vector<2x32xf32>
    %cst_25 = arith.constant 1.000000e+00 : f32
    %67 = vector.broadcast %cst_25 : f32 to vector<2x32xf32>
    %68 = arith.addf %67, %66 : vector<2x32xf32>
    %69 = arith.divf %67, %68 : vector<2x32xf32>
    %70 = vector.extract_strided_slice %57 {offsets = [0, 64], sizes = [2, 32], strides = [1, 1]} : vector<2x128xf32> to vector<2x32xf32>
    %71 = math.tanh %70 : vector<2x32xf32>
    %72 = vector.extract_strided_slice %57 {offsets = [0, 96], sizes = [2, 32], strides = [1, 1]} : vector<2x128xf32> to vector<2x32xf32>
    %73 = arith.negf %72 : vector<2x32xf32>
    %74 = math.exp %73 : vector<2x32xf32>
    %cst_26 = arith.constant 1.000000e+00 : f32
    %75 = vector.broadcast %cst_26 : f32 to vector<2x32xf32>
    %76 = arith.addf %75, %74 : vector<2x32xf32>
    %77 = arith.divf %75, %76 : vector<2x32xf32>
    %78 = arith.mulf %69, %10 : vector<2x32xf32>
    %79 = arith.mulf %63, %71 : vector<2x32xf32>
    %80 = arith.addf %78, %79 : vector<2x32xf32>
    %81 = math.tanh %80 : vector<2x32xf32>
    %82 = arith.mulf %77, %81 : vector<2x32xf32>
    %c7_i32 = arith.constant 7 : i32
    %83 = vector.broadcast %c7_i32 : i32 to vector<2x1xi32>
    %84 = arith.cmpi sgt, %6, %83 : vector<2x1xi32>
    %85 = vector.shape_cast %84 : vector<2x1xi1> to vector<2x1xi1>
    %86 = vector.broadcast %85 : vector<2x1xi1> to vector<2x32xi1>
    %87 = arith.select %86, %82, %9 : vector<2x32xi1>, vector<2x32xf32>
    %88 = vector.shape_cast %84 : vector<2x1xi1> to vector<2x1xi1>
    %89 = vector.broadcast %88 : vector<2x1xi1> to vector<2x32xi1>
    %90 = arith.select %89, %80, %10 : vector<2x32xi1>, vector<2x32xf32>
    %cst_27 = arith.constant 0.000000e+00 : f32
    %91 = vector.shape_cast %84 : vector<2x1xi1> to vector<2x1xi1>
    %92 = vector.broadcast %91 : vector<2x1xi1> to vector<2x32xi1>
    %93 = vector.broadcast %cst_27 : f32 to vector<2x32xf32>
    %94 = arith.select %92, %82, %93 : vector<2x32xi1>, vector<2x32xf32>
    %95 = vector.shape_cast %94 : vector<2x32xf32> to vector<2x1x32xf32>
    %c0_28 = arith.constant 0 : index
    %c7 = arith.constant 7 : index
    %c0_29 = arith.constant 0 : index
    %96 = vector.load %arg14[%c0_28, %c7, %c0_29] : memref<2x8x32xf32, #tpu.memory_space<vmem>>, vector<2x1x32xf32>
    tpu.vector_store %arg14[%c0_28, %c7, %c0_29], %95 {strides = array<i32>} : memref<2x8x32xf32, #tpu.memory_space<vmem>>, vector<2x1x32xf32>,
    %97 = vector.extract_strided_slice %5 {offsets = [2, 0], sizes = [2, 128], strides = [1, 1]} : vector<16x256xf32> to vector<2x128xf32>
    %c0_30 = arith.constant 0 : index
    %c0_31 = arith.constant 0 : index
    %98 = vector.load %arg5[%c0_30, %c0_31] : memref<32x128xf32, #tpu.memory_space<vmem>>, vector<32x128xf32>
    %cst_32 = arith.constant dense<0.000000e+00> : vector<2x128xf32>
    %99 = tpu.matmul %44, %98, %cst_32 {dimension_numbers = #tpu.dot_dimension_numbers<[1], [0], [0], [1], [0, 0, 1, 1], [], []>} : vector<2x32xf32>, vector<32x128xf32>, vector<2x128xf32> -> vector<2x128xf32>
    %100 = arith.addf %97, %99 : vector<2x128xf32>
    %101 = vector.extract_strided_slice %100 {offsets = [0, 0], sizes = [2, 32], strides = [1, 1]} : vector<2x128xf32> to vector<2x32xf32>
    %102 = arith.negf %101 : vector<2x32xf32>
    %103 = math.exp %102 : vector<2x32xf32>
    %cst_33 = arith.constant 1.000000e+00 : f32
    %104 = vector.broadcast %cst_33 : f32 to vector<2x32xf32>
    %105 = arith.addf %104, %103 : vector<2x32xf32>
    %106 = arith.divf %104, %105 : vector<2x32xf32>
    %107 = vector.extract_strided_slice %100 {offsets = [0, 32], sizes = [2, 32], strides = [1, 1]} : vector<2x128xf32> to vector<2x32xf32>
    %108 = arith.negf %107 : vector<2x32xf32>
    %109 = math.exp %108 : vector<2x32xf32>
    %cst_34 = arith.constant 1.000000e+00 : f32
    %110 = vector.broadcast %cst_34 : f32 to vector<2x32xf32>
    %111 = arith.addf %110, %109 : vector<2x32xf32>
    %112 = arith.divf %110, %111 : vector<2x32xf32>
    %113 = vector.extract_strided_slice %100 {offsets = [0, 64], sizes = [2, 32], strides = [1, 1]} : vector<2x128xf32> to vector<2x32xf32>
    %114 = math.tanh %113 : vector<2x32xf32>
    %115 = vector.extract_strided_slice %100 {offsets = [0, 96], sizes = [2, 32], strides = [1, 1]} : vector<2x128xf32> to vector<2x32xf32>
    %116 = arith.negf %115 : vector<2x32xf32>
    %117 = math.exp %116 : vector<2x32xf32>
    %cst_35 = arith.constant 1.000000e+00 : f32
    %118 = vector.broadcast %cst_35 : f32 to vector<2x32xf32>
    %119 = arith.addf %118, %117 : vector<2x32xf32>
    %120 = arith.divf %118, %119 : vector<2x32xf32>
    %121 = arith.mulf %112, %47 : vector<2x32xf32>
    %122 = arith.mulf %106, %114 : vector<2x32xf32>
    %123 = arith.addf %121, %122 : vector<2x32xf32>
    %124 = math.tanh %123 : vector<2x32xf32>
    %125 = arith.mulf %120, %124 : vector<2x32xf32>
    %c1_i32 = arith.constant 1 : i32
    %126 = vector.broadcast %c1_i32 : i32 to vector<2x1xi32>
    %127 = arith.cmpi sgt, %6, %126 : vector<2x1xi32>
    %128 = vector.shape_cast %127 : vector<2x1xi1> to vector<2x1xi1>
    %129 = vector.broadcast %128 : vector<2x1xi1> to vector<2x32xi1>
    %130 = arith.select %129, %125, %44 : vector<2x32xi1>, vector<2x32xf32>
    %131 = vector.shape_cast %127 : vector<2x1xi1> to vector<2x1xi1>
    %132 = vector.broadcast %131 : vector<2x1xi1> to vector<2x32xi1>
    %133 = arith.select %132, %123, %47 : vector<2x32xi1>, vector<2x32xf32>
    %cst_36 = arith.constant 0.000000e+00 : f32
    %134 = vector.shape_cast %127 : vector<2x1xi1> to vector<2x1xi1>
    %135 = vector.broadcast %134 : vector<2x1xi1> to vector<2x32xi1>
    %136 = vector.broadcast %cst_36 : f32 to vector<2x32xf32>
    %137 = arith.select %135, %125, %136 : vector<2x32xi1>, vector<2x32xf32>
    %138 = vector.shape_cast %137 : vector<2x32xf32> to vector<2x1x32xf32>
    %c0_37 = arith.constant 0 : index
    %c1 = arith.constant 1 : index
    %c0_38 = arith.constant 0 : index
    %139 = vector.load %arg13[%c0_37, %c1, %c0_38] : memref<2x8x32xf32, #tpu.memory_space<vmem>>, vector<2x1x32xf32>
    tpu.vector_store %arg13[%c0_37, %c1, %c0_38], %138 {strides = array<i32>} : memref<2x8x32xf32, #tpu.memory_space<vmem>>, vector<2x1x32xf32>,
    %140 = vector.extract_strided_slice %5 {offsets = [12, 128], sizes = [2, 128], strides = [1, 1]} : vector<16x256xf32> to vector<2x128xf32>
    %c0_39 = arith.constant 0 : index
    %c0_40 = arith.constant 0 : index
    %141 = vector.load %arg6[%c0_39, %c0_40] : memref<32x128xf32, #tpu.memory_space<vmem>>, vector<32x128xf32>
    %cst_41 = arith.constant dense<0.000000e+00> : vector<2x128xf32>
    %142 = tpu.matmul %87, %141, %cst_41 {dimension_numbers = #tpu.dot_dimension_numbers<[1], [0], [0], [1], [0, 0, 1, 1], [], []>} : vector<2x32xf32>, vector<32x128xf32>, vector<2x128xf32> -> vector<2x128xf32>
    %143 = arith.addf %140, %142 : vector<2x128xf32>
    %144 = vector.extract_strided_slice %143 {offsets = [0, 0], sizes = [2, 32], strides = [1, 1]} : vector<2x128xf32> to vector<2x32xf32>
    %145 = arith.negf %144 : vector<2x32xf32>
    %146 = math.exp %145 : vector<2x32xf32>
    %cst_42 = arith.constant 1.000000e+00 : f32
    %147 = vector.broadcast %cst_42 : f32 to vector<2x32xf32>
    %148 = arith.addf %147, %146 : vector<2x32xf32>
    %149 = arith.divf %147, %148 : vector<2x32xf32>
    %150 = vector.extract_strided_slice %143 {offsets = [0, 32], sizes = [2, 32], strides = [1, 1]} : vector<2x128xf32> to vector<2x32xf32>
    %151 = arith.negf %150 : vector<2x32xf32>
    %152 = math.exp %151 : vector<2x32xf32>
    %cst_43 = arith.constant 1.000000e+00 : f32
    %153 = vector.broadcast %cst_43 : f32 to vector<2x32xf32>
    %154 = arith.addf %153, %152 : vector<2x32xf32>
    %155 = arith.divf %153, %154 : vector<2x32xf32>
    %156 = vector.extract_strided_slice %143 {offsets = [0, 64], sizes = [2, 32], strides = [1, 1]} : vector<2x128xf32> to vector<2x32xf32>
    %157 = math.tanh %156 : vector<2x32xf32>
    %158 = vector.extract_strided_slice %143 {offsets = [0, 96], sizes = [2, 32], strides = [1, 1]} : vector<2x128xf32> to vector<2x32xf32>
    %159 = arith.negf %158 : vector<2x32xf32>
    %160 = math.exp %159 : vector<2x32xf32>
    %cst_44 = arith.constant 1.000000e+00 : f32
    %161 = vector.broadcast %cst_44 : f32 to vector<2x32xf32>
    %162 = arith.addf %161, %160 : vector<2x32xf32>
    %163 = arith.divf %161, %162 : vector<2x32xf32>
    %164 = arith.mulf %155, %90 : vector<2x32xf32>
    %165 = arith.mulf %149, %157 : vector<2x32xf32>
    %166 = arith.addf %164, %165 : vector<2x32xf32>
    %167 = math.tanh %166 : vector<2x32xf32>
    %168 = arith.mulf %163, %167 : vector<2x32xf32>
    %c6_i32 = arith.constant 6 : i32
    %169 = vector.broadcast %c6_i32 : i32 to vector<2x1xi32>
    %170 = arith.cmpi sgt, %6, %169 : vector<2x1xi32>
    %171 = vector.shape_cast %170 : vector<2x1xi1> to vector<2x1xi1>
    %172 = vector.broadcast %171 : vector<2x1xi1> to vector<2x32xi1>
    %173 = arith.select %172, %168, %87 : vector<2x32xi1>, vector<2x32xf32>
    %174 = vector.shape_cast %170 : vector<2x1xi1> to vector<2x1xi1>
    %175 = vector.broadcast %174 : vector<2x1xi1> to vector<2x32xi1>
    %176 = arith.select %175, %166, %90 : vector<2x32xi1>, vector<2x32xf32>
    %cst_45 = arith.constant 0.000000e+00 : f32
    %177 = vector.shape_cast %170 : vector<2x1xi1> to vector<2x1xi1>
    %178 = vector.broadcast %177 : vector<2x1xi1> to vector<2x32xi1>
    %179 = vector.broadcast %cst_45 : f32 to vector<2x32xf32>
    %180 = arith.select %178, %168, %179 : vector<2x32xi1>, vector<2x32xf32>
    %181 = vector.shape_cast %180 : vector<2x32xf32> to vector<2x1x32xf32>
    %c0_46 = arith.constant 0 : index
    %c6 = arith.constant 6 : index
    %c0_47 = arith.constant 0 : index
    %182 = vector.load %arg14[%c0_46, %c6, %c0_47] : memref<2x8x32xf32, #tpu.memory_space<vmem>>, vector<2x1x32xf32>
    tpu.vector_store %arg14[%c0_46, %c6, %c0_47], %181 {strides = array<i32>} : memref<2x8x32xf32, #tpu.memory_space<vmem>>, vector<2x1x32xf32>,
    %183 = vector.extract_strided_slice %5 {offsets = [4, 0], sizes = [2, 128], strides = [1, 1]} : vector<16x256xf32> to vector<2x128xf32>
    %c0_48 = arith.constant 0 : index
    %c0_49 = arith.constant 0 : index
    %184 = vector.load %arg5[%c0_48, %c0_49] : memref<32x128xf32, #tpu.memory_space<vmem>>, vector<32x128xf32>
    %cst_50 = arith.constant dense<0.000000e+00> : vector<2x128xf32>
    %185 = tpu.matmul %130, %184, %cst_50 {dimension_numbers = #tpu.dot_dimension_numbers<[1], [0], [0], [1], [0, 0, 1, 1], [], []>} : vector<2x32xf32>, vector<32x128xf32>, vector<2x128xf32> -> vector<2x128xf32>
    %186 = arith.addf %183, %185 : vector<2x128xf32>
    %187 = vector.extract_strided_slice %186 {offsets = [0, 0], sizes = [2, 32], strides = [1, 1]} : vector<2x128xf32> to vector<2x32xf32>
    %188 = arith.negf %187 : vector<2x32xf32>
    %189 = math.exp %188 : vector<2x32xf32>
    %cst_51 = arith.constant 1.000000e+00 : f32
    %190 = vector.broadcast %cst_51 : f32 to vector<2x32xf32>
    %191 = arith.addf %190, %189 : vector<2x32xf32>
    %192 = arith.divf %190, %191 : vector<2x32xf32>
    %193 = vector.extract_strided_slice %186 {offsets = [0, 32], sizes = [2, 32], strides = [1, 1]} : vector<2x128xf32> to vector<2x32xf32>
    %194 = arith.negf %193 : vector<2x32xf32>
    %195 = math.exp %194 : vector<2x32xf32>
    %cst_52 = arith.constant 1.000000e+00 : f32
    %196 = vector.broadcast %cst_52 : f32 to vector<2x32xf32>
    %197 = arith.addf %196, %195 : vector<2x32xf32>
    %198 = arith.divf %196, %197 : vector<2x32xf32>
    %199 = vector.extract_strided_slice %186 {offsets = [0, 64], sizes = [2, 32], strides = [1, 1]} : vector<2x128xf32> to vector<2x32xf32>
    %200 = math.tanh %199 : vector<2x32xf32>
    %201 = vector.extract_strided_slice %186 {offsets = [0, 96], sizes = [2, 32], strides = [1, 1]} : vector<2x128xf32> to vector<2x32xf32>
    %202 = arith.negf %201 : vector<2x32xf32>
    %203 = math.exp %202 : vector<2x32xf32>
    %cst_53 = arith.constant 1.000000e+00 : f32
    %204 = vector.broadcast %cst_53 : f32 to vector<2x32xf32>
    %205 = arith.addf %204, %203 : vector<2x32xf32>
    %206 = arith.divf %204, %205 : vector<2x32xf32>
    %207 = arith.mulf %198, %133 : vector<2x32xf32>
    %208 = arith.mulf %192, %200 : vector<2x32xf32>
    %209 = arith.addf %207, %208 : vector<2x32xf32>
    %210 = math.tanh %209 : vector<2x32xf32>
    %211 = arith.mulf %206, %210 : vector<2x32xf32>
    %c2_i32 = arith.constant 2 : i32
    %212 = vector.broadcast %c2_i32 : i32 to vector<2x1xi32>
    %213 = arith.cmpi sgt, %6, %212 : vector<2x1xi32>
    %214 = vector.shape_cast %213 : vector<2x1xi1> to vector<2x1xi1>
    %215 = vector.broadcast %214 : vector<2x1xi1> to vector<2x32xi1>
    %216 = arith.select %215, %211, %130 : vector<2x32xi1>, vector<2x32xf32>
    %217 = vector.shape_cast %213 : vector<2x1xi1> to vector<2x1xi1>
    %218 = vector.broadcast %217 : vector<2x1xi1> to vector<2x32xi1>
    %219 = arith.select %218, %209, %133 : vector<2x32xi1>, vector<2x32xf32>
    %cst_54 = arith.constant 0.000000e+00 : f32
    %220 = vector.shape_cast %213 : vector<2x1xi1> to vector<2x1xi1>
    %221 = vector.broadcast %220 : vector<2x1xi1> to vector<2x32xi1>
    %222 = vector.broadcast %cst_54 : f32 to vector<2x32xf32>
    %223 = arith.select %221, %211, %222 : vector<2x32xi1>, vector<2x32xf32>
    %224 = vector.shape_cast %223 : vector<2x32xf32> to vector<2x1x32xf32>
    %c0_55 = arith.constant 0 : index
    %c2 = arith.constant 2 : index
    %c0_56 = arith.constant 0 : index
    %225 = vector.load %arg13[%c0_55, %c2, %c0_56] : memref<2x8x32xf32, #tpu.memory_space<vmem>>, vector<2x1x32xf32>
    tpu.vector_store %arg13[%c0_55, %c2, %c0_56], %224 {strides = array<i32>} : memref<2x8x32xf32, #tpu.memory_space<vmem>>, vector<2x1x32xf32>,
    %226 = vector.extract_strided_slice %5 {offsets = [10, 128], sizes = [2, 128], strides = [1, 1]} : vector<16x256xf32> to vector<2x128xf32>
    %c0_57 = arith.constant 0 : index
    %c0_58 = arith.constant 0 : index
    %227 = vector.load %arg6[%c0_57, %c0_58] : memref<32x128xf32, #tpu.memory_space<vmem>>, vector<32x128xf32>
    %cst_59 = arith.constant dense<0.000000e+00> : vector<2x128xf32>
    %228 = tpu.matmul %173, %227, %cst_59 {dimension_numbers = #tpu.dot_dimension_numbers<[1], [0], [0], [1], [0, 0, 1, 1], [], []>} : vector<2x32xf32>, vector<32x128xf32>, vector<2x128xf32> -> vector<2x128xf32>
    %229 = arith.addf %226, %228 : vector<2x128xf32>
    %230 = vector.extract_strided_slice %229 {offsets = [0, 0], sizes = [2, 32], strides = [1, 1]} : vector<2x128xf32> to vector<2x32xf32>
    %231 = arith.negf %230 : vector<2x32xf32>
    %232 = math.exp %231 : vector<2x32xf32>
    %cst_60 = arith.constant 1.000000e+00 : f32
    %233 = vector.broadcast %cst_60 : f32 to vector<2x32xf32>
    %234 = arith.addf %233, %232 : vector<2x32xf32>
    %235 = arith.divf %233, %234 : vector<2x32xf32>
    %236 = vector.extract_strided_slice %229 {offsets = [0, 32], sizes = [2, 32], strides = [1, 1]} : vector<2x128xf32> to vector<2x32xf32>
    %237 = arith.negf %236 : vector<2x32xf32>
    %238 = math.exp %237 : vector<2x32xf32>
    %cst_61 = arith.constant 1.000000e+00 : f32
    %239 = vector.broadcast %cst_61 : f32 to vector<2x32xf32>
    %240 = arith.addf %239, %238 : vector<2x32xf32>
    %241 = arith.divf %239, %240 : vector<2x32xf32>
    %242 = vector.extract_strided_slice %229 {offsets = [0, 64], sizes = [2, 32], strides = [1, 1]} : vector<2x128xf32> to vector<2x32xf32>
    %243 = math.tanh %242 : vector<2x32xf32>
    %244 = vector.extract_strided_slice %229 {offsets = [0, 96], sizes = [2, 32], strides = [1, 1]} : vector<2x128xf32> to vector<2x32xf32>
    %245 = arith.negf %244 : vector<2x32xf32>
    %246 = math.exp %245 : vector<2x32xf32>
    %cst_62 = arith.constant 1.000000e+00 : f32
    %247 = vector.broadcast %cst_62 : f32 to vector<2x32xf32>
    %248 = arith.addf %247, %246 : vector<2x32xf32>
    %249 = arith.divf %247, %248 : vector<2x32xf32>
    %250 = arith.mulf %241, %176 : vector<2x32xf32>
    %251 = arith.mulf %235, %243 : vector<2x32xf32>
    %252 = arith.addf %250, %251 : vector<2x32xf32>
    %253 = math.tanh %252 : vector<2x32xf32>
    %254 = arith.mulf %249, %253 : vector<2x32xf32>
    %c5_i32 = arith.constant 5 : i32
    %255 = vector.broadcast %c5_i32 : i32 to vector<2x1xi32>
    %256 = arith.cmpi sgt, %6, %255 : vector<2x1xi32>
    %257 = vector.shape_cast %256 : vector<2x1xi1> to vector<2x1xi1>
    %258 = vector.broadcast %257 : vector<2x1xi1> to vector<2x32xi1>
    %259 = arith.select %258, %254, %173 : vector<2x32xi1>, vector<2x32xf32>
    %260 = vector.shape_cast %256 : vector<2x1xi1> to vector<2x1xi1>
    %261 = vector.broadcast %260 : vector<2x1xi1> to vector<2x32xi1>
    %262 = arith.select %261, %252, %176 : vector<2x32xi1>, vector<2x32xf32>
    %cst_63 = arith.constant 0.000000e+00 : f32
    %263 = vector.shape_cast %256 : vector<2x1xi1> to vector<2x1xi1>
    %264 = vector.broadcast %263 : vector<2x1xi1> to vector<2x32xi1>
    %265 = vector.broadcast %cst_63 : f32 to vector<2x32xf32>
    %266 = arith.select %264, %254, %265 : vector<2x32xi1>, vector<2x32xf32>
    %267 = vector.shape_cast %266 : vector<2x32xf32> to vector<2x1x32xf32>
    %c0_64 = arith.constant 0 : index
    %c5 = arith.constant 5 : index
    %c0_65 = arith.constant 0 : index
    %268 = vector.load %arg14[%c0_64, %c5, %c0_65] : memref<2x8x32xf32, #tpu.memory_space<vmem>>, vector<2x1x32xf32>
    tpu.vector_store %arg14[%c0_64, %c5, %c0_65], %267 {strides = array<i32>} : memref<2x8x32xf32, #tpu.memory_space<vmem>>, vector<2x1x32xf32>,
    %269 = vector.extract_strided_slice %5 {offsets = [6, 0], sizes = [2, 128], strides = [1, 1]} : vector<16x256xf32> to vector<2x128xf32>
    %c0_66 = arith.constant 0 : index
    %c0_67 = arith.constant 0 : index
    %270 = vector.load %arg5[%c0_66, %c0_67] : memref<32x128xf32, #tpu.memory_space<vmem>>, vector<32x128xf32>
    %cst_68 = arith.constant dense<0.000000e+00> : vector<2x128xf32>
    %271 = tpu.matmul %216, %270, %cst_68 {dimension_numbers = #tpu.dot_dimension_numbers<[1], [0], [0], [1], [0, 0, 1, 1], [], []>} : vector<2x32xf32>, vector<32x128xf32>, vector<2x128xf32> -> vector<2x128xf32>
    %272 = arith.addf %269, %271 : vector<2x128xf32>
    %273 = vector.extract_strided_slice %272 {offsets = [0, 0], sizes = [2, 32], strides = [1, 1]} : vector<2x128xf32> to vector<2x32xf32>
    %274 = arith.negf %273 : vector<2x32xf32>
    %275 = math.exp %274 : vector<2x32xf32>
    %cst_69 = arith.constant 1.000000e+00 : f32
    %276 = vector.broadcast %cst_69 : f32 to vector<2x32xf32>
    %277 = arith.addf %276, %275 : vector<2x32xf32>
    %278 = arith.divf %276, %277 : vector<2x32xf32>
    %279 = vector.extract_strided_slice %272 {offsets = [0, 32], sizes = [2, 32], strides = [1, 1]} : vector<2x128xf32> to vector<2x32xf32>
    %280 = arith.negf %279 : vector<2x32xf32>
    %281 = math.exp %280 : vector<2x32xf32>
    %cst_70 = arith.constant 1.000000e+00 : f32
    %282 = vector.broadcast %cst_70 : f32 to vector<2x32xf32>
    %283 = arith.addf %282, %281 : vector<2x32xf32>
    %284 = arith.divf %282, %283 : vector<2x32xf32>
    %285 = vector.extract_strided_slice %272 {offsets = [0, 64], sizes = [2, 32], strides = [1, 1]} : vector<2x128xf32> to vector<2x32xf32>
    %286 = math.tanh %285 : vector<2x32xf32>
    %287 = vector.extract_strided_slice %272 {offsets = [0, 96], sizes = [2, 32], strides = [1, 1]} : vector<2x128xf32> to vector<2x32xf32>
    %288 = arith.negf %287 : vector<2x32xf32>
    %289 = math.exp %288 : vector<2x32xf32>
    %cst_71 = arith.constant 1.000000e+00 : f32
    %290 = vector.broadcast %cst_71 : f32 to vector<2x32xf32>
    %291 = arith.addf %290, %289 : vector<2x32xf32>
    %292 = arith.divf %290, %291 : vector<2x32xf32>
    %293 = arith.mulf %284, %219 : vector<2x32xf32>
    %294 = arith.mulf %278, %286 : vector<2x32xf32>
    %295 = arith.addf %293, %294 : vector<2x32xf32>
    %296 = math.tanh %295 : vector<2x32xf32>
    %297 = arith.mulf %292, %296 : vector<2x32xf32>
    %c3_i32 = arith.constant 3 : i32
    %298 = vector.broadcast %c3_i32 : i32 to vector<2x1xi32>
    %299 = arith.cmpi sgt, %6, %298 : vector<2x1xi32>
    %300 = vector.shape_cast %299 : vector<2x1xi1> to vector<2x1xi1>
    %301 = vector.broadcast %300 : vector<2x1xi1> to vector<2x32xi1>
    %302 = arith.select %301, %297, %216 : vector<2x32xi1>, vector<2x32xf32>
    %303 = vector.shape_cast %299 : vector<2x1xi1> to vector<2x1xi1>
    %304 = vector.broadcast %303 : vector<2x1xi1> to vector<2x32xi1>
    %305 = arith.select %304, %295, %219 : vector<2x32xi1>, vector<2x32xf32>
    %cst_72 = arith.constant 0.000000e+00 : f32
    %306 = vector.shape_cast %299 : vector<2x1xi1> to vector<2x1xi1>
    %307 = vector.broadcast %306 : vector<2x1xi1> to vector<2x32xi1>
    %308 = vector.broadcast %cst_72 : f32 to vector<2x32xf32>
    %309 = arith.select %307, %297, %308 : vector<2x32xi1>, vector<2x32xf32>
    %310 = vector.shape_cast %309 : vector<2x32xf32> to vector<2x1x32xf32>
    %c0_73 = arith.constant 0 : index
    %c3 = arith.constant 3 : index
    %c0_74 = arith.constant 0 : index
    %311 = vector.load %arg13[%c0_73, %c3, %c0_74] : memref<2x8x32xf32, #tpu.memory_space<vmem>>, vector<2x1x32xf32>
    tpu.vector_store %arg13[%c0_73, %c3, %c0_74], %310 {strides = array<i32>} : memref<2x8x32xf32, #tpu.memory_space<vmem>>, vector<2x1x32xf32>,
    %312 = vector.extract_strided_slice %5 {offsets = [8, 128], sizes = [2, 128], strides = [1, 1]} : vector<16x256xf32> to vector<2x128xf32>
    %c0_75 = arith.constant 0 : index
    %c0_76 = arith.constant 0 : index
    %313 = vector.load %arg6[%c0_75, %c0_76] : memref<32x128xf32, #tpu.memory_space<vmem>>, vector<32x128xf32>
    %cst_77 = arith.constant dense<0.000000e+00> : vector<2x128xf32>
    %314 = tpu.matmul %259, %313, %cst_77 {dimension_numbers = #tpu.dot_dimension_numbers<[1], [0], [0], [1], [0, 0, 1, 1], [], []>} : vector<2x32xf32>, vector<32x128xf32>, vector<2x128xf32> -> vector<2x128xf32>
    %315 = arith.addf %312, %314 : vector<2x128xf32>
    %316 = vector.extract_strided_slice %315 {offsets = [0, 0], sizes = [2, 32], strides = [1, 1]} : vector<2x128xf32> to vector<2x32xf32>
    %317 = arith.negf %316 : vector<2x32xf32>
    %318 = math.exp %317 : vector<2x32xf32>
    %cst_78 = arith.constant 1.000000e+00 : f32
    %319 = vector.broadcast %cst_78 : f32 to vector<2x32xf32>
    %320 = arith.addf %319, %318 : vector<2x32xf32>
    %321 = arith.divf %319, %320 : vector<2x32xf32>
    %322 = vector.extract_strided_slice %315 {offsets = [0, 32], sizes = [2, 32], strides = [1, 1]} : vector<2x128xf32> to vector<2x32xf32>
    %323 = arith.negf %322 : vector<2x32xf32>
    %324 = math.exp %323 : vector<2x32xf32>
    %cst_79 = arith.constant 1.000000e+00 : f32
    %325 = vector.broadcast %cst_79 : f32 to vector<2x32xf32>
    %326 = arith.addf %325, %324 : vector<2x32xf32>
    %327 = arith.divf %325, %326 : vector<2x32xf32>
    %328 = vector.extract_strided_slice %315 {offsets = [0, 64], sizes = [2, 32], strides = [1, 1]} : vector<2x128xf32> to vector<2x32xf32>
    %329 = math.tanh %328 : vector<2x32xf32>
    %330 = vector.extract_strided_slice %315 {offsets = [0, 96], sizes = [2, 32], strides = [1, 1]} : vector<2x128xf32> to vector<2x32xf32>
    %331 = arith.negf %330 : vector<2x32xf32>
    %332 = math.exp %331 : vector<2x32xf32>
    %cst_80 = arith.constant 1.000000e+00 : f32
    %333 = vector.broadcast %cst_80 : f32 to vector<2x32xf32>
    %334 = arith.addf %333, %332 : vector<2x32xf32>
    %335 = arith.divf %333, %334 : vector<2x32xf32>
    %336 = arith.mulf %327, %262 : vector<2x32xf32>
    %337 = arith.mulf %321, %329 : vector<2x32xf32>
    %338 = arith.addf %336, %337 : vector<2x32xf32>
    %339 = math.tanh %338 : vector<2x32xf32>
    %340 = arith.mulf %335, %339 : vector<2x32xf32>
    %c4_i32 = arith.constant 4 : i32
    %341 = vector.broadcast %c4_i32 : i32 to vector<2x1xi32>
    %342 = arith.cmpi sgt, %6, %341 : vector<2x1xi32>
    %343 = vector.shape_cast %342 : vector<2x1xi1> to vector<2x1xi1>
    %344 = vector.broadcast %343 : vector<2x1xi1> to vector<2x32xi1>
    %345 = arith.select %344, %340, %259 : vector<2x32xi1>, vector<2x32xf32>
    %346 = vector.shape_cast %342 : vector<2x1xi1> to vector<2x1xi1>
    %347 = vector.broadcast %346 : vector<2x1xi1> to vector<2x32xi1>
    %348 = arith.select %347, %338, %262 : vector<2x32xi1>, vector<2x32xf32>
    %cst_81 = arith.constant 0.000000e+00 : f32
    %349 = vector.shape_cast %342 : vector<2x1xi1> to vector<2x1xi1>
    %350 = vector.broadcast %349 : vector<2x1xi1> to vector<2x32xi1>
    %351 = vector.broadcast %cst_81 : f32 to vector<2x32xf32>
    %352 = arith.select %350, %340, %351 : vector<2x32xi1>, vector<2x32xf32>
    %353 = vector.shape_cast %352 : vector<2x32xf32> to vector<2x1x32xf32>
    %c0_82 = arith.constant 0 : index
    %c4 = arith.constant 4 : index
    %c0_83 = arith.constant 0 : index
    %354 = vector.load %arg14[%c0_82, %c4, %c0_83] : memref<2x8x32xf32, #tpu.memory_space<vmem>>, vector<2x1x32xf32>
    tpu.vector_store %arg14[%c0_82, %c4, %c0_83], %353 {strides = array<i32>} : memref<2x8x32xf32, #tpu.memory_space<vmem>>, vector<2x1x32xf32>,
    %355 = vector.extract_strided_slice %5 {offsets = [8, 0], sizes = [2, 128], strides = [1, 1]} : vector<16x256xf32> to vector<2x128xf32>
    %c0_84 = arith.constant 0 : index
    %c0_85 = arith.constant 0 : index
    %356 = vector.load %arg5[%c0_84, %c0_85] : memref<32x128xf32, #tpu.memory_space<vmem>>, vector<32x128xf32>
    %cst_86 = arith.constant dense<0.000000e+00> : vector<2x128xf32>
    %357 = tpu.matmul %302, %356, %cst_86 {dimension_numbers = #tpu.dot_dimension_numbers<[1], [0], [0], [1], [0, 0, 1, 1], [], []>} : vector<2x32xf32>, vector<32x128xf32>, vector<2x128xf32> -> vector<2x128xf32>
    %358 = arith.addf %355, %357 : vector<2x128xf32>
    %359 = vector.extract_strided_slice %358 {offsets = [0, 0], sizes = [2, 32], strides = [1, 1]} : vector<2x128xf32> to vector<2x32xf32>
    %360 = arith.negf %359 : vector<2x32xf32>
    %361 = math.exp %360 : vector<2x32xf32>
    %cst_87 = arith.constant 1.000000e+00 : f32
    %362 = vector.broadcast %cst_87 : f32 to vector<2x32xf32>
    %363 = arith.addf %362, %361 : vector<2x32xf32>
    %364 = arith.divf %362, %363 : vector<2x32xf32>
    %365 = vector.extract_strided_slice %358 {offsets = [0, 32], sizes = [2, 32], strides = [1, 1]} : vector<2x128xf32> to vector<2x32xf32>
    %366 = arith.negf %365 : vector<2x32xf32>
    %367 = math.exp %366 : vector<2x32xf32>
    %cst_88 = arith.constant 1.000000e+00 : f32
    %368 = vector.broadcast %cst_88 : f32 to vector<2x32xf32>
    %369 = arith.addf %368, %367 : vector<2x32xf32>
    %370 = arith.divf %368, %369 : vector<2x32xf32>
    %371 = vector.extract_strided_slice %358 {offsets = [0, 64], sizes = [2, 32], strides = [1, 1]} : vector<2x128xf32> to vector<2x32xf32>
    %372 = math.tanh %371 : vector<2x32xf32>
    %373 = vector.extract_strided_slice %358 {offsets = [0, 96], sizes = [2, 32], strides = [1, 1]} : vector<2x128xf32> to vector<2x32xf32>
    %374 = arith.negf %373 : vector<2x32xf32>
    %375 = math.exp %374 : vector<2x32xf32>
    %cst_89 = arith.constant 1.000000e+00 : f32
    %376 = vector.broadcast %cst_89 : f32 to vector<2x32xf32>
    %377 = arith.addf %376, %375 : vector<2x32xf32>
    %378 = arith.divf %376, %377 : vector<2x32xf32>
    %379 = arith.mulf %370, %305 : vector<2x32xf32>
    %380 = arith.mulf %364, %372 : vector<2x32xf32>
    %381 = arith.addf %379, %380 : vector<2x32xf32>
    %382 = math.tanh %381 : vector<2x32xf32>
    %383 = arith.mulf %378, %382 : vector<2x32xf32>
    %c4_i32_90 = arith.constant 4 : i32
    %384 = vector.broadcast %c4_i32_90 : i32 to vector<2x1xi32>
    %385 = arith.cmpi sgt, %6, %384 : vector<2x1xi32>
    %386 = vector.shape_cast %385 : vector<2x1xi1> to vector<2x1xi1>
    %387 = vector.broadcast %386 : vector<2x1xi1> to vector<2x32xi1>
    %388 = arith.select %387, %383, %302 : vector<2x32xi1>, vector<2x32xf32>
    %389 = vector.shape_cast %385 : vector<2x1xi1> to vector<2x1xi1>
    %390 = vector.broadcast %389 : vector<2x1xi1> to vector<2x32xi1>
    %391 = arith.select %390, %381, %305 : vector<2x32xi1>, vector<2x32xf32>
    %cst_91 = arith.constant 0.000000e+00 : f32
    %392 = vector.shape_cast %385 : vector<2x1xi1> to vector<2x1xi1>
    %393 = vector.broadcast %392 : vector<2x1xi1> to vector<2x32xi1>
    %394 = vector.broadcast %cst_91 : f32 to vector<2x32xf32>
    %395 = arith.select %393, %383, %394 : vector<2x32xi1>, vector<2x32xf32>
    %396 = vector.shape_cast %395 : vector<2x32xf32> to vector<2x1x32xf32>
    %c0_92 = arith.constant 0 : index
    %c4_93 = arith.constant 4 : index
    %c0_94 = arith.constant 0 : index
    %397 = vector.load %arg13[%c0_92, %c4_93, %c0_94] : memref<2x8x32xf32, #tpu.memory_space<vmem>>, vector<2x1x32xf32>
    tpu.vector_store %arg13[%c0_92, %c4_93, %c0_94], %396 {strides = array<i32>} : memref<2x8x32xf32, #tpu.memory_space<vmem>>, vector<2x1x32xf32>,
    %398 = vector.extract_strided_slice %5 {offsets = [6, 128], sizes = [2, 128], strides = [1, 1]} : vector<16x256xf32> to vector<2x128xf32>
    %c0_95 = arith.constant 0 : index
    %c0_96 = arith.constant 0 : index
    %399 = vector.load %arg6[%c0_95, %c0_96] : memref<32x128xf32, #tpu.memory_space<vmem>>, vector<32x128xf32>
    %cst_97 = arith.constant dense<0.000000e+00> : vector<2x128xf32>
    %400 = tpu.matmul %345, %399, %cst_97 {dimension_numbers = #tpu.dot_dimension_numbers<[1], [0], [0], [1], [0, 0, 1, 1], [], []>} : vector<2x32xf32>, vector<32x128xf32>, vector<2x128xf32> -> vector<2x128xf32>
    %401 = arith.addf %398, %400 : vector<2x128xf32>
    %402 = vector.extract_strided_slice %401 {offsets = [0, 0], sizes = [2, 32], strides = [1, 1]} : vector<2x128xf32> to vector<2x32xf32>
    %403 = arith.negf %402 : vector<2x32xf32>
    %404 = math.exp %403 : vector<2x32xf32>
    %cst_98 = arith.constant 1.000000e+00 : f32
    %405 = vector.broadcast %cst_98 : f32 to vector<2x32xf32>
    %406 = arith.addf %405, %404 : vector<2x32xf32>
    %407 = arith.divf %405, %406 : vector<2x32xf32>
    %408 = vector.extract_strided_slice %401 {offsets = [0, 32], sizes = [2, 32], strides = [1, 1]} : vector<2x128xf32> to vector<2x32xf32>
    %409 = arith.negf %408 : vector<2x32xf32>
    %410 = math.exp %409 : vector<2x32xf32>
    %cst_99 = arith.constant 1.000000e+00 : f32
    %411 = vector.broadcast %cst_99 : f32 to vector<2x32xf32>
    %412 = arith.addf %411, %410 : vector<2x32xf32>
    %413 = arith.divf %411, %412 : vector<2x32xf32>
    %414 = vector.extract_strided_slice %401 {offsets = [0, 64], sizes = [2, 32], strides = [1, 1]} : vector<2x128xf32> to vector<2x32xf32>
    %415 = math.tanh %414 : vector<2x32xf32>
    %416 = vector.extract_strided_slice %401 {offsets = [0, 96], sizes = [2, 32], strides = [1, 1]} : vector<2x128xf32> to vector<2x32xf32>
    %417 = arith.negf %416 : vector<2x32xf32>
    %418 = math.exp %417 : vector<2x32xf32>
    %cst_100 = arith.constant 1.000000e+00 : f32
    %419 = vector.broadcast %cst_100 : f32 to vector<2x32xf32>
    %420 = arith.addf %419, %418 : vector<2x32xf32>
    %421 = arith.divf %419, %420 : vector<2x32xf32>
    %422 = arith.mulf %413, %348 : vector<2x32xf32>
    %423 = arith.mulf %407, %415 : vector<2x32xf32>
    %424 = arith.addf %422, %423 : vector<2x32xf32>
    %425 = math.tanh %424 : vector<2x32xf32>
    %426 = arith.mulf %421, %425 : vector<2x32xf32>
    %c3_i32_101 = arith.constant 3 : i32
    %427 = vector.broadcast %c3_i32_101 : i32 to vector<2x1xi32>
    %428 = arith.cmpi sgt, %6, %427 : vector<2x1xi32>
    %429 = vector.shape_cast %428 : vector<2x1xi1> to vector<2x1xi1>
    %430 = vector.broadcast %429 : vector<2x1xi1> to vector<2x32xi1>
    %431 = arith.select %430, %426, %345 : vector<2x32xi1>, vector<2x32xf32>
    %432 = vector.shape_cast %428 : vector<2x1xi1> to vector<2x1xi1>
    %433 = vector.broadcast %432 : vector<2x1xi1> to vector<2x32xi1>
    %434 = arith.select %433, %424, %348 : vector<2x32xi1>, vector<2x32xf32>
    %cst_102 = arith.constant 0.000000e+00 : f32
    %435 = vector.shape_cast %428 : vector<2x1xi1> to vector<2x1xi1>
    %436 = vector.broadcast %435 : vector<2x1xi1> to vector<2x32xi1>
    %437 = vector.broadcast %cst_102 : f32 to vector<2x32xf32>
    %438 = arith.select %436, %426, %437 : vector<2x32xi1>, vector<2x32xf32>
    %439 = vector.shape_cast %438 : vector<2x32xf32> to vector<2x1x32xf32>
    %c0_103 = arith.constant 0 : index
    %c3_104 = arith.constant 3 : index
    %c0_105 = arith.constant 0 : index
    %440 = vector.load %arg14[%c0_103, %c3_104, %c0_105] : memref<2x8x32xf32, #tpu.memory_space<vmem>>, vector<2x1x32xf32>
    tpu.vector_store %arg14[%c0_103, %c3_104, %c0_105], %439 {strides = array<i32>} : memref<2x8x32xf32, #tpu.memory_space<vmem>>, vector<2x1x32xf32>,
    %441 = vector.extract_strided_slice %5 {offsets = [10, 0], sizes = [2, 128], strides = [1, 1]} : vector<16x256xf32> to vector<2x128xf32>
    %c0_106 = arith.constant 0 : index
    %c0_107 = arith.constant 0 : index
    %442 = vector.load %arg5[%c0_106, %c0_107] : memref<32x128xf32, #tpu.memory_space<vmem>>, vector<32x128xf32>
    %cst_108 = arith.constant dense<0.000000e+00> : vector<2x128xf32>
    %443 = tpu.matmul %388, %442, %cst_108 {dimension_numbers = #tpu.dot_dimension_numbers<[1], [0], [0], [1], [0, 0, 1, 1], [], []>} : vector<2x32xf32>, vector<32x128xf32>, vector<2x128xf32> -> vector<2x128xf32>
    %444 = arith.addf %441, %443 : vector<2x128xf32>
    %445 = vector.extract_strided_slice %444 {offsets = [0, 0], sizes = [2, 32], strides = [1, 1]} : vector<2x128xf32> to vector<2x32xf32>
    %446 = arith.negf %445 : vector<2x32xf32>
    %447 = math.exp %446 : vector<2x32xf32>
    %cst_109 = arith.constant 1.000000e+00 : f32
    %448 = vector.broadcast %cst_109 : f32 to vector<2x32xf32>
    %449 = arith.addf %448, %447 : vector<2x32xf32>
    %450 = arith.divf %448, %449 : vector<2x32xf32>
    %451 = vector.extract_strided_slice %444 {offsets = [0, 32], sizes = [2, 32], strides = [1, 1]} : vector<2x128xf32> to vector<2x32xf32>
    %452 = arith.negf %451 : vector<2x32xf32>
    %453 = math.exp %452 : vector<2x32xf32>
    %cst_110 = arith.constant 1.000000e+00 : f32
    %454 = vector.broadcast %cst_110 : f32 to vector<2x32xf32>
    %455 = arith.addf %454, %453 : vector<2x32xf32>
    %456 = arith.divf %454, %455 : vector<2x32xf32>
    %457 = vector.extract_strided_slice %444 {offsets = [0, 64], sizes = [2, 32], strides = [1, 1]} : vector<2x128xf32> to vector<2x32xf32>
    %458 = math.tanh %457 : vector<2x32xf32>
    %459 = vector.extract_strided_slice %444 {offsets = [0, 96], sizes = [2, 32], strides = [1, 1]} : vector<2x128xf32> to vector<2x32xf32>
    %460 = arith.negf %459 : vector<2x32xf32>
    %461 = math.exp %460 : vector<2x32xf32>
    %cst_111 = arith.constant 1.000000e+00 : f32
    %462 = vector.broadcast %cst_111 : f32 to vector<2x32xf32>
    %463 = arith.addf %462, %461 : vector<2x32xf32>
    %464 = arith.divf %462, %463 : vector<2x32xf32>
    %465 = arith.mulf %456, %391 : vector<2x32xf32>
    %466 = arith.mulf %450, %458 : vector<2x32xf32>
    %467 = arith.addf %465, %466 : vector<2x32xf32>
    %468 = math.tanh %467 : vector<2x32xf32>
    %469 = arith.mulf %464, %468 : vector<2x32xf32>
    %c5_i32_112 = arith.constant 5 : i32
    %470 = vector.broadcast %c5_i32_112 : i32 to vector<2x1xi32>
    %471 = arith.cmpi sgt, %6, %470 : vector<2x1xi32>
    %472 = vector.shape_cast %471 : vector<2x1xi1> to vector<2x1xi1>
    %473 = vector.broadcast %472 : vector<2x1xi1> to vector<2x32xi1>
    %474 = arith.select %473, %469, %388 : vector<2x32xi1>, vector<2x32xf32>
    %475 = vector.shape_cast %471 : vector<2x1xi1> to vector<2x1xi1>
    %476 = vector.broadcast %475 : vector<2x1xi1> to vector<2x32xi1>
    %477 = arith.select %476, %467, %391 : vector<2x32xi1>, vector<2x32xf32>
    %cst_113 = arith.constant 0.000000e+00 : f32
    %478 = vector.shape_cast %471 : vector<2x1xi1> to vector<2x1xi1>
    %479 = vector.broadcast %478 : vector<2x1xi1> to vector<2x32xi1>
    %480 = vector.broadcast %cst_113 : f32 to vector<2x32xf32>
    %481 = arith.select %479, %469, %480 : vector<2x32xi1>, vector<2x32xf32>
    %482 = vector.shape_cast %481 : vector<2x32xf32> to vector<2x1x32xf32>
    %c0_114 = arith.constant 0 : index
    %c5_115 = arith.constant 5 : index
    %c0_116 = arith.constant 0 : index
    %483 = vector.load %arg13[%c0_114, %c5_115, %c0_116] : memref<2x8x32xf32, #tpu.memory_space<vmem>>, vector<2x1x32xf32>
    tpu.vector_store %arg13[%c0_114, %c5_115, %c0_116], %482 {strides = array<i32>} : memref<2x8x32xf32, #tpu.memory_space<vmem>>, vector<2x1x32xf32>,
    %484 = vector.extract_strided_slice %5 {offsets = [4, 128], sizes = [2, 128], strides = [1, 1]} : vector<16x256xf32> to vector<2x128xf32>
    %c0_117 = arith.constant 0 : index
    %c0_118 = arith.constant 0 : index
    %485 = vector.load %arg6[%c0_117, %c0_118] : memref<32x128xf32, #tpu.memory_space<vmem>>, vector<32x128xf32>
    %cst_119 = arith.constant dense<0.000000e+00> : vector<2x128xf32>
    %486 = tpu.matmul %431, %485, %cst_119 {dimension_numbers = #tpu.dot_dimension_numbers<[1], [0], [0], [1], [0, 0, 1, 1], [], []>} : vector<2x32xf32>, vector<32x128xf32>, vector<2x128xf32> -> vector<2x128xf32>
    %487 = arith.addf %484, %486 : vector<2x128xf32>
    %488 = vector.extract_strided_slice %487 {offsets = [0, 0], sizes = [2, 32], strides = [1, 1]} : vector<2x128xf32> to vector<2x32xf32>
    %489 = arith.negf %488 : vector<2x32xf32>
    %490 = math.exp %489 : vector<2x32xf32>
    %cst_120 = arith.constant 1.000000e+00 : f32
    %491 = vector.broadcast %cst_120 : f32 to vector<2x32xf32>
    %492 = arith.addf %491, %490 : vector<2x32xf32>
    %493 = arith.divf %491, %492 : vector<2x32xf32>
    %494 = vector.extract_strided_slice %487 {offsets = [0, 32], sizes = [2, 32], strides = [1, 1]} : vector<2x128xf32> to vector<2x32xf32>
    %495 = arith.negf %494 : vector<2x32xf32>
    %496 = math.exp %495 : vector<2x32xf32>
    %cst_121 = arith.constant 1.000000e+00 : f32
    %497 = vector.broadcast %cst_121 : f32 to vector<2x32xf32>
    %498 = arith.addf %497, %496 : vector<2x32xf32>
    %499 = arith.divf %497, %498 : vector<2x32xf32>
    %500 = vector.extract_strided_slice %487 {offsets = [0, 64], sizes = [2, 32], strides = [1, 1]} : vector<2x128xf32> to vector<2x32xf32>
    %501 = math.tanh %500 : vector<2x32xf32>
    %502 = vector.extract_strided_slice %487 {offsets = [0, 96], sizes = [2, 32], strides = [1, 1]} : vector<2x128xf32> to vector<2x32xf32>
    %503 = arith.negf %502 : vector<2x32xf32>
    %504 = math.exp %503 : vector<2x32xf32>
    %cst_122 = arith.constant 1.000000e+00 : f32
    %505 = vector.broadcast %cst_122 : f32 to vector<2x32xf32>
    %506 = arith.addf %505, %504 : vector<2x32xf32>
    %507 = arith.divf %505, %506 : vector<2x32xf32>
    %508 = arith.mulf %499, %434 : vector<2x32xf32>
    %509 = arith.mulf %493, %501 : vector<2x32xf32>
    %510 = arith.addf %508, %509 : vector<2x32xf32>
    %511 = math.tanh %510 : vector<2x32xf32>
    %512 = arith.mulf %507, %511 : vector<2x32xf32>
    %c2_i32_123 = arith.constant 2 : i32
    %513 = vector.broadcast %c2_i32_123 : i32 to vector<2x1xi32>
    %514 = arith.cmpi sgt, %6, %513 : vector<2x1xi32>
    %515 = vector.shape_cast %514 : vector<2x1xi1> to vector<2x1xi1>
    %516 = vector.broadcast %515 : vector<2x1xi1> to vector<2x32xi1>
    %517 = arith.select %516, %512, %431 : vector<2x32xi1>, vector<2x32xf32>
    %518 = vector.shape_cast %514 : vector<2x1xi1> to vector<2x1xi1>
    %519 = vector.broadcast %518 : vector<2x1xi1> to vector<2x32xi1>
    %520 = arith.select %519, %510, %434 : vector<2x32xi1>, vector<2x32xf32>
    %cst_124 = arith.constant 0.000000e+00 : f32
    %521 = vector.shape_cast %514 : vector<2x1xi1> to vector<2x1xi1>
    %522 = vector.broadcast %521 : vector<2x1xi1> to vector<2x32xi1>
    %523 = vector.broadcast %cst_124 : f32 to vector<2x32xf32>
    %524 = arith.select %522, %512, %523 : vector<2x32xi1>, vector<2x32xf32>
    %525 = vector.shape_cast %524 : vector<2x32xf32> to vector<2x1x32xf32>
    %c0_125 = arith.constant 0 : index
    %c2_126 = arith.constant 2 : index
    %c0_127 = arith.constant 0 : index
    %526 = vector.load %arg14[%c0_125, %c2_126, %c0_127] : memref<2x8x32xf32, #tpu.memory_space<vmem>>, vector<2x1x32xf32>
    tpu.vector_store %arg14[%c0_125, %c2_126, %c0_127], %525 {strides = array<i32>} : memref<2x8x32xf32, #tpu.memory_space<vmem>>, vector<2x1x32xf32>,
    %527 = vector.extract_strided_slice %5 {offsets = [12, 0], sizes = [2, 128], strides = [1, 1]} : vector<16x256xf32> to vector<2x128xf32>
    %c0_128 = arith.constant 0 : index
    %c0_129 = arith.constant 0 : index
    %528 = vector.load %arg5[%c0_128, %c0_129] : memref<32x128xf32, #tpu.memory_space<vmem>>, vector<32x128xf32>
    %cst_130 = arith.constant dense<0.000000e+00> : vector<2x128xf32>
    %529 = tpu.matmul %474, %528, %cst_130 {dimension_numbers = #tpu.dot_dimension_numbers<[1], [0], [0], [1], [0, 0, 1, 1], [], []>} : vector<2x32xf32>, vector<32x128xf32>, vector<2x128xf32> -> vector<2x128xf32>
    %530 = arith.addf %527, %529 : vector<2x128xf32>
    %531 = vector.extract_strided_slice %530 {offsets = [0, 0], sizes = [2, 32], strides = [1, 1]} : vector<2x128xf32> to vector<2x32xf32>
    %532 = arith.negf %531 : vector<2x32xf32>
    %533 = math.exp %532 : vector<2x32xf32>
    %cst_131 = arith.constant 1.000000e+00 : f32
    %534 = vector.broadcast %cst_131 : f32 to vector<2x32xf32>
    %535 = arith.addf %534, %533 : vector<2x32xf32>
    %536 = arith.divf %534, %535 : vector<2x32xf32>
    %537 = vector.extract_strided_slice %530 {offsets = [0, 32], sizes = [2, 32], strides = [1, 1]} : vector<2x128xf32> to vector<2x32xf32>
    %538 = arith.negf %537 : vector<2x32xf32>
    %539 = math.exp %538 : vector<2x32xf32>
    %cst_132 = arith.constant 1.000000e+00 : f32
    %540 = vector.broadcast %cst_132 : f32 to vector<2x32xf32>
    %541 = arith.addf %540, %539 : vector<2x32xf32>
    %542 = arith.divf %540, %541 : vector<2x32xf32>
    %543 = vector.extract_strided_slice %530 {offsets = [0, 64], sizes = [2, 32], strides = [1, 1]} : vector<2x128xf32> to vector<2x32xf32>
    %544 = math.tanh %543 : vector<2x32xf32>
    %545 = vector.extract_strided_slice %530 {offsets = [0, 96], sizes = [2, 32], strides = [1, 1]} : vector<2x128xf32> to vector<2x32xf32>
    %546 = arith.negf %545 : vector<2x32xf32>
    %547 = math.exp %546 : vector<2x32xf32>
    %cst_133 = arith.constant 1.000000e+00 : f32
    %548 = vector.broadcast %cst_133 : f32 to vector<2x32xf32>
    %549 = arith.addf %548, %547 : vector<2x32xf32>
    %550 = arith.divf %548, %549 : vector<2x32xf32>
    %551 = arith.mulf %542, %477 : vector<2x32xf32>
    %552 = arith.mulf %536, %544 : vector<2x32xf32>
    %553 = arith.addf %551, %552 : vector<2x32xf32>
    %554 = math.tanh %553 : vector<2x32xf32>
    %555 = arith.mulf %550, %554 : vector<2x32xf32>
    %c6_i32_134 = arith.constant 6 : i32
    %556 = vector.broadcast %c6_i32_134 : i32 to vector<2x1xi32>
    %557 = arith.cmpi sgt, %6, %556 : vector<2x1xi32>
    %558 = vector.shape_cast %557 : vector<2x1xi1> to vector<2x1xi1>
    %559 = vector.broadcast %558 : vector<2x1xi1> to vector<2x32xi1>
    %560 = arith.select %559, %555, %474 : vector<2x32xi1>, vector<2x32xf32>
    %561 = vector.shape_cast %557 : vector<2x1xi1> to vector<2x1xi1>
    %562 = vector.broadcast %561 : vector<2x1xi1> to vector<2x32xi1>
    %563 = arith.select %562, %553, %477 : vector<2x32xi1>, vector<2x32xf32>
    %cst_135 = arith.constant 0.000000e+00 : f32
    %564 = vector.shape_cast %557 : vector<2x1xi1> to vector<2x1xi1>
    %565 = vector.broadcast %564 : vector<2x1xi1> to vector<2x32xi1>
    %566 = vector.broadcast %cst_135 : f32 to vector<2x32xf32>
    %567 = arith.select %565, %555, %566 : vector<2x32xi1>, vector<2x32xf32>
    %568 = vector.shape_cast %567 : vector<2x32xf32> to vector<2x1x32xf32>
    %c0_136 = arith.constant 0 : index
    %c6_137 = arith.constant 6 : index
    %c0_138 = arith.constant 0 : index
    %569 = vector.load %arg13[%c0_136, %c6_137, %c0_138] : memref<2x8x32xf32, #tpu.memory_space<vmem>>, vector<2x1x32xf32>
    tpu.vector_store %arg13[%c0_136, %c6_137, %c0_138], %568 {strides = array<i32>} : memref<2x8x32xf32, #tpu.memory_space<vmem>>, vector<2x1x32xf32>,
    %570 = vector.extract_strided_slice %5 {offsets = [2, 128], sizes = [2, 128], strides = [1, 1]} : vector<16x256xf32> to vector<2x128xf32>
    %c0_139 = arith.constant 0 : index
    %c0_140 = arith.constant 0 : index
    %571 = vector.load %arg6[%c0_139, %c0_140] : memref<32x128xf32, #tpu.memory_space<vmem>>, vector<32x128xf32>
    %cst_141 = arith.constant dense<0.000000e+00> : vector<2x128xf32>
    %572 = tpu.matmul %517, %571, %cst_141 {dimension_numbers = #tpu.dot_dimension_numbers<[1], [0], [0], [1], [0, 0, 1, 1], [], []>} : vector<2x32xf32>, vector<32x128xf32>, vector<2x128xf32> -> vector<2x128xf32>
    %573 = arith.addf %570, %572 : vector<2x128xf32>
    %574 = vector.extract_strided_slice %573 {offsets = [0, 0], sizes = [2, 32], strides = [1, 1]} : vector<2x128xf32> to vector<2x32xf32>
    %575 = arith.negf %574 : vector<2x32xf32>
    %576 = math.exp %575 : vector<2x32xf32>
    %cst_142 = arith.constant 1.000000e+00 : f32
    %577 = vector.broadcast %cst_142 : f32 to vector<2x32xf32>
    %578 = arith.addf %577, %576 : vector<2x32xf32>
    %579 = arith.divf %577, %578 : vector<2x32xf32>
    %580 = vector.extract_strided_slice %573 {offsets = [0, 32], sizes = [2, 32], strides = [1, 1]} : vector<2x128xf32> to vector<2x32xf32>
    %581 = arith.negf %580 : vector<2x32xf32>
    %582 = math.exp %581 : vector<2x32xf32>
    %cst_143 = arith.constant 1.000000e+00 : f32
    %583 = vector.broadcast %cst_143 : f32 to vector<2x32xf32>
    %584 = arith.addf %583, %582 : vector<2x32xf32>
    %585 = arith.divf %583, %584 : vector<2x32xf32>
    %586 = vector.extract_strided_slice %573 {offsets = [0, 64], sizes = [2, 32], strides = [1, 1]} : vector<2x128xf32> to vector<2x32xf32>
    %587 = math.tanh %586 : vector<2x32xf32>
    %588 = vector.extract_strided_slice %573 {offsets = [0, 96], sizes = [2, 32], strides = [1, 1]} : vector<2x128xf32> to vector<2x32xf32>
    %589 = arith.negf %588 : vector<2x32xf32>
    %590 = math.exp %589 : vector<2x32xf32>
    %cst_144 = arith.constant 1.000000e+00 : f32
    %591 = vector.broadcast %cst_144 : f32 to vector<2x32xf32>
    %592 = arith.addf %591, %590 : vector<2x32xf32>
    %593 = arith.divf %591, %592 : vector<2x32xf32>
    %594 = arith.mulf %585, %520 : vector<2x32xf32>
    %595 = arith.mulf %579, %587 : vector<2x32xf32>
    %596 = arith.addf %594, %595 : vector<2x32xf32>
    %597 = math.tanh %596 : vector<2x32xf32>
    %598 = arith.mulf %593, %597 : vector<2x32xf32>
    %c1_i32_145 = arith.constant 1 : i32
    %599 = vector.broadcast %c1_i32_145 : i32 to vector<2x1xi32>
    %600 = arith.cmpi sgt, %6, %599 : vector<2x1xi32>
    %601 = vector.shape_cast %600 : vector<2x1xi1> to vector<2x1xi1>
    %602 = vector.broadcast %601 : vector<2x1xi1> to vector<2x32xi1>
    %603 = arith.select %602, %598, %517 : vector<2x32xi1>, vector<2x32xf32>
    %604 = vector.shape_cast %600 : vector<2x1xi1> to vector<2x1xi1>
    %605 = vector.broadcast %604 : vector<2x1xi1> to vector<2x32xi1>
    %606 = arith.select %605, %596, %520 : vector<2x32xi1>, vector<2x32xf32>
    %cst_146 = arith.constant 0.000000e+00 : f32
    %607 = vector.shape_cast %600 : vector<2x1xi1> to vector<2x1xi1>
    %608 = vector.broadcast %607 : vector<2x1xi1> to vector<2x32xi1>
    %609 = vector.broadcast %cst_146 : f32 to vector<2x32xf32>
    %610 = arith.select %608, %598, %609 : vector<2x32xi1>, vector<2x32xf32>
    %611 = vector.shape_cast %610 : vector<2x32xf32> to vector<2x1x32xf32>
    %c0_147 = arith.constant 0 : index
    %c1_148 = arith.constant 1 : index
    %c0_149 = arith.constant 0 : index
    %612 = vector.load %arg14[%c0_147, %c1_148, %c0_149] : memref<2x8x32xf32, #tpu.memory_space<vmem>>, vector<2x1x32xf32>
    tpu.vector_store %arg14[%c0_147, %c1_148, %c0_149], %611 {strides = array<i32>} : memref<2x8x32xf32, #tpu.memory_space<vmem>>, vector<2x1x32xf32>,
    %613 = vector.extract_strided_slice %5 {offsets = [14, 0], sizes = [2, 128], strides = [1, 1]} : vector<16x256xf32> to vector<2x128xf32>
    %c0_150 = arith.constant 0 : index
    %c0_151 = arith.constant 0 : index
    %614 = vector.load %arg5[%c0_150, %c0_151] : memref<32x128xf32, #tpu.memory_space<vmem>>, vector<32x128xf32>
    %cst_152 = arith.constant dense<0.000000e+00> : vector<2x128xf32>
    %615 = tpu.matmul %560, %614, %cst_152 {dimension_numbers = #tpu.dot_dimension_numbers<[1], [0], [0], [1], [0, 0, 1, 1], [], []>} : vector<2x32xf32>, vector<32x128xf32>, vector<2x128xf32> -> vector<2x128xf32>
    %616 = arith.addf %613, %615 : vector<2x128xf32>
    %617 = vector.extract_strided_slice %616 {offsets = [0, 0], sizes = [2, 32], strides = [1, 1]} : vector<2x128xf32> to vector<2x32xf32>
    %618 = arith.negf %617 : vector<2x32xf32>
    %619 = math.exp %618 : vector<2x32xf32>
    %cst_153 = arith.constant 1.000000e+00 : f32
    %620 = vector.broadcast %cst_153 : f32 to vector<2x32xf32>
    %621 = arith.addf %620, %619 : vector<2x32xf32>
    %622 = arith.divf %620, %621 : vector<2x32xf32>
    %623 = vector.extract_strided_slice %616 {offsets = [0, 32], sizes = [2, 32], strides = [1, 1]} : vector<2x128xf32> to vector<2x32xf32>
    %624 = arith.negf %623 : vector<2x32xf32>
    %625 = math.exp %624 : vector<2x32xf32>
    %cst_154 = arith.constant 1.000000e+00 : f32
    %626 = vector.broadcast %cst_154 : f32 to vector<2x32xf32>
    %627 = arith.addf %626, %625 : vector<2x32xf32>
    %628 = arith.divf %626, %627 : vector<2x32xf32>
    %629 = vector.extract_strided_slice %616 {offsets = [0, 64], sizes = [2, 32], strides = [1, 1]} : vector<2x128xf32> to vector<2x32xf32>
    %630 = math.tanh %629 : vector<2x32xf32>
    %631 = vector.extract_strided_slice %616 {offsets = [0, 96], sizes = [2, 32], strides = [1, 1]} : vector<2x128xf32> to vector<2x32xf32>
    %632 = arith.negf %631 : vector<2x32xf32>
    %633 = math.exp %632 : vector<2x32xf32>
    %cst_155 = arith.constant 1.000000e+00 : f32
    %634 = vector.broadcast %cst_155 : f32 to vector<2x32xf32>
    %635 = arith.addf %634, %633 : vector<2x32xf32>
    %636 = arith.divf %634, %635 : vector<2x32xf32>
    %637 = arith.mulf %628, %563 : vector<2x32xf32>
    %638 = arith.mulf %622, %630 : vector<2x32xf32>
    %639 = arith.addf %637, %638 : vector<2x32xf32>
    %640 = math.tanh %639 : vector<2x32xf32>
    %641 = arith.mulf %636, %640 : vector<2x32xf32>
    %c7_i32_156 = arith.constant 7 : i32
    %642 = vector.broadcast %c7_i32_156 : i32 to vector<2x1xi32>
    %643 = arith.cmpi sgt, %6, %642 : vector<2x1xi32>
    %644 = vector.shape_cast %643 : vector<2x1xi1> to vector<2x1xi1>
    %645 = vector.broadcast %644 : vector<2x1xi1> to vector<2x32xi1>
    %646 = arith.select %645, %641, %560 : vector<2x32xi1>, vector<2x32xf32>
    %647 = vector.shape_cast %643 : vector<2x1xi1> to vector<2x1xi1>
    %648 = vector.broadcast %647 : vector<2x1xi1> to vector<2x32xi1>
    %649 = arith.select %648, %639, %563 : vector<2x32xi1>, vector<2x32xf32>
    %cst_157 = arith.constant 0.000000e+00 : f32
    %650 = vector.shape_cast %643 : vector<2x1xi1> to vector<2x1xi1>
    %651 = vector.broadcast %650 : vector<2x1xi1> to vector<2x32xi1>
    %652 = vector.broadcast %cst_157 : f32 to vector<2x32xf32>
    %653 = arith.select %651, %641, %652 : vector<2x32xi1>, vector<2x32xf32>
    %654 = vector.shape_cast %653 : vector<2x32xf32> to vector<2x1x32xf32>
    %c0_158 = arith.constant 0 : index
    %c7_159 = arith.constant 7 : index
    %c0_160 = arith.constant 0 : index
    %655 = vector.load %arg13[%c0_158, %c7_159, %c0_160] : memref<2x8x32xf32, #tpu.memory_space<vmem>>, vector<2x1x32xf32>
    tpu.vector_store %arg13[%c0_158, %c7_159, %c0_160], %654 {strides = array<i32>} : memref<2x8x32xf32, #tpu.memory_space<vmem>>, vector<2x1x32xf32>,
    %656 = vector.extract_strided_slice %5 {offsets = [0, 128], sizes = [2, 128], strides = [1, 1]} : vector<16x256xf32> to vector<2x128xf32>
    %c0_161 = arith.constant 0 : index
    %c0_162 = arith.constant 0 : index
    %657 = vector.load %arg6[%c0_161, %c0_162] : memref<32x128xf32, #tpu.memory_space<vmem>>, vector<32x128xf32>
    %cst_163 = arith.constant dense<0.000000e+00> : vector<2x128xf32>
    %658 = tpu.matmul %603, %657, %cst_163 {dimension_numbers = #tpu.dot_dimension_numbers<[1], [0], [0], [1], [0, 0, 1, 1], [], []>} : vector<2x32xf32>, vector<32x128xf32>, vector<2x128xf32> -> vector<2x128xf32>
    %659 = arith.addf %656, %658 : vector<2x128xf32>
    %660 = vector.extract_strided_slice %659 {offsets = [0, 0], sizes = [2, 32], strides = [1, 1]} : vector<2x128xf32> to vector<2x32xf32>
    %661 = arith.negf %660 : vector<2x32xf32>
    %662 = math.exp %661 : vector<2x32xf32>
    %cst_164 = arith.constant 1.000000e+00 : f32
    %663 = vector.broadcast %cst_164 : f32 to vector<2x32xf32>
    %664 = arith.addf %663, %662 : vector<2x32xf32>
    %665 = arith.divf %663, %664 : vector<2x32xf32>
    %666 = vector.extract_strided_slice %659 {offsets = [0, 32], sizes = [2, 32], strides = [1, 1]} : vector<2x128xf32> to vector<2x32xf32>
    %667 = arith.negf %666 : vector<2x32xf32>
    %668 = math.exp %667 : vector<2x32xf32>
    %cst_165 = arith.constant 1.000000e+00 : f32
    %669 = vector.broadcast %cst_165 : f32 to vector<2x32xf32>
    %670 = arith.addf %669, %668 : vector<2x32xf32>
    %671 = arith.divf %669, %670 : vector<2x32xf32>
    %672 = vector.extract_strided_slice %659 {offsets = [0, 64], sizes = [2, 32], strides = [1, 1]} : vector<2x128xf32> to vector<2x32xf32>
    %673 = math.tanh %672 : vector<2x32xf32>
    %674 = vector.extract_strided_slice %659 {offsets = [0, 96], sizes = [2, 32], strides = [1, 1]} : vector<2x128xf32> to vector<2x32xf32>
    %675 = arith.negf %674 : vector<2x32xf32>
    %676 = math.exp %675 : vector<2x32xf32>
    %cst_166 = arith.constant 1.000000e+00 : f32
    %677 = vector.broadcast %cst_166 : f32 to vector<2x32xf32>
    %678 = arith.addf %677, %676 : vector<2x32xf32>
    %679 = arith.divf %677, %678 : vector<2x32xf32>
    %680 = arith.mulf %671, %606 : vector<2x32xf32>
    %681 = arith.mulf %665, %673 : vector<2x32xf32>
    %682 = arith.addf %680, %681 : vector<2x32xf32>
    %683 = math.tanh %682 : vector<2x32xf32>
    %684 = arith.mulf %679, %683 : vector<2x32xf32>
    %c0_i32_167 = arith.constant 0 : i32
    %685 = vector.broadcast %c0_i32_167 : i32 to vector<2x1xi32>
    %686 = arith.cmpi sgt, %6, %685 : vector<2x1xi32>
    %687 = vector.shape_cast %686 : vector<2x1xi1> to vector<2x1xi1>
    %688 = vector.broadcast %687 : vector<2x1xi1> to vector<2x32xi1>
    %689 = arith.select %688, %684, %603 : vector<2x32xi1>, vector<2x32xf32>
    %690 = vector.shape_cast %686 : vector<2x1xi1> to vector<2x1xi1>
    %691 = vector.broadcast %690 : vector<2x1xi1> to vector<2x32xi1>
    %692 = arith.select %691, %682, %606 : vector<2x32xi1>, vector<2x32xf32>
    %cst_168 = arith.constant 0.000000e+00 : f32
    %693 = vector.shape_cast %686 : vector<2x1xi1> to vector<2x1xi1>
    %694 = vector.broadcast %693 : vector<2x1xi1> to vector<2x32xi1>
    %695 = vector.broadcast %cst_168 : f32 to vector<2x32xf32>
    %696 = arith.select %694, %684, %695 : vector<2x32xi1>, vector<2x32xf32>
    %697 = vector.shape_cast %696 : vector<2x32xf32> to vector<2x1x32xf32>
    %c0_169 = arith.constant 0 : index
    %c0_170 = arith.constant 0 : index
    %c0_171 = arith.constant 0 : index
    %698 = vector.load %arg14[%c0_169, %c0_170, %c0_171] : memref<2x8x32xf32, #tpu.memory_space<vmem>>, vector<2x1x32xf32>
    tpu.vector_store %arg14[%c0_169, %c0_170, %c0_171], %697 {strides = array<i32>} : memref<2x8x32xf32, #tpu.memory_space<vmem>>, vector<2x1x32xf32>,
    %c0_172 = arith.constant 0 : index
    %c0_173 = arith.constant 0 : index
    %699 = vector.load %arg7[%c0_172, %c0_173] : memref<32x32xf32, #tpu.memory_space<vmem>>, vector<32x32xf32>
    %cst_174 = arith.constant dense<0.000000e+00> : vector<2x32xf32>
    %700 = tpu.matmul %646, %699, %cst_174 {dimension_numbers = #tpu.dot_dimension_numbers<[1], [0], [0], [1], [0, 0, 1, 1], [], []>} : vector<2x32xf32>, vector<32x32xf32>, vector<2x32xf32> -> vector<2x32xf32>
    %c0_175 = arith.constant 0 : index
    %c0_176 = arith.constant 0 : index
    %701 = vector.load %arg8[%c0_175, %c0_176] : memref<32x32xf32, #tpu.memory_space<vmem>>, vector<32x32xf32>
    %cst_177 = arith.constant dense<0.000000e+00> : vector<2x32xf32>
    %702 = tpu.matmul %689, %701, %cst_177 {dimension_numbers = #tpu.dot_dimension_numbers<[1], [0], [0], [1], [0, 0, 1, 1], [], []>} : vector<2x32xf32>, vector<32x32xf32>, vector<2x32xf32> -> vector<2x32xf32>
    %703 = arith.addf %700, %702 : vector<2x32xf32>
    %c0_178 = arith.constant 0 : index
    %c0_179 = arith.constant 0 : index
    %704 = vector.load %arg11[%c0_178, %c0_179] : memref<1x32xf32, #tpu.memory_space<vmem>>, vector<1x32xf32>
    %705 = vector.broadcast %704 : vector<1x32xf32> to vector<2x32xf32>
    %706 = arith.addf %703, %705 : vector<2x32xf32>
    %707 = math.tanh %706 : vector<2x32xf32>
    %c0_180 = arith.constant 0 : index
    %c0_181 = arith.constant 0 : index
    %708 = vector.load %arg15[%c0_180, %c0_181] : memref<2x32xf32, #tpu.memory_space<vmem>>, vector<2x32xf32>
    tpu.vector_store %arg15[%c0_180, %c0_181], %707 {strides = array<i32>} : memref<2x32xf32, #tpu.memory_space<vmem>>, vector<2x32xf32>,
    %c0_182 = arith.constant 0 : index
    %c0_183 = arith.constant 0 : index
    %709 = vector.load %arg9[%c0_182, %c0_183] : memref<32x32xf32, #tpu.memory_space<vmem>>, vector<32x32xf32>
    %cst_184 = arith.constant dense<0.000000e+00> : vector<2x32xf32>
    %710 = tpu.matmul %649, %709, %cst_184 {dimension_numbers = #tpu.dot_dimension_numbers<[1], [0], [0], [1], [0, 0, 1, 1], [], []>} : vector<2x32xf32>, vector<32x32xf32>, vector<2x32xf32> -> vector<2x32xf32>
    %c0_185 = arith.constant 0 : index
    %c0_186 = arith.constant 0 : index
    %711 = vector.load %arg10[%c0_185, %c0_186] : memref<32x32xf32, #tpu.memory_space<vmem>>, vector<32x32xf32>
    %cst_187 = arith.constant dense<0.000000e+00> : vector<2x32xf32>
    %712 = tpu.matmul %692, %711, %cst_187 {dimension_numbers = #tpu.dot_dimension_numbers<[1], [0], [0], [1], [0, 0, 1, 1], [], []>} : vector<2x32xf32>, vector<32x32xf32>, vector<2x32xf32> -> vector<2x32xf32>
    %713 = arith.addf %710, %712 : vector<2x32xf32>
    %c0_188 = arith.constant 0 : index
    %c0_189 = arith.constant 0 : index
    %714 = vector.load %arg12[%c0_188, %c0_189] : memref<1x32xf32, #tpu.memory_space<vmem>>, vector<1x32xf32>
    %715 = vector.broadcast %714 : vector<1x32xf32> to vector<2x32xf32>
    %716 = arith.addf %713, %715 : vector<2x32xf32>
    %717 = math.tanh %716 : vector<2x32xf32>
    %c0_190 = arith.constant 0 : index
    %c0_191 = arith.constant 0 : index
    %718 = vector.load %arg16[%c0_190, %c0_191] : memref<2x32xf32, #tpu.memory_space<vmem>>, vector<2x32xf32>
    tpu.vector_store %arg16[%c0_190, %c0_191], %717 {strides = array<i32>} : memref<2x32xf32, #tpu.memory_space<vmem>>, vector<2x32xf32>,
    return
  }
  func.func @transform_0(%arg0: i32) -> (i32, i32) {
    %c0_i32 = arith.constant 0 : i32
    %c0_i32_0 = arith.constant 0 : i32
    %c0_i32_1 = arith.constant 0 : i32
    return %c0_i32, %c0_i32_0 : i32, i32
  }
  func.func @transform_1(%arg0: i32) -> (i32, i32) {
    %c0_i32 = arith.constant 0 : i32
    %c0_i32_0 = arith.constant 0 : i32
    %c0_i32_1 = arith.constant 0 : i32
    return %c0_i32, %c0_i32_0 : i32, i32
  }
  func.func @transform_2(%arg0: i32) -> (i32, i32) {
    %c0_i32 = arith.constant 0 : i32
    %c0_i32_0 = arith.constant 0 : i32
    %c0_i32_1 = arith.constant 0 : i32
    return %c0_i32, %c0_i32_0 : i32, i32
  }
  func.func @transform_3(%arg0: i32) -> (i32, i32) {
    %c0_i32 = arith.constant 0 : i32
    %c0_i32_0 = arith.constant 0 : i32
    %c0_i32_1 = arith.constant 0 : i32
    return %c0_i32, %c0_i32_0 : i32, i32
  }
  func.func @transform_4(%arg0: i32) -> (i32, i32) {
    %c0_i32 = arith.constant 0 : i32
    %c0_i32_0 = arith.constant 0 : i32
    %c0_i32_1 = arith.constant 0 : i32
    return %c0_i32, %c0_i32_0 : i32, i32
  }
  func.func @transform_5(%arg0: i32) -> (i32, i32) {
    %c0_i32 = arith.constant 0 : i32
    %c0_i32_0 = arith.constant 0 : i32
    %c0_i32_1 = arith.constant 0 : i32
    return %c0_i32, %c0_i32_0 : i32, i32
  }
  func.func @transform_6(%arg0: i32) -> (i32, i32) {
    %c0_i32 = arith.constant 0 : i32
    %c0_i32_0 = arith.constant 0 : i32
    %c0_i32_1 = arith.constant 0 : i32
    return %c0_i32, %c0_i32_0 : i32, i32
  }
  func.func @transform_7(%arg0: i32) -> (i32, i32) {
    %c0_i32 = arith.constant 0 : i32
    %c0_i32_0 = arith.constant 0 : i32
    %c0_i32_1 = arith.constant 0 : i32
    return %c0_i32, %c0_i32_0 : i32, i32
  }
  func.func @transform_8(%arg0: i32) -> (i32, i32) {
    %c0_i32 = arith.constant 0 : i32
    %c0_i32_0 = arith.constant 0 : i32
    %c0_i32_1 = arith.constant 0 : i32
    return %c0_i32, %c0_i32_0 : i32, i32
  }
  func.func @transform_9(%arg0: i32) -> (i32, i32) {
    %c0_i32 = arith.constant 0 : i32
    %c0_i32_0 = arith.constant 0 : i32
    %c0_i32_1 = arith.constant 0 : i32
    return %c0_i32, %c0_i32_0 : i32, i32
  }
  func.func @transform_10(%arg0: i32) -> (i32, i32) {
    %c0_i32 = arith.constant 0 : i32
    %c0_i32_0 = arith.constant 0 : i32
    %c0_i32_1 = arith.constant 0 : i32
    return %c0_i32, %c0_i32_0 : i32, i32
  }
  func.func @transform_11(%arg0: i32) -> (i32, i32) {
    %c0_i32 = arith.constant 0 : i32
    %c0_i32_0 = arith.constant 0 : i32
    %c0_i32_1 = arith.constant 0 : i32
    return %c0_i32, %c0_i32_0 : i32, i32
  }
  func.func @transform_12(%arg0: i32) -> (i32, i32, i32) {
    %c0_i32 = arith.constant 0 : i32
    %c0_i32_0 = arith.constant 0 : i32
    %c0_i32_1 = arith.constant 0 : i32
    %c0_i32_2 = arith.constant 0 : i32
    return %c0_i32, %c0_i32_0, %c0_i32_1 : i32, i32, i32
  }
  func.func @transform_13(%arg0: i32) -> (i32, i32, i32) {
    %c0_i32 = arith.constant 0 : i32
    %c0_i32_0 = arith.constant 0 : i32
    %c0_i32_1 = arith.constant 0 : i32
    %c0_i32_2 = arith.constant 0 : i32
    return %c0_i32, %c0_i32_0, %c0_i32_1 : i32, i32, i32
  }
  func.func @transform_14(%arg0: i32) -> (i32, i32) {
    %c0_i32 = arith.constant 0 : i32
    %c0_i32_0 = arith.constant 0 : i32
    %c0_i32_1 = arith.constant 0 : i32
    return %c0_i32, %c0_i32_0 : i32, i32
  }
  func.func @transform_15(%arg0: i32) -> (i32, i32) {
    %c0_i32 = arith.constant 0 : i32
    %c0_i32_0 = arith.constant 0 : i32
    %c0_i32_1 = arith.constant 0 : i32
    return %c0_i32, %c0_i32_0 : i32, i32
  }
}

</mosaic_0001>

<llo_original>
// kernel: attention_seq2seq_forward.2
$region0: #{attention_seq2seq_forward.2}
  #allocation0 [shape = 'u32[]', space=smem, size = 0x4, offset = 0x4, fixed_abs, tag = 'smem constant byte address 0x4 - core index']
  #allocation1 [shape = 'u32[144,128]{1,0:T(1,128)}', space=vmem, size = 0x12000, scoped, tag = 'internal scratch']
  %s0 = inlined_call_operand.vmem [shape: f32[16,16], index: 0, kind: input, shape index: {}]
  %s1 = inlined_call_operand.vmem [shape: s32[2,1], index: 1, kind: input, shape index: {}]
  %s2 = inlined_call_operand.vmem [shape: f32[16,256], index: 2, kind: input, shape index: {}]
  %s3 = inlined_call_operand.vmem [shape: f32[1,256], index: 3, kind: input, shape index: {}]
  %s4 = inlined_call_operand.vmem [shape: f32[32,128], index: 4, kind: input, shape index: {}]
  %s5 = inlined_call_operand.vmem [shape: f32[32,128], index: 5, kind: input, shape index: {}]
  %s6 = inlined_call_operand.vmem [shape: f32[32,32], index: 6, kind: input, shape index: {}]
  %s7 = inlined_call_operand.vmem [shape: f32[32,32], index: 7, kind: input, shape index: {}]
  %s8 = inlined_call_operand.vmem [shape: f32[32,32], index: 8, kind: input, shape index: {}]
  %s9 = inlined_call_operand.vmem [shape: f32[32,32], index: 9, kind: input, shape index: {}]
  %s10 = inlined_call_operand.vmem [shape: f32[1,32], index: 10, kind: input, shape index: {}]
  %s11 = inlined_call_operand.vmem [shape: f32[1,32], index: 11, kind: input, shape index: {}]
  %s12 = inlined_call_operand.vmem [shape: f32[2,8,32], index: 12, kind: output, shape index: {0}]
  %s13 = inlined_call_operand.vmem [shape: f32[2,8,32], index: 13, kind: output, shape index: {1}]
  %s14 = inlined_call_operand.vmem [shape: f32[2,32], index: 14, kind: output, shape index: {2}]
  %s15 = inlined_call_operand.vmem [shape: f32[2,32], index: 15, kind: output, shape index: {3}]
  %16 = xla_tuple %s12, %s13, %s14, %s15
  %s17 = sld [smem:[#allocation0]]
  $region82: #{attention_seq2seq_forward.2} parent=0
    _
  %s19 = ssub.s32 1, %s17
  %s20 = scalar_select 0, %s19, %s17
  // Predicated region
  $region2: #{attention_seq2seq_forward.2} parent=0 // pred_check
    _
  $region3: #{attention_seq2seq_forward.2} parent=0 // pred_check_branch
    %22 = sbr.rel (0) target = $region5
  $region4: #{attention_seq2seq_forward.2} parent=0 // pred_region
    _
  $region5: #{attention_seq2seq_forward.2} parent=0 // pred_fallthru
    _
  // Predicated region
  $region6: #{attention_seq2seq_forward.2} parent=0 // pred_check
    _
  $region7: #{attention_seq2seq_forward.2} parent=0 // pred_check_branch
    %24 = sbr.rel (0) target = $region9
  $region8: #{attention_seq2seq_forward.2} parent=0 // pred_region
    _
  $region9: #{attention_seq2seq_forward.2} parent=0 // pred_fallthru
    _
  // Predicated region
  $region10: #{attention_seq2seq_forward.2} parent=0 // pred_check
    _
  $region11: #{attention_seq2seq_forward.2} parent=0 // pred_check_branch
    %26 = sbr.rel (0) target = $region13
  $region12: #{attention_seq2seq_forward.2} parent=0 // pred_region
    _
  $region13: #{attention_seq2seq_forward.2} parent=0 // pred_fallthru
    _
  // Predicated region
  $region14: #{attention_seq2seq_forward.2} parent=0 // pred_check
    _
  $region15: #{attention_seq2seq_forward.2} parent=0 // pred_check_branch
    %28 = sbr.rel (0) target = $region17
  $region16: #{attention_seq2seq_forward.2} parent=0 // pred_region
    _
  $region17: #{attention_seq2seq_forward.2} parent=0 // pred_fallthru
    _
  // Predicated region
  $region18: #{attention_seq2seq_forward.2} parent=0 // pred_check
    _
  $region19: #{attention_seq2seq_forward.2} parent=0 // pred_check_branch
    %30 = sbr.rel (0) target = $region21
  $region20: #{attention_seq2seq_forward.2} parent=0 // pred_region
    _
  $region21: #{attention_seq2seq_forward.2} parent=0 // pred_fallthru
    _
  // Predicated region
  $region22: #{attention_seq2seq_forward.2} parent=0 // pred_check
    _
  $region23: #{attention_seq2seq_forward.2} parent=0 // pred_check_branch
    %32 = sbr.rel (0) target = $region25
  $region24: #{attention_seq2seq_forward.2} parent=0 // pred_region
    _
  $region25: #{attention_seq2seq_forward.2} parent=0 // pred_fallthru
    _
  // Predicated region
  $region26: #{attention_seq2seq_forward.2} parent=0 // pred_check
    _
  $region27: #{attention_seq2seq_forward.2} parent=0 // pred_check_branch
    %34 = sbr.rel (0) target = $region29
  $region28: #{attention_seq2seq_forward.2} parent=0 // pred_region
    _
  $region29: #{attention_seq2seq_forward.2} parent=0 // pred_fallthru
    _
  // Predicated region
  $region30: #{attention_seq2seq_forward.2} parent=0 // pred_check
    _
  $region31: #{attention_seq2seq_forward.2} parent=0 // pred_check_branch
    %36 = sbr.rel (0) target = $region33
  $region32: #{attention_seq2seq_forward.2} parent=0 // pred_region
    _
  $region33: #{attention_seq2seq_forward.2} parent=0 // pred_fallthru
    _
  // Predicated region
  $region34: #{attention_seq2seq_forward.2} parent=0 // pred_check
    _
  $region35: #{attention_seq2seq_forward.2} parent=0 // pred_check_branch
    %38 = sbr.rel (0) target = $region37
  $region36: #{attention_seq2seq_forward.2} parent=0 // pred_region
    _
  $region37: #{attention_seq2seq_forward.2} parent=0 // pred_fallthru
    _
  // Predicated region
  $region38: #{attention_seq2seq_forward.2} parent=0 // pred_check
    _
  $region39: #{attention_seq2seq_forward.2} parent=0 // pred_check_branch
    %40 = sbr.rel (0) target = $region41
  $region40: #{attention_seq2seq_forward.2} parent=0 // pred_region
    _
  $region41: #{attention_seq2seq_forward.2} parent=0 // pred_fallthru
    _
  // Predicated region
  $region42: #{attention_seq2seq_forward.2} parent=0 // pred_check
    _
  $region43: #{attention_seq2seq_forward.2} parent=0 // pred_check_branch
    %42 = sbr.rel (0) target = $region45
  $region44: #{attention_seq2seq_forward.2} parent=0 // pred_region
    _
  $region45: #{attention_seq2seq_forward.2} parent=0 // pred_fallthru
    _
  // Predicated region
  $region46: #{attention_seq2seq_forward.2} parent=0 // pred_check
    _
  $region47: #{attention_seq2seq_forward.2} parent=0 // pred_check_branch
    %44 = sbr.rel (0) target = $region49
  $region48: #{attention_seq2seq_forward.2} parent=0 // pred_region
    _
  $region49: #{attention_seq2seq_forward.2} parent=0 // pred_fallthru
    _
  %v45 = vld [vmem:[%s0] sm:$0xff]
  %v46 = vld [vmem:[%s0 + $0x8] sm:$0xff]
  %v47 = vld [vmem:[%s2] sm:$0xff]
  %v48 = vld [vmem:[%s2 + $0x8] sm:$0xff]
  %v49 = vld [vmem:[%s2 + $0x10] sm:$0xff]
  %v50 = vld [vmem:[%s2 + $0x18] sm:$0xff]
  %v51 = vld [vmem:[%s3] sm:$0x3]
  %v53 = vlaneseq
  %v54 = vshrl.u32 %v53, 7
  %v55 = vsub.s32 0, %v54
  %v56 = vrot.slane %v51, %v55
  %v57 = vlaneseq
  %v58 = vshrl.u32 %v57, 7
  %v59 = vsub.s32 1, %v58
  %v60 = vrot.slane %v51, %v59
  %vm63 = vcmask 130048
  %v65 = vsel %vm63, %v45, 0
  %v68 = vsel %vm63, %v46, 0
  %70 = vmatprep.subr.mxu0 0.0
  %71 = vmatpush1.msra.mxu0 0.0
  %72 = vmatprep.subr.mxu0 0.0
  %73 = vmatpush1.msra.mxu0 0.0
  %74 = vmatprep.subr.mxu0 0.0
  %75 = vmatpush1.msra.mxu0 0.0
  %76 = vmatprep.subr.mxu0 0.0
  %77 = vmatpush1.msra.mxu0 0.0
  %78 = vmatprep.subr.mxu0 0.0
  %79 = vmatpush1.msra.mxu0 0.0
  %80 = vmatprep.subr.mxu0 0.0
  %81 = vmatpush1.msra.mxu0 0.0
  %82 = vmatprep.subr.mxu0 0.0
  %83 = vmatpush1.msra.mxu0 0.0
  %84 = vmatprep.subr.mxu0 0.0
  %85 = vmatpush1.msra.mxu0 0.0
  %86 = vmatprep.subr.mxu0 0.0
  %87 = vmatpush1.msra.mxu0 0.0
  %88 = vmatprep.subr.mxu0 0.0
  %89 = vmatpush1.msra.mxu0 0.0
  %90 = vmatprep.subr.mxu0 0.0
  %91 = vmatpush1.msra.mxu0 0.0
  %92 = vmatprep.subr.mxu0 0.0
  %93 = vmatpush1.msra.mxu0 0.0
  %94 = vmatprep.subr.mxu0 0.0
  %95 = vmatpush1.msra.mxu0 0.0
  %96 = vmatprep.subr.mxu0 0.0
  %97 = vmatpush1.msra.mxu0 0.0
  %98 = vmatprep.subr.mxu0 %v50
  %99 = vmatpush1.msra.mxu0 %v49
  %100 = vmatprep.subr.mxu0 %v48
  %101 = vmatpush1.msra.mxu0 %v47
  %102 = vmatprep.subr.mxu0 0.0
  %103 = vmatpush2.msra.mxu0 0.0
  %104 = vmatprep.subr.mxu0 0.0
  %105 = vmatpush2.msra.mxu0 0.0
  %106 = vmatprep.subr.mxu0 0.0
  %107 = vmatpush2.msra.mxu0 0.0
  %108 = vmatprep.subr.mxu0 0.0
  %109 = vmatpush2.msra.mxu0 0.0
  %110 = vmatprep.subr.mxu0 0.0
  %111 = vmatpush2.msra.mxu0 0.0
  %112 = vmatprep.subr.mxu0 0.0
  %113 = vmatpush2.msra.mxu0 0.0
  %114 = vmatprep.subr.mxu0 0.0
  %115 = vmatpush2.msra.mxu0 0.0
  %116 = vmatprep.subr.mxu0 0.0
  %117 = vmatpush2.msra.mxu0 0.0
  %118 = vmatprep.subr.mxu0 0.0
  %119 = vmatpush2.msra.mxu0 0.0
  %120 = vmatprep.subr.mxu0 0.0
  %121 = vmatpush2.msra.mxu0 0.0
  %122 = vmatprep.subr.mxu0 0.0
  %123 = vmatpush2.msra.mxu0 0.0
  %124 = vmatprep.subr.mxu0 0.0
  %125 = vmatpush2.msra.mxu0 0.0
  %126 = vmatprep.subr.mxu0 0.0
  %127 = vmatpush2.msra.mxu0 0.0
  %128 = vmatprep.subr.mxu0 0.0
  %129 = vmatpush2.msra.mxu0 0.0
  %130 = vmatprep.subr.mxu0 0.0
  %131 = vmatpush2.msra.mxu0 0.0
  %132 = vmatprep.subr.mxu0 0.0
  %133 = vmatpush2.msra.mxu0 0.0
  %134 = vmatprep.mubr.f32.mxu0 0.0
  %135 = vmatmul.mubr.f32.gmra.mxu0 %v65
  %v136 = vpop.f32.mrf.mxu0
  %v137 = vadd.f32 %v56, %v136
  %v138 = vpop.f32.mrf.mxu0
  %v139 = vadd.f32 %v60, %v138
  %140 = vmatprep.mubr.f32.mxu0 0.0
  %141 = vmatmul.mubr.f32.gmra.mxu0 %v68
  %v142 = vpop.f32.mrf.mxu0
  %v143 = vadd.f32 %v56, %v142
  %v144 = vpop.f32.mrf.mxu0
  %v145 = vadd.f32 %v60, %v144
  %146 = vdwg.mxu0
  %v147 = vld [vmem:[%s1] sm:$0x3]
  %v148 = vld [vmem:[%s4] sm:$0xff]
  %v149 = vld [vmem:[%s4 + $0x8] sm:$0xff]
  %v150 = vld [vmem:[%s4 + $0x10] sm:$0xff]
  %v151 = vld [vmem:[%s4 + $0x18] sm:$0xff]
  %vm152 = vcmask 261120
  %v154 = vsel %vm152, 0.0, 0
  %156 = vmatprep.subr.mxu0 0.0
  %157 = vmatpush1.msra.mxu0 0.0
  %158 = vmatprep.subr.mxu0 0.0
  %159 = vmatpush1.msra.mxu0 0.0
  %160 = vmatprep.subr.mxu0 0.0
  %161 = vmatpush1.msra.mxu0 0.0
  %162 = vmatprep.subr.mxu0 0.0
  %163 = vmatpush1.msra.mxu0 0.0
  %164 = vmatprep.subr.mxu0 0.0
  %165 = vmatpush1.msra.mxu0 0.0
  %166 = vmatprep.subr.mxu0 0.0
  %167 = vmatpush1.msra.mxu0 0.0
  %168 = vmatprep.subr.mxu0 0.0
  %169 = vmatpush1.msra.mxu0 0.0
  %170 = vmatprep.subr.mxu0 0.0
  %171 = vmatpush1.msra.mxu0 0.0
  %172 = vmatprep.subr.mxu0 0.0
  %173 = vmatpush1.msra.mxu0 0.0
  %174 = vmatprep.subr.mxu0 0.0
  %175 = vmatpush1.msra.mxu0 0.0
  %176 = vmatprep.subr.mxu0 0.0
  %177 = vmatpush1.msra.mxu0 0.0
  %178 = vmatprep.subr.mxu0 0.0
  %179 = vmatpush1.msra.mxu0 0.0
  %180 = vmatprep.subr.mxu0 0.0
  %181 = vmatpush1.msra.mxu0 %v151
  %182 = vmatprep.subr.mxu0 0.0
  %183 = vmatpush1.msra.mxu0 %v150
  %184 = vmatprep.subr.mxu0 0.0
  %185 = vmatpush1.msra.mxu0 %v149
  %186 = vmatprep.subr.mxu0 0.0
  %187 = vmatpush1.msra.mxu0 %v148
  %188 = vmatprep.subr.mxu0 0.0
  %189 = vmatpush2.msra.mxu0 0.0
  %190 = vmatprep.subr.mxu0 0.0
  %191 = vmatpush2.msra.mxu0 0.0
  %192 = vmatprep.subr.mxu0 0.0
  %193 = vmatpush2.msra.mxu0 0.0
  %194 = vmatprep.subr.mxu0 0.0
  %195 = vmatpush2.msra.mxu0 0.0
  %196 = vmatprep.subr.mxu0 0.0
  %197 = vmatpush2.msra.mxu0 0.0
  %198 = vmatprep.subr.mxu0 0.0
  %199 = vmatpush2.msra.mxu0 0.0
  %200 = vmatprep.subr.mxu0 0.0
  %201 = vmatpush2.msra.mxu0 0.0
  %202 = vmatprep.subr.mxu0 0.0
  %203 = vmatpush2.msra.mxu0 0.0
  %204 = vmatprep.subr.mxu0 0.0
  %205 = vmatpush2.msra.mxu0 0.0
  %206 = vmatprep.subr.mxu0 0.0
  %207 = vmatpush2.msra.mxu0 0.0
  %208 = vmatprep.subr.mxu0 0.0
  %209 = vmatpush2.msra.mxu0 0.0
  %210 = vmatprep.subr.mxu0 0.0
  %211 = vmatpush2.msra.mxu0 0.0
  %212 = vmatprep.subr.mxu0 0.0
  %213 = vmatpush2.msra.mxu0 0.0
  %214 = vmatprep.subr.mxu0 0.0
  %215 = vmatpush2.msra.mxu0 0.0
  %216 = vmatprep.subr.mxu0 0.0
  %217 = vmatpush2.msra.mxu0 0.0
  %218 = vmatprep.subr.mxu0 0.0
  %219 = vmatpush2.msra.mxu0 0.0
  %220 = vmatprep.mubr.f32.mxu0 0.0
  %221 = vmatmul.mubr.f32.gmra.mxu0 %v154
  %v222 = vpop.f32.mrf.mxu0
  %v223 = vadd.f32 0.0, %v222
  %v224 = vpop.f32.mrf.mxu0
  %225 = vdwg.mxu0
  %v226 = vadd.f32 %v137, %v223
  %v227 = vxor.u32 %v226, 2147483648
  %v228 = vmul.f32 %v227, 1.442695
  %v229 = vpow.pop %v228
  %v230 = vadd.f32 %v229, 1.0
  %v231 = vrcp.pop %v230
  %v232 = vmul.f32 1.0, %v231
  %v233 = vtanh.pop %v226
  %v234 = vmul.f32 %v232, 0.0
  %236 = vrot.lane.b32.xlu0 %v233, 64
  %v237 = vpop.permute.xlu0 %236
  %v239 = vmul.f32 %v232, %v237
  %241 = vrot.lane.b32.xlu0 %v239, 32
  %v242 = vpop.permute.xlu0 %241
  %v244 = vadd.f32 %v234, %v242
  %v245 = vtanh.pop %v244
  %247 = vrot.lane.b32.xlu0 %v245, 64
  %v248 = vpop.permute.xlu0 %247
  %v250 = vmul.f32 %v232, %v248
  %vm251 = vcmp.gt.s32.totalorder %v147, 0
  %v252 = vsel %vm251, 1, 0
  %253 = vset.pattern.permute.xlu0 0
  %254 = vperm.xlu0 %253, %v252
  %v255 = vpop.permute.xlu0 %254
  %vm256 = vcmp.eq.s32.totalorder %v255, 1
  %v257 = vsel %vm256, %v250, 0.0
  %v258 = vsel %vm256, %v244, 0.0
  %v261 = vunpack.c.l.s4 1966171168
  %v262 = vunpack.c.0.s8 %v261
  %v263 = vlaneseq
  %v264 = vshrl.u32 %v263, 7
  %v265 = vsub.s32 %v262, %v264
  %v266 = vrot.slane %v257, %v265
  %v267 = vcombine.high %v266, %v266
  %v269 = vunpack.c.l.s4 1966171168
  %v270 = vunpack.c.0.s8 %v269
  %v271 = vlaneseq
  %v272 = vshrl.u32 %v271, 7
  %v273 = vsub.s32 %v270, %v272
  %v274 = vrot.slane %v266, %v273
  %v276 = vunpack.c.l.s4 1966171168
  %v277 = vunpack.c.0.s8 %v276
  %v278 = vlaneseq
  %v279 = vshrl.u32 %v278, 7
  %v280 = vsub.s32 %v277, %v279
  %v281 = vrot.slane %v267, %v280
  %v282 = vlaneseq
  %v283 = vshrl.u32 %v282, 7
  %v284 = vsub.s32 0, %v283
  %v285 = vrot.slane %v274, %v284
  %v286 = vlaneseq
  %v287 = vshrl.u32 %v286, 7
  %v288 = vsub.s32 0, %v287
  %v289 = vrot.slane %v281, %v288
  %290 = vrot.lane.b32.xlu0 %v285, 32
  %v291 = vpop.permute.xlu0 %290
  %292 = vrot.lane.b32.xlu0 %v289, 32
  %v293 = vpop.permute.xlu0 %292
  %vm296 = vcmask 253952
  %297 = vst.msk [vmem:[%s12] sm:$0x1] %vm296, %v291
  %298 = vst.msk [vmem:[%s12 + $0x8] sm:$0x1] %vm296, %v293
  %v299 = vld [vmem:[%s5] sm:$0xff]
  %v300 = vld [vmem:[%s5 + $0x8] sm:$0xff]
  %v301 = vld [vmem:[%s5 + $0x10] sm:$0xff]
  %v302 = vld [vmem:[%s5 + $0x18] sm:$0xff]
  %303 = vmatprep.subr.mxu0 0.0
  %304 = vmatpush1.msra.mxu0 0.0
  %305 = vmatprep.subr.mxu0 0.0
  %306 = vmatpush1.msra.mxu0 0.0
  %307 = vmatprep.subr.mxu0 0.0
  %308 = vmatpush1.msra.mxu0 0.0
  %309 = vmatprep.subr.mxu0 0.0
  %310 = vmatpush1.msra.mxu0 0.0
  %311 = vmatprep.subr.mxu0 0.0
  %312 = vmatpush1.msra.mxu0 0.0
  %313 = vmatprep.subr.mxu0 0.0
  %314 = vmatpush1.msra.mxu0 0.0
  %315 = vmatprep.subr.mxu0 0.0
  %316 = vmatpush1.msra.mxu0 0.0
  %317 = vmatprep.subr.mxu0 0.0
  %318 = vmatpush1.msra.mxu0 0.0
  %319 = vmatprep.subr.mxu0 0.0
  %320 = vmatpush1.msra.mxu0 0.0
  %321 = vmatprep.subr.mxu0 0.0
  %322 = vmatpush1.msra.mxu0 0.0
  %323 = vmatprep.subr.mxu0 0.0
  %324 = vmatpush1.msra.mxu0 0.0
  %325 = vmatprep.subr.mxu0 0.0
  %326 = vmatpush1.msra.mxu0 0.0
  %327 = vmatprep.subr.mxu0 0.0
  %328 = vmatpush1.msra.mxu0 %v302
  %329 = vmatprep.subr.mxu0 0.0
  %330 = vmatpush1.msra.mxu0 %v301
  %331 = vmatprep.subr.mxu0 0.0
  %332 = vmatpush1.msra.mxu0 %v300
  %333 = vmatprep.subr.mxu0 0.0
  %334 = vmatpush1.msra.mxu0 %v299
  %335 = vmatprep.subr.mxu0 0.0
  %336 = vmatpush2.msra.mxu0 0.0
  %337 = vmatprep.subr.mxu0 0.0
  %338 = vmatpush2.msra.mxu0 0.0
  %339 = vmatprep.subr.mxu0 0.0
  %340 = vmatpush2.msra.mxu0 0.0
  %341 = vmatprep.subr.mxu0 0.0
  %342 = vmatpush2.msra.mxu0 0.0
  %343 = vmatprep.subr.mxu0 0.0
  %344 = vmatpush2.msra.mxu0 0.0
  %345 = vmatprep.subr.mxu0 0.0
  %346 = vmatpush2.msra.mxu0 0.0
  %347 = vmatprep.subr.mxu0 0.0
  %348 = vmatpush2.msra.mxu0 0.0
  %349 = vmatprep.subr.mxu0 0.0
  %350 = vmatpush2.msra.mxu0 0.0
  %351 = vmatprep.subr.mxu0 0.0
  %352 = vmatpush2.msra.mxu0 0.0
  %353 = vmatprep.subr.mxu0 0.0
  %354 = vmatpush2.msra.mxu0 0.0
  %355 = vmatprep.subr.mxu0 0.0
  %356 = vmatpush2.msra.mxu0 0.0
  %357 = vmatprep.subr.mxu0 0.0
  %358 = vmatpush2.msra.mxu0 0.0
  %359 = vmatprep.subr.mxu0 0.0
  %360 = vmatpush2.msra.mxu0 0.0
  %361 = vmatprep.subr.mxu0 0.0
  %362 = vmatpush2.msra.mxu0 0.0
  %363 = vmatprep.subr.mxu0 0.0
  %364 = vmatpush2.msra.mxu0 0.0
  %365 = vmatprep.subr.mxu0 0.0
  %366 = vmatpush2.msra.mxu0 0.0
  %367 = vmatprep.mubr.f32.mxu0 0.0
  %368 = vmatmul.mubr.f32.gmra.mxu0 %v154
  %v369 = vpop.f32.mrf.mxu0
  %v370 = vadd.f32 0.0, %v369
  %v371 = vpop.f32.mrf.mxu0
  %372 = vdwg.mxu0
  %v374 = vrot.slane %v370, 2
  %v376 = vadd.f32 %v145, %v374
  %v377 = vxor.u32 %v376, 2147483648
  %v378 = vmul.f32 %v377, 1.442695
  %v379 = vpow.pop %v378
  %v380 = vadd.f32 %v379, 1.0
  %v381 = vrcp.pop %v380
  %v382 = vmul.f32 1.0, %v381
  %v383 = vtanh.pop %v376
  %v384 = vmul.f32 %v382, 0.0
  %386 = vrot.lane.b32.xlu0 %v383, 64
  %v387 = vpop.permute.xlu0 %386
  %v389 = vmul.f32 %v382, %v387
  %391 = vrot.lane.b32.xlu0 %v389, 32
  %v392 = vpop.permute.xlu0 %391
  %v394 = vadd.f32 %v384, %v392
  %v395 = vtanh.pop %v394
  %397 = vrot.lane.b32.xlu0 %v395, 64
  %v398 = vpop.permute.xlu0 %397
  %v400 = vmul.f32 %v382, %v398
  %vm401 = vcmp.gt.s32.totalorder %v147, 7
  %v402 = vsel %vm401, 1, 0
  %403 = vset.pattern.permute.xlu0 0
  %404 = vperm.xlu0 %403, %v402
  %v405 = vpop.permute.xlu0 %404
  %vm406 = vcmp.eq.s32.totalorder %v405, 1
  %v408 = vrot.slane %v400, 6
  %409 = vrot.lane.b32.xlu0 %v408, 32
  %v410 = vpop.permute.xlu0 %409
  %v412 = vsel %vm406, %v410, 0.0
  %v414 = vrot.slane %v394, 6
  %415 = vrot.lane.b32.xlu0 %v414, 96
  %v416 = vpop.permute.xlu0 %415
  %v418 = vsel %vm406, %v416, 0.0
  %v421 = vunpack.c.l.s4 1966171168
  %v422 = vunpack.c.0.s8 %v421
  %v423 = vlaneseq
  %v424 = vshrl.u32 %v423, 7
  %v425 = vsub.s32 %v422, %v424
  %v426 = vrot.slane %v412, %v425
  %v427 = vcombine.high %v426, %v426
  %v429 = vunpack.c.l.s4 1966171168
  %v430 = vunpack.c.0.s8 %v429
  %v431 = vlaneseq
  %v432 = vshrl.u32 %v431, 7
  %v433 = vsub.s32 %v430, %v432
  %v434 = vrot.slane %v426, %v433
  %v436 = vunpack.c.l.s4 1966171168
  %v437 = vunpack.c.0.s8 %v436
  %v438 = vlaneseq
  %v439 = vshrl.u32 %v438, 7
  %v440 = vsub.s32 %v437, %v439
  %v441 = vrot.slane %v427, %v440
  %444 = vst.msk [vmem:[%s13 + $0x7] sm:$0x1] %vm296, %v434
  %445 = vst.msk [vmem:[%s13 + $0xf] sm:$0x1] %vm296, %v441
  %v446 = vld [vmem:[%s4] sm:$0xff]
  %v447 = vld [vmem:[%s4 + $0x8] sm:$0xff]
  %v448 = vld [vmem:[%s4 + $0x10] sm:$0xff]
  %v449 = vld [vmem:[%s4 + $0x18] sm:$0xff]
  %450 = vrot.lane.b32.xlu0 %v257, 32
  %v451 = vpop.permute.xlu0 %450
  %v452 = vsel %vm152, %v451, 0
  %454 = vmatprep.subr.mxu0 0.0
  %455 = vmatpush1.msra.mxu0 0.0
  %456 = vmatprep.subr.mxu0 0.0
  %457 = vmatpush1.msra.mxu0 0.0
  %458 = vmatprep.subr.mxu0 0.0
  %459 = vmatpush1.msra.mxu0 0.0
  %460 = vmatprep.subr.mxu0 0.0
  %461 = vmatpush1.msra.mxu0 0.0
  %462 = vmatprep.subr.mxu0 0.0
  %463 = vmatpush1.msra.mxu0 0.0
  %464 = vmatprep.subr.mxu0 0.0
  %465 = vmatpush1.msra.mxu0 0.0
  %466 = vmatprep.subr.mxu0 0.0
  %467 = vmatpush1.msra.mxu0 0.0
  %468 = vmatprep.subr.mxu0 0.0
  %469 = vmatpush1.msra.mxu0 0.0
  %470 = vmatprep.subr.mxu0 0.0
  %471 = vmatpush1.msra.mxu0 0.0
  %472 = vmatprep.subr.mxu0 0.0
  %473 = vmatpush1.msra.mxu0 0.0
  %474 = vmatprep.subr.mxu0 0.0
  %475 = vmatpush1.msra.mxu0 0.0
  %476 = vmatprep.subr.mxu0 0.0
  %477 = vmatpush1.msra.mxu0 0.0
  %478 = vmatprep.subr.mxu0 0.0
  %479 = vmatpush1.msra.mxu0 %v449
  %480 = vmatprep.subr.mxu0 0.0
  %481 = vmatpush1.msra.mxu0 %v448
  %482 = vmatprep.subr.mxu0 0.0
  %483 = vmatpush1.msra.mxu0 %v447
  %484 = vmatprep.subr.mxu0 0.0
  %485 = vmatpush1.msra.mxu0 %v446
  %486 = vmatprep.subr.mxu0 0.0
  %487 = vmatpush2.msra.mxu0 0.0
  %488 = vmatprep.subr.mxu0 0.0
  %489 = vmatpush2.msra.mxu0 0.0
  %490 = vmatprep.subr.mxu0 0.0
  %491 = vmatpush2.msra.mxu0 0.0
  %492 = vmatprep.subr.mxu0 0.0
  %493 = vmatpush2.msra.mxu0 0.0
  %494 = vmatprep.subr.mxu0 0.0
  %495 = vmatpush2.msra.mxu0 0.0
  %496 = vmatprep.subr.mxu0 0.0
  %497 = vmatpush2.msra.mxu0 0.0
  %498 = vmatprep.subr.mxu0 0.0
  %499 = vmatpush2.msra.mxu0 0.0
  %500 = vmatprep.subr.mxu0 0.0
  %501 = vmatpush2.msra.mxu0 0.0
  %502 = vmatprep.subr.mxu0 0.0
  %503 = vmatpush2.msra.mxu0 0.0
  %504 = vmatprep.subr.mxu0 0.0
  %505 = vmatpush2.msra.mxu0 0.0
  %506 = vmatprep.subr.mxu0 0.0
  %507 = vmatpush2.msra.mxu0 0.0
  %508 = vmatprep.subr.mxu0 0.0
  %509 = vmatpush2.msra.mxu0 0.0
  %510 = vmatprep.subr.mxu0 0.0
  %511 = vmatpush2.msra.mxu0 0.0
  %512 = vmatprep.subr.mxu0 0.0
  %513 = vmatpush2.msra.mxu0 0.0
  %514 = vmatprep.subr.mxu0 0.0
  %515 = vmatpush2.msra.mxu0 0.0
  %516 = vmatprep.subr.mxu0 0.0
  %517 = vmatpush2.msra.mxu0 0.0
  %518 = vmatprep.mubr.f32.mxu0 0.0
  %519 = vmatmul.mubr.f32.gmra.mxu0 %v452
  %v520 = vpop.f32.mrf.mxu0
  %v521 = vadd.f32 0.0, %v520
  %v522 = vpop.f32.mrf.mxu0
  %523 = vdwg.mxu0
  %v525 = vrot.slane %v521, 6
  %v527 = vadd.f32 %v137, %v525
  %v528 = vxor.u32 %v527, 2147483648
  %v529 = vmul.f32 %v528, 1.442695
  %v530 = vpow.pop %v529
  %v531 = vadd.f32 %v530, 1.0
  %v532 = vrcp.pop %v531
  %v533 = vmul.f32 1.0, %v532
  %v534 = vtanh.pop %v527
  %v536 = vrot.slane %v258, 6
  %v538 = vmul.f32 %v533, %v536
  %540 = vrot.lane.b32.xlu0 %v534, 64
  %v541 = vpop.permute.xlu0 %540
  %v543 = vmul.f32 %v533, %v541
  %545 = vrot.lane.b32.xlu0 %v543, 32
  %v546 = vpop.permute.xlu0 %545
  %v548 = vadd.f32 %v538, %v546
  %v549 = vtanh.pop %v548
  %551 = vrot.lane.b32.xlu0 %v549, 64
  %v552 = vpop.permute.xlu0 %551
  %v554 = vmul.f32 %v533, %v552
  %vm555 = vcmp.gt.s32.totalorder %v147, 1
  %v556 = vsel %vm555, 1, 0
  %557 = vset.pattern.permute.xlu0 0
  %558 = vperm.xlu0 %557, %v556
  %v559 = vpop.permute.xlu0 %558
  %vm560 = vcmp.eq.s32.totalorder %v559, 1
  %v562 = vrot.slane %v554, 2
  %563 = vrot.lane.b32.xlu0 %v562, 32
  %v564 = vpop.permute.xlu0 %563
  %v567 = vsel %vm560, %v564, %v451
  %v569 = vrot.slane %v548, 2
  %570 = vrot.lane.b32.xlu0 %v569, 96
  %v571 = vpop.permute.xlu0 %570
  %573 = vrot.lane.b32.xlu0 %v258, 96
  %v574 = vpop.permute.xlu0 %573
  %v576 = vsel %vm560, %v571, %v574
  %v577 = vsel %vm560, %v564, 0.0
  %v580 = vunpack.c.l.s4 1966171168
  %v581 = vunpack.c.0.s8 %v580
  %v582 = vlaneseq
  %v583 = vshrl.u32 %v582, 7
  %v584 = vsub.s32 %v581, %v583
  %v585 = vrot.slane %v577, %v584
  %v586 = vcombine.high %v585, %v585
  %v588 = vunpack.c.l.s4 1966171168
  %v589 = vunpack.c.0.s8 %v588
  %v590 = vlaneseq
  %v591 = vshrl.u32 %v590, 7
  %v592 = vsub.s32 %v589, %v591
  %v593 = vrot.slane %v585, %v592
  %v595 = vunpack.c.l.s4 1966171168
  %v596 = vunpack.c.0.s8 %v595
  %v597 = vlaneseq
  %v598 = vshrl.u32 %v597, 7
  %v599 = vsub.s32 %v596, %v598
  %v600 = vrot.slane %v586, %v599
  %603 = vst.msk [vmem:[%s12 + $0x1] sm:$0x1] %vm296, %v593
  %604 = vst.msk [vmem:[%s12 + $0x9] sm:$0x1] %vm296, %v600
  %v605 = vld [vmem:[%s5] sm:$0xff]
  %v606 = vld [vmem:[%s5 + $0x8] sm:$0xff]
  %v607 = vld [vmem:[%s5 + $0x10] sm:$0xff]
  %v608 = vld [vmem:[%s5 + $0x18] sm:$0xff]
  %v609 = vsel %vm152, %v412, 0
  %611 = vmatprep.subr.mxu0 0.0
  %612 = vmatpush1.msra.mxu0 0.0
  %613 = vmatprep.subr.mxu0 0.0
  %614 = vmatpush1.msra.mxu0 0.0
  %615 = vmatprep.subr.mxu0 0.0
  %616 = vmatpush1.msra.mxu0 0.0
  %617 = vmatprep.subr.mxu0 0.0
  %618 = vmatpush1.msra.mxu0 0.0
  %619 = vmatprep.subr.mxu0 0.0
  %620 = vmatpush1.msra.mxu0 0.0
  %621 = vmatprep.subr.mxu0 0.0
  %622 = vmatpush1.msra.mxu0 0.0
  %623 = vmatprep.subr.mxu0 0.0
  %624 = vmatpush1.msra.mxu0 0.0
  %625 = vmatprep.subr.mxu0 0.0
  %626 = vmatpush1.msra.mxu0 0.0
  %627 = vmatprep.subr.mxu0 0.0
  %628 = vmatpush1.msra.mxu0 0.0
  %629 = vmatprep.subr.mxu0 0.0
  %630 = vmatpush1.msra.mxu0 0.0
  %631 = vmatprep.subr.mxu0 0.0
  %632 = vmatpush1.msra.mxu0 0.0
  %633 = vmatprep.subr.mxu0 0.0
  %634 = vmatpush1.msra.mxu0 0.0
  %635 = vmatprep.subr.mxu0 0.0
  %636 = vmatpush1.msra.mxu0 %v608
  %637 = vmatprep.subr.mxu0 0.0
  %638 = vmatpush1.msra.mxu0 %v607
  %639 = vmatprep.subr.mxu0 0.0
  %640 = vmatpush1.msra.mxu0 %v606
  %641 = vmatprep.subr.mxu0 0.0
  %642 = vmatpush1.msra.mxu0 %v605
  %643 = vmatprep.subr.mxu0 0.0
  %644 = vmatpush2.msra.mxu0 0.0
  %645 = vmatprep.subr.mxu0 0.0
  %646 = vmatpush2.msra.mxu0 0.0
  %647 = vmatprep.subr.mxu0 0.0
  %648 = vmatpush2.msra.mxu0 0.0
  %649 = vmatprep.subr.mxu0 0.0
  %650 = vmatpush2.msra.mxu0 0.0
  %651 = vmatprep.subr.mxu0 0.0
  %652 = vmatpush2.msra.mxu0 0.0
  %653 = vmatprep.subr.mxu0 0.0
  %654 = vmatpush2.msra.mxu0 0.0
  %655 = vmatprep.subr.mxu0 0.0
  %656 = vmatpush2.msra.mxu0 0.0
  %657 = vmatprep.subr.mxu0 0.0
  %658 = vmatpush2.msra.mxu0 0.0
  %659 = vmatprep.subr.mxu0 0.0
  %660 = vmatpush2.msra.mxu0 0.0
  %661 = vmatprep.subr.mxu0 0.0
  %662 = vmatpush2.msra.mxu0 0.0
  %663 = vmatprep.subr.mxu0 0.0
  %664 = vmatpush2.msra.mxu0 0.0
  %665 = vmatprep.subr.mxu0 0.0
  %666 = vmatpush2.msra.mxu0 0.0
  %667 = vmatprep.subr.mxu0 0.0
  %668 = vmatpush2.msra.mxu0 0.0
  %669 = vmatprep.subr.mxu0 0.0
  %670 = vmatpush2.msra.mxu0 0.0
  %671 = vmatprep.subr.mxu0 0.0
  %672 = vmatpush2.msra.mxu0 0.0
  %673 = vmatprep.subr.mxu0 0.0
  %674 = vmatpush2.msra.mxu0 0.0
  %675 = vmatprep.mubr.f32.mxu0 0.0
  %676 = vmatmul.mubr.f32.gmra.mxu0 %v609
  %v677 = vpop.f32.mrf.mxu0
  %v678 = vadd.f32 0.0, %v677
  %v679 = vpop.f32.mrf.mxu0
  %680 = vdwg.mxu0
  %v682 = vrot.slane %v678, 4
  %v684 = vadd.f32 %v145, %v682
  %v685 = vxor.u32 %v684, 2147483648
  %v686 = vmul.f32 %v685, 1.442695
  %v687 = vpow.pop %v686
  %v688 = vadd.f32 %v687, 1.0
  %v689 = vrcp.pop %v688
  %v690 = vmul.f32 1.0, %v689
  %v691 = vtanh.pop %v684
  %v693 = vrot.slane %v418, 4
  %694 = vrot.lane.b32.xlu0 %v693, 32
  %v695 = vpop.permute.xlu0 %694
  %v697 = vmul.f32 %v690, %v695
  %699 = vrot.lane.b32.xlu0 %v691, 64
  %v700 = vpop.permute.xlu0 %699
  %v702 = vmul.f32 %v690, %v700
  %704 = vrot.lane.b32.xlu0 %v702, 32
  %v705 = vpop.permute.xlu0 %704
  %v707 = vadd.f32 %v697, %v705
  %v708 = vtanh.pop %v707
  %710 = vrot.lane.b32.xlu0 %v708, 64
  %v711 = vpop.permute.xlu0 %710
  %v713 = vmul.f32 %v690, %v711
  %vm714 = vcmp.gt.s32.totalorder %v147, 6
  %v715 = vsel %vm714, 1, 0
  %716 = vset.pattern.permute.xlu0 0
  %717 = vperm.xlu0 %716, %v715
  %v718 = vpop.permute.xlu0 %717
  %vm719 = vcmp.eq.s32.totalorder %v718, 1
  %v721 = vrot.slane %v713, 4
  %722 = vrot.lane.b32.xlu0 %v721, 32
  %v723 = vpop.permute.xlu0 %722
  %v725 = vsel %vm719, %v723, %v412
  %v727 = vrot.slane %v707, 4
  %728 = vrot.lane.b32.xlu0 %v727, 96
  %v729 = vpop.permute.xlu0 %728
  %v731 = vsel %vm719, %v729, %v418
  %v732 = vsel %vm719, %v723, 0.0
  %v735 = vunpack.c.l.s4 1966171168
  %v736 = vunpack.c.0.s8 %v735
  %v737 = vlaneseq
  %v738 = vshrl.u32 %v737, 7
  %v739 = vsub.s32 %v736, %v738
  %v740 = vrot.slane %v732, %v739
  %v741 = vcombine.high %v740, %v740
  %v743 = vunpack.c.l.s4 1966171168
  %v744 = vunpack.c.0.s8 %v743
  %v745 = vlaneseq
  %v746 = vshrl.u32 %v745, 7
  %v747 = vsub.s32 %v744, %v746
  %v748 = vrot.slane %v740, %v747
  %v750 = vunpack.c.l.s4 1966171168
  %v751 = vunpack.c.0.s8 %v750
  %v752 = vlaneseq
  %v753 = vshrl.u32 %v752, 7
  %v754 = vsub.s32 %v751, %v753
  %v755 = vrot.slane %v741, %v754
  %758 = vst.msk [vmem:[%s13 + $0x6] sm:$0x1] %vm296, %v748
  %759 = vst.msk [vmem:[%s13 + $0xe] sm:$0x1] %vm296, %v755
  %v760 = vld [vmem:[%s4] sm:$0xff]
  %v761 = vld [vmem:[%s4 + $0x8] sm:$0xff]
  %v762 = vld [vmem:[%s4 + $0x10] sm:$0xff]
  %v763 = vld [vmem:[%s4 + $0x18] sm:$0xff]
  %v765 = vsel %vm152, %v567, 0
  %767 = vmatprep.subr.mxu0 0.0
  %768 = vmatpush1.msra.mxu0 0.0
  %769 = vmatprep.subr.mxu0 0.0
  %770 = vmatpush1.msra.mxu0 0.0
  %771 = vmatprep.subr.mxu0 0.0
  %772 = vmatpush1.msra.mxu0 0.0
  %773 = vmatprep.subr.mxu0 0.0
  %774 = vmatpush1.msra.mxu0 0.0
  %775 = vmatprep.subr.mxu0 0.0
  %776 = vmatpush1.msra.mxu0 0.0
  %777 = vmatprep.subr.mxu0 0.0
  %778 = vmatpush1.msra.mxu0 0.0
  %779 = vmatprep.subr.mxu0 0.0
  %780 = vmatpush1.msra.mxu0 0.0
  %781 = vmatprep.subr.mxu0 0.0
  %782 = vmatpush1.msra.mxu0 0.0
  %783 = vmatprep.subr.mxu0 0.0
  %784 = vmatpush1.msra.mxu0 0.0
  %785 = vmatprep.subr.mxu0 0.0
  %786 = vmatpush1.msra.mxu0 0.0
  %787 = vmatprep.subr.mxu0 0.0
  %788 = vmatpush1.msra.mxu0 0.0
  %789 = vmatprep.subr.mxu0 0.0
  %790 = vmatpush1.msra.mxu0 0.0
  %791 = vmatprep.subr.mxu0 0.0
  %792 = vmatpush1.msra.mxu0 %v763
  %793 = vmatprep.subr.mxu0 0.0
  %794 = vmatpush1.msra.mxu0 %v762
  %795 = vmatprep.subr.mxu0 0.0
  %796 = vmatpush1.msra.mxu0 %v761
  %797 = vmatprep.subr.mxu0 0.0
  %798 = vmatpush1.msra.mxu0 %v760
  %799 = vmatprep.subr.mxu0 0.0
  %800 = vmatpush2.msra.mxu0 0.0
  %801 = vmatprep.subr.mxu0 0.0
  %802 = vmatpush2.msra.mxu0 0.0
  %803 = vmatprep.subr.mxu0 0.0
  %804 = vmatpush2.msra.mxu0 0.0
  %805 = vmatprep.subr.mxu0 0.0
  %806 = vmatpush2.msra.mxu0 0.0
  %807 = vmatprep.subr.mxu0 0.0
  %808 = vmatpush2.msra.mxu0 0.0
  %809 = vmatprep.subr.mxu0 0.0
  %810 = vmatpush2.msra.mxu0 0.0
  %811 = vmatprep.subr.mxu0 0.0
  %812 = vmatpush2.msra.mxu0 0.0
  %813 = vmatprep.subr.mxu0 0.0
  %814 = vmatpush2.msra.mxu0 0.0
  %815 = vmatprep.subr.mxu0 0.0
  %816 = vmatpush2.msra.mxu0 0.0
  %817 = vmatprep.subr.mxu0 0.0
  %818 = vmatpush2.msra.mxu0 0.0
  %819 = vmatprep.subr.mxu0 0.0
  %820 = vmatpush2.msra.mxu0 0.0
  %821 = vmatprep.subr.mxu0 0.0
  %822 = vmatpush2.msra.mxu0 0.0
  %823 = vmatprep.subr.mxu0 0.0
  %824 = vmatpush2.msra.mxu0 0.0
  %825 = vmatprep.subr.mxu0 0.0
  %826 = vmatpush2.msra.mxu0 0.0
  %827 = vmatprep.subr.mxu0 0.0
  %828 = vmatpush2.msra.mxu0 0.0
  %829 = vmatprep.subr.mxu0 0.0
  %830 = vmatpush2.msra.mxu0 0.0
  %831 = vmatprep.mubr.f32.mxu0 0.0
  %832 = vmatmul.mubr.f32.gmra.mxu0 %v765
  %v833 = vpop.f32.mrf.mxu0
  %v834 = vadd.f32 0.0, %v833
  %v835 = vpop.f32.mrf.mxu0
  %836 = vdwg.mxu0
  %v838 = vrot.slane %v834, 4
  %v840 = vadd.f32 %v137, %v838
  %v841 = vxor.u32 %v840, 2147483648
  %v842 = vmul.f32 %v841, 1.442695
  %v843 = vpow.pop %v842
  %v844 = vadd.f32 %v843, 1.0
  %v845 = vrcp.pop %v844
  %v846 = vmul.f32 1.0, %v845
  %v847 = vtanh.pop %v840
  %v849 = vrot.slane %v576, 4
  %850 = vrot.lane.b32.xlu0 %v849, 32
  %v851 = vpop.permute.xlu0 %850
  %v853 = vmul.f32 %v846, %v851
  %855 = vrot.lane.b32.xlu0 %v847, 64
  %v856 = vpop.permute.xlu0 %855
  %v858 = vmul.f32 %v846, %v856
  %860 = vrot.lane.b32.xlu0 %v858, 32
  %v861 = vpop.permute.xlu0 %860
  %v863 = vadd.f32 %v853, %v861
  %v864 = vtanh.pop %v863
  %866 = vrot.lane.b32.xlu0 %v864, 64
  %v867 = vpop.permute.xlu0 %866
  %v869 = vmul.f32 %v846, %v867
  %vm870 = vcmp.gt.s32.totalorder %v147, 2
  %v871 = vsel %vm870, 1, 0
  %872 = vset.pattern.permute.xlu0 0
  %873 = vperm.xlu0 %872, %v871
  %v874 = vpop.permute.xlu0 %873
  %vm875 = vcmp.eq.s32.totalorder %v874, 1
  %v877 = vrot.slane %v869, 4
  %878 = vrot.lane.b32.xlu0 %v877, 32
  %v879 = vpop.permute.xlu0 %878
  %v881 = vsel %vm875, %v879, %v567
  %v883 = vrot.slane %v863, 4
  %884 = vrot.lane.b32.xlu0 %v883, 96
  %v885 = vpop.permute.xlu0 %884
  %v887 = vsel %vm875, %v885, %v576
  %v888 = vsel %vm875, %v879, 0.0
  %v891 = vunpack.c.l.s4 1966171168
  %v892 = vunpack.c.0.s8 %v891
  %v893 = vlaneseq
  %v894 = vshrl.u32 %v893, 7
  %v895 = vsub.s32 %v892, %v894
  %v896 = vrot.slane %v888, %v895
  %v897 = vcombine.high %v896, %v896
  %v899 = vunpack.c.l.s4 1966171168
  %v900 = vunpack.c.0.s8 %v899
  %v901 = vlaneseq
  %v902 = vshrl.u32 %v901, 7
  %v903 = vsub.s32 %v900, %v902
  %v904 = vrot.slane %v896, %v903
  %v906 = vunpack.c.l.s4 1966171168
  %v907 = vunpack.c.0.s8 %v906
  %v908 = vlaneseq
  %v909 = vshrl.u32 %v908, 7
  %v910 = vsub.s32 %v907, %v909
  %v911 = vrot.slane %v897, %v910
  %914 = vst.msk [vmem:[%s12 + $0x2] sm:$0x1] %vm296, %v904
  %915 = vst.msk [vmem:[%s12 + $0xa] sm:$0x1] %vm296, %v911
  %v916 = vld [vmem:[%s5] sm:$0xff]
  %v917 = vld [vmem:[%s5 + $0x8] sm:$0xff]
  %v918 = vld [vmem:[%s5 + $0x10] sm:$0xff]
  %v919 = vld [vmem:[%s5 + $0x18] sm:$0xff]
  %v921 = vsel %vm152, %v725, 0
  %923 = vmatprep.subr.mxu0 0.0
  %924 = vmatpush1.msra.mxu0 0.0
  %925 = vmatprep.subr.mxu0 0.0
  %926 = vmatpush1.msra.mxu0 0.0
  %927 = vmatprep.subr.mxu0 0.0
  %928 = vmatpush1.msra.mxu0 0.0
  %929 = vmatprep.subr.mxu0 0.0
  %930 = vmatpush1.msra.mxu0 0.0
  %931 = vmatprep.subr.mxu0 0.0
  %932 = vmatpush1.msra.mxu0 0.0
  %933 = vmatprep.subr.mxu0 0.0
  %934 = vmatpush1.msra.mxu0 0.0
  %935 = vmatprep.subr.mxu0 0.0
  %936 = vmatpush1.msra.mxu0 0.0
  %937 = vmatprep.subr.mxu0 0.0
  %938 = vmatpush1.msra.mxu0 0.0
  %939 = vmatprep.subr.mxu0 0.0
  %940 = vmatpush1.msra.mxu0 0.0
  %941 = vmatprep.subr.mxu0 0.0
  %942 = vmatpush1.msra.mxu0 0.0
  %943 = vmatprep.subr.mxu0 0.0
  %944 = vmatpush1.msra.mxu0 0.0
  %945 = vmatprep.subr.mxu0 0.0
  %946 = vmatpush1.msra.mxu0 0.0
  %947 = vmatprep.subr.mxu0 0.0
  %948 = vmatpush1.msra.mxu0 %v919
  %949 = vmatprep.subr.mxu0 0.0
  %950 = vmatpush1.msra.mxu0 %v918
  %951 = vmatprep.subr.mxu0 0.0
  %952 = vmatpush1.msra.mxu0 %v917
  %953 = vmatprep.subr.mxu0 0.0
  %954 = vmatpush1.msra.mxu0 %v916
  %955 = vmatprep.subr.mxu0 0.0
  %956 = vmatpush2.msra.mxu0 0.0
  %957 = vmatprep.subr.mxu0 0.0
  %958 = vmatpush2.msra.mxu0 0.0
  %959 = vmatprep.subr.mxu0 0.0
  %960 = vmatpush2.msra.mxu0 0.0
  %961 = vmatprep.subr.mxu0 0.0
  %962 = vmatpush2.msra.mxu0 0.0
  %963 = vmatprep.subr.mxu0 0.0
  %964 = vmatpush2.msra.mxu0 0.0
  %965 = vmatprep.subr.mxu0 0.0
  %966 = vmatpush2.msra.mxu0 0.0
  %967 = vmatprep.subr.mxu0 0.0
  %968 = vmatpush2.msra.mxu0 0.0
  %969 = vmatprep.subr.mxu0 0.0
  %970 = vmatpush2.msra.mxu0 0.0
  %971 = vmatprep.subr.mxu0 0.0
  %972 = vmatpush2.msra.mxu0 0.0
  %973 = vmatprep.subr.mxu0 0.0
  %974 = vmatpush2.msra.mxu0 0.0
  %975 = vmatprep.subr.mxu0 0.0
  %976 = vmatpush2.msra.mxu0 0.0
  %977 = vmatprep.subr.mxu0 0.0
  %978 = vmatpush2.msra.mxu0 0.0
  %979 = vmatprep.subr.mxu0 0.0
  %980 = vmatpush2.msra.mxu0 0.0
  %981 = vmatprep.subr.mxu0 0.0
  %982 = vmatpush2.msra.mxu0 0.0
  %983 = vmatprep.subr.mxu0 0.0
  %984 = vmatpush2.msra.mxu0 0.0
  %985 = vmatprep.subr.mxu0 0.0
  %986 = vmatpush2.msra.mxu0 0.0
  %987 = vmatprep.mubr.f32.mxu0 0.0
  %988 = vmatmul.mubr.f32.gmra.mxu0 %v921
  %v989 = vpop.f32.mrf.mxu0
  %v990 = vadd.f32 0.0, %v989
  %v991 = vpop.f32.mrf.mxu0
  %992 = vdwg.mxu0
  %v994 = vrot.slane %v990, 6
  %v996 = vadd.f32 %v145, %v994
  %v997 = vxor.u32 %v996, 2147483648
  %v998 = vmul.f32 %v997, 1.442695
  %v999 = vpow.pop %v998
  %v1000 = vadd.f32 %v999, 1.0
  %v1001 = vrcp.pop %v1000
  %v1002 = vmul.f32 1.0, %v1001
  %v1003 = vtanh.pop %v996
  %v1005 = vrot.slane %v731, 6
  %1006 = vrot.lane.b32.xlu0 %v1005, 32
  %v1007 = vpop.permute.xlu0 %1006
  %v1009 = vmul.f32 %v1002, %v1007
  %1011 = vrot.lane.b32.xlu0 %v1003, 64
  %v1012 = vpop.permute.xlu0 %1011
  %v1014 = vmul.f32 %v1002, %v1012
  %1016 = vrot.lane.b32.xlu0 %v1014, 32
  %v1017 = vpop.permute.xlu0 %1016
  %v1019 = vadd.f32 %v1009, %v1017
  %v1020 = vtanh.pop %v1019
  %1022 = vrot.lane.b32.xlu0 %v1020, 64
  %v1023 = vpop.permute.xlu0 %1022
  %v1025 = vmul.f32 %v1002, %v1023
  %vm1026 = vcmp.gt.s32.totalorder %v147, 5
  %v1027 = vsel %vm1026, 1, 0
  %1028 = vset.pattern.permute.xlu0 0
  %1029 = vperm.xlu0 %1028, %v1027
  %v1030 = vpop.permute.xlu0 %1029
  %vm1031 = vcmp.eq.s32.totalorder %v1030, 1
  %v1033 = vrot.slane %v1025, 2
  %1034 = vrot.lane.b32.xlu0 %v1033, 32
  %v1035 = vpop.permute.xlu0 %1034
  %v1037 = vsel %vm1031, %v1035, %v725
  %v1039 = vrot.slane %v1019, 2
  %1040 = vrot.lane.b32.xlu0 %v1039, 96
  %v1041 = vpop.permute.xlu0 %1040
  %v1043 = vsel %vm1031, %v1041, %v731
  %v1044 = vsel %vm1031, %v1035, 0.0
  %v1047 = vunpack.c.l.s4 1966171168
  %v1048 = vunpack.c.0.s8 %v1047
  %v1049 = vlaneseq
  %v1050 = vshrl.u32 %v1049, 7
  %v1051 = vsub.s32 %v1048, %v1050
  %v1052 = vrot.slane %v1044, %v1051
  %v1053 = vcombine.high %v1052, %v1052
  %v1055 = vunpack.c.l.s4 1966171168
  %v1056 = vunpack.c.0.s8 %v1055
  %v1057 = vlaneseq
  %v1058 = vshrl.u32 %v1057, 7
  %v1059 = vsub.s32 %v1056, %v1058
  %v1060 = vrot.slane %v1052, %v1059
  %v1062 = vunpack.c.l.s4 1966171168
  %v1063 = vunpack.c.0.s8 %v1062
  %v1064 = vlaneseq
  %v1065 = vshrl.u32 %v1064, 7
  %v1066 = vsub.s32 %v1063, %v1065
  %v1067 = vrot.slane %v1053, %v1066
  %1070 = vst.msk [vmem:[%s13 + $0x5] sm:$0x1] %vm296, %v1060
  %1071 = vst.msk [vmem:[%s13 + $0xd] sm:$0x1] %vm296, %v1067
  %v1072 = vld [vmem:[%s4] sm:$0xff]
  %v1073 = vld [vmem:[%s4 + $0x8] sm:$0xff]
  %v1074 = vld [vmem:[%s4 + $0x10] sm:$0xff]
  %v1075 = vld [vmem:[%s4 + $0x18] sm:$0xff]
  %v1077 = vsel %vm152, %v881, 0
  %1079 = vmatprep.subr.mxu0 0.0
  %1080 = vmatpush1.msra.mxu0 0.0
  %1081 = vmatprep.subr.mxu0 0.0
  %1082 = vmatpush1.msra.mxu0 0.0
  %1083 = vmatprep.subr.mxu0 0.0
  %1084 = vmatpush1.msra.mxu0 0.0
  %1085 = vmatprep.subr.mxu0 0.0
  %1086 = vmatpush1.msra.mxu0 0.0
  %1087 = vmatprep.subr.mxu0 0.0
  %1088 = vmatpush1.msra.mxu0 0.0
  %1089 = vmatprep.subr.mxu0 0.0
  %1090 = vmatpush1.msra.mxu0 0.0
  %1091 = vmatprep.subr.mxu0 0.0
  %1092 = vmatpush1.msra.mxu0 0.0
  %1093 = vmatprep.subr.mxu0 0.0
  %1094 = vmatpush1.msra.mxu0 0.0
  %1095 = vmatprep.subr.mxu0 0.0
  %1096 = vmatpush1.msra.mxu0 0.0
  %1097 = vmatprep.subr.mxu0 0.0
  %1098 = vmatpush1.msra.mxu0 0.0
  %1099 = vmatprep.subr.mxu0 0.0
  %1100 = vmatpush1.msra.mxu0 0.0
  %1101 = vmatprep.subr.mxu0 0.0
  %1102 = vmatpush1.msra.mxu0 0.0
  %1103 = vmatprep.subr.mxu0 0.0
  %1104 = vmatpush1.msra.mxu0 %v1075
  %1105 = vmatprep.subr.mxu0 0.0
  %1106 = vmatpush1.msra.mxu0 %v1074
  %1107 = vmatprep.subr.mxu0 0.0
  %1108 = vmatpush1.msra.mxu0 %v1073
  %1109 = vmatprep.subr.mxu0 0.0
  %1110 = vmatpush1.msra.mxu0 %v1072
  %1111 = vmatprep.subr.mxu0 0.0
  %1112 = vmatpush2.msra.mxu0 0.0
  %1113 = vmatprep.subr.mxu0 0.0
  %1114 = vmatpush2.msra.mxu0 0.0
  %1115 = vmatprep.subr.mxu0 0.0
  %1116 = vmatpush2.msra.mxu0 0.0
  %1117 = vmatprep.subr.mxu0 0.0
  %1118 = vmatpush2.msra.mxu0 0.0
  %1119 = vmatprep.subr.mxu0 0.0
  %1120 = vmatpush2.msra.mxu0 0.0
  %1121 = vmatprep.subr.mxu0 0.0
  %1122 = vmatpush2.msra.mxu0 0.0
  %1123 = vmatprep.subr.mxu0 0.0
  %1124 = vmatpush2.msra.mxu0 0.0
  %1125 = vmatprep.subr.mxu0 0.0
  %1126 = vmatpush2.msra.mxu0 0.0
  %1127 = vmatprep.subr.mxu0 0.0
  %1128 = vmatpush2.msra.mxu0 0.0
  %1129 = vmatprep.subr.mxu0 0.0
  %1130 = vmatpush2.msra.mxu0 0.0
  %1131 = vmatprep.subr.mxu0 0.0
  %1132 = vmatpush2.msra.mxu0 0.0
  %1133 = vmatprep.subr.mxu0 0.0
  %1134 = vmatpush2.msra.mxu0 0.0
  %1135 = vmatprep.subr.mxu0 0.0
  %1136 = vmatpush2.msra.mxu0 0.0
  %1137 = vmatprep.subr.mxu0 0.0
  %1138 = vmatpush2.msra.mxu0 0.0
  %1139 = vmatprep.subr.mxu0 0.0
  %1140 = vmatpush2.msra.mxu0 0.0
  %1141 = vmatprep.subr.mxu0 0.0
  %1142 = vmatpush2.msra.mxu0 0.0
  %1143 = vmatprep.mubr.f32.mxu0 0.0
  %1144 = vmatmul.mubr.f32.gmra.mxu0 %v1077
  %v1145 = vpop.f32.mrf.mxu0
  %v1146 = vadd.f32 0.0, %v1145
  %v1147 = vpop.f32.mrf.mxu0
  %1148 = vdwg.mxu0
  %v1150 = vrot.slane %v1146, 2
  %v1152 = vadd.f32 %v137, %v1150
  %v1153 = vxor.u32 %v1152, 2147483648
  %v1154 = vmul.f32 %v1153, 1.442695
  %v1155 = vpow.pop %v1154
  %v1156 = vadd.f32 %v1155, 1.0
  %v1157 = vrcp.pop %v1156
  %v1158 = vmul.f32 1.0, %v1157
  %v1159 = vtanh.pop %v1152
  %v1161 = vrot.slane %v887, 2
  %1162 = vrot.lane.b32.xlu0 %v1161, 32
  %v1163 = vpop.permute.xlu0 %1162
  %v1165 = vmul.f32 %v1158, %v1163
  %1167 = vrot.lane.b32.xlu0 %v1159, 64
  %v1168 = vpop.permute.xlu0 %1167
  %v1170 = vmul.f32 %v1158, %v1168
  %1172 = vrot.lane.b32.xlu0 %v1170, 32
  %v1173 = vpop.permute.xlu0 %1172
  %v1175 = vadd.f32 %v1165, %v1173
  %v1176 = vtanh.pop %v1175
  %1178 = vrot.lane.b32.xlu0 %v1176, 64
  %v1179 = vpop.permute.xlu0 %1178
  %v1181 = vmul.f32 %v1158, %v1179
  %vm1182 = vcmp.gt.s32.totalorder %v147, 3
  %v1183 = vsel %vm1182, 1, 0
  %1184 = vset.pattern.permute.xlu0 0
  %1185 = vperm.xlu0 %1184, %v1183
  %v1186 = vpop.permute.xlu0 %1185
  %vm1187 = vcmp.eq.s32.totalorder %v1186, 1
  %v1189 = vrot.slane %v1181, 6
  %1190 = vrot.lane.b32.xlu0 %v1189, 32
  %v1191 = vpop.permute.xlu0 %1190
  %v1193 = vsel %vm1187, %v1191, %v881
  %v1195 = vrot.slane %v1175, 6
  %1196 = vrot.lane.b32.xlu0 %v1195, 96
  %v1197 = vpop.permute.xlu0 %1196
  %v1199 = vsel %vm1187, %v1197, %v887
  %v1200 = vsel %vm1187, %v1191, 0.0
  %v1203 = vunpack.c.l.s4 1966171168
  %v1204 = vunpack.c.0.s8 %v1203
  %v1205 = vlaneseq
  %v1206 = vshrl.u32 %v1205, 7
  %v1207 = vsub.s32 %v1204, %v1206
  %v1208 = vrot.slane %v1200, %v1207
  %v1209 = vcombine.high %v1208, %v1208
  %v1211 = vunpack.c.l.s4 1966171168
  %v1212 = vunpack.c.0.s8 %v1211
  %v1213 = vlaneseq
  %v1214 = vshrl.u32 %v1213, 7
  %v1215 = vsub.s32 %v1212, %v1214
  %v1216 = vrot.slane %v1208, %v1215
  %v1218 = vunpack.c.l.s4 1966171168
  %v1219 = vunpack.c.0.s8 %v1218
  %v1220 = vlaneseq
  %v1221 = vshrl.u32 %v1220, 7
  %v1222 = vsub.s32 %v1219, %v1221
  %v1223 = vrot.slane %v1209, %v1222
  %1226 = vst.msk [vmem:[%s12 + $0x3] sm:$0x1] %vm296, %v1216
  %1227 = vst.msk [vmem:[%s12 + $0xb] sm:$0x1] %vm296, %v1223
  %v1228 = vld [vmem:[%s5] sm:$0xff]
  %v1229 = vld [vmem:[%s5 + $0x8] sm:$0xff]
  %v1230 = vld [vmem:[%s5 + $0x10] sm:$0xff]
  %v1231 = vld [vmem:[%s5 + $0x18] sm:$0xff]
  %v1233 = vsel %vm152, %v1037, 0
  %1235 = vmatprep.subr.mxu0 0.0
  %1236 = vmatpush1.msra.mxu0 0.0
  %1237 = vmatprep.subr.mxu0 0.0
  %1238 = vmatpush1.msra.mxu0 0.0
  %1239 = vmatprep.subr.mxu0 0.0
  %1240 = vmatpush1.msra.mxu0 0.0
  %1241 = vmatprep.subr.mxu0 0.0
  %1242 = vmatpush1.msra.mxu0 0.0
  %1243 = vmatprep.subr.mxu0 0.0
  %1244 = vmatpush1.msra.mxu0 0.0
  %1245 = vmatprep.subr.mxu0 0.0
  %1246 = vmatpush1.msra.mxu0 0.0
  %1247 = vmatprep.subr.mxu0 0.0
  %1248 = vmatpush1.msra.mxu0 0.0
  %1249 = vmatprep.subr.mxu0 0.0
  %1250 = vmatpush1.msra.mxu0 0.0
  %1251 = vmatprep.subr.mxu0 0.0
  %1252 = vmatpush1.msra.mxu0 0.0
  %1253 = vmatprep.subr.mxu0 0.0
  %1254 = vmatpush1.msra.mxu0 0.0
  %1255 = vmatprep.subr.mxu0 0.0
  %1256 = vmatpush1.msra.mxu0 0.0
  %1257 = vmatprep.subr.mxu0 0.0
  %1258 = vmatpush1.msra.mxu0 0.0
  %1259 = vmatprep.subr.mxu0 0.0
  %1260 = vmatpush1.msra.mxu0 %v1231
  %1261 = vmatprep.subr.mxu0 0.0
  %1262 = vmatpush1.msra.mxu0 %v1230
  %1263 = vmatprep.subr.mxu0 0.0
  %1264 = vmatpush1.msra.mxu0 %v1229
  %1265 = vmatprep.subr.mxu0 0.0
  %1266 = vmatpush1.msra.mxu0 %v1228
  %1267 = vmatprep.subr.mxu0 0.0
  %1268 = vmatpush2.msra.mxu0 0.0
  %1269 = vmatprep.subr.mxu0 0.0
  %1270 = vmatpush2.msra.mxu0 0.0
  %1271 = vmatprep.subr.mxu0 0.0
  %1272 = vmatpush2.msra.mxu0 0.0
  %1273 = vmatprep.subr.mxu0 0.0
  %1274 = vmatpush2.msra.mxu0 0.0
  %1275 = vmatprep.subr.mxu0 0.0
  %1276 = vmatpush2.msra.mxu0 0.0
  %1277 = vmatprep.subr.mxu0 0.0
  %1278 = vmatpush2.msra.mxu0 0.0
  %1279 = vmatprep.subr.mxu0 0.0
  %1280 = vmatpush2.msra.mxu0 0.0
  %1281 = vmatprep.subr.mxu0 0.0
  %1282 = vmatpush2.msra.mxu0 0.0
  %1283 = vmatprep.subr.mxu0 0.0
  %1284 = vmatpush2.msra.mxu0 0.0
  %1285 = vmatprep.subr.mxu0 0.0
  %1286 = vmatpush2.msra.mxu0 0.0
  %1287 = vmatprep.subr.mxu0 0.0
  %1288 = vmatpush2.msra.mxu0 0.0
  %1289 = vmatprep.subr.mxu0 0.0
  %1290 = vmatpush2.msra.mxu0 0.0
  %1291 = vmatprep.subr.mxu0 0.0
  %1292 = vmatpush2.msra.mxu0 0.0
  %1293 = vmatprep.subr.mxu0 0.0
  %1294 = vmatpush2.msra.mxu0 0.0
  %1295 = vmatprep.subr.mxu0 0.0
  %1296 = vmatpush2.msra.mxu0 0.0
  %1297 = vmatprep.subr.mxu0 0.0
  %1298 = vmatpush2.msra.mxu0 0.0
  %1299 = vmatprep.mubr.f32.mxu0 0.0
  %1300 = vmatmul.mubr.f32.gmra.mxu0 %v1233
  %v1301 = vpop.f32.mrf.mxu0
  %v1302 = vadd.f32 0.0, %v1301
  %v1303 = vpop.f32.mrf.mxu0
  %1304 = vdwg.mxu0
  %v1305 = vadd.f32 %v145, %v1302
  %v1306 = vxor.u32 %v1305, 2147483648
  %v1307 = vmul.f32 %v1306, 1.442695
  %v1308 = vpow.pop %v1307
  %v1309 = vadd.f32 %v1308, 1.0
  %v1310 = vrcp.pop %v1309
  %v1311 = vmul.f32 1.0, %v1310
  %v1312 = vtanh.pop %v1305
  %1314 = vrot.lane.b32.xlu0 %v1043, 32
  %v1315 = vpop.permute.xlu0 %1314
  %v1317 = vmul.f32 %v1311, %v1315
  %1319 = vrot.lane.b32.xlu0 %v1312, 64
  %v1320 = vpop.permute.xlu0 %1319
  %v1322 = vmul.f32 %v1311, %v1320
  %1324 = vrot.lane.b32.xlu0 %v1322, 32
  %v1325 = vpop.permute.xlu0 %1324
  %v1327 = vadd.f32 %v1317, %v1325
  %v1328 = vtanh.pop %v1327
  %1330 = vrot.lane.b32.xlu0 %v1328, 64
  %v1331 = vpop.permute.xlu0 %1330
  %v1333 = vmul.f32 %v1311, %v1331
  %vm1334 = vcmp.gt.s32.totalorder %v147, 4
  %v1335 = vsel %vm1334, 1, 0
  %1336 = vset.pattern.permute.xlu0 0
  %1337 = vperm.xlu0 %1336, %v1335
  %v1338 = vpop.permute.xlu0 %1337
  %vm1339 = vcmp.eq.s32.totalorder %v1338, 1
  %1340 = vrot.lane.b32.xlu0 %v1037, 96
  %v1341 = vpop.permute.xlu0 %1340
  %v1343 = vsel %vm1339, %v1333, %v1341
  %v1344 = vsel %vm1339, %v1327, %v1315
  %v1345 = vsel %vm1339, %v1333, 0.0
  %v1348 = vunpack.c.l.s4 1966171168
  %v1349 = vunpack.c.0.s8 %v1348
  %v1350 = vlaneseq
  %v1351 = vshrl.u32 %v1350, 7
  %v1352 = vsub.s32 %v1349, %v1351
  %v1353 = vrot.slane %v1345, %v1352
  %v1354 = vcombine.high %v1353, %v1353
  %v1356 = vunpack.c.l.s4 1966171168
  %v1357 = vunpack.c.0.s8 %v1356
  %v1358 = vlaneseq
  %v1359 = vshrl.u32 %v1358, 7
  %v1360 = vsub.s32 %v1357, %v1359
  %v1361 = vrot.slane %v1353, %v1360
  %v1363 = vunpack.c.l.s4 1966171168
  %v1364 = vunpack.c.0.s8 %v1363
  %v1365 = vlaneseq
  %v1366 = vshrl.u32 %v1365, 7
  %v1367 = vsub.s32 %v1364, %v1366
  %v1368 = vrot.slane %v1354, %v1367
  %v1369 = vlaneseq
  %v1370 = vshrl.u32 %v1369, 7
  %v1371 = vsub.s32 0, %v1370
  %v1372 = vrot.slane %v1361, %v1371
  %v1373 = vlaneseq
  %v1374 = vshrl.u32 %v1373, 7
  %v1375 = vsub.s32 0, %v1374
  %v1376 = vrot.slane %v1368, %v1375
  %1377 = vrot.lane.b32.xlu0 %v1372, 32
  %v1378 = vpop.permute.xlu0 %1377
  %1379 = vrot.lane.b32.xlu0 %v1376, 32
  %v1380 = vpop.permute.xlu0 %1379
  %1383 = vst.msk [vmem:[%s13 + $0x4] sm:$0x1] %vm296, %v1378
  %1384 = vst.msk [vmem:[%s13 + $0xc] sm:$0x1] %vm296, %v1380
  %v1385 = vld [vmem:[%s4] sm:$0xff]
  %v1386 = vld [vmem:[%s4 + $0x8] sm:$0xff]
  %v1387 = vld [vmem:[%s4 + $0x10] sm:$0xff]
  %v1388 = vld [vmem:[%s4 + $0x18] sm:$0xff]
  %v1390 = vsel %vm152, %v1193, 0
  %1392 = vmatprep.subr.mxu0 0.0
  %1393 = vmatpush1.msra.mxu0 0.0
  %1394 = vmatprep.subr.mxu0 0.0
  %1395 = vmatpush1.msra.mxu0 0.0
  %1396 = vmatprep.subr.mxu0 0.0
  %1397 = vmatpush1.msra.mxu0 0.0
  %1398 = vmatprep.subr.mxu0 0.0
  %1399 = vmatpush1.msra.mxu0 0.0
  %1400 = vmatprep.subr.mxu0 0.0
  %1401 = vmatpush1.msra.mxu0 0.0
  %1402 = vmatprep.subr.mxu0 0.0
  %1403 = vmatpush1.msra.mxu0 0.0
  %1404 = vmatprep.subr.mxu0 0.0
  %1405 = vmatpush1.msra.mxu0 0.0
  %1406 = vmatprep.subr.mxu0 0.0
  %1407 = vmatpush1.msra.mxu0 0.0
  %1408 = vmatprep.subr.mxu0 0.0
  %1409 = vmatpush1.msra.mxu0 0.0
  %1410 = vmatprep.subr.mxu0 0.0
  %1411 = vmatpush1.msra.mxu0 0.0
  %1412 = vmatprep.subr.mxu0 0.0
  %1413 = vmatpush1.msra.mxu0 0.0
  %1414 = vmatprep.subr.mxu0 0.0
  %1415 = vmatpush1.msra.mxu0 0.0
  %1416 = vmatprep.subr.mxu0 0.0
  %1417 = vmatpush1.msra.mxu0 %v1388
  %1418 = vmatprep.subr.mxu0 0.0
  %1419 = vmatpush1.msra.mxu0 %v1387
  %1420 = vmatprep.subr.mxu0 0.0
  %1421 = vmatpush1.msra.mxu0 %v1386
  %1422 = vmatprep.subr.mxu0 0.0
  %1423 = vmatpush1.msra.mxu0 %v1385
  %1424 = vmatprep.subr.mxu0 0.0
  %1425 = vmatpush2.msra.mxu0 0.0
  %1426 = vmatprep.subr.mxu0 0.0
  %1427 = vmatpush2.msra.mxu0 0.0
  %1428 = vmatprep.subr.mxu0 0.0
  %1429 = vmatpush2.msra.mxu0 0.0
  %1430 = vmatprep.subr.mxu0 0.0
  %1431 = vmatpush2.msra.mxu0 0.0
  %1432 = vmatprep.subr.mxu0 0.0
  %1433 = vmatpush2.msra.mxu0 0.0
  %1434 = vmatprep.subr.mxu0 0.0
  %1435 = vmatpush2.msra.mxu0 0.0
  %1436 = vmatprep.subr.mxu0 0.0
  %1437 = vmatpush2.msra.mxu0 0.0
  %1438 = vmatprep.subr.mxu0 0.0
  %1439 = vmatpush2.msra.mxu0 0.0
  %1440 = vmatprep.subr.mxu0 0.0
  %1441 = vmatpush2.msra.mxu0 0.0
  %1442 = vmatprep.subr.mxu0 0.0
  %1443 = vmatpush2.msra.mxu0 0.0
  %1444 = vmatprep.subr.mxu0 0.0
  %1445 = vmatpush2.msra.mxu0 0.0
  %1446 = vmatprep.subr.mxu0 0.0
  %1447 = vmatpush2.msra.mxu0 0.0
  %1448 = vmatprep.subr.mxu0 0.0
  %1449 = vmatpush2.msra.mxu0 0.0
  %1450 = vmatprep.subr.mxu0 0.0
  %1451 = vmatpush2.msra.mxu0 0.0
  %1452 = vmatprep.subr.mxu0 0.0
  %1453 = vmatpush2.msra.mxu0 0.0
  %1454 = vmatprep.subr.mxu0 0.0
  %1455 = vmatpush2.msra.mxu0 0.0
  %1456 = vmatprep.mubr.f32.mxu0 0.0
  %1457 = vmatmul.mubr.f32.gmra.mxu0 %v1390
  %v1458 = vpop.f32.mrf.mxu0
  %v1459 = vadd.f32 0.0, %v1458
  %v1460 = vpop.f32.mrf.mxu0
  %1461 = vdwg.mxu0
  %v1462 = vadd.f32 %v143, %v1459
  %v1463 = vxor.u32 %v1462, 2147483648
  %v1464 = vmul.f32 %v1463, 1.442695
  %v1465 = vpow.pop %v1464
  %v1466 = vadd.f32 %v1465, 1.0
  %v1467 = vrcp.pop %v1466
  %v1468 = vmul.f32 1.0, %v1467
  %v1469 = vtanh.pop %v1462
  %1471 = vrot.lane.b32.xlu0 %v1199, 32
  %v1472 = vpop.permute.xlu0 %1471
  %v1474 = vmul.f32 %v1468, %v1472
  %1476 = vrot.lane.b32.xlu0 %v1469, 64
  %v1477 = vpop.permute.xlu0 %1476
  %v1479 = vmul.f32 %v1468, %v1477
  %1481 = vrot.lane.b32.xlu0 %v1479, 32
  %v1482 = vpop.permute.xlu0 %1481
  %v1484 = vadd.f32 %v1474, %v1482
  %v1485 = vtanh.pop %v1484
  %1487 = vrot.lane.b32.xlu0 %v1485, 64
  %v1488 = vpop.permute.xlu0 %1487
  %v1490 = vmul.f32 %v1468, %v1488
  %1491 = vrot.lane.b32.xlu0 %v1193, 96
  %v1492 = vpop.permute.xlu0 %1491
  %v1494 = vsel %vm1339, %v1490, %v1492
  %v1495 = vsel %vm1339, %v1484, %v1472
  %v1496 = vsel %vm1339, %v1490, 0.0
  %v1499 = vunpack.c.l.s4 1966171168
  %v1500 = vunpack.c.0.s8 %v1499
  %v1501 = vlaneseq
  %v1502 = vshrl.u32 %v1501, 7
  %v1503 = vsub.s32 %v1500, %v1502
  %v1504 = vrot.slane %v1496, %v1503
  %v1505 = vcombine.high %v1504, %v1504
  %v1507 = vunpack.c.l.s4 1966171168
  %v1508 = vunpack.c.0.s8 %v1507
  %v1509 = vlaneseq
  %v1510 = vshrl.u32 %v1509, 7
  %v1511 = vsub.s32 %v1508, %v1510
  %v1512 = vrot.slane %v1504, %v1511
  %v1514 = vunpack.c.l.s4 1966171168
  %v1515 = vunpack.c.0.s8 %v1514
  %v1516 = vlaneseq
  %v1517 = vshrl.u32 %v1516, 7
  %v1518 = vsub.s32 %v1515, %v1517
  %v1519 = vrot.slane %v1505, %v1518
  %v1520 = vlaneseq
  %v1521 = vshrl.u32 %v1520, 7
  %v1522 = vsub.s32 0, %v1521
  %v1523 = vrot.slane %v1512, %v1522
  %v1524 = vlaneseq
  %v1525 = vshrl.u32 %v1524, 7
  %v1526 = vsub.s32 0, %v1525
  %v1527 = vrot.slane %v1519, %v1526
  %1528 = vrot.lane.b32.xlu0 %v1523, 32
  %v1529 = vpop.permute.xlu0 %1528
  %1530 = vrot.lane.b32.xlu0 %v1527, 32
  %v1531 = vpop.permute.xlu0 %1530
  %1534 = vst.msk [vmem:[%s12 + $0x4] sm:$0x1] %vm296, %v1529
  %1535 = vst.msk [vmem:[%s12 + $0xc] sm:$0x1] %vm296, %v1531
  %v1536 = vld [vmem:[%s5] sm:$0xff]
  %v1537 = vld [vmem:[%s5 + $0x8] sm:$0xff]
  %v1538 = vld [vmem:[%s5 + $0x10] sm:$0xff]
  %v1539 = vld [vmem:[%s5 + $0x18] sm:$0xff]
  %1541 = vrot.lane.b32.xlu0 %v1343, 32
  %v1542 = vpop.permute.xlu0 %1541
  %v1543 = vsel %vm152, %v1542, 0
  %1545 = vmatprep.subr.mxu0 0.0
  %1546 = vmatpush1.msra.mxu0 0.0
  %1547 = vmatprep.subr.mxu0 0.0
  %1548 = vmatpush1.msra.mxu0 0.0
  %1549 = vmatprep.subr.mxu0 0.0
  %1550 = vmatpush1.msra.mxu0 0.0
  %1551 = vmatprep.subr.mxu0 0.0
  %1552 = vmatpush1.msra.mxu0 0.0
  %1553 = vmatprep.subr.mxu0 0.0
  %1554 = vmatpush1.msra.mxu0 0.0
  %1555 = vmatprep.subr.mxu0 0.0
  %1556 = vmatpush1.msra.mxu0 0.0
  %1557 = vmatprep.subr.mxu0 0.0
  %1558 = vmatpush1.msra.mxu0 0.0
  %1559 = vmatprep.subr.mxu0 0.0
  %1560 = vmatpush1.msra.mxu0 0.0
  %1561 = vmatprep.subr.mxu0 0.0
  %1562 = vmatpush1.msra.mxu0 0.0
  %1563 = vmatprep.subr.mxu0 0.0
  %1564 = vmatpush1.msra.mxu0 0.0
  %1565 = vmatprep.subr.mxu0 0.0
  %1566 = vmatpush1.msra.mxu0 0.0
  %1567 = vmatprep.subr.mxu0 0.0
  %1568 = vmatpush1.msra.mxu0 0.0
  %1569 = vmatprep.subr.mxu0 0.0
  %1570 = vmatpush1.msra.mxu0 %v1539
  %1571 = vmatprep.subr.mxu0 0.0
  %1572 = vmatpush1.msra.mxu0 %v1538
  %1573 = vmatprep.subr.mxu0 0.0
  %1574 = vmatpush1.msra.mxu0 %v1537
  %1575 = vmatprep.subr.mxu0 0.0
  %1576 = vmatpush1.msra.mxu0 %v1536
  %1577 = vmatprep.subr.mxu0 0.0
  %1578 = vmatpush2.msra.mxu0 0.0
  %1579 = vmatprep.subr.mxu0 0.0
  %1580 = vmatpush2.msra.mxu0 0.0
  %1581 = vmatprep.subr.mxu0 0.0
  %1582 = vmatpush2.msra.mxu0 0.0
  %1583 = vmatprep.subr.mxu0 0.0
  %1584 = vmatpush2.msra.mxu0 0.0
  %1585 = vmatprep.subr.mxu0 0.0
  %1586 = vmatpush2.msra.mxu0 0.0
  %1587 = vmatprep.subr.mxu0 0.0
  %1588 = vmatpush2.msra.mxu0 0.0
  %1589 = vmatprep.subr.mxu0 0.0
  %1590 = vmatpush2.msra.mxu0 0.0
  %1591 = vmatprep.subr.mxu0 0.0
  %1592 = vmatpush2.msra.mxu0 0.0
  %1593 = vmatprep.subr.mxu0 0.0
  %1594 = vmatpush2.msra.mxu0 0.0
  %1595 = vmatprep.subr.mxu0 0.0
  %1596 = vmatpush2.msra.mxu0 0.0
  %1597 = vmatprep.subr.mxu0 0.0
  %1598 = vmatpush2.msra.mxu0 0.0
  %1599 = vmatprep.subr.mxu0 0.0
  %1600 = vmatpush2.msra.mxu0 0.0
  %1601 = vmatprep.subr.mxu0 0.0
  %1602 = vmatpush2.msra.mxu0 0.0
  %1603 = vmatprep.subr.mxu0 0.0
  %1604 = vmatpush2.msra.mxu0 0.0
  %1605 = vmatprep.subr.mxu0 0.0
  %1606 = vmatpush2.msra.mxu0 0.0
  %1607 = vmatprep.subr.mxu0 0.0
  %1608 = vmatpush2.msra.mxu0 0.0
  %1609 = vmatprep.mubr.f32.mxu0 0.0
  %1610 = vmatmul.mubr.f32.gmra.mxu0 %v1543
  %v1611 = vpop.f32.mrf.mxu0
  %v1612 = vadd.f32 0.0, %v1611
  %v1613 = vpop.f32.mrf.mxu0
  %1614 = vdwg.mxu0
  %v1616 = vrot.slane %v1612, 2
  %v1618 = vadd.f32 %v139, %v1616
  %v1619 = vxor.u32 %v1618, 2147483648
  %v1620 = vmul.f32 %v1619, 1.442695
  %v1621 = vpow.pop %v1620
  %v1622 = vadd.f32 %v1621, 1.0
  %v1623 = vrcp.pop %v1622
  %v1624 = vmul.f32 1.0, %v1623
  %v1625 = vtanh.pop %v1618
  %v1627 = vrot.slane %v1344, 2
  %v1629 = vmul.f32 %v1624, %v1627
  %1631 = vrot.lane.b32.xlu0 %v1625, 64
  %v1632 = vpop.permute.xlu0 %1631
  %v1634 = vmul.f32 %v1624, %v1632
  %1636 = vrot.lane.b32.xlu0 %v1634, 32
  %v1637 = vpop.permute.xlu0 %1636
  %v1639 = vadd.f32 %v1629, %v1637
  %v1640 = vtanh.pop %v1639
  %1642 = vrot.lane.b32.xlu0 %v1640, 64
  %v1643 = vpop.permute.xlu0 %1642
  %v1645 = vmul.f32 %v1624, %v1643
  %v1647 = vrot.slane %v1645, 6
  %1648 = vrot.lane.b32.xlu0 %v1647, 32
  %v1649 = vpop.permute.xlu0 %1648
  %v1652 = vsel %vm1187, %v1649, %v1542
  %v1654 = vrot.slane %v1639, 6
  %1655 = vrot.lane.b32.xlu0 %v1654, 96
  %v1656 = vpop.permute.xlu0 %1655
  %1658 = vrot.lane.b32.xlu0 %v1344, 96
  %v1659 = vpop.permute.xlu0 %1658
  %v1661 = vsel %vm1187, %v1656, %v1659
  %v1662 = vsel %vm1187, %v1649, 0.0
  %v1665 = vunpack.c.l.s4 1966171168
  %v1666 = vunpack.c.0.s8 %v1665
  %v1667 = vlaneseq
  %v1668 = vshrl.u32 %v1667, 7
  %v1669 = vsub.s32 %v1666, %v1668
  %v1670 = vrot.slane %v1662, %v1669
  %v1671 = vcombine.high %v1670, %v1670
  %v1673 = vunpack.c.l.s4 1966171168
  %v1674 = vunpack.c.0.s8 %v1673
  %v1675 = vlaneseq
  %v1676 = vshrl.u32 %v1675, 7
  %v1677 = vsub.s32 %v1674, %v1676
  %v1678 = vrot.slane %v1670, %v1677
  %v1680 = vunpack.c.l.s4 1966171168
  %v1681 = vunpack.c.0.s8 %v1680
  %v1682 = vlaneseq
  %v1683 = vshrl.u32 %v1682, 7
  %v1684 = vsub.s32 %v1681, %v1683
  %v1685 = vrot.slane %v1671, %v1684
  %1688 = vst.msk [vmem:[%s13 + $0x3] sm:$0x1] %vm296, %v1678
  %1689 = vst.msk [vmem:[%s13 + $0xb] sm:$0x1] %vm296, %v1685
  %v1690 = vld [vmem:[%s4] sm:$0xff]
  %v1691 = vld [vmem:[%s4 + $0x8] sm:$0xff]
  %v1692 = vld [vmem:[%s4 + $0x10] sm:$0xff]
  %v1693 = vld [vmem:[%s4 + $0x18] sm:$0xff]
  %1695 = vrot.lane.b32.xlu0 %v1494, 32
  %v1696 = vpop.permute.xlu0 %1695
  %v1697 = vsel %vm152, %v1696, 0
  %1699 = vmatprep.subr.mxu0 0.0
  %1700 = vmatpush1.msra.mxu0 0.0
  %1701 = vmatprep.subr.mxu0 0.0
  %1702 = vmatpush1.msra.mxu0 0.0
  %1703 = vmatprep.subr.mxu0 0.0
  %1704 = vmatpush1.msra.mxu0 0.0
  %1705 = vmatprep.subr.mxu0 0.0
  %1706 = vmatpush1.msra.mxu0 0.0
  %1707 = vmatprep.subr.mxu0 0.0
  %1708 = vmatpush1.msra.mxu0 0.0
  %1709 = vmatprep.subr.mxu0 0.0
  %1710 = vmatpush1.msra.mxu0 0.0
  %1711 = vmatprep.subr.mxu0 0.0
  %1712 = vmatpush1.msra.mxu0 0.0
  %1713 = vmatprep.subr.mxu0 0.0
  %1714 = vmatpush1.msra.mxu0 0.0
  %1715 = vmatprep.subr.mxu0 0.0
  %1716 = vmatpush1.msra.mxu0 0.0
  %1717 = vmatprep.subr.mxu0 0.0
  %1718 = vmatpush1.msra.mxu0 0.0
  %1719 = vmatprep.subr.mxu0 0.0
  %1720 = vmatpush1.msra.mxu0 0.0
  %1721 = vmatprep.subr.mxu0 0.0
  %1722 = vmatpush1.msra.mxu0 0.0
  %1723 = vmatprep.subr.mxu0 0.0
  %1724 = vmatpush1.msra.mxu0 %v1693
  %1725 = vmatprep.subr.mxu0 0.0
  %1726 = vmatpush1.msra.mxu0 %v1692
  %1727 = vmatprep.subr.mxu0 0.0
  %1728 = vmatpush1.msra.mxu0 %v1691
  %1729 = vmatprep.subr.mxu0 0.0
  %1730 = vmatpush1.msra.mxu0 %v1690
  %1731 = vmatprep.subr.mxu0 0.0
  %1732 = vmatpush2.msra.mxu0 0.0
  %1733 = vmatprep.subr.mxu0 0.0
  %1734 = vmatpush2.msra.mxu0 0.0
  %1735 = vmatprep.subr.mxu0 0.0
  %1736 = vmatpush2.msra.mxu0 0.0
  %1737 = vmatprep.subr.mxu0 0.0
  %1738 = vmatpush2.msra.mxu0 0.0
  %1739 = vmatprep.subr.mxu0 0.0
  %1740 = vmatpush2.msra.mxu0 0.0
  %1741 = vmatprep.subr.mxu0 0.0
  %1742 = vmatpush2.msra.mxu0 0.0
  %1743 = vmatprep.subr.mxu0 0.0
  %1744 = vmatpush2.msra.mxu0 0.0
  %1745 = vmatprep.subr.mxu0 0.0
  %1746 = vmatpush2.msra.mxu0 0.0
  %1747 = vmatprep.subr.mxu0 0.0
  %1748 = vmatpush2.msra.mxu0 0.0
  %1749 = vmatprep.subr.mxu0 0.0
  %1750 = vmatpush2.msra.mxu0 0.0
  %1751 = vmatprep.subr.mxu0 0.0
  %1752 = vmatpush2.msra.mxu0 0.0
  %1753 = vmatprep.subr.mxu0 0.0
  %1754 = vmatpush2.msra.mxu0 0.0
  %1755 = vmatprep.subr.mxu0 0.0
  %1756 = vmatpush2.msra.mxu0 0.0
  %1757 = vmatprep.subr.mxu0 0.0
  %1758 = vmatpush2.msra.mxu0 0.0
  %1759 = vmatprep.subr.mxu0 0.0
  %1760 = vmatpush2.msra.mxu0 0.0
  %1761 = vmatprep.subr.mxu0 0.0
  %1762 = vmatpush2.msra.mxu0 0.0
  %1763 = vmatprep.mubr.f32.mxu0 0.0
  %1764 = vmatmul.mubr.f32.gmra.mxu0 %v1697
  %v1765 = vpop.f32.mrf.mxu0
  %v1766 = vadd.f32 0.0, %v1765
  %v1767 = vpop.f32.mrf.mxu0
  %1768 = vdwg.mxu0
  %v1770 = vrot.slane %v1766, 6
  %v1772 = vadd.f32 %v143, %v1770
  %v1773 = vxor.u32 %v1772, 2147483648
  %v1774 = vmul.f32 %v1773, 1.442695
  %v1775 = vpow.pop %v1774
  %v1776 = vadd.f32 %v1775, 1.0
  %v1777 = vrcp.pop %v1776
  %v1778 = vmul.f32 1.0, %v1777
  %v1779 = vtanh.pop %v1772
  %v1781 = vrot.slane %v1495, 6
  %v1783 = vmul.f32 %v1778, %v1781
  %1785 = vrot.lane.b32.xlu0 %v1779, 64
  %v1786 = vpop.permute.xlu0 %1785
  %v1788 = vmul.f32 %v1778, %v1786
  %1790 = vrot.lane.b32.xlu0 %v1788, 32
  %v1791 = vpop.permute.xlu0 %1790
  %v1793 = vadd.f32 %v1783, %v1791
  %v1794 = vtanh.pop %v1793
  %1796 = vrot.lane.b32.xlu0 %v1794, 64
  %v1797 = vpop.permute.xlu0 %1796
  %v1799 = vmul.f32 %v1778, %v1797
  %v1801 = vrot.slane %v1799, 2
  %1802 = vrot.lane.b32.xlu0 %v1801, 32
  %v1803 = vpop.permute.xlu0 %1802
  %v1806 = vsel %vm1031, %v1803, %v1696
  %v1808 = vrot.slane %v1793, 2
  %1809 = vrot.lane.b32.xlu0 %v1808, 96
  %v1810 = vpop.permute.xlu0 %1809
  %1812 = vrot.lane.b32.xlu0 %v1495, 96
  %v1813 = vpop.permute.xlu0 %1812
  %v1815 = vsel %vm1031, %v1810, %v1813
  %v1816 = vsel %vm1031, %v1803, 0.0
  %v1819 = vunpack.c.l.s4 1966171168
  %v1820 = vunpack.c.0.s8 %v1819
  %v1821 = vlaneseq
  %v1822 = vshrl.u32 %v1821, 7
  %v1823 = vsub.s32 %v1820, %v1822
  %v1824 = vrot.slane %v1816, %v1823
  %v1825 = vcombine.high %v1824, %v1824
  %v1827 = vunpack.c.l.s4 1966171168
  %v1828 = vunpack.c.0.s8 %v1827
  %v1829 = vlaneseq
  %v1830 = vshrl.u32 %v1829, 7
  %v1831 = vsub.s32 %v1828, %v1830
  %v1832 = vrot.slane %v1824, %v1831
  %v1834 = vunpack.c.l.s4 1966171168
  %v1835 = vunpack.c.0.s8 %v1834
  %v1836 = vlaneseq
  %v1837 = vshrl.u32 %v1836, 7
  %v1838 = vsub.s32 %v1835, %v1837
  %v1839 = vrot.slane %v1825, %v1838
  %1842 = vst.msk [vmem:[%s12 + $0x5] sm:$0x1] %vm296, %v1832
  %1843 = vst.msk [vmem:[%s12 + $0xd] sm:$0x1] %vm296, %v1839
  %v1844 = vld [vmem:[%s5] sm:$0xff]
  %v1845 = vld [vmem:[%s5 + $0x8] sm:$0xff]
  %v1846 = vld [vmem:[%s5 + $0x10] sm:$0xff]
  %v1847 = vld [vmem:[%s5 + $0x18] sm:$0xff]
  %v1849 = vsel %vm152, %v1652, 0
  %1851 = vmatprep.subr.mxu0 0.0
  %1852 = vmatpush1.msra.mxu0 0.0
  %1853 = vmatprep.subr.mxu0 0.0
  %1854 = vmatpush1.msra.mxu0 0.0
  %1855 = vmatprep.subr.mxu0 0.0
  %1856 = vmatpush1.msra.mxu0 0.0
  %1857 = vmatprep.subr.mxu0 0.0
  %1858 = vmatpush1.msra.mxu0 0.0
  %1859 = vmatprep.subr.mxu0 0.0
  %1860 = vmatpush1.msra.mxu0 0.0
  %1861 = vmatprep.subr.mxu0 0.0
  %1862 = vmatpush1.msra.mxu0 0.0
  %1863 = vmatprep.subr.mxu0 0.0
  %1864 = vmatpush1.msra.mxu0 0.0
  %1865 = vmatprep.subr.mxu0 0.0
  %1866 = vmatpush1.msra.mxu0 0.0
  %1867 = vmatprep.subr.mxu0 0.0
  %1868 = vmatpush1.msra.mxu0 0.0
  %1869 = vmatprep.subr.mxu0 0.0
  %1870 = vmatpush1.msra.mxu0 0.0
  %1871 = vmatprep.subr.mxu0 0.0
  %1872 = vmatpush1.msra.mxu0 0.0
  %1873 = vmatprep.subr.mxu0 0.0
  %1874 = vmatpush1.msra.mxu0 0.0
  %1875 = vmatprep.subr.mxu0 0.0
  %1876 = vmatpush1.msra.mxu0 %v1847
  %1877 = vmatprep.subr.mxu0 0.0
  %1878 = vmatpush1.msra.mxu0 %v1846
  %1879 = vmatprep.subr.mxu0 0.0
  %1880 = vmatpush1.msra.mxu0 %v1845
  %1881 = vmatprep.subr.mxu0 0.0
  %1882 = vmatpush1.msra.mxu0 %v1844
  %1883 = vmatprep.subr.mxu0 0.0
  %1884 = vmatpush2.msra.mxu0 0.0
  %1885 = vmatprep.subr.mxu0 0.0
  %1886 = vmatpush2.msra.mxu0 0.0
  %1887 = vmatprep.subr.mxu0 0.0
  %1888 = vmatpush2.msra.mxu0 0.0
  %1889 = vmatprep.subr.mxu0 0.0
  %1890 = vmatpush2.msra.mxu0 0.0
  %1891 = vmatprep.subr.mxu0 0.0
  %1892 = vmatpush2.msra.mxu0 0.0
  %1893 = vmatprep.subr.mxu0 0.0
  %1894 = vmatpush2.msra.mxu0 0.0
  %1895 = vmatprep.subr.mxu0 0.0
  %1896 = vmatpush2.msra.mxu0 0.0
  %1897 = vmatprep.subr.mxu0 0.0
  %1898 = vmatpush2.msra.mxu0 0.0
  %1899 = vmatprep.subr.mxu0 0.0
  %1900 = vmatpush2.msra.mxu0 0.0
  %1901 = vmatprep.subr.mxu0 0.0
  %1902 = vmatpush2.msra.mxu0 0.0
  %1903 = vmatprep.subr.mxu0 0.0
  %1904 = vmatpush2.msra.mxu0 0.0
  %1905 = vmatprep.subr.mxu0 0.0
  %1906 = vmatpush2.msra.mxu0 0.0
  %1907 = vmatprep.subr.mxu0 0.0
  %1908 = vmatpush2.msra.mxu0 0.0
  %1909 = vmatprep.subr.mxu0 0.0
  %1910 = vmatpush2.msra.mxu0 0.0
  %1911 = vmatprep.subr.mxu0 0.0
  %1912 = vmatpush2.msra.mxu0 0.0
  %1913 = vmatprep.subr.mxu0 0.0
  %1914 = vmatpush2.msra.mxu0 0.0
  %1915 = vmatprep.mubr.f32.mxu0 0.0
  %1916 = vmatmul.mubr.f32.gmra.mxu0 %v1849
  %v1917 = vpop.f32.mrf.mxu0
  %v1918 = vadd.f32 0.0, %v1917
  %v1919 = vpop.f32.mrf.mxu0
  %1920 = vdwg.mxu0
  %v1922 = vrot.slane %v1918, 4
  %v1924 = vadd.f32 %v139, %v1922
  %v1925 = vxor.u32 %v1924, 2147483648
  %v1926 = vmul.f32 %v1925, 1.442695
  %v1927 = vpow.pop %v1926
  %v1928 = vadd.f32 %v1927, 1.0
  %v1929 = vrcp.pop %v1928
  %v1930 = vmul.f32 1.0, %v1929
  %v1931 = vtanh.pop %v1924
  %v1933 = vrot.slane %v1661, 4
  %1934 = vrot.lane.b32.xlu0 %v1933, 32
  %v1935 = vpop.permute.xlu0 %1934
  %v1937 = vmul.f32 %v1930, %v1935
  %1939 = vrot.lane.b32.xlu0 %v1931, 64
  %v1940 = vpop.permute.xlu0 %1939
  %v1942 = vmul.f32 %v1930, %v1940
  %1944 = vrot.lane.b32.xlu0 %v1942, 32
  %v1945 = vpop.permute.xlu0 %1944
  %v1947 = vadd.f32 %v1937, %v1945
  %v1948 = vtanh.pop %v1947
  %1950 = vrot.lane.b32.xlu0 %v1948, 64
  %v1951 = vpop.permute.xlu0 %1950
  %v1953 = vmul.f32 %v1930, %v1951
  %v1955 = vrot.slane %v1953, 4
  %1956 = vrot.lane.b32.xlu0 %v1955, 32
  %v1957 = vpop.permute.xlu0 %1956
  %v1959 = vsel %vm875, %v1957, %v1652
  %v1961 = vrot.slane %v1947, 4
  %1962 = vrot.lane.b32.xlu0 %v1961, 96
  %v1963 = vpop.permute.xlu0 %1962
  %v1965 = vsel %vm875, %v1963, %v1661
  %v1966 = vsel %vm875, %v1957, 0.0
  %v1969 = vunpack.c.l.s4 1966171168
  %v1970 = vunpack.c.0.s8 %v1969
  %v1971 = vlaneseq
  %v1972 = vshrl.u32 %v1971, 7
  %v1973 = vsub.s32 %v1970, %v1972
  %v1974 = vrot.slane %v1966, %v1973
  %v1975 = vcombine.high %v1974, %v1974
  %v1977 = vunpack.c.l.s4 1966171168
  %v1978 = vunpack.c.0.s8 %v1977
  %v1979 = vlaneseq
  %v1980 = vshrl.u32 %v1979, 7
  %v1981 = vsub.s32 %v1978, %v1980
  %v1982 = vrot.slane %v1974, %v1981
  %v1984 = vunpack.c.l.s4 1966171168
  %v1985 = vunpack.c.0.s8 %v1984
  %v1986 = vlaneseq
  %v1987 = vshrl.u32 %v1986, 7
  %v1988 = vsub.s32 %v1985, %v1987
  %v1989 = vrot.slane %v1975, %v1988
  %1992 = vst.msk [vmem:[%s13 + $0x2] sm:$0x1] %vm296, %v1982
  %1993 = vst.msk [vmem:[%s13 + $0xa] sm:$0x1] %vm296, %v1989
  %v1994 = vld [vmem:[%s4] sm:$0xff]
  %v1995 = vld [vmem:[%s4 + $0x8] sm:$0xff]
  %v1996 = vld [vmem:[%s4 + $0x10] sm:$0xff]
  %v1997 = vld [vmem:[%s4 + $0x18] sm:$0xff]
  %v1999 = vsel %vm152, %v1806, 0
  %2001 = vmatprep.subr.mxu0 0.0
  %2002 = vmatpush1.msra.mxu0 0.0
  %2003 = vmatprep.subr.mxu0 0.0
  %2004 = vmatpush1.msra.mxu0 0.0
  %2005 = vmatprep.subr.mxu0 0.0
  %2006 = vmatpush1.msra.mxu0 0.0
  %2007 = vmatprep.subr.mxu0 0.0
  %2008 = vmatpush1.msra.mxu0 0.0
  %2009 = vmatprep.subr.mxu0 0.0
  %2010 = vmatpush1.msra.mxu0 0.0
  %2011 = vmatprep.subr.mxu0 0.0
  %2012 = vmatpush1.msra.mxu0 0.0
  %2013 = vmatprep.subr.mxu0 0.0
  %2014 = vmatpush1.msra.mxu0 0.0
  %2015 = vmatprep.subr.mxu0 0.0
  %2016 = vmatpush1.msra.mxu0 0.0
  %2017 = vmatprep.subr.mxu0 0.0
  %2018 = vmatpush1.msra.mxu0 0.0
  %2019 = vmatprep.subr.mxu0 0.0
  %2020 = vmatpush1.msra.mxu0 0.0
  %2021 = vmatprep.subr.mxu0 0.0
  %2022 = vmatpush1.msra.mxu0 0.0
  %2023 = vmatprep.subr.mxu0 0.0
  %2024 = vmatpush1.msra.mxu0 0.0
  %2025 = vmatprep.subr.mxu0 0.0
  %2026 = vmatpush1.msra.mxu0 %v1997
  %2027 = vmatprep.subr.mxu0 0.0
  %2028 = vmatpush1.msra.mxu0 %v1996
  %2029 = vmatprep.subr.mxu0 0.0
  %2030 = vmatpush1.msra.mxu0 %v1995
  %2031 = vmatprep.subr.mxu0 0.0
  %2032 = vmatpush1.msra.mxu0 %v1994
  %2033 = vmatprep.subr.mxu0 0.0
  %2034 = vmatpush2.msra.mxu0 0.0
  %2035 = vmatprep.subr.mxu0 0.0
  %2036 = vmatpush2.msra.mxu0 0.0
  %2037 = vmatprep.subr.mxu0 0.0
  %2038 = vmatpush2.msra.mxu0 0.0
  %2039 = vmatprep.subr.mxu0 0.0
  %2040 = vmatpush2.msra.mxu0 0.0
  %2041 = vmatprep.subr.mxu0 0.0
  %2042 = vmatpush2.msra.mxu0 0.0
  %2043 = vmatprep.subr.mxu0 0.0
  %2044 = vmatpush2.msra.mxu0 0.0
  %2045 = vmatprep.subr.mxu0 0.0
  %2046 = vmatpush2.msra.mxu0 0.0
  %2047 = vmatprep.subr.mxu0 0.0
  %2048 = vmatpush2.msra.mxu0 0.0
  %2049 = vmatprep.subr.mxu0 0.0
  %2050 = vmatpush2.msra.mxu0 0.0
  %2051 = vmatprep.subr.mxu0 0.0
  %2052 = vmatpush2.msra.mxu0 0.0
  %2053 = vmatprep.subr.mxu0 0.0
  %2054 = vmatpush2.msra.mxu0 0.0
  %2055 = vmatprep.subr.mxu0 0.0
  %2056 = vmatpush2.msra.mxu0 0.0
  %2057 = vmatprep.subr.mxu0 0.0
  %2058 = vmatpush2.msra.mxu0 0.0
  %2059 = vmatprep.subr.mxu0 0.0
  %2060 = vmatpush2.msra.mxu0 0.0
  %2061 = vmatprep.subr.mxu0 0.0
  %2062 = vmatpush2.msra.mxu0 0.0
  %2063 = vmatprep.subr.mxu0 0.0
  %2064 = vmatpush2.msra.mxu0 0.0
  %2065 = vmatprep.mubr.f32.mxu0 0.0
  %2066 = vmatmul.mubr.f32.gmra.mxu0 %v1999
  %v2067 = vpop.f32.mrf.mxu0
  %v2068 = vadd.f32 0.0, %v2067
  %v2069 = vpop.f32.mrf.mxu0
  %2070 = vdwg.mxu0
  %v2072 = vrot.slane %v2068, 4
  %v2074 = vadd.f32 %v143, %v2072
  %v2075 = vxor.u32 %v2074, 2147483648
  %v2076 = vmul.f32 %v2075, 1.442695
  %v2077 = vpow.pop %v2076
  %v2078 = vadd.f32 %v2077, 1.0
  %v2079 = vrcp.pop %v2078
  %v2080 = vmul.f32 1.0, %v2079
  %v2081 = vtanh.pop %v2074
  %v2083 = vrot.slane %v1815, 4
  %2084 = vrot.lane.b32.xlu0 %v2083, 32
  %v2085 = vpop.permute.xlu0 %2084
  %v2087 = vmul.f32 %v2080, %v2085
  %2089 = vrot.lane.b32.xlu0 %v2081, 64
  %v2090 = vpop.permute.xlu0 %2089
  %v2092 = vmul.f32 %v2080, %v2090
  %2094 = vrot.lane.b32.xlu0 %v2092, 32
  %v2095 = vpop.permute.xlu0 %2094
  %v2097 = vadd.f32 %v2087, %v2095
  %v2098 = vtanh.pop %v2097
  %2100 = vrot.lane.b32.xlu0 %v2098, 64
  %v2101 = vpop.permute.xlu0 %2100
  %v2103 = vmul.f32 %v2080, %v2101
  %v2105 = vrot.slane %v2103, 4
  %2106 = vrot.lane.b32.xlu0 %v2105, 32
  %v2107 = vpop.permute.xlu0 %2106
  %v2109 = vsel %vm719, %v2107, %v1806
  %v2111 = vrot.slane %v2097, 4
  %2112 = vrot.lane.b32.xlu0 %v2111, 96
  %v2113 = vpop.permute.xlu0 %2112
  %v2115 = vsel %vm719, %v2113, %v1815
  %v2116 = vsel %vm719, %v2107, 0.0
  %v2119 = vunpack.c.l.s4 1966171168
  %v2120 = vunpack.c.0.s8 %v2119
  %v2121 = vlaneseq
  %v2122 = vshrl.u32 %v2121, 7
  %v2123 = vsub.s32 %v2120, %v2122
  %v2124 = vrot.slane %v2116, %v2123
  %v2125 = vcombine.high %v2124, %v2124
  %v2127 = vunpack.c.l.s4 1966171168
  %v2128 = vunpack.c.0.s8 %v2127
  %v2129 = vlaneseq
  %v2130 = vshrl.u32 %v2129, 7
  %v2131 = vsub.s32 %v2128, %v2130
  %v2132 = vrot.slane %v2124, %v2131
  %v2134 = vunpack.c.l.s4 1966171168
  %v2135 = vunpack.c.0.s8 %v2134
  %v2136 = vlaneseq
  %v2137 = vshrl.u32 %v2136, 7
  %v2138 = vsub.s32 %v2135, %v2137
  %v2139 = vrot.slane %v2125, %v2138
  %2142 = vst.msk [vmem:[%s12 + $0x6] sm:$0x1] %vm296, %v2132
  %2143 = vst.msk [vmem:[%s12 + $0xe] sm:$0x1] %vm296, %v2139
  %v2144 = vld [vmem:[%s5] sm:$0xff]
  %v2145 = vld [vmem:[%s5 + $0x8] sm:$0xff]
  %v2146 = vld [vmem:[%s5 + $0x10] sm:$0xff]
  %v2147 = vld [vmem:[%s5 + $0x18] sm:$0xff]
  %v2149 = vsel %vm152, %v1959, 0
  %2151 = vmatprep.subr.mxu0 0.0
  %2152 = vmatpush1.msra.mxu0 0.0
  %2153 = vmatprep.subr.mxu0 0.0
  %2154 = vmatpush1.msra.mxu0 0.0
  %2155 = vmatprep.subr.mxu0 0.0
  %2156 = vmatpush1.msra.mxu0 0.0
  %2157 = vmatprep.subr.mxu0 0.0
  %2158 = vmatpush1.msra.mxu0 0.0
  %2159 = vmatprep.subr.mxu0 0.0
  %2160 = vmatpush1.msra.mxu0 0.0
  %2161 = vmatprep.subr.mxu0 0.0
  %2162 = vmatpush1.msra.mxu0 0.0
  %2163 = vmatprep.subr.mxu0 0.0
  %2164 = vmatpush1.msra.mxu0 0.0
  %2165 = vmatprep.subr.mxu0 0.0
  %2166 = vmatpush1.msra.mxu0 0.0
  %2167 = vmatprep.subr.mxu0 0.0
  %2168 = vmatpush1.msra.mxu0 0.0
  %2169 = vmatprep.subr.mxu0 0.0
  %2170 = vmatpush1.msra.mxu0 0.0
  %2171 = vmatprep.subr.mxu0 0.0
  %2172 = vmatpush1.msra.mxu0 0.0
  %2173 = vmatprep.subr.mxu0 0.0
  %2174 = vmatpush1.msra.mxu0 0.0
  %2175 = vmatprep.subr.mxu0 0.0
  %2176 = vmatpush1.msra.mxu0 %v2147
  %2177 = vmatprep.subr.mxu0 0.0
  %2178 = vmatpush1.msra.mxu0 %v2146
  %2179 = vmatprep.subr.mxu0 0.0
  %2180 = vmatpush1.msra.mxu0 %v2145
  %2181 = vmatprep.subr.mxu0 0.0
  %2182 = vmatpush1.msra.mxu0 %v2144
  %2183 = vmatprep.subr.mxu0 0.0
  %2184 = vmatpush2.msra.mxu0 0.0
  %2185 = vmatprep.subr.mxu0 0.0
  %2186 = vmatpush2.msra.mxu0 0.0
  %2187 = vmatprep.subr.mxu0 0.0
  %2188 = vmatpush2.msra.mxu0 0.0
  %2189 = vmatprep.subr.mxu0 0.0
  %2190 = vmatpush2.msra.mxu0 0.0
  %2191 = vmatprep.subr.mxu0 0.0
  %2192 = vmatpush2.msra.mxu0 0.0
  %2193 = vmatprep.subr.mxu0 0.0
  %2194 = vmatpush2.msra.mxu0 0.0
  %2195 = vmatprep.subr.mxu0 0.0
  %2196 = vmatpush2.msra.mxu0 0.0
  %2197 = vmatprep.subr.mxu0 0.0
  %2198 = vmatpush2.msra.mxu0 0.0
  %2199 = vmatprep.subr.mxu0 0.0
  %2200 = vmatpush2.msra.mxu0 0.0
  %2201 = vmatprep.subr.mxu0 0.0
  %2202 = vmatpush2.msra.mxu0 0.0
  %2203 = vmatprep.subr.mxu0 0.0
  %2204 = vmatpush2.msra.mxu0 0.0
  %2205 = vmatprep.subr.mxu0 0.0
  %2206 = vmatpush2.msra.mxu0 0.0
  %2207 = vmatprep.subr.mxu0 0.0
  %2208 = vmatpush2.msra.mxu0 0.0
  %2209 = vmatprep.subr.mxu0 0.0
  %2210 = vmatpush2.msra.mxu0 0.0
  %2211 = vmatprep.subr.mxu0 0.0
  %2212 = vmatpush2.msra.mxu0 0.0
  %2213 = vmatprep.subr.mxu0 0.0
  %2214 = vmatpush2.msra.mxu0 0.0
  %2215 = vmatprep.mubr.f32.mxu0 0.0
  %2216 = vmatmul.mubr.f32.gmra.mxu0 %v2149
  %v2217 = vpop.f32.mrf.mxu0
  %v2218 = vadd.f32 0.0, %v2217
  %v2219 = vpop.f32.mrf.mxu0
  %2220 = vdwg.mxu0
  %v2222 = vrot.slane %v2218, 6
  %v2224 = vadd.f32 %v139, %v2222
  %v2225 = vxor.u32 %v2224, 2147483648
  %v2226 = vmul.f32 %v2225, 1.442695
  %v2227 = vpow.pop %v2226
  %v2228 = vadd.f32 %v2227, 1.0
  %v2229 = vrcp.pop %v2228
  %v2230 = vmul.f32 1.0, %v2229
  %v2231 = vtanh.pop %v2224
  %v2233 = vrot.slane %v1965, 6
  %2234 = vrot.lane.b32.xlu0 %v2233, 32
  %v2235 = vpop.permute.xlu0 %2234
  %v2237 = vmul.f32 %v2230, %v2235
  %2239 = vrot.lane.b32.xlu0 %v2231, 64
  %v2240 = vpop.permute.xlu0 %2239
  %v2242 = vmul.f32 %v2230, %v2240
  %2244 = vrot.lane.b32.xlu0 %v2242, 32
  %v2245 = vpop.permute.xlu0 %2244
  %v2247 = vadd.f32 %v2237, %v2245
  %v2248 = vtanh.pop %v2247
  %2250 = vrot.lane.b32.xlu0 %v2248, 64
  %v2251 = vpop.permute.xlu0 %2250
  %v2253 = vmul.f32 %v2230, %v2251
  %v2255 = vrot.slane %v2253, 2
  %2256 = vrot.lane.b32.xlu0 %v2255, 32
  %v2257 = vpop.permute.xlu0 %2256
  %v2259 = vsel %vm560, %v2257, %v1959
  %v2261 = vrot.slane %v2247, 2
  %2262 = vrot.lane.b32.xlu0 %v2261, 96
  %v2263 = vpop.permute.xlu0 %2262
  %v2265 = vsel %vm560, %v2263, %v1965
  %v2266 = vsel %vm560, %v2257, 0.0
  %v2269 = vunpack.c.l.s4 1966171168
  %v2270 = vunpack.c.0.s8 %v2269
  %v2271 = vlaneseq
  %v2272 = vshrl.u32 %v2271, 7
  %v2273 = vsub.s32 %v2270, %v2272
  %v2274 = vrot.slane %v2266, %v2273
  %v2275 = vcombine.high %v2274, %v2274
  %v2277 = vunpack.c.l.s4 1966171168
  %v2278 = vunpack.c.0.s8 %v2277
  %v2279 = vlaneseq
  %v2280 = vshrl.u32 %v2279, 7
  %v2281 = vsub.s32 %v2278, %v2280
  %v2282 = vrot.slane %v2274, %v2281
  %v2284 = vunpack.c.l.s4 1966171168
  %v2285 = vunpack.c.0.s8 %v2284
  %v2286 = vlaneseq
  %v2287 = vshrl.u32 %v2286, 7
  %v2288 = vsub.s32 %v2285, %v2287
  %v2289 = vrot.slane %v2275, %v2288
  %2292 = vst.msk [vmem:[%s13 + $0x1] sm:$0x1] %vm296, %v2282
  %2293 = vst.msk [vmem:[%s13 + $0x9] sm:$0x1] %vm296, %v2289
  %v2294 = vld [vmem:[%s4] sm:$0xff]
  %v2295 = vld [vmem:[%s4 + $0x8] sm:$0xff]
  %v2296 = vld [vmem:[%s4 + $0x10] sm:$0xff]
  %v2297 = vld [vmem:[%s4 + $0x18] sm:$0xff]
  %v2299 = vsel %vm152, %v2109, 0
  %2301 = vmatprep.subr.mxu0 0.0
  %2302 = vmatpush1.msra.mxu0 0.0
  %2303 = vmatprep.subr.mxu0 0.0
  %2304 = vmatpush1.msra.mxu0 0.0
  %2305 = vmatprep.subr.mxu0 0.0
  %2306 = vmatpush1.msra.mxu0 0.0
  %2307 = vmatprep.subr.mxu0 0.0
  %2308 = vmatpush1.msra.mxu0 0.0
  %2309 = vmatprep.subr.mxu0 0.0
  %2310 = vmatpush1.msra.mxu0 0.0
  %2311 = vmatprep.subr.mxu0 0.0
  %2312 = vmatpush1.msra.mxu0 0.0
  %2313 = vmatprep.subr.mxu0 0.0
  %2314 = vmatpush1.msra.mxu0 0.0
  %2315 = vmatprep.subr.mxu0 0.0
  %2316 = vmatpush1.msra.mxu0 0.0
  %2317 = vmatprep.subr.mxu0 0.0
  %2318 = vmatpush1.msra.mxu0 0.0
  %2319 = vmatprep.subr.mxu0 0.0
  %2320 = vmatpush1.msra.mxu0 0.0
  %2321 = vmatprep.subr.mxu0 0.0
  %2322 = vmatpush1.msra.mxu0 0.0
  %2323 = vmatprep.subr.mxu0 0.0
  %2324 = vmatpush1.msra.mxu0 0.0
  %2325 = vmatprep.subr.mxu0 0.0
  %2326 = vmatpush1.msra.mxu0 %v2297
  %2327 = vmatprep.subr.mxu0 0.0
  %2328 = vmatpush1.msra.mxu0 %v2296
  %2329 = vmatprep.subr.mxu0 0.0
  %2330 = vmatpush1.msra.mxu0 %v2295
  %2331 = vmatprep.subr.mxu0 0.0
  %2332 = vmatpush1.msra.mxu0 %v2294
  %2333 = vmatprep.subr.mxu0 0.0
  %2334 = vmatpush2.msra.mxu0 0.0
  %2335 = vmatprep.subr.mxu0 0.0
  %2336 = vmatpush2.msra.mxu0 0.0
  %2337 = vmatprep.subr.mxu0 0.0
  %2338 = vmatpush2.msra.mxu0 0.0
  %2339 = vmatprep.subr.mxu0 0.0
  %2340 = vmatpush2.msra.mxu0 0.0
  %2341 = vmatprep.subr.mxu0 0.0
  %2342 = vmatpush2.msra.mxu0 0.0
  %2343 = vmatprep.subr.mxu0 0.0
  %2344 = vmatpush2.msra.mxu0 0.0
  %2345 = vmatprep.subr.mxu0 0.0
  %2346 = vmatpush2.msra.mxu0 0.0
  %2347 = vmatprep.subr.mxu0 0.0
  %2348 = vmatpush2.msra.mxu0 0.0
  %2349 = vmatprep.subr.mxu0 0.0
  %2350 = vmatpush2.msra.mxu0 0.0
  %2351 = vmatprep.subr.mxu0 0.0
  %2352 = vmatpush2.msra.mxu0 0.0
  %2353 = vmatprep.subr.mxu0 0.0
  %2354 = vmatpush2.msra.mxu0 0.0
  %2355 = vmatprep.subr.mxu0 0.0
  %2356 = vmatpush2.msra.mxu0 0.0
  %2357 = vmatprep.subr.mxu0 0.0
  %2358 = vmatpush2.msra.mxu0 0.0
  %2359 = vmatprep.subr.mxu0 0.0
  %2360 = vmatpush2.msra.mxu0 0.0
  %2361 = vmatprep.subr.mxu0 0.0
  %2362 = vmatpush2.msra.mxu0 0.0
  %2363 = vmatprep.subr.mxu0 0.0
  %2364 = vmatpush2.msra.mxu0 0.0
  %2365 = vmatprep.mubr.f32.mxu0 0.0
  %2366 = vmatmul.mubr.f32.gmra.mxu0 %v2299
  %v2367 = vpop.f32.mrf.mxu0
  %v2368 = vadd.f32 0.0, %v2367
  %v2369 = vpop.f32.mrf.mxu0
  %2370 = vdwg.mxu0
  %v2372 = vrot.slane %v2368, 2
  %v2374 = vadd.f32 %v143, %v2372
  %v2375 = vxor.u32 %v2374, 2147483648
  %v2376 = vmul.f32 %v2375, 1.442695
  %v2377 = vpow.pop %v2376
  %v2378 = vadd.f32 %v2377, 1.0
  %v2379 = vrcp.pop %v2378
  %v2380 = vmul.f32 1.0, %v2379
  %v2381 = vtanh.pop %v2374
  %v2383 = vrot.slane %v2115, 2
  %2384 = vrot.lane.b32.xlu0 %v2383, 32
  %v2385 = vpop.permute.xlu0 %2384
  %v2387 = vmul.f32 %v2380, %v2385
  %2389 = vrot.lane.b32.xlu0 %v2381, 64
  %v2390 = vpop.permute.xlu0 %2389
  %v2392 = vmul.f32 %v2380, %v2390
  %2394 = vrot.lane.b32.xlu0 %v2392, 32
  %v2395 = vpop.permute.xlu0 %2394
  %v2397 = vadd.f32 %v2387, %v2395
  %v2398 = vtanh.pop %v2397
  %2400 = vrot.lane.b32.xlu0 %v2398, 64
  %v2401 = vpop.permute.xlu0 %2400
  %v2403 = vmul.f32 %v2380, %v2401
  %v2405 = vrot.slane %v2403, 6
  %2406 = vrot.lane.b32.xlu0 %v2405, 32
  %v2407 = vpop.permute.xlu0 %2406
  %v2409 = vsel %vm406, %v2407, %v2109
  %v2411 = vrot.slane %v2397, 6
  %2412 = vrot.lane.b32.xlu0 %v2411, 96
  %v2413 = vpop.permute.xlu0 %2412
  %v2415 = vsel %vm406, %v2413, %v2115
  %v2416 = vsel %vm406, %v2407, 0.0
  %v2419 = vunpack.c.l.s4 1966171168
  %v2420 = vunpack.c.0.s8 %v2419
  %v2421 = vlaneseq
  %v2422 = vshrl.u32 %v2421, 7
  %v2423 = vsub.s32 %v2420, %v2422
  %v2424 = vrot.slane %v2416, %v2423
  %v2425 = vcombine.high %v2424, %v2424
  %v2427 = vunpack.c.l.s4 1966171168
  %v2428 = vunpack.c.0.s8 %v2427
  %v2429 = vlaneseq
  %v2430 = vshrl.u32 %v2429, 7
  %v2431 = vsub.s32 %v2428, %v2430
  %v2432 = vrot.slane %v2424, %v2431
  %v2434 = vunpack.c.l.s4 1966171168
  %v2435 = vunpack.c.0.s8 %v2434
  %v2436 = vlaneseq
  %v2437 = vshrl.u32 %v2436, 7
  %v2438 = vsub.s32 %v2435, %v2437
  %v2439 = vrot.slane %v2425, %v2438
  %2442 = vst.msk [vmem:[%s12 + $0x7] sm:$0x1] %vm296, %v2432
  %2443 = vst.msk [vmem:[%s12 + $0xf] sm:$0x1] %vm296, %v2439
  %v2444 = vld [vmem:[%s5] sm:$0xff]
  %v2445 = vld [vmem:[%s5 + $0x8] sm:$0xff]
  %v2446 = vld [vmem:[%s5 + $0x10] sm:$0xff]
  %v2447 = vld [vmem:[%s5 + $0x18] sm:$0xff]
  %v2449 = vsel %vm152, %v2259, 0
  %2451 = vmatprep.subr.mxu0 0.0
  %2452 = vmatpush1.msra.mxu0 0.0
  %2453 = vmatprep.subr.mxu0 0.0
  %2454 = vmatpush1.msra.mxu0 0.0
  %2455 = vmatprep.subr.mxu0 0.0
  %2456 = vmatpush1.msra.mxu0 0.0
  %2457 = vmatprep.subr.mxu0 0.0
  %2458 = vmatpush1.msra.mxu0 0.0
  %2459 = vmatprep.subr.mxu0 0.0
  %2460 = vmatpush1.msra.mxu0 0.0
  %2461 = vmatprep.subr.mxu0 0.0
  %2462 = vmatpush1.msra.mxu0 0.0
  %2463 = vmatprep.subr.mxu0 0.0
  %2464 = vmatpush1.msra.mxu0 0.0
  %2465 = vmatprep.subr.mxu0 0.0
  %2466 = vmatpush1.msra.mxu0 0.0
  %2467 = vmatprep.subr.mxu0 0.0
  %2468 = vmatpush1.msra.mxu0 0.0
  %2469 = vmatprep.subr.mxu0 0.0
  %2470 = vmatpush1.msra.mxu0 0.0
  %2471 = vmatprep.subr.mxu0 0.0
  %2472 = vmatpush1.msra.mxu0 0.0
  %2473 = vmatprep.subr.mxu0 0.0
  %2474 = vmatpush1.msra.mxu0 0.0
  %2475 = vmatprep.subr.mxu0 0.0
  %2476 = vmatpush1.msra.mxu0 %v2447
  %2477 = vmatprep.subr.mxu0 0.0
  %2478 = vmatpush1.msra.mxu0 %v2446
  %2479 = vmatprep.subr.mxu0 0.0
  %2480 = vmatpush1.msra.mxu0 %v2445
  %2481 = vmatprep.subr.mxu0 0.0
  %2482 = vmatpush1.msra.mxu0 %v2444
  %2483 = vmatprep.subr.mxu0 0.0
  %2484 = vmatpush2.msra.mxu0 0.0
  %2485 = vmatprep.subr.mxu0 0.0
  %2486 = vmatpush2.msra.mxu0 0.0
  %2487 = vmatprep.subr.mxu0 0.0
  %2488 = vmatpush2.msra.mxu0 0.0
  %2489 = vmatprep.subr.mxu0 0.0
  %2490 = vmatpush2.msra.mxu0 0.0
  %2491 = vmatprep.subr.mxu0 0.0
  %2492 = vmatpush2.msra.mxu0 0.0
  %2493 = vmatprep.subr.mxu0 0.0
  %2494 = vmatpush2.msra.mxu0 0.0
  %2495 = vmatprep.subr.mxu0 0.0
  %2496 = vmatpush2.msra.mxu0 0.0
  %2497 = vmatprep.subr.mxu0 0.0
  %2498 = vmatpush2.msra.mxu0 0.0
  %2499 = vmatprep.subr.mxu0 0.0
  %2500 = vmatpush2.msra.mxu0 0.0
  %2501 = vmatprep.subr.mxu0 0.0
  %2502 = vmatpush2.msra.mxu0 0.0
  %2503 = vmatprep.subr.mxu0 0.0
  %2504 = vmatpush2.msra.mxu0 0.0
  %2505 = vmatprep.subr.mxu0 0.0
  %2506 = vmatpush2.msra.mxu0 0.0
  %2507 = vmatprep.subr.mxu0 0.0
  %2508 = vmatpush2.msra.mxu0 0.0
  %2509 = vmatprep.subr.mxu0 0.0
  %2510 = vmatpush2.msra.mxu0 0.0
  %2511 = vmatprep.subr.mxu0 0.0
  %2512 = vmatpush2.msra.mxu0 0.0
  %2513 = vmatprep.subr.mxu0 0.0
  %2514 = vmatpush2.msra.mxu0 0.0
  %2515 = vmatprep.mubr.f32.mxu0 0.0
  %2516 = vmatmul.mubr.f32.gmra.mxu0 %v2449
  %v2517 = vpop.f32.mrf.mxu0
  %v2518 = vadd.f32 0.0, %v2517
  %v2519 = vpop.f32.mrf.mxu0
  %2520 = vdwg.mxu0
  %v2521 = vadd.f32 %v139, %v2518
  %v2522 = vxor.u32 %v2521, 2147483648
  %v2523 = vmul.f32 %v2522, 1.442695
  %v2524 = vpow.pop %v2523
  %v2525 = vadd.f32 %v2524, 1.0
  %v2526 = vrcp.pop %v2525
  %v2527 = vmul.f32 1.0, %v2526
  %v2528 = vtanh.pop %v2521
  %2530 = vrot.lane.b32.xlu0 %v2265, 32
  %v2531 = vpop.permute.xlu0 %2530
  %v2533 = vmul.f32 %v2527, %v2531
  %2535 = vrot.lane.b32.xlu0 %v2528, 64
  %v2536 = vpop.permute.xlu0 %2535
  %v2538 = vmul.f32 %v2527, %v2536
  %2540 = vrot.lane.b32.xlu0 %v2538, 32
  %v2541 = vpop.permute.xlu0 %2540
  %v2543 = vadd.f32 %v2533, %v2541
  %v2544 = vtanh.pop %v2543
  %2546 = vrot.lane.b32.xlu0 %v2544, 64
  %v2547 = vpop.permute.xlu0 %2546
  %v2549 = vmul.f32 %v2527, %v2547
  %2550 = vrot.lane.b32.xlu0 %v2259, 96
  %v2551 = vpop.permute.xlu0 %2550
  %v2553 = vsel %vm256, %v2549, %v2551
  %v2554 = vsel %vm256, %v2543, %v2531
  %v2555 = vsel %vm256, %v2549, 0.0
  %v2558 = vunpack.c.l.s4 1966171168
  %v2559 = vunpack.c.0.s8 %v2558
  %v2560 = vlaneseq
  %v2561 = vshrl.u32 %v2560, 7
  %v2562 = vsub.s32 %v2559, %v2561
  %v2563 = vrot.slane %v2555, %v2562
  %v2564 = vcombine.high %v2563, %v2563
  %v2566 = vunpack.c.l.s4 1966171168
  %v2567 = vunpack.c.0.s8 %v2566
  %v2568 = vlaneseq
  %v2569 = vshrl.u32 %v2568, 7
  %v2570 = vsub.s32 %v2567, %v2569
  %v2571 = vrot.slane %v2563, %v2570
  %v2573 = vunpack.c.l.s4 1966171168
  %v2574 = vunpack.c.0.s8 %v2573
  %v2575 = vlaneseq
  %v2576 = vshrl.u32 %v2575, 7
  %v2577 = vsub.s32 %v2574, %v2576
  %v2578 = vrot.slane %v2564, %v2577
  %v2579 = vlaneseq
  %v2580 = vshrl.u32 %v2579, 7
  %v2581 = vsub.s32 0, %v2580
  %v2582 = vrot.slane %v2571, %v2581
  %v2583 = vlaneseq
  %v2584 = vshrl.u32 %v2583, 7
  %v2585 = vsub.s32 0, %v2584
  %v2586 = vrot.slane %v2578, %v2585
  %2587 = vrot.lane.b32.xlu0 %v2582, 32
  %v2588 = vpop.permute.xlu0 %2587
  %2589 = vrot.lane.b32.xlu0 %v2586, 32
  %v2590 = vpop.permute.xlu0 %2589
  %2593 = vst.msk [vmem:[%s13] sm:$0x1] %vm296, %v2588
  %2594 = vst.msk [vmem:[%s13 + $0x8] sm:$0x1] %vm296, %v2590
  %v2595 = vld [vmem:[%s6] sm:$0xff]
  %v2596 = vld [vmem:[%s6 + $0x8] sm:$0xff]
  %v2597 = vld [vmem:[%s6 + $0x10] sm:$0xff]
  %v2598 = vld [vmem:[%s6 + $0x18] sm:$0xff]
  %v2599 = vld [vmem:[%s7] sm:$0xff]
  %v2600 = vld [vmem:[%s7 + $0x8] sm:$0xff]
  %v2601 = vld [vmem:[%s7 + $0x10] sm:$0xff]
  %v2602 = vld [vmem:[%s7 + $0x18] sm:$0xff]
  %2604 = vrot.lane.b32.xlu0 %v2553, 32
  %v2605 = vpop.permute.xlu0 %2604
  %v2606 = vsel %vm152, %v2605, 0
  %2608 = vmatprep.subr.mxu0 0.0
  %2609 = vmatpush1.msra.mxu0 0.0
  %2610 = vmatprep.subr.mxu0 0.0
  %2611 = vmatpush1.msra.mxu0 0.0
  %2612 = vmatprep.subr.mxu0 0.0
  %2613 = vmatpush1.msra.mxu0 0.0
  %2614 = vmatprep.subr.mxu0 0.0
  %2615 = vmatpush1.msra.mxu0 0.0
  %2616 = vmatprep.subr.mxu0 0.0
  %2617 = vmatpush1.msra.mxu0 0.0
  %2618 = vmatprep.subr.mxu0 0.0
  %2619 = vmatpush1.msra.mxu0 0.0
  %2620 = vmatprep.subr.mxu0 0.0
  %2621 = vmatpush1.msra.mxu0 0.0
  %2622 = vmatprep.subr.mxu0 0.0
  %2623 = vmatpush1.msra.mxu0 0.0
  %2624 = vmatprep.subr.mxu0 0.0
  %2625 = vmatpush1.msra.mxu0 0.0
  %2626 = vmatprep.subr.mxu0 0.0
  %2627 = vmatpush1.msra.mxu0 0.0
  %2628 = vmatprep.subr.mxu0 0.0
  %2629 = vmatpush1.msra.mxu0 0.0
  %2630 = vmatprep.subr.mxu0 0.0
  %2631 = vmatpush1.msra.mxu0 0.0
  %2632 = vmatprep.subr.mxu0 0.0
  %2633 = vmatpush1.msra.mxu0 %v2602
  %2634 = vmatprep.subr.mxu0 0.0
  %2635 = vmatpush1.msra.mxu0 %v2601
  %2636 = vmatprep.subr.mxu0 0.0
  %2637 = vmatpush1.msra.mxu0 %v2600
  %2638 = vmatprep.subr.mxu0 0.0
  %2639 = vmatpush1.msra.mxu0 %v2599
  %2640 = vmatprep.subr.mxu0 0.0
  %2641 = vmatpush2.msra.mxu0 0.0
  %2642 = vmatprep.subr.mxu0 0.0
  %2643 = vmatpush2.msra.mxu0 0.0
  %2644 = vmatprep.subr.mxu0 0.0
  %2645 = vmatpush2.msra.mxu0 0.0
  %2646 = vmatprep.subr.mxu0 0.0
  %2647 = vmatpush2.msra.mxu0 0.0
  %2648 = vmatprep.subr.mxu0 0.0
  %2649 = vmatpush2.msra.mxu0 0.0
  %2650 = vmatprep.subr.mxu0 0.0
  %2651 = vmatpush2.msra.mxu0 0.0
  %2652 = vmatprep.subr.mxu0 0.0
  %2653 = vmatpush2.msra.mxu0 0.0
  %2654 = vmatprep.subr.mxu0 0.0
  %2655 = vmatpush2.msra.mxu0 0.0
  %2656 = vmatprep.subr.mxu0 0.0
  %2657 = vmatpush2.msra.mxu0 0.0
  %2658 = vmatprep.subr.mxu0 0.0
  %2659 = vmatpush2.msra.mxu0 0.0
  %2660 = vmatprep.subr.mxu0 0.0
  %2661 = vmatpush2.msra.mxu0 0.0
  %2662 = vmatprep.subr.mxu0 0.0
  %2663 = vmatpush2.msra.mxu0 0.0
  %2664 = vmatprep.subr.mxu0 0.0
  %2665 = vmatpush2.msra.mxu0 0.0
  %2666 = vmatprep.subr.mxu0 0.0
  %2667 = vmatpush2.msra.mxu0 0.0
  %2668 = vmatprep.subr.mxu0 0.0
  %2669 = vmatpush2.msra.mxu0 0.0
  %2670 = vmatprep.subr.mxu0 0.0
  %2671 = vmatpush2.msra.mxu0 0.0
  %2672 = vmatprep.mubr.f32.mxu0 0.0
  %2673 = vmatmul.mubr.f32.gmra.mxu0 %v2606
  %v2674 = vpop.f32.mrf.mxu0
  %v2675 = vadd.f32 0.0, %v2674
  %v2676 = vpop.f32.mrf.mxu0
  %2677 = vdwg.mxu0
  %v2679 = vsel %vm152, %v2409, 0
  %2681 = vmatprep.subr.mxu0 0.0
  %2682 = vmatpush1.msra.mxu0 0.0
  %2683 = vmatprep.subr.mxu0 0.0
  %2684 = vmatpush1.msra.mxu0 0.0
  %2685 = vmatprep.subr.mxu0 0.0
  %2686 = vmatpush1.msra.mxu0 0.0
  %2687 = vmatprep.subr.mxu0 0.0
  %2688 = vmatpush1.msra.mxu0 0.0
  %2689 = vmatprep.subr.mxu0 0.0
  %2690 = vmatpush1.msra.mxu0 0.0
  %2691 = vmatprep.subr.mxu0 0.0
  %2692 = vmatpush1.msra.mxu0 0.0
  %2693 = vmatprep.subr.mxu0 0.0
  %2694 = vmatpush1.msra.mxu0 0.0
  %2695 = vmatprep.subr.mxu0 0.0
  %2696 = vmatpush1.msra.mxu0 0.0
  %2697 = vmatprep.subr.mxu0 0.0
  %2698 = vmatpush1.msra.mxu0 0.0
  %2699 = vmatprep.subr.mxu0 0.0
  %2700 = vmatpush1.msra.mxu0 0.0
  %2701 = vmatprep.subr.mxu0 0.0
  %2702 = vmatpush1.msra.mxu0 0.0
  %2703 = vmatprep.subr.mxu0 0.0
  %2704 = vmatpush1.msra.mxu0 0.0
  %2705 = vmatprep.subr.mxu0 0.0
  %2706 = vmatpush1.msra.mxu0 %v2598
  %2707 = vmatprep.subr.mxu0 0.0
  %2708 = vmatpush1.msra.mxu0 %v2597
  %2709 = vmatprep.subr.mxu0 0.0
  %2710 = vmatpush1.msra.mxu0 %v2596
  %2711 = vmatprep.subr.mxu0 0.0
  %2712 = vmatpush1.msra.mxu0 %v2595
  %2713 = vmatprep.subr.mxu0 0.0
  %2714 = vmatpush2.msra.mxu0 0.0
  %2715 = vmatprep.subr.mxu0 0.0
  %2716 = vmatpush2.msra.mxu0 0.0
  %2717 = vmatprep.subr.mxu0 0.0
  %2718 = vmatpush2.msra.mxu0 0.0
  %2719 = vmatprep.subr.mxu0 0.0
  %2720 = vmatpush2.msra.mxu0 0.0
  %2721 = vmatprep.subr.mxu0 0.0
  %2722 = vmatpush2.msra.mxu0 0.0
  %2723 = vmatprep.subr.mxu0 0.0
  %2724 = vmatpush2.msra.mxu0 0.0
  %2725 = vmatprep.subr.mxu0 0.0
  %2726 = vmatpush2.msra.mxu0 0.0
  %2727 = vmatprep.subr.mxu0 0.0
  %2728 = vmatpush2.msra.mxu0 0.0
  %2729 = vmatprep.subr.mxu0 0.0
  %2730 = vmatpush2.msra.mxu0 0.0
  %2731 = vmatprep.subr.mxu0 0.0
  %2732 = vmatpush2.msra.mxu0 0.0
  %2733 = vmatprep.subr.mxu0 0.0
  %2734 = vmatpush2.msra.mxu0 0.0
  %2735 = vmatprep.subr.mxu0 0.0
  %2736 = vmatpush2.msra.mxu0 0.0
  %2737 = vmatprep.subr.mxu0 0.0
  %2738 = vmatpush2.msra.mxu0 0.0
  %2739 = vmatprep.subr.mxu0 0.0
  %2740 = vmatpush2.msra.mxu0 0.0
  %2741 = vmatprep.subr.mxu0 0.0
  %2742 = vmatpush2.msra.mxu0 0.0
  %2743 = vmatprep.subr.mxu0 0.0
  %2744 = vmatpush2.msra.mxu0 0.0
  %2745 = vmatprep.mubr.f32.mxu0 0.0
  %2746 = vmatmul.mubr.f32.gmra.mxu0 %v2679
  %v2747 = vpop.f32.mrf.mxu0
  %v2748 = vadd.f32 %v2675, %v2747
  %v2749 = vpop.f32.mrf.mxu0
  %2750 = vdwg.mxu0
  %v2751 = vld [vmem:[%s10] sm:$0x1]
  %v2753 = vlaneseq
  %v2754 = vshrl.u32 %v2753, 7
  %v2755 = vsub.s32 0, %v2754
  %v2756 = vrot.slane %v2751, %v2755
  %v2758 = vadd.f32 %v2748, %v2756
  %v2759 = vtanh.pop %v2758
  %vm2760 = vcmask 254976
  %2761 = vst.msk [vmem:[%s14] sm:$0x3] %vm2760, %v2759
  %v2762 = vld [vmem:[%s8] sm:$0xff]
  %v2763 = vld [vmem:[%s8 + $0x8] sm:$0xff]
  %v2764 = vld [vmem:[%s8 + $0x10] sm:$0xff]
  %v2765 = vld [vmem:[%s8 + $0x18] sm:$0xff]
  %v2766 = vld [vmem:[%s9] sm:$0xff]
  %v2767 = vld [vmem:[%s9 + $0x8] sm:$0xff]
  %v2768 = vld [vmem:[%s9 + $0x10] sm:$0xff]
  %v2769 = vld [vmem:[%s9 + $0x18] sm:$0xff]
  %2771 = vrot.lane.b32.xlu0 %v2554, 96
  %v2772 = vpop.permute.xlu0 %2771
  %v2773 = vsel %vm152, %v2772, 0
  %2775 = vmatprep.subr.mxu0 0.0
  %2776 = vmatpush1.msra.mxu0 0.0
  %2777 = vmatprep.subr.mxu0 0.0
  %2778 = vmatpush1.msra.mxu0 0.0
  %2779 = vmatprep.subr.mxu0 0.0
  %2780 = vmatpush1.msra.mxu0 0.0
  %2781 = vmatprep.subr.mxu0 0.0
  %2782 = vmatpush1.msra.mxu0 0.0
  %2783 = vmatprep.subr.mxu0 0.0
  %2784 = vmatpush1.msra.mxu0 0.0
  %2785 = vmatprep.subr.mxu0 0.0
  %2786 = vmatpush1.msra.mxu0 0.0
  %2787 = vmatprep.subr.mxu0 0.0
  %2788 = vmatpush1.msra.mxu0 0.0
  %2789 = vmatprep.subr.mxu0 0.0
  %2790 = vmatpush1.msra.mxu0 0.0
  %2791 = vmatprep.subr.mxu0 0.0
  %2792 = vmatpush1.msra.mxu0 0.0
  %2793 = vmatprep.subr.mxu0 0.0
  %2794 = vmatpush1.msra.mxu0 0.0
  %2795 = vmatprep.subr.mxu0 0.0
  %2796 = vmatpush1.msra.mxu0 0.0
  %2797 = vmatprep.subr.mxu0 0.0
  %2798 = vmatpush1.msra.mxu0 0.0
  %2799 = vmatprep.subr.mxu0 0.0
  %2800 = vmatpush1.msra.mxu0 %v2769
  %2801 = vmatprep.subr.mxu0 0.0
  %2802 = vmatpush1.msra.mxu0 %v2768
  %2803 = vmatprep.subr.mxu0 0.0
  %2804 = vmatpush1.msra.mxu0 %v2767
  %2805 = vmatprep.subr.mxu0 0.0
  %2806 = vmatpush1.msra.mxu0 %v2766
  %2807 = vmatprep.subr.mxu0 0.0
  %2808 = vmatpush2.msra.mxu0 0.0
  %2809 = vmatprep.subr.mxu0 0.0
  %2810 = vmatpush2.msra.mxu0 0.0
  %2811 = vmatprep.subr.mxu0 0.0
  %2812 = vmatpush2.msra.mxu0 0.0
  %2813 = vmatprep.subr.mxu0 0.0
  %2814 = vmatpush2.msra.mxu0 0.0
  %2815 = vmatprep.subr.mxu0 0.0
  %2816 = vmatpush2.msra.mxu0 0.0
  %2817 = vmatprep.subr.mxu0 0.0
  %2818 = vmatpush2.msra.mxu0 0.0
  %2819 = vmatprep.subr.mxu0 0.0
  %2820 = vmatpush2.msra.mxu0 0.0
  %2821 = vmatprep.subr.mxu0 0.0
  %2822 = vmatpush2.msra.mxu0 0.0
  %2823 = vmatprep.subr.mxu0 0.0
  %2824 = vmatpush2.msra.mxu0 0.0
  %2825 = vmatprep.subr.mxu0 0.0
  %2826 = vmatpush2.msra.mxu0 0.0
  %2827 = vmatprep.subr.mxu0 0.0
  %2828 = vmatpush2.msra.mxu0 0.0
  %2829 = vmatprep.subr.mxu0 0.0
  %2830 = vmatpush2.msra.mxu0 0.0
  %2831 = vmatprep.subr.mxu0 0.0
  %2832 = vmatpush2.msra.mxu0 0.0
  %2833 = vmatprep.subr.mxu0 0.0
  %2834 = vmatpush2.msra.mxu0 0.0
  %2835 = vmatprep.subr.mxu0 0.0
  %2836 = vmatpush2.msra.mxu0 0.0
  %2837 = vmatprep.subr.mxu0 0.0
  %2838 = vmatpush2.msra.mxu0 0.0
  %2839 = vmatprep.mubr.f32.mxu0 0.0
  %2840 = vmatmul.mubr.f32.gmra.mxu0 %v2773
  %v2841 = vpop.f32.mrf.mxu0
  %v2842 = vadd.f32 0.0, %v2841
  %v2843 = vpop.f32.mrf.mxu0
  %2844 = vdwg.mxu0
  %v2846 = vsel %vm152, %v2415, 0
  %2848 = vmatprep.subr.mxu0 0.0
  %2849 = vmatpush1.msra.mxu0 0.0
  %2850 = vmatprep.subr.mxu0 0.0
  %2851 = vmatpush1.msra.mxu0 0.0
  %2852 = vmatprep.subr.mxu0 0.0
  %2853 = vmatpush1.msra.mxu0 0.0
  %2854 = vmatprep.subr.mxu0 0.0
  %2855 = vmatpush1.msra.mxu0 0.0
  %2856 = vmatprep.subr.mxu0 0.0
  %2857 = vmatpush1.msra.mxu0 0.0
  %2858 = vmatprep.subr.mxu0 0.0
  %2859 = vmatpush1.msra.mxu0 0.0
  %2860 = vmatprep.subr.mxu0 0.0
  %2861 = vmatpush1.msra.mxu0 0.0
  %2862 = vmatprep.subr.mxu0 0.0
  %2863 = vmatpush1.msra.mxu0 0.0
  %2864 = vmatprep.subr.mxu0 0.0
  %2865 = vmatpush1.msra.mxu0 0.0
  %2866 = vmatprep.subr.mxu0 0.0
  %2867 = vmatpush1.msra.mxu0 0.0
  %2868 = vmatprep.subr.mxu0 0.0
  %2869 = vmatpush1.msra.mxu0 0.0
  %2870 = vmatprep.subr.mxu0 0.0
  %2871 = vmatpush1.msra.mxu0 0.0
  %2872 = vmatprep.subr.mxu0 0.0
  %2873 = vmatpush1.msra.mxu0 %v2765
  %2874 = vmatprep.subr.mxu0 0.0
  %2875 = vmatpush1.msra.mxu0 %v2764
  %2876 = vmatprep.subr.mxu0 0.0
  %2877 = vmatpush1.msra.mxu0 %v2763
  %2878 = vmatprep.subr.mxu0 0.0
  %2879 = vmatpush1.msra.mxu0 %v2762
  %2880 = vmatprep.subr.mxu0 0.0
  %2881 = vmatpush2.msra.mxu0 0.0
  %2882 = vmatprep.subr.mxu0 0.0
  %2883 = vmatpush2.msra.mxu0 0.0
  %2884 = vmatprep.subr.mxu0 0.0
  %2885 = vmatpush2.msra.mxu0 0.0
  %2886 = vmatprep.subr.mxu0 0.0
  %2887 = vmatpush2.msra.mxu0 0.0
  %2888 = vmatprep.subr.mxu0 0.0
  %2889 = vmatpush2.msra.mxu0 0.0
  %2890 = vmatprep.subr.mxu0 0.0
  %2891 = vmatpush2.msra.mxu0 0.0
  %2892 = vmatprep.subr.mxu0 0.0
  %2893 = vmatpush2.msra.mxu0 0.0
  %2894 = vmatprep.subr.mxu0 0.0
  %2895 = vmatpush2.msra.mxu0 0.0
  %2896 = vmatprep.subr.mxu0 0.0
  %2897 = vmatpush2.msra.mxu0 0.0
  %2898 = vmatprep.subr.mxu0 0.0
  %2899 = vmatpush2.msra.mxu0 0.0
  %2900 = vmatprep.subr.mxu0 0.0
  %2901 = vmatpush2.msra.mxu0 0.0
  %2902 = vmatprep.subr.mxu0 0.0
  %2903 = vmatpush2.msra.mxu0 0.0
  %2904 = vmatprep.subr.mxu0 0.0
  %2905 = vmatpush2.msra.mxu0 0.0
  %2906 = vmatprep.subr.mxu0 0.0
  %2907 = vmatpush2.msra.mxu0 0.0
  %2908 = vmatprep.subr.mxu0 0.0
  %2909 = vmatpush2.msra.mxu0 0.0
  %2910 = vmatprep.subr.mxu0 0.0
  %2911 = vmatpush2.msra.mxu0 0.0
  %2912 = vmatprep.mubr.f32.mxu0 0.0
  %2913 = vmatmul.mubr.f32.gmra.mxu0 %v2846
  %v2914 = vpop.f32.mrf.mxu0
  %v2915 = vadd.f32 %v2842, %v2914
  %v2916 = vpop.f32.mrf.mxu0
  %2917 = vdwg.mxu0
  %v2918 = vld [vmem:[%s11] sm:$0x1]
  %v2920 = vlaneseq
  %v2921 = vshrl.u32 %v2920, 7
  %v2922 = vsub.s32 0, %v2921
  %v2923 = vrot.slane %v2918, %v2922
  %v2925 = vadd.f32 %v2915, %v2923
  %v2926 = vtanh.pop %v2925
  %2927 = vst.msk [vmem:[%s15] sm:$0x3] %vm2760, %v2926
  // Predicated region
  $region50: #{attention_seq2seq_forward.2} parent=0 // pred_check
    _
  $region51: #{attention_seq2seq_forward.2} parent=0 // pred_check_branch
    %2929 = sbr.rel (0) target = $region53
  $region52: #{attention_seq2seq_forward.2} parent=0 // pred_region
    _
  $region53: #{attention_seq2seq_forward.2} parent=0 // pred_fallthru
    _
  // Predicated region
  $region54: #{attention_seq2seq_forward.2} parent=0 // pred_check
    _
  $region55: #{attention_seq2seq_forward.2} parent=0 // pred_check_branch
    %2931 = sbr.rel (0) target = $region57
  $region56: #{attention_seq2seq_forward.2} parent=0 // pred_region
    _
  $region57: #{attention_seq2seq_forward.2} parent=0 // pred_fallthru
    _
  // Predicated region
  $region58: #{attention_seq2seq_forward.2} parent=0 // pred_check
    _
  $region59: #{attention_seq2seq_forward.2} parent=0 // pred_check_branch
    %2933 = sbr.rel (0) target = $region61
  $region60: #{attention_seq2seq_forward.2} parent=0 // pred_region
    _
  $region61: #{attention_seq2seq_forward.2} parent=0 // pred_fallthru
    _
  // Predicated region
  $region62: #{attention_seq2seq_forward.2} parent=0 // pred_check
    _
  $region63: #{attention_seq2seq_forward.2} parent=0 // pred_check_branch
    %2935 = sbr.rel (0) target = $region65
  $region64: #{attention_seq2seq_forward.2} parent=0 // pred_region
    _
  $region65: #{attention_seq2seq_forward.2} parent=0 // pred_fallthru
    _
  // Predicated region
  $region66: #{attention_seq2seq_forward.2} parent=0 // pred_check
    _
  $region67: #{attention_seq2seq_forward.2} parent=0 // pred_check_branch
    %2937 = sbr.rel (0) target = $region69
  $region68: #{attention_seq2seq_forward.2} parent=0 // pred_region
    _
  $region69: #{attention_seq2seq_forward.2} parent=0 // pred_fallthru
    _
  // Predicated region
  $region70: #{attention_seq2seq_forward.2} parent=0 // pred_check
    _
  $region71: #{attention_seq2seq_forward.2} parent=0 // pred_check_branch
    %2939 = sbr.rel (0) target = $region73
  $region72: #{attention_seq2seq_forward.2} parent=0 // pred_region
    _
  $region73: #{attention_seq2seq_forward.2} parent=0 // pred_fallthru
    _
  // Predicated region
  $region74: #{attention_seq2seq_forward.2} parent=0 // pred_check
    _
  $region75: #{attention_seq2seq_forward.2} parent=0 // pred_check_branch
    %2941 = sbr.rel (0) target = $region77
  $region76: #{attention_seq2seq_forward.2} parent=0 // pred_region
    _
  $region77: #{attention_seq2seq_forward.2} parent=0 // pred_fallthru
    _
  // Predicated region
  $region78: #{attention_seq2seq_forward.2} parent=0 // pred_check
    _
  $region79: #{attention_seq2seq_forward.2} parent=0 // pred_check_branch
    %2943 = sbr.rel (0) target = $region81
  $region80: #{attention_seq2seq_forward.2} parent=0 // pred_region
    _
  $region81: #{attention_seq2seq_forward.2} parent=0 // pred_fallthru
    _

// kernel: attention_seq2seq_forward.3
$region0: #{attention_seq2seq_forward.3}
  #allocation0 [shape = 'u32[]', space=smem, size = 0x4, offset = 0x4, fixed_abs, tag = 'smem constant byte address 0x4 - core index']
  #allocation1 [shape = 'u32[144,128]{1,0:T(1,128)}', space=vmem, size = 0x12000, scoped, tag = 'internal scratch']
  #allocation2 [shape = 'f32[1,1]{1,0:T(1,128)S(1)}', space=vmem, size = 0x200, scoped, tag = 'scoped memory for attention_seq2seq_forward.3']
  %s0 = inlined_call_operand.vmem [shape: f32[2,32], index: 0, kind: input, shape index: {}]
  %s1 = inlined_call_operand.vmem [shape: f32[2,32], index: 1, kind: input, shape index: {}]
  %s2 = inlined_call_operand.vmem [shape: f32[10,16], index: 2, kind: input, shape index: {}]
  %s3 = inlined_call_operand.vmem [shape: f32[2,8,32], index: 3, kind: input, shape index: {}]
  %s4 = inlined_call_operand.vmem [shape: f32[2,8,32], index: 4, kind: input, shape index: {}]
  %s5 = inlined_call_operand.vmem [shape: s32[2,1], index: 5, kind: input, shape index: {}]
  %s6 = inlined_call_operand.vmem [shape: f32[32,32], index: 6, kind: input, shape index: {}]
  %s7 = inlined_call_operand.vmem [shape: f32[32,32], index: 7, kind: input, shape index: {}]
  %s8 = inlined_call_operand.vmem [shape: f32[1,32], index: 8, kind: input, shape index: {}]
  %s9 = inlined_call_operand.vmem [shape: f32[32,32], index: 9, kind: input, shape index: {}]
  %s10 = inlined_call_operand.vmem [shape: f32[1,32], index: 10, kind: input, shape index: {}]
  %s11 = inlined_call_operand.<no memory space> [shape: f32[1,1], index: 11, kind: input, shape index: {}]
  %s12 = inlined_call_operand.vmem [shape: f32[16,128], index: 12, kind: input, shape index: {}]
  %s13 = inlined_call_operand.vmem [shape: f32[1,128], index: 13, kind: input, shape index: {}]
  %s14 = inlined_call_operand.vmem [shape: f32[32,128], index: 14, kind: input, shape index: {}]
  %s15 = inlined_call_operand.vmem [shape: f32[32,128], index: 15, kind: input, shape index: {}]
  %s16 = inlined_call_operand.vmem [shape: f32[32,128], index: 16, kind: input, shape index: {}]
  %s17 = inlined_call_operand.vmem [shape: f32[32,128], index: 17, kind: input, shape index: {}]
  %s18 = inlined_call_operand.vmem [shape: f32[32,128], index: 18, kind: input, shape index: {}]
  %s19 = inlined_call_operand.vmem [shape: f32[32,128], index: 19, kind: input, shape index: {}]
  %s20 = inlined_call_operand.vmem [shape: f32[16,128], index: 20, kind: input, shape index: {}]
  %s21 = inlined_call_operand.vmem [shape: f32[1,128], index: 21, kind: input, shape index: {}]
  %s22 = inlined_call_operand.vmem [shape: f32[2,5,128], index: 22, kind: output, shape index: {0}]
  %s23 = inlined_call_operand.vmem [shape: f32[2,5,8], index: 23, kind: output, shape index: {1}]
  %24 = xla_tuple %s22, %s23
  %s25 = sld [smem:[#allocation0]]
  $region106: #{attention_seq2seq_forward.3} parent=0
    _
  %s27 = ssub.s32 1, %s25
  %s28 = scalar_select 0, %s27, %s25
  %v29 = vstv %s11
  %30 = vst [vmem:[#allocation2] sm:$0x1] %v29
  // Predicated region
  $region2: #{attention_seq2seq_forward.3} parent=0 // pred_check
    _
  $region3: #{attention_seq2seq_forward.3} parent=0 // pred_check_branch
    %32 = sbr.rel (0) target = $region5
  $region4: #{attention_seq2seq_forward.3} parent=0 // pred_region
    _
  $region5: #{attention_seq2seq_forward.3} parent=0 // pred_fallthru
    _
  // Predicated region
  $region6: #{attention_seq2seq_forward.3} parent=0 // pred_check
    _
  $region7: #{attention_seq2seq_forward.3} parent=0 // pred_check_branch
    %34 = sbr.rel (0) target = $region9
  $region8: #{attention_seq2seq_forward.3} parent=0 // pred_region
    _
  $region9: #{attention_seq2seq_forward.3} parent=0 // pred_fallthru
    _
  // Predicated region
  $region10: #{attention_seq2seq_forward.3} parent=0 // pred_check
    _
  $region11: #{attention_seq2seq_forward.3} parent=0 // pred_check_branch
    %36 = sbr.rel (0) target = $region13
  $region12: #{attention_seq2seq_forward.3} parent=0 // pred_region
    _
  $region13: #{attention_seq2seq_forward.3} parent=0 // pred_fallthru
    _
  // Predicated region
  $region14: #{attention_seq2seq_forward.3} parent=0 // pred_check
    _
  $region15: #{attention_seq2seq_forward.3} parent=0 // pred_check_branch
    %38 = sbr.rel (0) target = $region17
  $region16: #{attention_seq2seq_forward.3} parent=0 // pred_region
    _
  $region17: #{attention_seq2seq_forward.3} parent=0 // pred_fallthru
    _
  // Predicated region
  $region18: #{attention_seq2seq_forward.3} parent=0 // pred_check
    _
  $region19: #{attention_seq2seq_forward.3} parent=0 // pred_check_branch
    %40 = sbr.rel (0) target = $region21
  $region20: #{attention_seq2seq_forward.3} parent=0 // pred_region
    _
  $region21: #{attention_seq2seq_forward.3} parent=0 // pred_fallthru
    _
  // Predicated region
  $region22: #{attention_seq2seq_forward.3} parent=0 // pred_check
    _
  $region23: #{attention_seq2seq_forward.3} parent=0 // pred_check_branch
    %42 = sbr.rel (0) target = $region25
  $region24: #{attention_seq2seq_forward.3} parent=0 // pred_region
    _
  $region25: #{attention_seq2seq_forward.3} parent=0 // pred_fallthru
    _
  // Predicated region
  $region26: #{attention_seq2seq_forward.3} parent=0 // pred_check
    _
  $region27: #{attention_seq2seq_forward.3} parent=0 // pred_check_branch
    %44 = sbr.rel (0) target = $region29
  $region28: #{attention_seq2seq_forward.3} parent=0 // pred_region
    _
  $region29: #{attention_seq2seq_forward.3} parent=0 // pred_fallthru
    _
  // Predicated region
  $region30: #{attention_seq2seq_forward.3} parent=0 // pred_check
    _
  $region31: #{attention_seq2seq_forward.3} parent=0 // pred_check_branch
    %46 = sbr.rel (0) target = $region33
  $region32: #{attention_seq2seq_forward.3} parent=0 // pred_region
    _
  $region33: #{attention_seq2seq_forward.3} parent=0 // pred_fallthru
    _
  // Predicated region
  $region34: #{attention_seq2seq_forward.3} parent=0 // pred_check
    _
  $region35: #{attention_seq2seq_forward.3} parent=0 // pred_check_branch
    %48 = sbr.rel (0) target = $region37
  $region36: #{attention_seq2seq_forward.3} parent=0 // pred_region
    _
  $region37: #{attention_seq2seq_forward.3} parent=0 // pred_fallthru
    _
  // Predicated region
  $region38: #{attention_seq2seq_forward.3} parent=0 // pred_check
    _
  $region39: #{attention_seq2seq_forward.3} parent=0 // pred_check_branch
    %50 = sbr.rel (0) target = $region41
  $region40: #{attention_seq2seq_forward.3} parent=0 // pred_region
    _
  $region41: #{attention_seq2seq_forward.3} parent=0 // pred_fallthru
    _
  // Predicated region
  $region42: #{attention_seq2seq_forward.3} parent=0 // pred_check
    _
  $region43: #{attention_seq2seq_forward.3} parent=0 // pred_check_branch
    %52 = sbr.rel (0) target = $region45
  $region44: #{attention_seq2seq_forward.3} parent=0 // pred_region
    _
  $region45: #{attention_seq2seq_forward.3} parent=0 // pred_fallthru
    _
  // Predicated region
  $region46: #{attention_seq2seq_forward.3} parent=0 // pred_check
    _
  $region47: #{attention_seq2seq_forward.3} parent=0 // pred_check_branch
    %54 = sbr.rel (0) target = $region49
  $region48: #{attention_seq2seq_forward.3} parent=0 // pred_region
    _
  $region49: #{attention_seq2seq_forward.3} parent=0 // pred_fallthru
    _
  // Predicated region
  $region50: #{attention_seq2seq_forward.3} parent=0 // pred_check
    _
  $region51: #{attention_seq2seq_forward.3} parent=0 // pred_check_branch
    %56 = sbr.rel (0) target = $region53
  $region52: #{attention_seq2seq_forward.3} parent=0 // pred_region
    _
  $region53: #{attention_seq2seq_forward.3} parent=0 // pred_fallthru
    _
  // Predicated region
  $region54: #{attention_seq2seq_forward.3} parent=0 // pred_check
    _
  $region55: #{attention_seq2seq_forward.3} parent=0 // pred_check_branch
    %58 = sbr.rel (0) target = $region57
  $region56: #{attention_seq2seq_forward.3} parent=0 // pred_region
    _
  $region57: #{attention_seq2seq_forward.3} parent=0 // pred_fallthru
    _
  // Predicated region
  $region58: #{attention_seq2seq_forward.3} parent=0 // pred_check
    _
  $region59: #{attention_seq2seq_forward.3} parent=0 // pred_check_branch
    %60 = sbr.rel (0) target = $region61
  $region60: #{attention_seq2seq_forward.3} parent=0 // pred_region
    _
  $region61: #{attention_seq2seq_forward.3} parent=0 // pred_fallthru
    _
  // Predicated region
  $region62: #{attention_seq2seq_forward.3} parent=0 // pred_check
    _
  $region63: #{attention_seq2seq_forward.3} parent=0 // pred_check_branch
    %62 = sbr.rel (0) target = $region65
  $region64: #{attention_seq2seq_forward.3} parent=0 // pred_region
    _
  $region65: #{attention_seq2seq_forward.3} parent=0 // pred_fallthru
    _
  // Predicated region
  $region66: #{attention_seq2seq_forward.3} parent=0 // pred_check
    _
  $region67: #{attention_seq2seq_forward.3} parent=0 // pred_check_branch
    %64 = sbr.rel (0) target = $region69
  $region68: #{attention_seq2seq_forward.3} parent=0 // pred_region
    _
  $region69: #{attention_seq2seq_forward.3} parent=0 // pred_fallthru
    _
  // Predicated region
  $region70: #{attention_seq2seq_forward.3} parent=0 // pred_check
    _
  $region71: #{attention_seq2seq_forward.3} parent=0 // pred_check_branch
    %66 = sbr.rel (0) target = $region73
  $region72: #{attention_seq2seq_forward.3} parent=0 // pred_region
    _
  $region73: #{attention_seq2seq_forward.3} parent=0 // pred_fallthru
    _
  // Predicated region
  $region74: #{attention_seq2seq_forward.3} parent=0 // pred_check
    _
  $region75: #{attention_seq2seq_forward.3} parent=0 // pred_check_branch
    %68 = sbr.rel (0) target = $region77
  $region76: #{attention_seq2seq_forward.3} parent=0 // pred_region
    _
  $region77: #{attention_seq2seq_forward.3} parent=0 // pred_fallthru
    _
  // Predicated region
  $region78: #{attention_seq2seq_forward.3} parent=0 // pred_check
    _
  $region79: #{attention_seq2seq_forward.3} parent=0 // pred_check_branch
    %70 = sbr.rel (0) target = $region81
  $region80: #{attention_seq2seq_forward.3} parent=0 // pred_region
    _
  $region81: #{attention_seq2seq_forward.3} parent=0 // pred_fallthru
    _
  // Predicated region
  $region82: #{attention_seq2seq_forward.3} parent=0 // pred_check
    _
  $region83: #{attention_seq2seq_forward.3} parent=0 // pred_check_branch
    %72 = sbr.rel (0) target = $region85
  $region84: #{attention_seq2seq_forward.3} parent=0 // pred_region
    _
  $region85: #{attention_seq2seq_forward.3} parent=0 // pred_fallthru
    _
  // Predicated region
  $region86: #{attention_seq2seq_forward.3} parent=0 // pred_check
    _
  $region87: #{attention_seq2seq_forward.3} parent=0 // pred_check_branch
    %74 = sbr.rel (0) target = $region89
  $region88: #{attention_seq2seq_forward.3} parent=0 // pred_region
    _
  $region89: #{attention_seq2seq_forward.3} parent=0 // pred_fallthru
    _
  %v75 = vld [vmem:[%s3] sm:$0xff]
  %v76 = vld [vmem:[%s3 + $0x8] sm:$0xff]
  %v77 = vld [vmem:[%s4] sm:$0xff]
  %v78 = vld [vmem:[%s4 + $0x8] sm:$0xff]
  %v79 = vld [vmem:[%s6] sm:$0xff]
  %v80 = vld [vmem:[%s6 + $0x8] sm:$0xff]
  %v81 = vld [vmem:[%s6 + $0x10] sm:$0xff]
  %v82 = vld [vmem:[%s6 + $0x18] sm:$0xff]
  %v83 = vld [vmem:[%s7] sm:$0xff]
  %v84 = vld [vmem:[%s7 + $0x8] sm:$0xff]
  %v85 = vld [vmem:[%s7 + $0x10] sm:$0xff]
  %v86 = vld [vmem:[%s7 + $0x18] sm:$0xff]
  %vm87 = vcmask 261120
  %v89 = vsel %vm87, %v77, 0
  %v92 = vsel %vm87, %v78, 0
  %94 = vmatprep.subr.mxu0 0.0
  %95 = vmatpush1.msra.mxu0 0.0
  %96 = vmatprep.subr.mxu0 0.0
  %97 = vmatpush1.msra.mxu0 0.0
  %98 = vmatprep.subr.mxu0 0.0
  %99 = vmatpush1.msra.mxu0 0.0
  %100 = vmatprep.subr.mxu0 0.0
  %101 = vmatpush1.msra.mxu0 0.0
  %102 = vmatprep.subr.mxu0 0.0
  %103 = vmatpush1.msra.mxu0 0.0
  %104 = vmatprep.subr.mxu0 0.0
  %105 = vmatpush1.msra.mxu0 0.0
  %106 = vmatprep.subr.mxu0 0.0
  %107 = vmatpush1.msra.mxu0 0.0
  %108 = vmatprep.subr.mxu0 0.0
  %109 = vmatpush1.msra.mxu0 0.0
  %110 = vmatprep.subr.mxu0 0.0
  %111 = vmatpush1.msra.mxu0 0.0
  %112 = vmatprep.subr.mxu0 0.0
  %113 = vmatpush1.msra.mxu0 0.0
  %114 = vmatprep.subr.mxu0 0.0
  %115 = vmatpush1.msra.mxu0 0.0
  %116 = vmatprep.subr.mxu0 0.0
  %117 = vmatpush1.msra.mxu0 0.0
  %118 = vmatprep.subr.mxu0 0.0
  %119 = vmatpush1.msra.mxu0 %v86
  %120 = vmatprep.subr.mxu0 0.0
  %121 = vmatpush1.msra.mxu0 %v85
  %122 = vmatprep.subr.mxu0 0.0
  %123 = vmatpush1.msra.mxu0 %v84
  %124 = vmatprep.subr.mxu0 0.0
  %125 = vmatpush1.msra.mxu0 %v83
  %126 = vmatprep.subr.mxu0 0.0
  %127 = vmatpush2.msra.mxu0 0.0
  %128 = vmatprep.subr.mxu0 0.0
  %129 = vmatpush2.msra.mxu0 0.0
  %130 = vmatprep.subr.mxu0 0.0
  %131 = vmatpush2.msra.mxu0 0.0
  %132 = vmatprep.subr.mxu0 0.0
  %133 = vmatpush2.msra.mxu0 0.0
  %134 = vmatprep.subr.mxu0 0.0
  %135 = vmatpush2.msra.mxu0 0.0
  %136 = vmatprep.subr.mxu0 0.0
  %137 = vmatpush2.msra.mxu0 0.0
  %138 = vmatprep.subr.mxu0 0.0
  %139 = vmatpush2.msra.mxu0 0.0
  %140 = vmatprep.subr.mxu0 0.0
  %141 = vmatpush2.msra.mxu0 0.0
  %142 = vmatprep.subr.mxu0 0.0
  %143 = vmatpush2.msra.mxu0 0.0
  %144 = vmatprep.subr.mxu0 0.0
  %145 = vmatpush2.msra.mxu0 0.0
  %146 = vmatprep.subr.mxu0 0.0
  %147 = vmatpush2.msra.mxu0 0.0
  %148 = vmatprep.subr.mxu0 0.0
  %149 = vmatpush2.msra.mxu0 0.0
  %150 = vmatprep.subr.mxu0 0.0
  %151 = vmatpush2.msra.mxu0 0.0
  %152 = vmatprep.subr.mxu0 0.0
  %153 = vmatpush2.msra.mxu0 0.0
  %154 = vmatprep.subr.mxu0 0.0
  %155 = vmatpush2.msra.mxu0 0.0
  %156 = vmatprep.subr.mxu0 0.0
  %157 = vmatpush2.msra.mxu0 0.0
  %158 = vmatprep.mubr.f32.mxu0 0.0
  %159 = vmatmul.mubr.f32.gmra.mxu0 %v89
  %v160 = vpop.f32.mrf.mxu0
  %v161 = vadd.f32 0.0, %v160
  %v162 = vpop.f32.mrf.mxu0
  %163 = vmatprep.mubr.f32.mxu0 0.0
  %164 = vmatmul.mubr.f32.gmra.mxu0 %v92
  %v165 = vpop.f32.mrf.mxu0
  %v166 = vadd.f32 0.0, %v165
  %v167 = vpop.f32.mrf.mxu0
  %168 = vdwg.mxu0
  %v170 = vsel %vm87, %v75, 0
  %v173 = vsel %vm87, %v76, 0
  %175 = vmatprep.subr.mxu0 0.0
  %176 = vmatpush1.msra.mxu0 0.0
  %177 = vmatprep.subr.mxu0 0.0
  %178 = vmatpush1.msra.mxu0 0.0
  %179 = vmatprep.subr.mxu0 0.0
  %180 = vmatpush1.msra.mxu0 0.0
  %181 = vmatprep.subr.mxu0 0.0
  %182 = vmatpush1.msra.mxu0 0.0
  %183 = vmatprep.subr.mxu0 0.0
  %184 = vmatpush1.msra.mxu0 0.0
  %185 = vmatprep.subr.mxu0 0.0
  %186 = vmatpush1.msra.mxu0 0.0
  %187 = vmatprep.subr.mxu0 0.0
  %188 = vmatpush1.msra.mxu0 0.0
  %189 = vmatprep.subr.mxu0 0.0
  %190 = vmatpush1.msra.mxu0 0.0
  %191 = vmatprep.subr.mxu0 0.0
  %192 = vmatpush1.msra.mxu0 0.0
  %193 = vmatprep.subr.mxu0 0.0
  %194 = vmatpush1.msra.mxu0 0.0
  %195 = vmatprep.subr.mxu0 0.0
  %196 = vmatpush1.msra.mxu0 0.0
  %197 = vmatprep.subr.mxu0 0.0
  %198 = vmatpush1.msra.mxu0 0.0
  %199 = vmatprep.subr.mxu0 0.0
  %200 = vmatpush1.msra.mxu0 %v82
  %201 = vmatprep.subr.mxu0 0.0
  %202 = vmatpush1.msra.mxu0 %v81
  %203 = vmatprep.subr.mxu0 0.0
  %204 = vmatpush1.msra.mxu0 %v80
  %205 = vmatprep.subr.mxu0 0.0
  %206 = vmatpush1.msra.mxu0 %v79
  %207 = vmatprep.subr.mxu0 0.0
  %208 = vmatpush2.msra.mxu0 0.0
  %209 = vmatprep.subr.mxu0 0.0
  %210 = vmatpush2.msra.mxu0 0.0
  %211 = vmatprep.subr.mxu0 0.0
  %212 = vmatpush2.msra.mxu0 0.0
  %213 = vmatprep.subr.mxu0 0.0
  %214 = vmatpush2.msra.mxu0 0.0
  %215 = vmatprep.subr.mxu0 0.0
  %216 = vmatpush2.msra.mxu0 0.0
  %217 = vmatprep.subr.mxu0 0.0
  %218 = vmatpush2.msra.mxu0 0.0
  %219 = vmatprep.subr.mxu0 0.0
  %220 = vmatpush2.msra.mxu0 0.0
  %221 = vmatprep.subr.mxu0 0.0
  %222 = vmatpush2.msra.mxu0 0.0
  %223 = vmatprep.subr.mxu0 0.0
  %224 = vmatpush2.msra.mxu0 0.0
  %225 = vmatprep.subr.mxu0 0.0
  %226 = vmatpush2.msra.mxu0 0.0
  %227 = vmatprep.subr.mxu0 0.0
  %228 = vmatpush2.msra.mxu0 0.0
  %229 = vmatprep.subr.mxu0 0.0
  %230 = vmatpush2.msra.mxu0 0.0
  %231 = vmatprep.subr.mxu0 0.0
  %232 = vmatpush2.msra.mxu0 0.0
  %233 = vmatprep.subr.mxu0 0.0
  %234 = vmatpush2.msra.mxu0 0.0
  %235 = vmatprep.subr.mxu0 0.0
  %236 = vmatpush2.msra.mxu0 0.0
  %237 = vmatprep.subr.mxu0 0.0
  %238 = vmatpush2.msra.mxu0 0.0
  %239 = vmatprep.mubr.f32.mxu0 0.0
  %240 = vmatmul.mubr.f32.gmra.mxu0 %v170
  %v241 = vpop.f32.mrf.mxu0
  %v242 = vadd.f32 %v161, %v241
  %v243 = vpop.f32.mrf.mxu0
  %244 = vmatprep.mubr.f32.mxu0 0.0
  %245 = vmatmul.mubr.f32.gmra.mxu0 %v173
  %v246 = vpop.f32.mrf.mxu0
  %v247 = vadd.f32 %v166, %v246
  %v248 = vpop.f32.mrf.mxu0
  %249 = vdwg.mxu0
  %v250 = vld [vmem:[%s8] sm:$0x1]
  %v252 = vlaneseq
  %v253 = vshrl.u32 %v252, 7
  %v254 = vsub.s32 0, %v253
  %v255 = vrot.slane %v250, %v254
  %v257 = vadd.f32 %v242, %v255
  %v258 = vadd.f32 %v247, %v255
  %v259 = vld [vmem:[%s2] sm:$0xff]
  %v260 = vld [vmem:[%s2 + $0x8] sm:$0x3]
  %v261 = vld [vmem:[%s12] sm:$0xff]
  %v262 = vld [vmem:[%s12 + $0x8] sm:$0xff]
  %v263 = vld [vmem:[%s13] sm:$0x1]
  %v265 = vlaneseq
  %v266 = vshrl.u32 %v265, 7
  %v267 = vsub.s32 0, %v266
  %v268 = vrot.slane %v263, %v267
  %vm270 = vcmask 130048
  %v272 = vsel %vm270, %v259, 0
  %v275 = vsel %vm270, %v260, 0
  %277 = vmatprep.subr.mxu0 0.0
  %278 = vmatpush1.msra.mxu0 0.0
  %279 = vmatprep.subr.mxu0 0.0
  %280 = vmatpush1.msra.mxu0 0.0
  %281 = vmatprep.subr.mxu0 0.0
  %282 = vmatpush1.msra.mxu0 0.0
  %283 = vmatprep.subr.mxu0 0.0
  %284 = vmatpush1.msra.mxu0 0.0
  %285 = vmatprep.subr.mxu0 0.0
  %286 = vmatpush1.msra.mxu0 0.0
  %287 = vmatprep.subr.mxu0 0.0
  %288 = vmatpush1.msra.mxu0 0.0
  %289 = vmatprep.subr.mxu0 0.0
  %290 = vmatpush1.msra.mxu0 0.0
  %291 = vmatprep.subr.mxu0 0.0
  %292 = vmatpush1.msra.mxu0 0.0
  %293 = vmatprep.subr.mxu0 0.0
  %294 = vmatpush1.msra.mxu0 0.0
  %295 = vmatprep.subr.mxu0 0.0
  %296 = vmatpush1.msra.mxu0 0.0
  %297 = vmatprep.subr.mxu0 0.0
  %298 = vmatpush1.msra.mxu0 0.0
  %299 = vmatprep.subr.mxu0 0.0
  %300 = vmatpush1.msra.mxu0 0.0
  %301 = vmatprep.subr.mxu0 0.0
  %302 = vmatpush1.msra.mxu0 0.0
  %303 = vmatprep.subr.mxu0 0.0
  %304 = vmatpush1.msra.mxu0 0.0
  %305 = vmatprep.subr.mxu0 0.0
  %306 = vmatpush1.msra.mxu0 %v262
  %307 = vmatprep.subr.mxu0 0.0
  %308 = vmatpush1.msra.mxu0 %v261
  %309 = vmatprep.subr.mxu0 0.0
  %310 = vmatpush2.msra.mxu0 0.0
  %311 = vmatprep.subr.mxu0 0.0
  %312 = vmatpush2.msra.mxu0 0.0
  %313 = vmatprep.subr.mxu0 0.0
  %314 = vmatpush2.msra.mxu0 0.0
  %315 = vmatprep.subr.mxu0 0.0
  %316 = vmatpush2.msra.mxu0 0.0
  %317 = vmatprep.subr.mxu0 0.0
  %318 = vmatpush2.msra.mxu0 0.0
  %319 = vmatprep.subr.mxu0 0.0
  %320 = vmatpush2.msra.mxu0 0.0
  %321 = vmatprep.subr.mxu0 0.0
  %322 = vmatpush2.msra.mxu0 0.0
  %323 = vmatprep.subr.mxu0 0.0
  %324 = vmatpush2.msra.mxu0 0.0
  %325 = vmatprep.subr.mxu0 0.0
  %326 = vmatpush2.msra.mxu0 0.0
  %327 = vmatprep.subr.mxu0 0.0
  %328 = vmatpush2.msra.mxu0 0.0
  %329 = vmatprep.subr.mxu0 0.0
  %330 = vmatpush2.msra.mxu0 0.0
  %331 = vmatprep.subr.mxu0 0.0
  %332 = vmatpush2.msra.mxu0 0.0
  %333 = vmatprep.subr.mxu0 0.0
  %334 = vmatpush2.msra.mxu0 0.0
  %335 = vmatprep.subr.mxu0 0.0
  %336 = vmatpush2.msra.mxu0 0.0
  %337 = vmatprep.subr.mxu0 0.0
  %338 = vmatpush2.msra.mxu0 0.0
  %339 = vmatprep.subr.mxu0 0.0
  %340 = vmatpush2.msra.mxu0 0.0
  %341 = vmatprep.mubr.f32.mxu0 0.0
  %342 = vmatmul.mubr.f32.gmra.mxu0 %v272
  %v343 = vpop.f32.mrf.mxu0
  %v344 = vadd.f32 %v268, %v343
  %v345 = vpop.f32.mrf.mxu0
  %346 = vmatprep.mubr.f32.mxu0 0.0
  %347 = vmatmul.mubr.f32.gmra.mxu0 %v275
  %v348 = vpop.f32.mrf.mxu0
  %v349 = vadd.f32 %v268, %v348
  %v350 = vpop.f32.mrf.mxu0
  %351 = vdwg.mxu0
  %v352 = vlaneseq
  %v353 = vand.u32 %v352, 127
  %v354 = vld [vmem:[%s5] sm:$0x3]
  %355 = vset.pattern.permute.xlu0 0
  %356 = vperm.xlu0 %355, %v354
  %v357 = vpop.permute.xlu0 %356
  %vm358 = vcmp.lt.s32.totalorder %v353, %v357
  %v359 = vld [vmem:[%s0] sm:$0x3]
  %v360 = vld [vmem:[%s1] sm:$0x3]
  %v361 = vld [vmem:[%s10] sm:$0x1]
  %v362 = vld [vmem:[%s9] sm:$0xff]
  %v363 = vld [vmem:[%s9 + $0x8] sm:$0xff]
  %v364 = vld [vmem:[%s9 + $0x10] sm:$0xff]
  %v365 = vld [vmem:[%s9 + $0x18] sm:$0xff]
  %v367 = vsel %vm87, %v359, 0
  %369 = vmatprep.subr.mxu0 0.0
  %370 = vmatpush1.msra.mxu0 0.0
  %371 = vmatprep.subr.mxu0 0.0
  %372 = vmatpush1.msra.mxu0 0.0
  %373 = vmatprep.subr.mxu0 0.0
  %374 = vmatpush1.msra.mxu0 0.0
  %375 = vmatprep.subr.mxu0 0.0
  %376 = vmatpush1.msra.mxu0 0.0
  %377 = vmatprep.subr.mxu0 0.0
  %378 = vmatpush1.msra.mxu0 0.0
  %379 = vmatprep.subr.mxu0 0.0
  %380 = vmatpush1.msra.mxu0 0.0
  %381 = vmatprep.subr.mxu0 0.0
  %382 = vmatpush1.msra.mxu0 0.0
  %383 = vmatprep.subr.mxu0 0.0
  %384 = vmatpush1.msra.mxu0 0.0
  %385 = vmatprep.subr.mxu0 0.0
  %386 = vmatpush1.msra.mxu0 0.0
  %387 = vmatprep.subr.mxu0 0.0
  %388 = vmatpush1.msra.mxu0 0.0
  %389 = vmatprep.subr.mxu0 0.0
  %390 = vmatpush1.msra.mxu0 0.0
  %391 = vmatprep.subr.mxu0 0.0
  %392 = vmatpush1.msra.mxu0 0.0
  %393 = vmatprep.subr.mxu0 0.0
  %394 = vmatpush1.msra.mxu0 %v365
  %395 = vmatprep.subr.mxu0 0.0
  %396 = vmatpush1.msra.mxu0 %v364
  %397 = vmatprep.subr.mxu0 0.0
  %398 = vmatpush1.msra.mxu0 %v363
  %399 = vmatprep.subr.mxu0 0.0
  %400 = vmatpush1.msra.mxu0 %v362
  %401 = vmatprep.subr.mxu0 0.0
  %402 = vmatpush2.msra.mxu0 0.0
  %403 = vmatprep.subr.mxu0 0.0
  %404 = vmatpush2.msra.mxu0 0.0
  %405 = vmatprep.subr.mxu0 0.0
  %406 = vmatpush2.msra.mxu0 0.0
  %407 = vmatprep.subr.mxu0 0.0
  %408 = vmatpush2.msra.mxu0 0.0
  %409 = vmatprep.subr.mxu0 0.0
  %410 = vmatpush2.msra.mxu0 0.0
  %411 = vmatprep.subr.mxu0 0.0
  %412 = vmatpush2.msra.mxu0 0.0
  %413 = vmatprep.subr.mxu0 0.0
  %414 = vmatpush2.msra.mxu0 0.0
  %415 = vmatprep.subr.mxu0 0.0
  %416 = vmatpush2.msra.mxu0 0.0
  %417 = vmatprep.subr.mxu0 0.0
  %418 = vmatpush2.msra.mxu0 0.0
  %419 = vmatprep.subr.mxu0 0.0
  %420 = vmatpush2.msra.mxu0 0.0
  %421 = vmatprep.subr.mxu0 0.0
  %422 = vmatpush2.msra.mxu0 0.0
  %423 = vmatprep.subr.mxu0 0.0
  %424 = vmatpush2.msra.mxu0 0.0
  %425 = vmatprep.subr.mxu0 0.0
  %426 = vmatpush2.msra.mxu0 0.0
  %427 = vmatprep.subr.mxu0 0.0
  %428 = vmatpush2.msra.mxu0 0.0
  %429 = vmatprep.subr.mxu0 0.0
  %430 = vmatpush2.msra.mxu0 0.0
  %431 = vmatprep.subr.mxu0 0.0
  %432 = vmatpush2.msra.mxu0 0.0
  %433 = vmatprep.mubr.f32.mxu0 0.0
  %434 = vmatmul.mubr.f32.gmra.mxu0 %v367
  %v435 = vpop.f32.mrf.mxu0
  %v436 = vadd.f32 0.0, %v435
  %v437 = vpop.f32.mrf.mxu0
  %438 = vdwg.mxu0
  %v441 = vunpack.c.l.s4 1966171168
  %v442 = vunpack.c.0.s8 %v441
  %v443 = vlaneseq
  %v444 = vshrl.u32 %v443, 7
  %v445 = vsub.s32 %v442, %v444
  %v446 = vrot.slane %v436, %v445
  %v447 = vcombine.high %v446, %v446
  %v449 = vunpack.c.l.s4 1966171168
  %v450 = vunpack.c.0.s8 %v449
  %v451 = vlaneseq
  %v452 = vshrl.u32 %v451, 7
  %v453 = vsub.s32 %v450, %v452
  %v454 = vrot.slane %v446, %v453
  %v456 = vunpack.c.l.s4 1966171168
  %v457 = vunpack.c.0.s8 %v456
  %v458 = vlaneseq
  %v459 = vshrl.u32 %v458, 7
  %v460 = vsub.s32 %v457, %v459
  %v461 = vrot.slane %v447, %v460
  %v462 = vlaneseq
  %v463 = vshrl.u32 %v462, 7
  %v464 = vsub.s32 0, %v463
  %v465 = vrot.slane %v454, %v464
  %v466 = vlaneseq
  %v467 = vshrl.u32 %v466, 7
  %v468 = vsub.s32 0, %v467
  %v469 = vrot.slane %v461, %v468
  %v472 = vadd.f32 %v257, %v465
  %v473 = vadd.f32 %v258, %v469
  %v474 = vtanh.pop %v472
  %v475 = vtanh.pop %v473
  %v477 = vlaneseq
  %v478 = vshrl.u32 %v477, 7
  %v479 = vsub.s32 0, %v478
  %v480 = vrot.slane %v361, %v479
  %v482 = vmul.f32 %v474, %v480
  %v483 = vmul.f32 %v475, %v480
  %v484 = vsel %vm87, %v482, 0.0
  %485 = vadd.xlane.f32.xlu0 %v484
  %v486 = vpop.xlane.xlu0 %485
  %v487 = vsel %vm87, %v483, 0.0
  %488 = vadd.xlane.f32.xlu0 %v487
  %v489 = vpop.xlane.xlu0 %488
  %v490 = vld [vmem:[#allocation2] sm:$0x1]
  %v492 = vlaneseq
  %v493 = vshrl.u32 %v492, 7
  %v494 = vsub.s32 0, %v493
  %v495 = vrot.slane %v490, %v494
  %496 = vset.pattern.permute.xlu0 0
  %497 = vperm.xlu0 %496, %v495
  %v498 = vpop.permute.xlu0 %497
  %v500 = vadd.f32 %v486, %v498
  %v501 = vadd.f32 %v489, %v498
  %v504 = vlaneseq
  %v505 = vshrl.u32 %v504, 7
  %v506 = vsub.s32 %v353, %v505
  %v507 = vrot.slane %v500, %v506
  %v508 = vlaneseq
  %v509 = vshrl.u32 %v508, 7
  %v510 = vsub.s32 %v353, %v509
  %v511 = vrot.slane %v501, %v510
  %vm512 = vcmask 1041409
  %v513 = vsel %vm512, %v511, %v507
  %v515 = vsel %vm358, %v513, -1e+10
  %vm516 = vcmask 58368
  %v517 = vsel %vm516, %v515, -inf
  %518 = vmax.xlane.f32.xlu0 %v517
  %v519 = vpop.xlane.xlu0 %518
  %v520 = vsub.f32 %v515, %v519
  %v521 = vmul.f32 %v520, 1.442695
  %v522 = vpow.pop %v521
  %v523 = vsel %vm516, %v522, 0.0
  %524 = vadd.xlane.f32.xlu0 %v523
  %v525 = vpop.xlane.xlu0 %524
  %v526 = vrcp.pop %v525
  %v527 = vmul.f32 %v522, %v526
  %v528 = vlaneseq
  %v529 = vshrl.u32 %v528, 7
  %v530 = vsub.s32 0, %v529
  %v531 = vrot.slane %v527, %v530
  %533 = vbcast.lane.b32.xlu0 %v531, 256
  %v534 = vpop.permute.xlu0 %533
  %v535 = vlaneseq
  %v536 = vshrl.u32 %v535, 7
  %v537 = vsub.s32 1, %v536
  %v538 = vrot.slane %v527, %v537
  %540 = vbcast.lane.b32.xlu0 %v538, 256
  %v541 = vpop.permute.xlu0 %540
  %v542 = vmul.f32 %v534, %v75
  %v543 = vmul.f32 %v541, %v76
  %v544 = vsel %vm87, %v542, 0.0
  %v545 = vrot.slane %v544, 4
  %v546 = vadd.f32 %v544, %v545
  %v547 = vrot.slane %v546, 2
  %v548 = vadd.f32 %v546, %v547
  %v549 = vrot.slane %v548, 1
  %v550 = vadd.f32 %v548, %v549
  %v551 = vsel %vm87, %v543, 0.0
  %v552 = vrot.slane %v551, 4
  %v553 = vadd.f32 %v551, %v552
  %v554 = vrot.slane %v553, 2
  %v555 = vadd.f32 %v553, %v554
  %v556 = vrot.slane %v555, 1
  %v557 = vadd.f32 %v555, %v556
  %v558 = vmul.f32 %v534, %v77
  %v559 = vmul.f32 %v541, %v78
  %v560 = vsel %vm87, %v558, 0.0
  %v561 = vrot.slane %v560, 4
  %v562 = vadd.f32 %v560, %v561
  %v563 = vrot.slane %v562, 2
  %v564 = vadd.f32 %v562, %v563
  %v565 = vrot.slane %v564, 1
  %v566 = vadd.f32 %v564, %v565
  %v567 = vsel %vm87, %v559, 0.0
  %v568 = vrot.slane %v567, 4
  %v569 = vadd.f32 %v567, %v568
  %v570 = vrot.slane %v569, 2
  %v571 = vadd.f32 %v569, %v570
  %v572 = vrot.slane %v571, 1
  %v573 = vadd.f32 %v571, %v572
  %v574 = vld [vmem:[%s14] sm:$0xff]
  %v575 = vld [vmem:[%s14 + $0x8] sm:$0xff]
  %v576 = vld [vmem:[%s14 + $0x10] sm:$0xff]
  %v577 = vld [vmem:[%s14 + $0x18] sm:$0xff]
  %v580 = vsel %vm512, %v557, %v550
  %v581 = vsel %vm87, %v580, 0
  %583 = vmatprep.subr.mxu0 0.0
  %584 = vmatpush1.msra.mxu0 0.0
  %585 = vmatprep.subr.mxu0 0.0
  %586 = vmatpush1.msra.mxu0 0.0
  %587 = vmatprep.subr.mxu0 0.0
  %588 = vmatpush1.msra.mxu0 0.0
  %589 = vmatprep.subr.mxu0 0.0
  %590 = vmatpush1.msra.mxu0 0.0
  %591 = vmatprep.subr.mxu0 0.0
  %592 = vmatpush1.msra.mxu0 0.0
  %593 = vmatprep.subr.mxu0 0.0
  %594 = vmatpush1.msra.mxu0 0.0
  %595 = vmatprep.subr.mxu0 0.0
  %596 = vmatpush1.msra.mxu0 0.0
  %597 = vmatprep.subr.mxu0 0.0
  %598 = vmatpush1.msra.mxu0 0.0
  %599 = vmatprep.subr.mxu0 0.0
  %600 = vmatpush1.msra.mxu0 0.0
  %601 = vmatprep.subr.mxu0 0.0
  %602 = vmatpush1.msra.mxu0 0.0
  %603 = vmatprep.subr.mxu0 0.0
  %604 = vmatpush1.msra.mxu0 0.0
  %605 = vmatprep.subr.mxu0 0.0
  %606 = vmatpush1.msra.mxu0 0.0
  %607 = vmatprep.subr.mxu0 0.0
  %608 = vmatpush1.msra.mxu0 %v577
  %609 = vmatprep.subr.mxu0 0.0
  %610 = vmatpush1.msra.mxu0 %v576
  %611 = vmatprep.subr.mxu0 0.0
  %612 = vmatpush1.msra.mxu0 %v575
  %613 = vmatprep.subr.mxu0 0.0
  %614 = vmatpush1.msra.mxu0 %v574
  %615 = vmatprep.subr.mxu0 0.0
  %616 = vmatpush2.msra.mxu0 0.0
  %617 = vmatprep.subr.mxu0 0.0
  %618 = vmatpush2.msra.mxu0 0.0
  %619 = vmatprep.subr.mxu0 0.0
  %620 = vmatpush2.msra.mxu0 0.0
  %621 = vmatprep.subr.mxu0 0.0
  %622 = vmatpush2.msra.mxu0 0.0
  %623 = vmatprep.subr.mxu0 0.0
  %624 = vmatpush2.msra.mxu0 0.0
  %625 = vmatprep.subr.mxu0 0.0
  %626 = vmatpush2.msra.mxu0 0.0
  %627 = vmatprep.subr.mxu0 0.0
  %628 = vmatpush2.msra.mxu0 0.0
  %629 = vmatprep.subr.mxu0 0.0
  %630 = vmatpush2.msra.mxu0 0.0
  %631 = vmatprep.subr.mxu0 0.0
  %632 = vmatpush2.msra.mxu0 0.0
  %633 = vmatprep.subr.mxu0 0.0
  %634 = vmatpush2.msra.mxu0 0.0
  %635 = vmatprep.subr.mxu0 0.0
  %636 = vmatpush2.msra.mxu0 0.0
  %637 = vmatprep.subr.mxu0 0.0
  %638 = vmatpush2.msra.mxu0 0.0
  %639 = vmatprep.subr.mxu0 0.0
  %640 = vmatpush2.msra.mxu0 0.0
  %641 = vmatprep.subr.mxu0 0.0
  %642 = vmatpush2.msra.mxu0 0.0
  %643 = vmatprep.subr.mxu0 0.0
  %644 = vmatpush2.msra.mxu0 0.0
  %645 = vmatprep.subr.mxu0 0.0
  %646 = vmatpush2.msra.mxu0 0.0
  %647 = vmatprep.mubr.f32.mxu0 0.0
  %648 = vmatmul.mubr.f32.gmra.mxu0 %v581
  %v649 = vpop.f32.mrf.mxu0
  %v650 = vadd.f32 0.0, %v649
  %v651 = vpop.f32.mrf.mxu0
  %652 = vdwg.mxu0
  %v653 = vadd.f32 %v344, %v650
  %v654 = vld [vmem:[%s15] sm:$0xff]
  %v655 = vld [vmem:[%s15 + $0x8] sm:$0xff]
  %v656 = vld [vmem:[%s15 + $0x10] sm:$0xff]
  %v657 = vld [vmem:[%s15 + $0x18] sm:$0xff]
  %v660 = vsel %vm512, %v573, %v566
  %v661 = vsel %vm87, %v660, 0
  %663 = vmatprep.subr.mxu0 0.0
  %664 = vmatpush1.msra.mxu0 0.0
  %665 = vmatprep.subr.mxu0 0.0
  %666 = vmatpush1.msra.mxu0 0.0
  %667 = vmatprep.subr.mxu0 0.0
  %668 = vmatpush1.msra.mxu0 0.0
  %669 = vmatprep.subr.mxu0 0.0
  %670 = vmatpush1.msra.mxu0 0.0
  %671 = vmatprep.subr.mxu0 0.0
  %672 = vmatpush1.msra.mxu0 0.0
  %673 = vmatprep.subr.mxu0 0.0
  %674 = vmatpush1.msra.mxu0 0.0
  %675 = vmatprep.subr.mxu0 0.0
  %676 = vmatpush1.msra.mxu0 0.0
  %677 = vmatprep.subr.mxu0 0.0
  %678 = vmatpush1.msra.mxu0 0.0
  %679 = vmatprep.subr.mxu0 0.0
  %680 = vmatpush1.msra.mxu0 0.0
  %681 = vmatprep.subr.mxu0 0.0
  %682 = vmatpush1.msra.mxu0 0.0
  %683 = vmatprep.subr.mxu0 0.0
  %684 = vmatpush1.msra.mxu0 0.0
  %685 = vmatprep.subr.mxu0 0.0
  %686 = vmatpush1.msra.mxu0 0.0
  %687 = vmatprep.subr.mxu0 0.0
  %688 = vmatpush1.msra.mxu0 %v657
  %689 = vmatprep.subr.mxu0 0.0
  %690 = vmatpush1.msra.mxu0 %v656
  %691 = vmatprep.subr.mxu0 0.0
  %692 = vmatpush1.msra.mxu0 %v655
  %693 = vmatprep.subr.mxu0 0.0
  %694 = vmatpush1.msra.mxu0 %v654
  %695 = vmatprep.subr.mxu0 0.0
  %696 = vmatpush2.msra.mxu0 0.0
  %697 = vmatprep.subr.mxu0 0.0
  %698 = vmatpush2.msra.mxu0 0.0
  %699 = vmatprep.subr.mxu0 0.0
  %700 = vmatpush2.msra.mxu0 0.0
  %701 = vmatprep.subr.mxu0 0.0
  %702 = vmatpush2.msra.mxu0 0.0
  %703 = vmatprep.subr.mxu0 0.0
  %704 = vmatpush2.msra.mxu0 0.0
  %705 = vmatprep.subr.mxu0 0.0
  %706 = vmatpush2.msra.mxu0 0.0
  %707 = vmatprep.subr.mxu0 0.0
  %708 = vmatpush2.msra.mxu0 0.0
  %709 = vmatprep.subr.mxu0 0.0
  %710 = vmatpush2.msra.mxu0 0.0
  %711 = vmatprep.subr.mxu0 0.0
  %712 = vmatpush2.msra.mxu0 0.0
  %713 = vmatprep.subr.mxu0 0.0
  %714 = vmatpush2.msra.mxu0 0.0
  %715 = vmatprep.subr.mxu0 0.0
  %716 = vmatpush2.msra.mxu0 0.0
  %717 = vmatprep.subr.mxu0 0.0
  %718 = vmatpush2.msra.mxu0 0.0
  %719 = vmatprep.subr.mxu0 0.0
  %720 = vmatpush2.msra.mxu0 0.0
  %721 = vmatprep.subr.mxu0 0.0
  %722 = vmatpush2.msra.mxu0 0.0
  %723 = vmatprep.subr.mxu0 0.0
  %724 = vmatpush2.msra.mxu0 0.0
  %725 = vmatprep.subr.mxu0 0.0
  %726 = vmatpush2.msra.mxu0 0.0
  %727 = vmatprep.mubr.f32.mxu0 0.0
  %728 = vmatmul.mubr.f32.gmra.mxu0 %v661
  %v729 = vpop.f32.mrf.mxu0
  %v730 = vadd.f32 0.0, %v729
  %v731 = vpop.f32.mrf.mxu0
  %732 = vdwg.mxu0
  %v733 = vadd.f32 %v653, %v730
  %v734 = vld [vmem:[%s16] sm:$0xff]
  %v735 = vld [vmem:[%s16 + $0x8] sm:$0xff]
  %v736 = vld [vmem:[%s16 + $0x10] sm:$0xff]
  %v737 = vld [vmem:[%s16 + $0x18] sm:$0xff]
  %738 = vmatprep.subr.mxu0 0.0
  %739 = vmatpush1.msra.mxu0 0.0
  %740 = vmatprep.subr.mxu0 0.0
  %741 = vmatpush1.msra.mxu0 0.0
  %742 = vmatprep.subr.mxu0 0.0
  %743 = vmatpush1.msra.mxu0 0.0
  %744 = vmatprep.subr.mxu0 0.0
  %745 = vmatpush1.msra.mxu0 0.0
  %746 = vmatprep.subr.mxu0 0.0
  %747 = vmatpush1.msra.mxu0 0.0
  %748 = vmatprep.subr.mxu0 0.0
  %749 = vmatpush1.msra.mxu0 0.0
  %750 = vmatprep.subr.mxu0 0.0
  %751 = vmatpush1.msra.mxu0 0.0
  %752 = vmatprep.subr.mxu0 0.0
  %753 = vmatpush1.msra.mxu0 0.0
  %754 = vmatprep.subr.mxu0 0.0
  %755 = vmatpush1.msra.mxu0 0.0
  %756 = vmatprep.subr.mxu0 0.0
  %757 = vmatpush1.msra.mxu0 0.0
  %758 = vmatprep.subr.mxu0 0.0
  %759 = vmatpush1.msra.mxu0 0.0
  %760 = vmatprep.subr.mxu0 0.0
  %761 = vmatpush1.msra.mxu0 0.0
  %762 = vmatprep.subr.mxu0 0.0
  %763 = vmatpush1.msra.mxu0 %v737
  %764 = vmatprep.subr.mxu0 0.0
  %765 = vmatpush1.msra.mxu0 %v736
  %766 = vmatprep.subr.mxu0 0.0
  %767 = vmatpush1.msra.mxu0 %v735
  %768 = vmatprep.subr.mxu0 0.0
  %769 = vmatpush1.msra.mxu0 %v734
  %770 = vmatprep.subr.mxu0 0.0
  %771 = vmatpush2.msra.mxu0 0.0
  %772 = vmatprep.subr.mxu0 0.0
  %773 = vmatpush2.msra.mxu0 0.0
  %774 = vmatprep.subr.mxu0 0.0
  %775 = vmatpush2.msra.mxu0 0.0
  %776 = vmatprep.subr.mxu0 0.0
  %777 = vmatpush2.msra.mxu0 0.0
  %778 = vmatprep.subr.mxu0 0.0
  %779 = vmatpush2.msra.mxu0 0.0
  %780 = vmatprep.subr.mxu0 0.0
  %781 = vmatpush2.msra.mxu0 0.0
  %782 = vmatprep.subr.mxu0 0.0
  %783 = vmatpush2.msra.mxu0 0.0
  %784 = vmatprep.subr.mxu0 0.0
  %785 = vmatpush2.msra.mxu0 0.0
  %786 = vmatprep.subr.mxu0 0.0
  %787 = vmatpush2.msra.mxu0 0.0
  %788 = vmatprep.subr.mxu0 0.0
  %789 = vmatpush2.msra.mxu0 0.0
  %790 = vmatprep.subr.mxu0 0.0
  %791 = vmatpush2.msra.mxu0 0.0
  %792 = vmatprep.subr.mxu0 0.0
  %793 = vmatpush2.msra.mxu0 0.0
  %794 = vmatprep.subr.mxu0 0.0
  %795 = vmatpush2.msra.mxu0 0.0
  %796 = vmatprep.subr.mxu0 0.0
  %797 = vmatpush2.msra.mxu0 0.0
  %798 = vmatprep.subr.mxu0 0.0
  %799 = vmatpush2.msra.mxu0 0.0
  %800 = vmatprep.subr.mxu0 0.0
  %801 = vmatpush2.msra.mxu0 0.0
  %802 = vmatprep.mubr.f32.mxu0 0.0
  %803 = vmatmul.mubr.f32.gmra.mxu0 %v367
  %v804 = vpop.f32.mrf.mxu0
  %v805 = vadd.f32 0.0, %v804
  %v806 = vpop.f32.mrf.mxu0
  %807 = vdwg.mxu0
  %v808 = vadd.f32 %v733, %v805
  %v809 = vxor.u32 %v808, 2147483648
  %v810 = vmul.f32 %v809, 1.442695
  %v811 = vpow.pop %v810
  %v812 = vadd.f32 %v811, 1.0
  %v813 = vrcp.pop %v812
  %v814 = vmul.f32 1.0, %v813
  %v815 = vtanh.pop %v808
  %817 = vrot.lane.b32.xlu0 %v360, 32
  %v818 = vpop.permute.xlu0 %817
  %v820 = vmul.f32 %v814, %v818
  %822 = vrot.lane.b32.xlu0 %v815, 64
  %v823 = vpop.permute.xlu0 %822
  %v825 = vmul.f32 %v814, %v823
  %827 = vrot.lane.b32.xlu0 %v825, 32
  %v828 = vpop.permute.xlu0 %827
  %v830 = vadd.f32 %v820, %v828
  %v831 = vtanh.pop %v830
  %833 = vrot.lane.b32.xlu0 %v831, 64
  %v834 = vpop.permute.xlu0 %833
  %v836 = vmul.f32 %v814, %v834
  %v837 = vld [vmem:[%s17] sm:$0xff]
  %v838 = vld [vmem:[%s17 + $0x8] sm:$0xff]
  %v839 = vld [vmem:[%s17 + $0x10] sm:$0xff]
  %v840 = vld [vmem:[%s17 + $0x18] sm:$0xff]
  %v841 = vld [vmem:[%s18] sm:$0xff]
  %v842 = vld [vmem:[%s18 + $0x8] sm:$0xff]
  %v843 = vld [vmem:[%s18 + $0x10] sm:$0xff]
  %v844 = vld [vmem:[%s18 + $0x18] sm:$0xff]
  %845 = vmatprep.subr.mxu0 0.0
  %846 = vmatpush1.msra.mxu0 0.0
  %847 = vmatprep.subr.mxu0 0.0
  %848 = vmatpush1.msra.mxu0 0.0
  %849 = vmatprep.subr.mxu0 0.0
  %850 = vmatpush1.msra.mxu0 0.0
  %851 = vmatprep.subr.mxu0 0.0
  %852 = vmatpush1.msra.mxu0 0.0
  %853 = vmatprep.subr.mxu0 0.0
  %854 = vmatpush1.msra.mxu0 0.0
  %855 = vmatprep.subr.mxu0 0.0
  %856 = vmatpush1.msra.mxu0 0.0
  %857 = vmatprep.subr.mxu0 0.0
  %858 = vmatpush1.msra.mxu0 0.0
  %859 = vmatprep.subr.mxu0 0.0
  %860 = vmatpush1.msra.mxu0 0.0
  %861 = vmatprep.subr.mxu0 0.0
  %862 = vmatpush1.msra.mxu0 0.0
  %863 = vmatprep.subr.mxu0 0.0
  %864 = vmatpush1.msra.mxu0 0.0
  %865 = vmatprep.subr.mxu0 0.0
  %866 = vmatpush1.msra.mxu0 0.0
  %867 = vmatprep.subr.mxu0 0.0
  %868 = vmatpush1.msra.mxu0 0.0
  %869 = vmatprep.subr.mxu0 0.0
  %870 = vmatpush1.msra.mxu0 %v844
  %871 = vmatprep.subr.mxu0 0.0
  %872 = vmatpush1.msra.mxu0 %v843
  %873 = vmatprep.subr.mxu0 0.0
  %874 = vmatpush1.msra.mxu0 %v842
  %875 = vmatprep.subr.mxu0 0.0
  %876 = vmatpush1.msra.mxu0 %v841
  %877 = vmatprep.subr.mxu0 0.0
  %878 = vmatpush2.msra.mxu0 0.0
  %879 = vmatprep.subr.mxu0 0.0
  %880 = vmatpush2.msra.mxu0 0.0
  %881 = vmatprep.subr.mxu0 0.0
  %882 = vmatpush2.msra.mxu0 0.0
  %883 = vmatprep.subr.mxu0 0.0
  %884 = vmatpush2.msra.mxu0 0.0
  %885 = vmatprep.subr.mxu0 0.0
  %886 = vmatpush2.msra.mxu0 0.0
  %887 = vmatprep.subr.mxu0 0.0
  %888 = vmatpush2.msra.mxu0 0.0
  %889 = vmatprep.subr.mxu0 0.0
  %890 = vmatpush2.msra.mxu0 0.0
  %891 = vmatprep.subr.mxu0 0.0
  %892 = vmatpush2.msra.mxu0 0.0
  %893 = vmatprep.subr.mxu0 0.0
  %894 = vmatpush2.msra.mxu0 0.0
  %895 = vmatprep.subr.mxu0 0.0
  %896 = vmatpush2.msra.mxu0 0.0
  %897 = vmatprep.subr.mxu0 0.0
  %898 = vmatpush2.msra.mxu0 0.0
  %899 = vmatprep.subr.mxu0 0.0
  %900 = vmatpush2.msra.mxu0 0.0
  %901 = vmatprep.subr.mxu0 0.0
  %902 = vmatpush2.msra.mxu0 0.0
  %903 = vmatprep.subr.mxu0 0.0
  %904 = vmatpush2.msra.mxu0 0.0
  %905 = vmatprep.subr.mxu0 0.0
  %906 = vmatpush2.msra.mxu0 0.0
  %907 = vmatprep.subr.mxu0 0.0
  %908 = vmatpush2.msra.mxu0 0.0
  %909 = vmatprep.mubr.f32.mxu0 0.0
  %910 = vmatmul.mubr.f32.gmra.mxu0 %v581
  %v911 = vpop.f32.mrf.mxu0
  %v912 = vadd.f32 0.0, %v911
  %v913 = vpop.f32.mrf.mxu0
  %914 = vdwg.mxu0
  %916 = vrot.lane.b32.xlu0 %v836, 32
  %v917 = vpop.permute.xlu0 %916
  %v918 = vsel %vm87, %v917, 0
  %920 = vmatprep.subr.mxu0 0.0
  %921 = vmatpush1.msra.mxu0 0.0
  %922 = vmatprep.subr.mxu0 0.0
  %923 = vmatpush1.msra.mxu0 0.0
  %924 = vmatprep.subr.mxu0 0.0
  %925 = vmatpush1.msra.mxu0 0.0
  %926 = vmatprep.subr.mxu0 0.0
  %927 = vmatpush1.msra.mxu0 0.0
  %928 = vmatprep.subr.mxu0 0.0
  %929 = vmatpush1.msra.mxu0 0.0
  %930 = vmatprep.subr.mxu0 0.0
  %931 = vmatpush1.msra.mxu0 0.0
  %932 = vmatprep.subr.mxu0 0.0
  %933 = vmatpush1.msra.mxu0 0.0
  %934 = vmatprep.subr.mxu0 0.0
  %935 = vmatpush1.msra.mxu0 0.0
  %936 = vmatprep.subr.mxu0 0.0
  %937 = vmatpush1.msra.mxu0 0.0
  %938 = vmatprep.subr.mxu0 0.0
  %939 = vmatpush1.msra.mxu0 0.0
  %940 = vmatprep.subr.mxu0 0.0
  %941 = vmatpush1.msra.mxu0 0.0
  %942 = vmatprep.subr.mxu0 0.0
  %943 = vmatpush1.msra.mxu0 0.0
  %944 = vmatprep.subr.mxu0 0.0
  %945 = vmatpush1.msra.mxu0 %v840
  %946 = vmatprep.subr.mxu0 0.0
  %947 = vmatpush1.msra.mxu0 %v839
  %948 = vmatprep.subr.mxu0 0.0
  %949 = vmatpush1.msra.mxu0 %v838
  %950 = vmatprep.subr.mxu0 0.0
  %951 = vmatpush1.msra.mxu0 %v837
  %952 = vmatprep.subr.mxu0 0.0
  %953 = vmatpush2.msra.mxu0 0.0
  %954 = vmatprep.subr.mxu0 0.0
  %955 = vmatpush2.msra.mxu0 0.0
  %956 = vmatprep.subr.mxu0 0.0
  %957 = vmatpush2.msra.mxu0 0.0
  %958 = vmatprep.subr.mxu0 0.0
  %959 = vmatpush2.msra.mxu0 0.0
  %960 = vmatprep.subr.mxu0 0.0
  %961 = vmatpush2.msra.mxu0 0.0
  %962 = vmatprep.subr.mxu0 0.0
  %963 = vmatpush2.msra.mxu0 0.0
  %964 = vmatprep.subr.mxu0 0.0
  %965 = vmatpush2.msra.mxu0 0.0
  %966 = vmatprep.subr.mxu0 0.0
  %967 = vmatpush2.msra.mxu0 0.0
  %968 = vmatprep.subr.mxu0 0.0
  %969 = vmatpush2.msra.mxu0 0.0
  %970 = vmatprep.subr.mxu0 0.0
  %971 = vmatpush2.msra.mxu0 0.0
  %972 = vmatprep.subr.mxu0 0.0
  %973 = vmatpush2.msra.mxu0 0.0
  %974 = vmatprep.subr.mxu0 0.0
  %975 = vmatpush2.msra.mxu0 0.0
  %976 = vmatprep.subr.mxu0 0.0
  %977 = vmatpush2.msra.mxu0 0.0
  %978 = vmatprep.subr.mxu0 0.0
  %979 = vmatpush2.msra.mxu0 0.0
  %980 = vmatprep.subr.mxu0 0.0
  %981 = vmatpush2.msra.mxu0 0.0
  %982 = vmatprep.subr.mxu0 0.0
  %983 = vmatpush2.msra.mxu0 0.0
  %984 = vmatprep.mubr.f32.mxu0 0.0
  %985 = vmatmul.mubr.f32.gmra.mxu0 %v918
  %v986 = vpop.f32.mrf.mxu0
  %v987 = vadd.f32 %v912, %v986
  %v988 = vpop.f32.mrf.mxu0
  %989 = vdwg.mxu0
  %v990 = vld [vmem:[%s19] sm:$0xff]
  %v991 = vld [vmem:[%s19 + $0x8] sm:$0xff]
  %v992 = vld [vmem:[%s19 + $0x10] sm:$0xff]
  %v993 = vld [vmem:[%s19 + $0x18] sm:$0xff]
  %994 = vmatprep.subr.mxu0 0.0
  %995 = vmatpush1.msra.mxu0 0.0
  %996 = vmatprep.subr.mxu0 0.0
  %997 = vmatpush1.msra.mxu0 0.0
  %998 = vmatprep.subr.mxu0 0.0
  %999 = vmatpush1.msra.mxu0 0.0
  %1000 = vmatprep.subr.mxu0 0.0
  %1001 = vmatpush1.msra.mxu0 0.0
  %1002 = vmatprep.subr.mxu0 0.0
  %1003 = vmatpush1.msra.mxu0 0.0
  %1004 = vmatprep.subr.mxu0 0.0
  %1005 = vmatpush1.msra.mxu0 0.0
  %1006 = vmatprep.subr.mxu0 0.0
  %1007 = vmatpush1.msra.mxu0 0.0
  %1008 = vmatprep.subr.mxu0 0.0
  %1009 = vmatpush1.msra.mxu0 0.0
  %1010 = vmatprep.subr.mxu0 0.0
  %1011 = vmatpush1.msra.mxu0 0.0
  %1012 = vmatprep.subr.mxu0 0.0
  %1013 = vmatpush1.msra.mxu0 0.0
  %1014 = vmatprep.subr.mxu0 0.0
  %1015 = vmatpush1.msra.mxu0 0.0
  %1016 = vmatprep.subr.mxu0 0.0
  %1017 = vmatpush1.msra.mxu0 0.0
  %1018 = vmatprep.subr.mxu0 0.0
  %1019 = vmatpush1.msra.mxu0 %v993
  %1020 = vmatprep.subr.mxu0 0.0
  %1021 = vmatpush1.msra.mxu0 %v992
  %1022 = vmatprep.subr.mxu0 0.0
  %1023 = vmatpush1.msra.mxu0 %v991
  %1024 = vmatprep.subr.mxu0 0.0
  %1025 = vmatpush1.msra.mxu0 %v990
  %1026 = vmatprep.subr.mxu0 0.0
  %1027 = vmatpush2.msra.mxu0 0.0
  %1028 = vmatprep.subr.mxu0 0.0
  %1029 = vmatpush2.msra.mxu0 0.0
  %1030 = vmatprep.subr.mxu0 0.0
  %1031 = vmatpush2.msra.mxu0 0.0
  %1032 = vmatprep.subr.mxu0 0.0
  %1033 = vmatpush2.msra.mxu0 0.0
  %1034 = vmatprep.subr.mxu0 0.0
  %1035 = vmatpush2.msra.mxu0 0.0
  %1036 = vmatprep.subr.mxu0 0.0
  %1037 = vmatpush2.msra.mxu0 0.0
  %1038 = vmatprep.subr.mxu0 0.0
  %1039 = vmatpush2.msra.mxu0 0.0
  %1040 = vmatprep.subr.mxu0 0.0
  %1041 = vmatpush2.msra.mxu0 0.0
  %1042 = vmatprep.subr.mxu0 0.0
  %1043 = vmatpush2.msra.mxu0 0.0
  %1044 = vmatprep.subr.mxu0 0.0
  %1045 = vmatpush2.msra.mxu0 0.0
  %1046 = vmatprep.subr.mxu0 0.0
  %1047 = vmatpush2.msra.mxu0 0.0
  %1048 = vmatprep.subr.mxu0 0.0
  %1049 = vmatpush2.msra.mxu0 0.0
  %1050 = vmatprep.subr.mxu0 0.0
  %1051 = vmatpush2.msra.mxu0 0.0
  %1052 = vmatprep.subr.mxu0 0.0
  %1053 = vmatpush2.msra.mxu0 0.0
  %1054 = vmatprep.subr.mxu0 0.0
  %1055 = vmatpush2.msra.mxu0 0.0
  %1056 = vmatprep.subr.mxu0 0.0
  %1057 = vmatpush2.msra.mxu0 0.0
  %1058 = vmatprep.mubr.f32.mxu0 0.0
  %1059 = vmatmul.mubr.f32.gmra.mxu0 %v661
  %v1060 = vpop.f32.mrf.mxu0
  %v1061 = vadd.f32 0.0, %v1060
  %v1062 = vpop.f32.mrf.mxu0
  %1063 = vdwg.mxu0
  %v1064 = vadd.f32 %v987, %v1061
  %v1065 = vld [vmem:[%s20] sm:$0xff]
  %v1066 = vld [vmem:[%s20 + $0x8] sm:$0xff]
  %1067 = vmatprep.subr.mxu0 0.0
  %1068 = vmatpush1.msra.mxu0 0.0
  %1069 = vmatprep.subr.mxu0 0.0
  %1070 = vmatpush1.msra.mxu0 0.0
  %1071 = vmatprep.subr.mxu0 0.0
  %1072 = vmatpush1.msra.mxu0 0.0
  %1073 = vmatprep.subr.mxu0 0.0
  %1074 = vmatpush1.msra.mxu0 0.0
  %1075 = vmatprep.subr.mxu0 0.0
  %1076 = vmatpush1.msra.mxu0 0.0
  %1077 = vmatprep.subr.mxu0 0.0
  %1078 = vmatpush1.msra.mxu0 0.0
  %1079 = vmatprep.subr.mxu0 0.0
  %1080 = vmatpush1.msra.mxu0 0.0
  %1081 = vmatprep.subr.mxu0 0.0
  %1082 = vmatpush1.msra.mxu0 0.0
  %1083 = vmatprep.subr.mxu0 0.0
  %1084 = vmatpush1.msra.mxu0 0.0
  %1085 = vmatprep.subr.mxu0 0.0
  %1086 = vmatpush1.msra.mxu0 0.0
  %1087 = vmatprep.subr.mxu0 0.0
  %1088 = vmatpush1.msra.mxu0 0.0
  %1089 = vmatprep.subr.mxu0 0.0
  %1090 = vmatpush1.msra.mxu0 0.0
  %1091 = vmatprep.subr.mxu0 0.0
  %1092 = vmatpush1.msra.mxu0 0.0
  %1093 = vmatprep.subr.mxu0 0.0
  %1094 = vmatpush1.msra.mxu0 0.0
  %1095 = vmatprep.subr.mxu0 0.0
  %1096 = vmatpush1.msra.mxu0 %v1066
  %1097 = vmatprep.subr.mxu0 0.0
  %1098 = vmatpush1.msra.mxu0 %v1065
  %1099 = vmatprep.subr.mxu0 0.0
  %1100 = vmatpush2.msra.mxu0 0.0
  %1101 = vmatprep.subr.mxu0 0.0
  %1102 = vmatpush2.msra.mxu0 0.0
  %1103 = vmatprep.subr.mxu0 0.0
  %1104 = vmatpush2.msra.mxu0 0.0
  %1105 = vmatprep.subr.mxu0 0.0
  %1106 = vmatpush2.msra.mxu0 0.0
  %1107 = vmatprep.subr.mxu0 0.0
  %1108 = vmatpush2.msra.mxu0 0.0
  %1109 = vmatprep.subr.mxu0 0.0
  %1110 = vmatpush2.msra.mxu0 0.0
  %1111 = vmatprep.subr.mxu0 0.0
  %1112 = vmatpush2.msra.mxu0 0.0
  %1113 = vmatprep.subr.mxu0 0.0
  %1114 = vmatpush2.msra.mxu0 0.0
  %1115 = vmatprep.subr.mxu0 0.0
  %1116 = vmatpush2.msra.mxu0 0.0
  %1117 = vmatprep.subr.mxu0 0.0
  %1118 = vmatpush2.msra.mxu0 0.0
  %1119 = vmatprep.subr.mxu0 0.0
  %1120 = vmatpush2.msra.mxu0 0.0
  %1121 = vmatprep.subr.mxu0 0.0
  %1122 = vmatpush2.msra.mxu0 0.0
  %1123 = vmatprep.subr.mxu0 0.0
  %1124 = vmatpush2.msra.mxu0 0.0
  %1125 = vmatprep.subr.mxu0 0.0
  %1126 = vmatpush2.msra.mxu0 0.0
  %1127 = vmatprep.subr.mxu0 0.0
  %1128 = vmatpush2.msra.mxu0 0.0
  %1129 = vmatprep.subr.mxu0 0.0
  %1130 = vmatpush2.msra.mxu0 0.0
  %1131 = vmatprep.mubr.f32.mxu0 0.0
  %1132 = vmatmul.mubr.f32.gmra.mxu0 %v272
  %v1133 = vpop.f32.mrf.mxu0
  %v1134 = vadd.f32 0.0, %v1133
  %v1135 = vpop.f32.mrf.mxu0
  %1136 = vdwg.mxu0
  %v1137 = vadd.f32 %v1064, %v1134
  %v1138 = vld [vmem:[%s21] sm:$0x1]
  %v1140 = vlaneseq
  %v1141 = vshrl.u32 %v1140, 7
  %v1142 = vsub.s32 0, %v1141
  %v1143 = vrot.slane %v1138, %v1142
  %v1145 = vadd.f32 %v1137, %v1143
  %v1148 = vunpack.c.l.s4 1966171168
  %v1149 = vunpack.c.0.s8 %v1148
  %v1150 = vlaneseq
  %v1151 = vshrl.u32 %v1150, 7
  %v1152 = vsub.s32 %v1149, %v1151
  %v1153 = vrot.slane %v1145, %v1152
  %v1154 = vcombine.high %v1153, %v1153
  %v1156 = vunpack.c.l.s4 1966171168
  %v1157 = vunpack.c.0.s8 %v1156
  %v1158 = vlaneseq
  %v1159 = vshrl.u32 %v1158, 7
  %v1160 = vsub.s32 %v1157, %v1159
  %v1161 = vrot.slane %v1153, %v1160
  %v1163 = vunpack.c.l.s4 1966171168
  %v1164 = vunpack.c.0.s8 %v1163
  %v1165 = vlaneseq
  %v1166 = vshrl.u32 %v1165, 7
  %v1167 = vsub.s32 %v1164, %v1166
  %v1168 = vrot.slane %v1154, %v1167
  %1171 = vst [vmem:[%s22] sm:$0x1] %v1161
  %1172 = vst [vmem:[%s22 + $0x8] sm:$0x1] %v1168
  %v1175 = vunpack.c.l.s4 1966171168
  %v1176 = vunpack.c.0.s8 %v1175
  %v1177 = vlaneseq
  %v1178 = vshrl.u32 %v1177, 7
  %v1179 = vsub.s32 %v1176, %v1178
  %v1180 = vrot.slane %v527, %v1179
  %v1181 = vcombine.high %v1180, %v1180
  %v1183 = vunpack.c.l.s4 1966171168
  %v1184 = vunpack.c.0.s8 %v1183
  %v1185 = vlaneseq
  %v1186 = vshrl.u32 %v1185, 7
  %v1187 = vsub.s32 %v1184, %v1186
  %v1188 = vrot.slane %v1180, %v1187
  %v1190 = vunpack.c.l.s4 1966171168
  %v1191 = vunpack.c.0.s8 %v1190
  %v1192 = vlaneseq
  %v1193 = vshrl.u32 %v1192, 7
  %v1194 = vsub.s32 %v1191, %v1193
  %v1195 = vrot.slane %v1181, %v1194
  %vm1198 = vcmask 57344
  %1199 = vst.msk [vmem:[%s23] sm:$0x1] %vm1198, %v1188
  %1200 = vst.msk [vmem:[%s23 + $0x8] sm:$0x1] %vm1198, %v1195
  %v1201 = vld [vmem:[%s9] sm:$0xff]
  %v1202 = vld [vmem:[%s9 + $0x8] sm:$0xff]
  %v1203 = vld [vmem:[%s9 + $0x10] sm:$0xff]
  %v1204 = vld [vmem:[%s9 + $0x18] sm:$0xff]
  %1205 = vmatprep.subr.mxu0 0.0
  %1206 = vmatpush1.msra.mxu0 0.0
  %1207 = vmatprep.subr.mxu0 0.0
  %1208 = vmatpush1.msra.mxu0 0.0
  %1209 = vmatprep.subr.mxu0 0.0
  %1210 = vmatpush1.msra.mxu0 0.0
  %1211 = vmatprep.subr.mxu0 0.0
  %1212 = vmatpush1.msra.mxu0 0.0
  %1213 = vmatprep.subr.mxu0 0.0
  %1214 = vmatpush1.msra.mxu0 0.0
  %1215 = vmatprep.subr.mxu0 0.0
  %1216 = vmatpush1.msra.mxu0 0.0
  %1217 = vmatprep.subr.mxu0 0.0
  %1218 = vmatpush1.msra.mxu0 0.0
  %1219 = vmatprep.subr.mxu0 0.0
  %1220 = vmatpush1.msra.mxu0 0.0
  %1221 = vmatprep.subr.mxu0 0.0
  %1222 = vmatpush1.msra.mxu0 0.0
  %1223 = vmatprep.subr.mxu0 0.0
  %1224 = vmatpush1.msra.mxu0 0.0
  %1225 = vmatprep.subr.mxu0 0.0
  %1226 = vmatpush1.msra.mxu0 0.0
  %1227 = vmatprep.subr.mxu0 0.0
  %1228 = vmatpush1.msra.mxu0 0.0
  %1229 = vmatprep.subr.mxu0 0.0
  %1230 = vmatpush1.msra.mxu0 %v1204
  %1231 = vmatprep.subr.mxu0 0.0
  %1232 = vmatpush1.msra.mxu0 %v1203
  %1233 = vmatprep.subr.mxu0 0.0
  %1234 = vmatpush1.msra.mxu0 %v1202
  %1235 = vmatprep.subr.mxu0 0.0
  %1236 = vmatpush1.msra.mxu0 %v1201
  %1237 = vmatprep.subr.mxu0 0.0
  %1238 = vmatpush2.msra.mxu0 0.0
  %1239 = vmatprep.subr.mxu0 0.0
  %1240 = vmatpush2.msra.mxu0 0.0
  %1241 = vmatprep.subr.mxu0 0.0
  %1242 = vmatpush2.msra.mxu0 0.0
  %1243 = vmatprep.subr.mxu0 0.0
  %1244 = vmatpush2.msra.mxu0 0.0
  %1245 = vmatprep.subr.mxu0 0.0
  %1246 = vmatpush2.msra.mxu0 0.0
  %1247 = vmatprep.subr.mxu0 0.0
  %1248 = vmatpush2.msra.mxu0 0.0
  %1249 = vmatprep.subr.mxu0 0.0
  %1250 = vmatpush2.msra.mxu0 0.0
  %1251 = vmatprep.subr.mxu0 0.0
  %1252 = vmatpush2.msra.mxu0 0.0
  %1253 = vmatprep.subr.mxu0 0.0
  %1254 = vmatpush2.msra.mxu0 0.0
  %1255 = vmatprep.subr.mxu0 0.0
  %1256 = vmatpush2.msra.mxu0 0.0
  %1257 = vmatprep.subr.mxu0 0.0
  %1258 = vmatpush2.msra.mxu0 0.0
  %1259 = vmatprep.subr.mxu0 0.0
  %1260 = vmatpush2.msra.mxu0 0.0
  %1261 = vmatprep.subr.mxu0 0.0
  %1262 = vmatpush2.msra.mxu0 0.0
  %1263 = vmatprep.subr.mxu0 0.0
  %1264 = vmatpush2.msra.mxu0 0.0
  %1265 = vmatprep.subr.mxu0 0.0
  %1266 = vmatpush2.msra.mxu0 0.0
  %1267 = vmatprep.subr.mxu0 0.0
  %1268 = vmatpush2.msra.mxu0 0.0
  %1269 = vmatprep.mubr.f32.mxu0 0.0
  %1270 = vmatmul.mubr.f32.gmra.mxu0 %v918
  %v1271 = vpop.f32.mrf.mxu0
  %v1272 = vadd.f32 0.0, %v1271
  %v1273 = vpop.f32.mrf.mxu0
  %1274 = vdwg.mxu0
  %v1277 = vunpack.c.l.s4 1966171168
  %v1278 = vunpack.c.0.s8 %v1277
  %v1279 = vlaneseq
  %v1280 = vshrl.u32 %v1279, 7
  %v1281 = vsub.s32 %v1278, %v1280
  %v1282 = vrot.slane %v1272, %v1281
  %v1283 = vcombine.high %v1282, %v1282
  %v1285 = vunpack.c.l.s4 1966171168
  %v1286 = vunpack.c.0.s8 %v1285
  %v1287 = vlaneseq
  %v1288 = vshrl.u32 %v1287, 7
  %v1289 = vsub.s32 %v1286, %v1288
  %v1290 = vrot.slane %v1282, %v1289
  %v1292 = vunpack.c.l.s4 1966171168
  %v1293 = vunpack.c.0.s8 %v1292
  %v1294 = vlaneseq
  %v1295 = vshrl.u32 %v1294, 7
  %v1296 = vsub.s32 %v1293, %v1295
  %v1297 = vrot.slane %v1283, %v1296
  %v1298 = vlaneseq
  %v1299 = vshrl.u32 %v1298, 7
  %v1300 = vsub.s32 0, %v1299
  %v1301 = vrot.slane %v1290, %v1300
  %v1302 = vlaneseq
  %v1303 = vshrl.u32 %v1302, 7
  %v1304 = vsub.s32 0, %v1303
  %v1305 = vrot.slane %v1297, %v1304
  %v1308 = vadd.f32 %v257, %v1301
  %v1309 = vadd.f32 %v258, %v1305
  %v1310 = vtanh.pop %v1308
  %v1311 = vtanh.pop %v1309
  %v1312 = vmul.f32 %v1310, %v480
  %v1313 = vmul.f32 %v1311, %v480
  %v1314 = vsel %vm87, %v1312, 0.0
  %1315 = vadd.xlane.f32.xlu0 %v1314
  %v1316 = vpop.xlane.xlu0 %1315
  %v1317 = vsel %vm87, %v1313, 0.0
  %1318 = vadd.xlane.f32.xlu0 %v1317
  %v1319 = vpop.xlane.xlu0 %1318
  %v1320 = vld [vmem:[#allocation2] sm:$0x1]
  %v1322 = vlaneseq
  %v1323 = vshrl.u32 %v1322, 7
  %v1324 = vsub.s32 0, %v1323
  %v1325 = vrot.slane %v1320, %v1324
  %1326 = vset.pattern.permute.xlu0 0
  %1327 = vperm.xlu0 %1326, %v1325
  %v1328 = vpop.permute.xlu0 %1327
  %v1330 = vadd.f32 %v1316, %v1328
  %v1331 = vadd.f32 %v1319, %v1328
  %v1334 = vlaneseq
  %v1335 = vshrl.u32 %v1334, 7
  %v1336 = vsub.s32 %v353, %v1335
  %v1337 = vrot.slane %v1330, %v1336
  %v1338 = vlaneseq
  %v1339 = vshrl.u32 %v1338, 7
  %v1340 = vsub.s32 %v353, %v1339
  %v1341 = vrot.slane %v1331, %v1340
  %v1342 = vsel %vm512, %v1341, %v1337
  %v1344 = vsel %vm358, %v1342, -1e+10
  %v1345 = vsel %vm516, %v1344, -inf
  %1346 = vmax.xlane.f32.xlu0 %v1345
  %v1347 = vpop.xlane.xlu0 %1346
  %v1348 = vsub.f32 %v1344, %v1347
  %v1349 = vmul.f32 %v1348, 1.442695
  %v1350 = vpow.pop %v1349
  %v1351 = vsel %vm516, %v1350, 0.0
  %1352 = vadd.xlane.f32.xlu0 %v1351
  %v1353 = vpop.xlane.xlu0 %1352
  %v1354 = vrcp.pop %v1353
  %v1355 = vmul.f32 %v1350, %v1354
  %v1356 = vlaneseq
  %v1357 = vshrl.u32 %v1356, 7
  %v1358 = vsub.s32 0, %v1357
  %v1359 = vrot.slane %v1355, %v1358
  %1361 = vbcast.lane.b32.xlu0 %v1359, 256
  %v1362 = vpop.permute.xlu0 %1361
  %v1363 = vlaneseq
  %v1364 = vshrl.u32 %v1363, 7
  %v1365 = vsub.s32 1, %v1364
  %v1366 = vrot.slane %v1355, %v1365
  %1368 = vbcast.lane.b32.xlu0 %v1366, 256
  %v1369 = vpop.permute.xlu0 %1368
  %v1370 = vmul.f32 %v1362, %v75
  %v1371 = vmul.f32 %v1369, %v76
  %v1372 = vsel %vm87, %v1370, 0.0
  %v1373 = vrot.slane %v1372, 4
  %v1374 = vadd.f32 %v1372, %v1373
  %v1375 = vrot.slane %v1374, 2
  %v1376 = vadd.f32 %v1374, %v1375
  %v1377 = vrot.slane %v1376, 1
  %v1378 = vadd.f32 %v1376, %v1377
  %v1379 = vsel %vm87, %v1371, 0.0
  %v1380 = vrot.slane %v1379, 4
  %v1381 = vadd.f32 %v1379, %v1380
  %v1382 = vrot.slane %v1381, 2
  %v1383 = vadd.f32 %v1381, %v1382
  %v1384 = vrot.slane %v1383, 1
  %v1385 = vadd.f32 %v1383, %v1384
  %v1386 = vmul.f32 %v1362, %v77
  %v1387 = vmul.f32 %v1369, %v78
  %v1388 = vsel %vm87, %v1386, 0.0
  %v1389 = vrot.slane %v1388, 4
  %v1390 = vadd.f32 %v1388, %v1389
  %v1391 = vrot.slane %v1390, 2
  %v1392 = vadd.f32 %v1390, %v1391
  %v1393 = vrot.slane %v1392, 1
  %v1394 = vadd.f32 %v1392, %v1393
  %v1395 = vsel %vm87, %v1387, 0.0
  %v1396 = vrot.slane %v1395, 4
  %v1397 = vadd.f32 %v1395, %v1396
  %v1398 = vrot.slane %v1397, 2
  %v1399 = vadd.f32 %v1397, %v1398
  %v1400 = vrot.slane %v1399, 1
  %v1401 = vadd.f32 %v1399, %v1400
  %v1402 = vld [vmem:[%s14] sm:$0xff]
  %v1403 = vld [vmem:[%s14 + $0x8] sm:$0xff]
  %v1404 = vld [vmem:[%s14 + $0x10] sm:$0xff]
  %v1405 = vld [vmem:[%s14 + $0x18] sm:$0xff]
  %v1408 = vsel %vm512, %v1385, %v1378
  %v1409 = vsel %vm87, %v1408, 0
  %1411 = vmatprep.subr.mxu0 0.0
  %1412 = vmatpush1.msra.mxu0 0.0
  %1413 = vmatprep.subr.mxu0 0.0
  %1414 = vmatpush1.msra.mxu0 0.0
  %1415 = vmatprep.subr.mxu0 0.0
  %1416 = vmatpush1.msra.mxu0 0.0
  %1417 = vmatprep.subr.mxu0 0.0
  %1418 = vmatpush1.msra.mxu0 0.0
  %1419 = vmatprep.subr.mxu0 0.0
  %1420 = vmatpush1.msra.mxu0 0.0
  %1421 = vmatprep.subr.mxu0 0.0
  %1422 = vmatpush1.msra.mxu0 0.0
  %1423 = vmatprep.subr.mxu0 0.0
  %1424 = vmatpush1.msra.mxu0 0.0
  %1425 = vmatprep.subr.mxu0 0.0
  %1426 = vmatpush1.msra.mxu0 0.0
  %1427 = vmatprep.subr.mxu0 0.0
  %1428 = vmatpush1.msra.mxu0 0.0
  %1429 = vmatprep.subr.mxu0 0.0
  %1430 = vmatpush1.msra.mxu0 0.0
  %1431 = vmatprep.subr.mxu0 0.0
  %1432 = vmatpush1.msra.mxu0 0.0
  %1433 = vmatprep.subr.mxu0 0.0
  %1434 = vmatpush1.msra.mxu0 0.0
  %1435 = vmatprep.subr.mxu0 0.0
  %1436 = vmatpush1.msra.mxu0 %v1405
  %1437 = vmatprep.subr.mxu0 0.0
  %1438 = vmatpush1.msra.mxu0 %v1404
  %1439 = vmatprep.subr.mxu0 0.0
  %1440 = vmatpush1.msra.mxu0 %v1403
  %1441 = vmatprep.subr.mxu0 0.0
  %1442 = vmatpush1.msra.mxu0 %v1402
  %1443 = vmatprep.subr.mxu0 0.0
  %1444 = vmatpush2.msra.mxu0 0.0
  %1445 = vmatprep.subr.mxu0 0.0
  %1446 = vmatpush2.msra.mxu0 0.0
  %1447 = vmatprep.subr.mxu0 0.0
  %1448 = vmatpush2.msra.mxu0 0.0
  %1449 = vmatprep.subr.mxu0 0.0
  %1450 = vmatpush2.msra.mxu0 0.0
  %1451 = vmatprep.subr.mxu0 0.0
  %1452 = vmatpush2.msra.mxu0 0.0
  %1453 = vmatprep.subr.mxu0 0.0
  %1454 = vmatpush2.msra.mxu0 0.0
  %1455 = vmatprep.subr.mxu0 0.0
  %1456 = vmatpush2.msra.mxu0 0.0
  %1457 = vmatprep.subr.mxu0 0.0
  %1458 = vmatpush2.msra.mxu0 0.0
  %1459 = vmatprep.subr.mxu0 0.0
  %1460 = vmatpush2.msra.mxu0 0.0
  %1461 = vmatprep.subr.mxu0 0.0
  %1462 = vmatpush2.msra.mxu0 0.0
  %1463 = vmatprep.subr.mxu0 0.0
  %1464 = vmatpush2.msra.mxu0 0.0
  %1465 = vmatprep.subr.mxu0 0.0
  %1466 = vmatpush2.msra.mxu0 0.0
  %1467 = vmatprep.subr.mxu0 0.0
  %1468 = vmatpush2.msra.mxu0 0.0
  %1469 = vmatprep.subr.mxu0 0.0
  %1470 = vmatpush2.msra.mxu0 0.0
  %1471 = vmatprep.subr.mxu0 0.0
  %1472 = vmatpush2.msra.mxu0 0.0
  %1473 = vmatprep.subr.mxu0 0.0
  %1474 = vmatpush2.msra.mxu0 0.0
  %1475 = vmatprep.mubr.f32.mxu0 0.0
  %1476 = vmatmul.mubr.f32.gmra.mxu0 %v1409
  %v1477 = vpop.f32.mrf.mxu0
  %v1478 = vadd.f32 0.0, %v1477
  %v1479 = vpop.f32.mrf.mxu0
  %1480 = vdwg.mxu0
  %v1482 = vrot.slane %v1478, 6
  %v1484 = vadd.f32 %v344, %v1482
  %v1485 = vld [vmem:[%s15] sm:$0xff]
  %v1486 = vld [vmem:[%s15 + $0x8] sm:$0xff]
  %v1487 = vld [vmem:[%s15 + $0x10] sm:$0xff]
  %v1488 = vld [vmem:[%s15 + $0x18] sm:$0xff]
  %v1491 = vsel %vm512, %v1401, %v1394
  %v1492 = vsel %vm87, %v1491, 0
  %1494 = vmatprep.subr.mxu0 0.0
  %1495 = vmatpush1.msra.mxu0 0.0
  %1496 = vmatprep.subr.mxu0 0.0
  %1497 = vmatpush1.msra.mxu0 0.0
  %1498 = vmatprep.subr.mxu0 0.0
  %1499 = vmatpush1.msra.mxu0 0.0
  %1500 = vmatprep.subr.mxu0 0.0
  %1501 = vmatpush1.msra.mxu0 0.0
  %1502 = vmatprep.subr.mxu0 0.0
  %1503 = vmatpush1.msra.mxu0 0.0
  %1504 = vmatprep.subr.mxu0 0.0
  %1505 = vmatpush1.msra.mxu0 0.0
  %1506 = vmatprep.subr.mxu0 0.0
  %1507 = vmatpush1.msra.mxu0 0.0
  %1508 = vmatprep.subr.mxu0 0.0
  %1509 = vmatpush1.msra.mxu0 0.0
  %1510 = vmatprep.subr.mxu0 0.0
  %1511 = vmatpush1.msra.mxu0 0.0
  %1512 = vmatprep.subr.mxu0 0.0
  %1513 = vmatpush1.msra.mxu0 0.0
  %1514 = vmatprep.subr.mxu0 0.0
  %1515 = vmatpush1.msra.mxu0 0.0
  %1516 = vmatprep.subr.mxu0 0.0
  %1517 = vmatpush1.msra.mxu0 0.0
  %1518 = vmatprep.subr.mxu0 0.0
  %1519 = vmatpush1.msra.mxu0 %v1488
  %1520 = vmatprep.subr.mxu0 0.0
  %1521 = vmatpush1.msra.mxu0 %v1487
  %1522 = vmatprep.subr.mxu0 0.0
  %1523 = vmatpush1.msra.mxu0 %v1486
  %1524 = vmatprep.subr.mxu0 0.0
  %1525 = vmatpush1.msra.mxu0 %v1485
  %1526 = vmatprep.subr.mxu0 0.0
  %1527 = vmatpush2.msra.mxu0 0.0
  %1528 = vmatprep.subr.mxu0 0.0
  %1529 = vmatpush2.msra.mxu0 0.0
  %1530 = vmatprep.subr.mxu0 0.0
  %1531 = vmatpush2.msra.mxu0 0.0
  %1532 = vmatprep.subr.mxu0 0.0
  %1533 = vmatpush2.msra.mxu0 0.0
  %1534 = vmatprep.subr.mxu0 0.0
  %1535 = vmatpush2.msra.mxu0 0.0
  %1536 = vmatprep.subr.mxu0 0.0
  %1537 = vmatpush2.msra.mxu0 0.0
  %1538 = vmatprep.subr.mxu0 0.0
  %1539 = vmatpush2.msra.mxu0 0.0
  %1540 = vmatprep.subr.mxu0 0.0
  %1541 = vmatpush2.msra.mxu0 0.0
  %1542 = vmatprep.subr.mxu0 0.0
  %1543 = vmatpush2.msra.mxu0 0.0
  %1544 = vmatprep.subr.mxu0 0.0
  %1545 = vmatpush2.msra.mxu0 0.0
  %1546 = vmatprep.subr.mxu0 0.0
  %1547 = vmatpush2.msra.mxu0 0.0
  %1548 = vmatprep.subr.mxu0 0.0
  %1549 = vmatpush2.msra.mxu0 0.0
  %1550 = vmatprep.subr.mxu0 0.0
  %1551 = vmatpush2.msra.mxu0 0.0
  %1552 = vmatprep.subr.mxu0 0.0
  %1553 = vmatpush2.msra.mxu0 0.0
  %1554 = vmatprep.subr.mxu0 0.0
  %1555 = vmatpush2.msra.mxu0 0.0
  %1556 = vmatprep.subr.mxu0 0.0
  %1557 = vmatpush2.msra.mxu0 0.0
  %1558 = vmatprep.mubr.f32.mxu0 0.0
  %1559 = vmatmul.mubr.f32.gmra.mxu0 %v1492
  %v1560 = vpop.f32.mrf.mxu0
  %v1561 = vadd.f32 0.0, %v1560
  %v1562 = vpop.f32.mrf.mxu0
  %1563 = vdwg.mxu0
  %v1565 = vrot.slane %v1561, 6
  %v1567 = vadd.f32 %v1484, %v1565
  %v1568 = vld [vmem:[%s16] sm:$0xff]
  %v1569 = vld [vmem:[%s16 + $0x8] sm:$0xff]
  %v1570 = vld [vmem:[%s16 + $0x10] sm:$0xff]
  %v1571 = vld [vmem:[%s16 + $0x18] sm:$0xff]
  %1572 = vmatprep.subr.mxu0 0.0
  %1573 = vmatpush1.msra.mxu0 0.0
  %1574 = vmatprep.subr.mxu0 0.0
  %1575 = vmatpush1.msra.mxu0 0.0
  %1576 = vmatprep.subr.mxu0 0.0
  %1577 = vmatpush1.msra.mxu0 0.0
  %1578 = vmatprep.subr.mxu0 0.0
  %1579 = vmatpush1.msra.mxu0 0.0
  %1580 = vmatprep.subr.mxu0 0.0
  %1581 = vmatpush1.msra.mxu0 0.0
  %1582 = vmatprep.subr.mxu0 0.0
  %1583 = vmatpush1.msra.mxu0 0.0
  %1584 = vmatprep.subr.mxu0 0.0
  %1585 = vmatpush1.msra.mxu0 0.0
  %1586 = vmatprep.subr.mxu0 0.0
  %1587 = vmatpush1.msra.mxu0 0.0
  %1588 = vmatprep.subr.mxu0 0.0
  %1589 = vmatpush1.msra.mxu0 0.0
  %1590 = vmatprep.subr.mxu0 0.0
  %1591 = vmatpush1.msra.mxu0 0.0
  %1592 = vmatprep.subr.mxu0 0.0
  %1593 = vmatpush1.msra.mxu0 0.0
  %1594 = vmatprep.subr.mxu0 0.0
  %1595 = vmatpush1.msra.mxu0 0.0
  %1596 = vmatprep.subr.mxu0 0.0
  %1597 = vmatpush1.msra.mxu0 %v1571
  %1598 = vmatprep.subr.mxu0 0.0
  %1599 = vmatpush1.msra.mxu0 %v1570
  %1600 = vmatprep.subr.mxu0 0.0
  %1601 = vmatpush1.msra.mxu0 %v1569
  %1602 = vmatprep.subr.mxu0 0.0
  %1603 = vmatpush1.msra.mxu0 %v1568
  %1604 = vmatprep.subr.mxu0 0.0
  %1605 = vmatpush2.msra.mxu0 0.0
  %1606 = vmatprep.subr.mxu0 0.0
  %1607 = vmatpush2.msra.mxu0 0.0
  %1608 = vmatprep.subr.mxu0 0.0
  %1609 = vmatpush2.msra.mxu0 0.0
  %1610 = vmatprep.subr.mxu0 0.0
  %1611 = vmatpush2.msra.mxu0 0.0
  %1612 = vmatprep.subr.mxu0 0.0
  %1613 = vmatpush2.msra.mxu0 0.0
  %1614 = vmatprep.subr.mxu0 0.0
  %1615 = vmatpush2.msra.mxu0 0.0
  %1616 = vmatprep.subr.mxu0 0.0
  %1617 = vmatpush2.msra.mxu0 0.0
  %1618 = vmatprep.subr.mxu0 0.0
  %1619 = vmatpush2.msra.mxu0 0.0
  %1620 = vmatprep.subr.mxu0 0.0
  %1621 = vmatpush2.msra.mxu0 0.0
  %1622 = vmatprep.subr.mxu0 0.0
  %1623 = vmatpush2.msra.mxu0 0.0
  %1624 = vmatprep.subr.mxu0 0.0
  %1625 = vmatpush2.msra.mxu0 0.0
  %1626 = vmatprep.subr.mxu0 0.0
  %1627 = vmatpush2.msra.mxu0 0.0
  %1628 = vmatprep.subr.mxu0 0.0
  %1629 = vmatpush2.msra.mxu0 0.0
  %1630 = vmatprep.subr.mxu0 0.0
  %1631 = vmatpush2.msra.mxu0 0.0
  %1632 = vmatprep.subr.mxu0 0.0
  %1633 = vmatpush2.msra.mxu0 0.0
  %1634 = vmatprep.subr.mxu0 0.0
  %1635 = vmatpush2.msra.mxu0 0.0
  %1636 = vmatprep.mubr.f32.mxu0 0.0
  %1637 = vmatmul.mubr.f32.gmra.mxu0 %v918
  %v1638 = vpop.f32.mrf.mxu0
  %v1639 = vadd.f32 0.0, %v1638
  %v1640 = vpop.f32.mrf.mxu0
  %1641 = vdwg.mxu0
  %v1643 = vrot.slane %v1639, 6
  %v1645 = vadd.f32 %v1567, %v1643
  %v1646 = vxor.u32 %v1645, 2147483648
  %v1647 = vmul.f32 %v1646, 1.442695
  %v1648 = vpow.pop %v1647
  %v1649 = vadd.f32 %v1648, 1.0
  %v1650 = vrcp.pop %v1649
  %v1651 = vmul.f32 1.0, %v1650
  %v1652 = vtanh.pop %v1645
  %v1654 = vrot.slane %v830, 6
  %v1656 = vmul.f32 %v1651, %v1654
  %1658 = vrot.lane.b32.xlu0 %v1652, 64
  %v1659 = vpop.permute.xlu0 %1658
  %v1661 = vmul.f32 %v1651, %v1659
  %1663 = vrot.lane.b32.xlu0 %v1661, 32
  %v1664 = vpop.permute.xlu0 %1663
  %v1666 = vadd.f32 %v1656, %v1664
  %v1667 = vtanh.pop %v1666
  %1669 = vrot.lane.b32.xlu0 %v1667, 64
  %v1670 = vpop.permute.xlu0 %1669
  %v1672 = vmul.f32 %v1651, %v1670
  %v1673 = vld [vmem:[%s17] sm:$0xff]
  %v1674 = vld [vmem:[%s17 + $0x8] sm:$0xff]
  %v1675 = vld [vmem:[%s17 + $0x10] sm:$0xff]
  %v1676 = vld [vmem:[%s17 + $0x18] sm:$0xff]
  %v1677 = vld [vmem:[%s18] sm:$0xff]
  %v1678 = vld [vmem:[%s18 + $0x8] sm:$0xff]
  %v1679 = vld [vmem:[%s18 + $0x10] sm:$0xff]
  %v1680 = vld [vmem:[%s18 + $0x18] sm:$0xff]
  %1681 = vmatprep.subr.mxu0 0.0
  %1682 = vmatpush1.msra.mxu0 0.0
  %1683 = vmatprep.subr.mxu0 0.0
  %1684 = vmatpush1.msra.mxu0 0.0
  %1685 = vmatprep.subr.mxu0 0.0
  %1686 = vmatpush1.msra.mxu0 0.0
  %1687 = vmatprep.subr.mxu0 0.0
  %1688 = vmatpush1.msra.mxu0 0.0
  %1689 = vmatprep.subr.mxu0 0.0
  %1690 = vmatpush1.msra.mxu0 0.0
  %1691 = vmatprep.subr.mxu0 0.0
  %1692 = vmatpush1.msra.mxu0 0.0
  %1693 = vmatprep.subr.mxu0 0.0
  %1694 = vmatpush1.msra.mxu0 0.0
  %1695 = vmatprep.subr.mxu0 0.0
  %1696 = vmatpush1.msra.mxu0 0.0
  %1697 = vmatprep.subr.mxu0 0.0
  %1698 = vmatpush1.msra.mxu0 0.0
  %1699 = vmatprep.subr.mxu0 0.0
  %1700 = vmatpush1.msra.mxu0 0.0
  %1701 = vmatprep.subr.mxu0 0.0
  %1702 = vmatpush1.msra.mxu0 0.0
  %1703 = vmatprep.subr.mxu0 0.0
  %1704 = vmatpush1.msra.mxu0 0.0
  %1705 = vmatprep.subr.mxu0 0.0
  %1706 = vmatpush1.msra.mxu0 %v1680
  %1707 = vmatprep.subr.mxu0 0.0
  %1708 = vmatpush1.msra.mxu0 %v1679
  %1709 = vmatprep.subr.mxu0 0.0
  %1710 = vmatpush1.msra.mxu0 %v1678
  %1711 = vmatprep.subr.mxu0 0.0
  %1712 = vmatpush1.msra.mxu0 %v1677
  %1713 = vmatprep.subr.mxu0 0.0
  %1714 = vmatpush2.msra.mxu0 0.0
  %1715 = vmatprep.subr.mxu0 0.0
  %1716 = vmatpush2.msra.mxu0 0.0
  %1717 = vmatprep.subr.mxu0 0.0
  %1718 = vmatpush2.msra.mxu0 0.0
  %1719 = vmatprep.subr.mxu0 0.0
  %1720 = vmatpush2.msra.mxu0 0.0
  %1721 = vmatprep.subr.mxu0 0.0
  %1722 = vmatpush2.msra.mxu0 0.0
  %1723 = vmatprep.subr.mxu0 0.0
  %1724 = vmatpush2.msra.mxu0 0.0
  %1725 = vmatprep.subr.mxu0 0.0
  %1726 = vmatpush2.msra.mxu0 0.0
  %1727 = vmatprep.subr.mxu0 0.0
  %1728 = vmatpush2.msra.mxu0 0.0
  %1729 = vmatprep.subr.mxu0 0.0
  %1730 = vmatpush2.msra.mxu0 0.0
  %1731 = vmatprep.subr.mxu0 0.0
  %1732 = vmatpush2.msra.mxu0 0.0
  %1733 = vmatprep.subr.mxu0 0.0
  %1734 = vmatpush2.msra.mxu0 0.0
  %1735 = vmatprep.subr.mxu0 0.0
  %1736 = vmatpush2.msra.mxu0 0.0
  %1737 = vmatprep.subr.mxu0 0.0
  %1738 = vmatpush2.msra.mxu0 0.0
  %1739 = vmatprep.subr.mxu0 0.0
  %1740 = vmatpush2.msra.mxu0 0.0
  %1741 = vmatprep.subr.mxu0 0.0
  %1742 = vmatpush2.msra.mxu0 0.0
  %1743 = vmatprep.subr.mxu0 0.0
  %1744 = vmatpush2.msra.mxu0 0.0
  %1745 = vmatprep.mubr.f32.mxu0 0.0
  %1746 = vmatmul.mubr.f32.gmra.mxu0 %v1409
  %v1747 = vpop.f32.mrf.mxu0
  %v1748 = vadd.f32 0.0, %v1747
  %v1749 = vpop.f32.mrf.mxu0
  %1750 = vdwg.mxu0
  %v1752 = vrot.slane %v1672, 2
  %1753 = vrot.lane.b32.xlu0 %v1752, 32
  %v1754 = vpop.permute.xlu0 %1753
  %v1755 = vsel %vm87, %v1754, 0
  %1757 = vmatprep.subr.mxu0 0.0
  %1758 = vmatpush1.msra.mxu0 0.0
  %1759 = vmatprep.subr.mxu0 0.0
  %1760 = vmatpush1.msra.mxu0 0.0
  %1761 = vmatprep.subr.mxu0 0.0
  %1762 = vmatpush1.msra.mxu0 0.0
  %1763 = vmatprep.subr.mxu0 0.0
  %1764 = vmatpush1.msra.mxu0 0.0
  %1765 = vmatprep.subr.mxu0 0.0
  %1766 = vmatpush1.msra.mxu0 0.0
  %1767 = vmatprep.subr.mxu0 0.0
  %1768 = vmatpush1.msra.mxu0 0.0
  %1769 = vmatprep.subr.mxu0 0.0
  %1770 = vmatpush1.msra.mxu0 0.0
  %1771 = vmatprep.subr.mxu0 0.0
  %1772 = vmatpush1.msra.mxu0 0.0
  %1773 = vmatprep.subr.mxu0 0.0
  %1774 = vmatpush1.msra.mxu0 0.0
  %1775 = vmatprep.subr.mxu0 0.0
  %1776 = vmatpush1.msra.mxu0 0.0
  %1777 = vmatprep.subr.mxu0 0.0
  %1778 = vmatpush1.msra.mxu0 0.0
  %1779 = vmatprep.subr.mxu0 0.0
  %1780 = vmatpush1.msra.mxu0 0.0
  %1781 = vmatprep.subr.mxu0 0.0
  %1782 = vmatpush1.msra.mxu0 %v1676
  %1783 = vmatprep.subr.mxu0 0.0
  %1784 = vmatpush1.msra.mxu0 %v1675
  %1785 = vmatprep.subr.mxu0 0.0
  %1786 = vmatpush1.msra.mxu0 %v1674
  %1787 = vmatprep.subr.mxu0 0.0
  %1788 = vmatpush1.msra.mxu0 %v1673
  %1789 = vmatprep.subr.mxu0 0.0
  %1790 = vmatpush2.msra.mxu0 0.0
  %1791 = vmatprep.subr.mxu0 0.0
  %1792 = vmatpush2.msra.mxu0 0.0
  %1793 = vmatprep.subr.mxu0 0.0
  %1794 = vmatpush2.msra.mxu0 0.0
  %1795 = vmatprep.subr.mxu0 0.0
  %1796 = vmatpush2.msra.mxu0 0.0
  %1797 = vmatprep.subr.mxu0 0.0
  %1798 = vmatpush2.msra.mxu0 0.0
  %1799 = vmatprep.subr.mxu0 0.0
  %1800 = vmatpush2.msra.mxu0 0.0
  %1801 = vmatprep.subr.mxu0 0.0
  %1802 = vmatpush2.msra.mxu0 0.0
  %1803 = vmatprep.subr.mxu0 0.0
  %1804 = vmatpush2.msra.mxu0 0.0
  %1805 = vmatprep.subr.mxu0 0.0
  %1806 = vmatpush2.msra.mxu0 0.0
  %1807 = vmatprep.subr.mxu0 0.0
  %1808 = vmatpush2.msra.mxu0 0.0
  %1809 = vmatprep.subr.mxu0 0.0
  %1810 = vmatpush2.msra.mxu0 0.0
  %1811 = vmatprep.subr.mxu0 0.0
  %1812 = vmatpush2.msra.mxu0 0.0
  %1813 = vmatprep.subr.mxu0 0.0
  %1814 = vmatpush2.msra.mxu0 0.0
  %1815 = vmatprep.subr.mxu0 0.0
  %1816 = vmatpush2.msra.mxu0 0.0
  %1817 = vmatprep.subr.mxu0 0.0
  %1818 = vmatpush2.msra.mxu0 0.0
  %1819 = vmatprep.subr.mxu0 0.0
  %1820 = vmatpush2.msra.mxu0 0.0
  %1821 = vmatprep.mubr.f32.mxu0 0.0
  %1822 = vmatmul.mubr.f32.gmra.mxu0 %v1755
  %v1823 = vpop.f32.mrf.mxu0
  %v1824 = vadd.f32 %v1748, %v1823
  %v1825 = vpop.f32.mrf.mxu0
  %1826 = vdwg.mxu0
  %v1827 = vld [vmem:[%s19] sm:$0xff]
  %v1828 = vld [vmem:[%s19 + $0x8] sm:$0xff]
  %v1829 = vld [vmem:[%s19 + $0x10] sm:$0xff]
  %v1830 = vld [vmem:[%s19 + $0x18] sm:$0xff]
  %1831 = vmatprep.subr.mxu0 0.0
  %1832 = vmatpush1.msra.mxu0 0.0
  %1833 = vmatprep.subr.mxu0 0.0
  %1834 = vmatpush1.msra.mxu0 0.0
  %1835 = vmatprep.subr.mxu0 0.0
  %1836 = vmatpush1.msra.mxu0 0.0
  %1837 = vmatprep.subr.mxu0 0.0
  %1838 = vmatpush1.msra.mxu0 0.0
  %1839 = vmatprep.subr.mxu0 0.0
  %1840 = vmatpush1.msra.mxu0 0.0
  %1841 = vmatprep.subr.mxu0 0.0
  %1842 = vmatpush1.msra.mxu0 0.0
  %1843 = vmatprep.subr.mxu0 0.0
  %1844 = vmatpush1.msra.mxu0 0.0
  %1845 = vmatprep.subr.mxu0 0.0
  %1846 = vmatpush1.msra.mxu0 0.0
  %1847 = vmatprep.subr.mxu0 0.0
  %1848 = vmatpush1.msra.mxu0 0.0
  %1849 = vmatprep.subr.mxu0 0.0
  %1850 = vmatpush1.msra.mxu0 0.0
  %1851 = vmatprep.subr.mxu0 0.0
  %1852 = vmatpush1.msra.mxu0 0.0
  %1853 = vmatprep.subr.mxu0 0.0
  %1854 = vmatpush1.msra.mxu0 0.0
  %1855 = vmatprep.subr.mxu0 0.0
  %1856 = vmatpush1.msra.mxu0 %v1830
  %1857 = vmatprep.subr.mxu0 0.0
  %1858 = vmatpush1.msra.mxu0 %v1829
  %1859 = vmatprep.subr.mxu0 0.0
  %1860 = vmatpush1.msra.mxu0 %v1828
  %1861 = vmatprep.subr.mxu0 0.0
  %1862 = vmatpush1.msra.mxu0 %v1827
  %1863 = vmatprep.subr.mxu0 0.0
  %1864 = vmatpush2.msra.mxu0 0.0
  %1865 = vmatprep.subr.mxu0 0.0
  %1866 = vmatpush2.msra.mxu0 0.0
  %1867 = vmatprep.subr.mxu0 0.0
  %1868 = vmatpush2.msra.mxu0 0.0
  %1869 = vmatprep.subr.mxu0 0.0
  %1870 = vmatpush2.msra.mxu0 0.0
  %1871 = vmatprep.subr.mxu0 0.0
  %1872 = vmatpush2.msra.mxu0 0.0
  %1873 = vmatprep.subr.mxu0 0.0
  %1874 = vmatpush2.msra.mxu0 0.0
  %1875 = vmatprep.subr.mxu0 0.0
  %1876 = vmatpush2.msra.mxu0 0.0
  %1877 = vmatprep.subr.mxu0 0.0
  %1878 = vmatpush2.msra.mxu0 0.0
  %1879 = vmatprep.subr.mxu0 0.0
  %1880 = vmatpush2.msra.mxu0 0.0
  %1881 = vmatprep.subr.mxu0 0.0
  %1882 = vmatpush2.msra.mxu0 0.0
  %1883 = vmatprep.subr.mxu0 0.0
  %1884 = vmatpush2.msra.mxu0 0.0
  %1885 = vmatprep.subr.mxu0 0.0
  %1886 = vmatpush2.msra.mxu0 0.0
  %1887 = vmatprep.subr.mxu0 0.0
  %1888 = vmatpush2.msra.mxu0 0.0
  %1889 = vmatprep.subr.mxu0 0.0
  %1890 = vmatpush2.msra.mxu0 0.0
  %1891 = vmatprep.subr.mxu0 0.0
  %1892 = vmatpush2.msra.mxu0 0.0
  %1893 = vmatprep.subr.mxu0 0.0
  %1894 = vmatpush2.msra.mxu0 0.0
  %1895 = vmatprep.mubr.f32.mxu0 0.0
  %1896 = vmatmul.mubr.f32.gmra.mxu0 %v1492
  %v1897 = vpop.f32.mrf.mxu0
  %v1898 = vadd.f32 0.0, %v1897
  %v1899 = vpop.f32.mrf.mxu0
  %1900 = vdwg.mxu0
  %v1901 = vadd.f32 %v1824, %v1898
  %v1902 = vld [vmem:[%s20] sm:$0xff]
  %v1903 = vld [vmem:[%s20 + $0x8] sm:$0xff]
  %v1904 = vrot.slane %v259, 2
  %v1905 = vsel %vm270, %v1904, 0
  %1907 = vmatprep.subr.mxu0 0.0
  %1908 = vmatpush1.msra.mxu0 0.0
  %1909 = vmatprep.subr.mxu0 0.0
  %1910 = vmatpush1.msra.mxu0 0.0
  %1911 = vmatprep.subr.mxu0 0.0
  %1912 = vmatpush1.msra.mxu0 0.0
  %1913 = vmatprep.subr.mxu0 0.0
  %1914 = vmatpush1.msra.mxu0 0.0
  %1915 = vmatprep.subr.mxu0 0.0
  %1916 = vmatpush1.msra.mxu0 0.0
  %1917 = vmatprep.subr.mxu0 0.0
  %1918 = vmatpush1.msra.mxu0 0.0
  %1919 = vmatprep.subr.mxu0 0.0
  %1920 = vmatpush1.msra.mxu0 0.0
  %1921 = vmatprep.subr.mxu0 0.0
  %1922 = vmatpush1.msra.mxu0 0.0
  %1923 = vmatprep.subr.mxu0 0.0
  %1924 = vmatpush1.msra.mxu0 0.0
  %1925 = vmatprep.subr.mxu0 0.0
  %1926 = vmatpush1.msra.mxu0 0.0
  %1927 = vmatprep.subr.mxu0 0.0
  %1928 = vmatpush1.msra.mxu0 0.0
  %1929 = vmatprep.subr.mxu0 0.0
  %1930 = vmatpush1.msra.mxu0 0.0
  %1931 = vmatprep.subr.mxu0 0.0
  %1932 = vmatpush1.msra.mxu0 0.0
  %1933 = vmatprep.subr.mxu0 0.0
  %1934 = vmatpush1.msra.mxu0 0.0
  %1935 = vmatprep.subr.mxu0 0.0
  %1936 = vmatpush1.msra.mxu0 %v1903
  %1937 = vmatprep.subr.mxu0 0.0
  %1938 = vmatpush1.msra.mxu0 %v1902
  %1939 = vmatprep.subr.mxu0 0.0
  %1940 = vmatpush2.msra.mxu0 0.0
  %1941 = vmatprep.subr.mxu0 0.0
  %1942 = vmatpush2.msra.mxu0 0.0
  %1943 = vmatprep.subr.mxu0 0.0
  %1944 = vmatpush2.msra.mxu0 0.0
  %1945 = vmatprep.subr.mxu0 0.0
  %1946 = vmatpush2.msra.mxu0 0.0
  %1947 = vmatprep.subr.mxu0 0.0
  %1948 = vmatpush2.msra.mxu0 0.0
  %1949 = vmatprep.subr.mxu0 0.0
  %1950 = vmatpush2.msra.mxu0 0.0
  %1951 = vmatprep.subr.mxu0 0.0
  %1952 = vmatpush2.msra.mxu0 0.0
  %1953 = vmatprep.subr.mxu0 0.0
  %1954 = vmatpush2.msra.mxu0 0.0
  %1955 = vmatprep.subr.mxu0 0.0
  %1956 = vmatpush2.msra.mxu0 0.0
  %1957 = vmatprep.subr.mxu0 0.0
  %1958 = vmatpush2.msra.mxu0 0.0
  %1959 = vmatprep.subr.mxu0 0.0
  %1960 = vmatpush2.msra.mxu0 0.0
  %1961 = vmatprep.subr.mxu0 0.0
  %1962 = vmatpush2.msra.mxu0 0.0
  %1963 = vmatprep.subr.mxu0 0.0
  %1964 = vmatpush2.msra.mxu0 0.0
  %1965 = vmatprep.subr.mxu0 0.0
  %1966 = vmatpush2.msra.mxu0 0.0
  %1967 = vmatprep.subr.mxu0 0.0
  %1968 = vmatpush2.msra.mxu0 0.0
  %1969 = vmatprep.subr.mxu0 0.0
  %1970 = vmatpush2.msra.mxu0 0.0
  %1971 = vmatprep.mubr.f32.mxu0 0.0
  %1972 = vmatmul.mubr.f32.gmra.mxu0 %v1905
  %v1973 = vpop.f32.mrf.mxu0
  %v1974 = vadd.f32 0.0, %v1973
  %v1975 = vpop.f32.mrf.mxu0
  %1976 = vdwg.mxu0
  %v1977 = vadd.f32 %v1901, %v1974
  %v1978 = vld [vmem:[%s21] sm:$0x1]
  %v1980 = vlaneseq
  %v1981 = vshrl.u32 %v1980, 7
  %v1982 = vsub.s32 0, %v1981
  %v1983 = vrot.slane %v1978, %v1982
  %v1985 = vadd.f32 %v1977, %v1983
  %v1988 = vunpack.c.l.s4 1966171168
  %v1989 = vunpack.c.0.s8 %v1988
  %v1990 = vlaneseq
  %v1991 = vshrl.u32 %v1990, 7
  %v1992 = vsub.s32 %v1989, %v1991
  %v1993 = vrot.slane %v1985, %v1992
  %v1994 = vcombine.high %v1993, %v1993
  %v1996 = vunpack.c.l.s4 1966171168
  %v1997 = vunpack.c.0.s8 %v1996
  %v1998 = vlaneseq
  %v1999 = vshrl.u32 %v1998, 7
  %v2000 = vsub.s32 %v1997, %v1999
  %v2001 = vrot.slane %v1993, %v2000
  %v2003 = vunpack.c.l.s4 1966171168
  %v2004 = vunpack.c.0.s8 %v2003
  %v2005 = vlaneseq
  %v2006 = vshrl.u32 %v2005, 7
  %v2007 = vsub.s32 %v2004, %v2006
  %v2008 = vrot.slane %v1994, %v2007
  %2011 = vst [vmem:[%s22 + $0x1] sm:$0x1] %v2001
  %2012 = vst [vmem:[%s22 + $0x9] sm:$0x1] %v2008
  %v2015 = vunpack.c.l.s4 1966171168
  %v2016 = vunpack.c.0.s8 %v2015
  %v2017 = vlaneseq
  %v2018 = vshrl.u32 %v2017, 7
  %v2019 = vsub.s32 %v2016, %v2018
  %v2020 = vrot.slane %v1355, %v2019
  %v2021 = vcombine.high %v2020, %v2020
  %v2023 = vunpack.c.l.s4 1966171168
  %v2024 = vunpack.c.0.s8 %v2023
  %v2025 = vlaneseq
  %v2026 = vshrl.u32 %v2025, 7
  %v2027 = vsub.s32 %v2024, %v2026
  %v2028 = vrot.slane %v2020, %v2027
  %v2030 = vunpack.c.l.s4 1966171168
  %v2031 = vunpack.c.0.s8 %v2030
  %v2032 = vlaneseq
  %v2033 = vshrl.u32 %v2032, 7
  %v2034 = vsub.s32 %v2031, %v2033
  %v2035 = vrot.slane %v2021, %v2034
  %2038 = vst.msk [vmem:[%s23 + $0x1] sm:$0x1] %vm1198, %v2028
  %2039 = vst.msk [vmem:[%s23 + $0x9] sm:$0x1] %vm1198, %v2035
  %v2040 = vld [vmem:[%s9] sm:$0xff]
  %v2041 = vld [vmem:[%s9 + $0x8] sm:$0xff]
  %v2042 = vld [vmem:[%s9 + $0x10] sm:$0xff]
  %v2043 = vld [vmem:[%s9 + $0x18] sm:$0xff]
  %2044 = vmatprep.subr.mxu0 0.0
  %2045 = vmatpush1.msra.mxu0 0.0
  %2046 = vmatprep.subr.mxu0 0.0
  %2047 = vmatpush1.msra.mxu0 0.0
  %2048 = vmatprep.subr.mxu0 0.0
  %2049 = vmatpush1.msra.mxu0 0.0
  %2050 = vmatprep.subr.mxu0 0.0
  %2051 = vmatpush1.msra.mxu0 0.0
  %2052 = vmatprep.subr.mxu0 0.0
  %2053 = vmatpush1.msra.mxu0 0.0
  %2054 = vmatprep.subr.mxu0 0.0
  %2055 = vmatpush1.msra.mxu0 0.0
  %2056 = vmatprep.subr.mxu0 0.0
  %2057 = vmatpush1.msra.mxu0 0.0
  %2058 = vmatprep.subr.mxu0 0.0
  %2059 = vmatpush1.msra.mxu0 0.0
  %2060 = vmatprep.subr.mxu0 0.0
  %2061 = vmatpush1.msra.mxu0 0.0
  %2062 = vmatprep.subr.mxu0 0.0
  %2063 = vmatpush1.msra.mxu0 0.0
  %2064 = vmatprep.subr.mxu0 0.0
  %2065 = vmatpush1.msra.mxu0 0.0
  %2066 = vmatprep.subr.mxu0 0.0
  %2067 = vmatpush1.msra.mxu0 0.0
  %2068 = vmatprep.subr.mxu0 0.0
  %2069 = vmatpush1.msra.mxu0 %v2043
  %2070 = vmatprep.subr.mxu0 0.0
  %2071 = vmatpush1.msra.mxu0 %v2042
  %2072 = vmatprep.subr.mxu0 0.0
  %2073 = vmatpush1.msra.mxu0 %v2041
  %2074 = vmatprep.subr.mxu0 0.0
  %2075 = vmatpush1.msra.mxu0 %v2040
  %2076 = vmatprep.subr.mxu0 0.0
  %2077 = vmatpush2.msra.mxu0 0.0
  %2078 = vmatprep.subr.mxu0 0.0
  %2079 = vmatpush2.msra.mxu0 0.0
  %2080 = vmatprep.subr.mxu0 0.0
  %2081 = vmatpush2.msra.mxu0 0.0
  %2082 = vmatprep.subr.mxu0 0.0
  %2083 = vmatpush2.msra.mxu0 0.0
  %2084 = vmatprep.subr.mxu0 0.0
  %2085 = vmatpush2.msra.mxu0 0.0
  %2086 = vmatprep.subr.mxu0 0.0
  %2087 = vmatpush2.msra.mxu0 0.0
  %2088 = vmatprep.subr.mxu0 0.0
  %2089 = vmatpush2.msra.mxu0 0.0
  %2090 = vmatprep.subr.mxu0 0.0
  %2091 = vmatpush2.msra.mxu0 0.0
  %2092 = vmatprep.subr.mxu0 0.0
  %2093 = vmatpush2.msra.mxu0 0.0
  %2094 = vmatprep.subr.mxu0 0.0
  %2095 = vmatpush2.msra.mxu0 0.0
  %2096 = vmatprep.subr.mxu0 0.0
  %2097 = vmatpush2.msra.mxu0 0.0
  %2098 = vmatprep.subr.mxu0 0.0
  %2099 = vmatpush2.msra.mxu0 0.0
  %2100 = vmatprep.subr.mxu0 0.0
  %2101 = vmatpush2.msra.mxu0 0.0
  %2102 = vmatprep.subr.mxu0 0.0
  %2103 = vmatpush2.msra.mxu0 0.0
  %2104 = vmatprep.subr.mxu0 0.0
  %2105 = vmatpush2.msra.mxu0 0.0
  %2106 = vmatprep.subr.mxu0 0.0
  %2107 = vmatpush2.msra.mxu0 0.0
  %2108 = vmatprep.mubr.f32.mxu0 0.0
  %2109 = vmatmul.mubr.f32.gmra.mxu0 %v1755
  %v2110 = vpop.f32.mrf.mxu0
  %v2111 = vadd.f32 0.0, %v2110
  %v2112 = vpop.f32.mrf.mxu0
  %2113 = vdwg.mxu0
  %v2116 = vunpack.c.l.s4 1966171168
  %v2117 = vunpack.c.0.s8 %v2116
  %v2118 = vlaneseq
  %v2119 = vshrl.u32 %v2118, 7
  %v2120 = vsub.s32 %v2117, %v2119
  %v2121 = vrot.slane %v2111, %v2120
  %v2122 = vcombine.high %v2121, %v2121
  %v2124 = vunpack.c.l.s4 1966171168
  %v2125 = vunpack.c.0.s8 %v2124
  %v2126 = vlaneseq
  %v2127 = vshrl.u32 %v2126, 7
  %v2128 = vsub.s32 %v2125, %v2127
  %v2129 = vrot.slane %v2121, %v2128
  %v2131 = vunpack.c.l.s4 1966171168
  %v2132 = vunpack.c.0.s8 %v2131
  %v2133 = vlaneseq
  %v2134 = vshrl.u32 %v2133, 7
  %v2135 = vsub.s32 %v2132, %v2134
  %v2136 = vrot.slane %v2122, %v2135
  %v2137 = vlaneseq
  %v2138 = vshrl.u32 %v2137, 7
  %v2139 = vsub.s32 0, %v2138
  %v2140 = vrot.slane %v2129, %v2139
  %v2141 = vlaneseq
  %v2142 = vshrl.u32 %v2141, 7
  %v2143 = vsub.s32 0, %v2142
  %v2144 = vrot.slane %v2136, %v2143
  %v2147 = vadd.f32 %v257, %v2140
  %v2148 = vadd.f32 %v258, %v2144
  %v2149 = vtanh.pop %v2147
  %v2150 = vtanh.pop %v2148
  %v2151 = vmul.f32 %v2149, %v480
  %v2152 = vmul.f32 %v2150, %v480
  %v2153 = vsel %vm87, %v2151, 0.0
  %2154 = vadd.xlane.f32.xlu0 %v2153
  %v2155 = vpop.xlane.xlu0 %2154
  %v2156 = vsel %vm87, %v2152, 0.0
  %2157 = vadd.xlane.f32.xlu0 %v2156
  %v2158 = vpop.xlane.xlu0 %2157
  %v2159 = vld [vmem:[#allocation2] sm:$0x1]
  %v2161 = vlaneseq
  %v2162 = vshrl.u32 %v2161, 7
  %v2163 = vsub.s32 0, %v2162
  %v2164 = vrot.slane %v2159, %v2163
  %2165 = vset.pattern.permute.xlu0 0
  %2166 = vperm.xlu0 %2165, %v2164
  %v2167 = vpop.permute.xlu0 %2166
  %v2169 = vadd.f32 %v2155, %v2167
  %v2170 = vadd.f32 %v2158, %v2167
  %v2173 = vlaneseq
  %v2174 = vshrl.u32 %v2173, 7
  %v2175 = vsub.s32 %v353, %v2174
  %v2176 = vrot.slane %v2169, %v2175
  %v2177 = vlaneseq
  %v2178 = vshrl.u32 %v2177, 7
  %v2179 = vsub.s32 %v353, %v2178
  %v2180 = vrot.slane %v2170, %v2179
  %v2181 = vsel %vm512, %v2180, %v2176
  %v2183 = vsel %vm358, %v2181, -1e+10
  %v2184 = vsel %vm516, %v2183, -inf
  %2185 = vmax.xlane.f32.xlu0 %v2184
  %v2186 = vpop.xlane.xlu0 %2185
  %v2187 = vsub.f32 %v2183, %v2186
  %v2188 = vmul.f32 %v2187, 1.442695
  %v2189 = vpow.pop %v2188
  %v2190 = vsel %vm516, %v2189, 0.0
  %2191 = vadd.xlane.f32.xlu0 %v2190
  %v2192 = vpop.xlane.xlu0 %2191
  %v2193 = vrcp.pop %v2192
  %v2194 = vmul.f32 %v2189, %v2193
  %v2195 = vlaneseq
  %v2196 = vshrl.u32 %v2195, 7
  %v2197 = vsub.s32 0, %v2196
  %v2198 = vrot.slane %v2194, %v2197
  %2200 = vbcast.lane.b32.xlu0 %v2198, 256
  %v2201 = vpop.permute.xlu0 %2200
  %v2202 = vlaneseq
  %v2203 = vshrl.u32 %v2202, 7
  %v2204 = vsub.s32 1, %v2203
  %v2205 = vrot.slane %v2194, %v2204
  %2207 = vbcast.lane.b32.xlu0 %v2205, 256
  %v2208 = vpop.permute.xlu0 %2207
  %v2209 = vmul.f32 %v2201, %v75
  %v2210 = vmul.f32 %v2208, %v76
  %v2211 = vsel %vm87, %v2209, 0.0
  %v2212 = vrot.slane %v2211, 4
  %v2213 = vadd.f32 %v2211, %v2212
  %v2214 = vrot.slane %v2213, 2
  %v2215 = vadd.f32 %v2213, %v2214
  %v2216 = vrot.slane %v2215, 1
  %v2217 = vadd.f32 %v2215, %v2216
  %v2218 = vsel %vm87, %v2210, 0.0
  %v2219 = vrot.slane %v2218, 4
  %v2220 = vadd.f32 %v2218, %v2219
  %v2221 = vrot.slane %v2220, 2
  %v2222 = vadd.f32 %v2220, %v2221
  %v2223 = vrot.slane %v2222, 1
  %v2224 = vadd.f32 %v2222, %v2223
  %v2225 = vmul.f32 %v2201, %v77
  %v2226 = vmul.f32 %v2208, %v78
  %v2227 = vsel %vm87, %v2225, 0.0
  %v2228 = vrot.slane %v2227, 4
  %v2229 = vadd.f32 %v2227, %v2228
  %v2230 = vrot.slane %v2229, 2
  %v2231 = vadd.f32 %v2229, %v2230
  %v2232 = vrot.slane %v2231, 1
  %v2233 = vadd.f32 %v2231, %v2232
  %v2234 = vsel %vm87, %v2226, 0.0
  %v2235 = vrot.slane %v2234, 4
  %v2236 = vadd.f32 %v2234, %v2235
  %v2237 = vrot.slane %v2236, 2
  %v2238 = vadd.f32 %v2236, %v2237
  %v2239 = vrot.slane %v2238, 1
  %v2240 = vadd.f32 %v2238, %v2239
  %v2241 = vld [vmem:[%s14] sm:$0xff]
  %v2242 = vld [vmem:[%s14 + $0x8] sm:$0xff]
  %v2243 = vld [vmem:[%s14 + $0x10] sm:$0xff]
  %v2244 = vld [vmem:[%s14 + $0x18] sm:$0xff]
  %v2247 = vsel %vm512, %v2224, %v2217
  %v2248 = vsel %vm87, %v2247, 0
  %2250 = vmatprep.subr.mxu0 0.0
  %2251 = vmatpush1.msra.mxu0 0.0
  %2252 = vmatprep.subr.mxu0 0.0
  %2253 = vmatpush1.msra.mxu0 0.0
  %2254 = vmatprep.subr.mxu0 0.0
  %2255 = vmatpush1.msra.mxu0 0.0
  %2256 = vmatprep.subr.mxu0 0.0
  %2257 = vmatpush1.msra.mxu0 0.0
  %2258 = vmatprep.subr.mxu0 0.0
  %2259 = vmatpush1.msra.mxu0 0.0
  %2260 = vmatprep.subr.mxu0 0.0
  %2261 = vmatpush1.msra.mxu0 0.0
  %2262 = vmatprep.subr.mxu0 0.0
  %2263 = vmatpush1.msra.mxu0 0.0
  %2264 = vmatprep.subr.mxu0 0.0
  %2265 = vmatpush1.msra.mxu0 0.0
  %2266 = vmatprep.subr.mxu0 0.0
  %2267 = vmatpush1.msra.mxu0 0.0
  %2268 = vmatprep.subr.mxu0 0.0
  %2269 = vmatpush1.msra.mxu0 0.0
  %2270 = vmatprep.subr.mxu0 0.0
  %2271 = vmatpush1.msra.mxu0 0.0
  %2272 = vmatprep.subr.mxu0 0.0
  %2273 = vmatpush1.msra.mxu0 0.0
  %2274 = vmatprep.subr.mxu0 0.0
  %2275 = vmatpush1.msra.mxu0 %v2244
  %2276 = vmatprep.subr.mxu0 0.0
  %2277 = vmatpush1.msra.mxu0 %v2243
  %2278 = vmatprep.subr.mxu0 0.0
  %2279 = vmatpush1.msra.mxu0 %v2242
  %2280 = vmatprep.subr.mxu0 0.0
  %2281 = vmatpush1.msra.mxu0 %v2241
  %2282 = vmatprep.subr.mxu0 0.0
  %2283 = vmatpush2.msra.mxu0 0.0
  %2284 = vmatprep.subr.mxu0 0.0
  %2285 = vmatpush2.msra.mxu0 0.0
  %2286 = vmatprep.subr.mxu0 0.0
  %2287 = vmatpush2.msra.mxu0 0.0
  %2288 = vmatprep.subr.mxu0 0.0
  %2289 = vmatpush2.msra.mxu0 0.0
  %2290 = vmatprep.subr.mxu0 0.0
  %2291 = vmatpush2.msra.mxu0 0.0
  %2292 = vmatprep.subr.mxu0 0.0
  %2293 = vmatpush2.msra.mxu0 0.0
  %2294 = vmatprep.subr.mxu0 0.0
  %2295 = vmatpush2.msra.mxu0 0.0
  %2296 = vmatprep.subr.mxu0 0.0
  %2297 = vmatpush2.msra.mxu0 0.0
  %2298 = vmatprep.subr.mxu0 0.0
  %2299 = vmatpush2.msra.mxu0 0.0
  %2300 = vmatprep.subr.mxu0 0.0
  %2301 = vmatpush2.msra.mxu0 0.0
  %2302 = vmatprep.subr.mxu0 0.0
  %2303 = vmatpush2.msra.mxu0 0.0
  %2304 = vmatprep.subr.mxu0 0.0
  %2305 = vmatpush2.msra.mxu0 0.0
  %2306 = vmatprep.subr.mxu0 0.0
  %2307 = vmatpush2.msra.mxu0 0.0
  %2308 = vmatprep.subr.mxu0 0.0
  %2309 = vmatpush2.msra.mxu0 0.0
  %2310 = vmatprep.subr.mxu0 0.0
  %2311 = vmatpush2.msra.mxu0 0.0
  %2312 = vmatprep.subr.mxu0 0.0
  %2313 = vmatpush2.msra.mxu0 0.0
  %2314 = vmatprep.mubr.f32.mxu0 0.0
  %2315 = vmatmul.mubr.f32.gmra.mxu0 %v2248
  %v2316 = vpop.f32.mrf.mxu0
  %v2317 = vadd.f32 0.0, %v2316
  %v2318 = vpop.f32.mrf.mxu0
  %2319 = vdwg.mxu0
  %v2321 = vrot.slane %v2317, 4
  %v2323 = vadd.f32 %v344, %v2321
  %v2324 = vld [vmem:[%s15] sm:$0xff]
  %v2325 = vld [vmem:[%s15 + $0x8] sm:$0xff]
  %v2326 = vld [vmem:[%s15 + $0x10] sm:$0xff]
  %v2327 = vld [vmem:[%s15 + $0x18] sm:$0xff]
  %v2330 = vsel %vm512, %v2240, %v2233
  %v2331 = vsel %vm87, %v2330, 0
  %2333 = vmatprep.subr.mxu0 0.0
  %2334 = vmatpush1.msra.mxu0 0.0
  %2335 = vmatprep.subr.mxu0 0.0
  %2336 = vmatpush1.msra.mxu0 0.0
  %2337 = vmatprep.subr.mxu0 0.0
  %2338 = vmatpush1.msra.mxu0 0.0
  %2339 = vmatprep.subr.mxu0 0.0
  %2340 = vmatpush1.msra.mxu0 0.0
  %2341 = vmatprep.subr.mxu0 0.0
  %2342 = vmatpush1.msra.mxu0 0.0
  %2343 = vmatprep.subr.mxu0 0.0
  %2344 = vmatpush1.msra.mxu0 0.0
  %2345 = vmatprep.subr.mxu0 0.0
  %2346 = vmatpush1.msra.mxu0 0.0
  %2347 = vmatprep.subr.mxu0 0.0
  %2348 = vmatpush1.msra.mxu0 0.0
  %2349 = vmatprep.subr.mxu0 0.0
  %2350 = vmatpush1.msra.mxu0 0.0
  %2351 = vmatprep.subr.mxu0 0.0
  %2352 = vmatpush1.msra.mxu0 0.0
  %2353 = vmatprep.subr.mxu0 0.0
  %2354 = vmatpush1.msra.mxu0 0.0
  %2355 = vmatprep.subr.mxu0 0.0
  %2356 = vmatpush1.msra.mxu0 0.0
  %2357 = vmatprep.subr.mxu0 0.0
  %2358 = vmatpush1.msra.mxu0 %v2327
  %2359 = vmatprep.subr.mxu0 0.0
  %2360 = vmatpush1.msra.mxu0 %v2326
  %2361 = vmatprep.subr.mxu0 0.0
  %2362 = vmatpush1.msra.mxu0 %v2325
  %2363 = vmatprep.subr.mxu0 0.0
  %2364 = vmatpush1.msra.mxu0 %v2324
  %2365 = vmatprep.subr.mxu0 0.0
  %2366 = vmatpush2.msra.mxu0 0.0
  %2367 = vmatprep.subr.mxu0 0.0
  %2368 = vmatpush2.msra.mxu0 0.0
  %2369 = vmatprep.subr.mxu0 0.0
  %2370 = vmatpush2.msra.mxu0 0.0
  %2371 = vmatprep.subr.mxu0 0.0
  %2372 = vmatpush2.msra.mxu0 0.0
  %2373 = vmatprep.subr.mxu0 0.0
  %2374 = vmatpush2.msra.mxu0 0.0
  %2375 = vmatprep.subr.mxu0 0.0
  %2376 = vmatpush2.msra.mxu0 0.0
  %2377 = vmatprep.subr.mxu0 0.0
  %2378 = vmatpush2.msra.mxu0 0.0
  %2379 = vmatprep.subr.mxu0 0.0
  %2380 = vmatpush2.msra.mxu0 0.0
  %2381 = vmatprep.subr.mxu0 0.0
  %2382 = vmatpush2.msra.mxu0 0.0
  %2383 = vmatprep.subr.mxu0 0.0
  %2384 = vmatpush2.msra.mxu0 0.0
  %2385 = vmatprep.subr.mxu0 0.0
  %2386 = vmatpush2.msra.mxu0 0.0
  %2387 = vmatprep.subr.mxu0 0.0
  %2388 = vmatpush2.msra.mxu0 0.0
  %2389 = vmatprep.subr.mxu0 0.0
  %2390 = vmatpush2.msra.mxu0 0.0
  %2391 = vmatprep.subr.mxu0 0.0
  %2392 = vmatpush2.msra.mxu0 0.0
  %2393 = vmatprep.subr.mxu0 0.0
  %2394 = vmatpush2.msra.mxu0 0.0
  %2395 = vmatprep.subr.mxu0 0.0
  %2396 = vmatpush2.msra.mxu0 0.0
  %2397 = vmatprep.mubr.f32.mxu0 0.0
  %2398 = vmatmul.mubr.f32.gmra.mxu0 %v2331
  %v2399 = vpop.f32.mrf.mxu0
  %v2400 = vadd.f32 0.0, %v2399
  %v2401 = vpop.f32.mrf.mxu0
  %2402 = vdwg.mxu0
  %v2404 = vrot.slane %v2400, 4
  %v2406 = vadd.f32 %v2323, %v2404
  %v2407 = vld [vmem:[%s16] sm:$0xff]
  %v2408 = vld [vmem:[%s16 + $0x8] sm:$0xff]
  %v2409 = vld [vmem:[%s16 + $0x10] sm:$0xff]
  %v2410 = vld [vmem:[%s16 + $0x18] sm:$0xff]
  %2411 = vmatprep.subr.mxu0 0.0
  %2412 = vmatpush1.msra.mxu0 0.0
  %2413 = vmatprep.subr.mxu0 0.0
  %2414 = vmatpush1.msra.mxu0 0.0
  %2415 = vmatprep.subr.mxu0 0.0
  %2416 = vmatpush1.msra.mxu0 0.0
  %2417 = vmatprep.subr.mxu0 0.0
  %2418 = vmatpush1.msra.mxu0 0.0
  %2419 = vmatprep.subr.mxu0 0.0
  %2420 = vmatpush1.msra.mxu0 0.0
  %2421 = vmatprep.subr.mxu0 0.0
  %2422 = vmatpush1.msra.mxu0 0.0
  %2423 = vmatprep.subr.mxu0 0.0
  %2424 = vmatpush1.msra.mxu0 0.0
  %2425 = vmatprep.subr.mxu0 0.0
  %2426 = vmatpush1.msra.mxu0 0.0
  %2427 = vmatprep.subr.mxu0 0.0
  %2428 = vmatpush1.msra.mxu0 0.0
  %2429 = vmatprep.subr.mxu0 0.0
  %2430 = vmatpush1.msra.mxu0 0.0
  %2431 = vmatprep.subr.mxu0 0.0
  %2432 = vmatpush1.msra.mxu0 0.0
  %2433 = vmatprep.subr.mxu0 0.0
  %2434 = vmatpush1.msra.mxu0 0.0
  %2435 = vmatprep.subr.mxu0 0.0
  %2436 = vmatpush1.msra.mxu0 %v2410
  %2437 = vmatprep.subr.mxu0 0.0
  %2438 = vmatpush1.msra.mxu0 %v2409
  %2439 = vmatprep.subr.mxu0 0.0
  %2440 = vmatpush1.msra.mxu0 %v2408
  %2441 = vmatprep.subr.mxu0 0.0
  %2442 = vmatpush1.msra.mxu0 %v2407
  %2443 = vmatprep.subr.mxu0 0.0
  %2444 = vmatpush2.msra.mxu0 0.0
  %2445 = vmatprep.subr.mxu0 0.0
  %2446 = vmatpush2.msra.mxu0 0.0
  %2447 = vmatprep.subr.mxu0 0.0
  %2448 = vmatpush2.msra.mxu0 0.0
  %2449 = vmatprep.subr.mxu0 0.0
  %2450 = vmatpush2.msra.mxu0 0.0
  %2451 = vmatprep.subr.mxu0 0.0
  %2452 = vmatpush2.msra.mxu0 0.0
  %2453 = vmatprep.subr.mxu0 0.0
  %2454 = vmatpush2.msra.mxu0 0.0
  %2455 = vmatprep.subr.mxu0 0.0
  %2456 = vmatpush2.msra.mxu0 0.0
  %2457 = vmatprep.subr.mxu0 0.0
  %2458 = vmatpush2.msra.mxu0 0.0
  %2459 = vmatprep.subr.mxu0 0.0
  %2460 = vmatpush2.msra.mxu0 0.0
  %2461 = vmatprep.subr.mxu0 0.0
  %2462 = vmatpush2.msra.mxu0 0.0
  %2463 = vmatprep.subr.mxu0 0.0
  %2464 = vmatpush2.msra.mxu0 0.0
  %2465 = vmatprep.subr.mxu0 0.0
  %2466 = vmatpush2.msra.mxu0 0.0
  %2467 = vmatprep.subr.mxu0 0.0
  %2468 = vmatpush2.msra.mxu0 0.0
  %2469 = vmatprep.subr.mxu0 0.0
  %2470 = vmatpush2.msra.mxu0 0.0
  %2471 = vmatprep.subr.mxu0 0.0
  %2472 = vmatpush2.msra.mxu0 0.0
  %2473 = vmatprep.subr.mxu0 0.0
  %2474 = vmatpush2.msra.mxu0 0.0
  %2475 = vmatprep.mubr.f32.mxu0 0.0
  %2476 = vmatmul.mubr.f32.gmra.mxu0 %v1755
  %v2477 = vpop.f32.mrf.mxu0
  %v2478 = vadd.f32 0.0, %v2477
  %v2479 = vpop.f32.mrf.mxu0
  %2480 = vdwg.mxu0
  %v2482 = vrot.slane %v2478, 4
  %v2484 = vadd.f32 %v2406, %v2482
  %v2485 = vxor.u32 %v2484, 2147483648
  %v2486 = vmul.f32 %v2485, 1.442695
  %v2487 = vpow.pop %v2486
  %v2488 = vadd.f32 %v2487, 1.0
  %v2489 = vrcp.pop %v2488
  %v2490 = vmul.f32 1.0, %v2489
  %v2491 = vtanh.pop %v2484
  %v2493 = vrot.slane %v1666, 6
  %v2495 = vmul.f32 %v2490, %v2493
  %2497 = vrot.lane.b32.xlu0 %v2491, 64
  %v2498 = vpop.permute.xlu0 %2497
  %v2500 = vmul.f32 %v2490, %v2498
  %2502 = vrot.lane.b32.xlu0 %v2500, 32
  %v2503 = vpop.permute.xlu0 %2502
  %v2505 = vadd.f32 %v2495, %v2503
  %v2506 = vtanh.pop %v2505
  %2508 = vrot.lane.b32.xlu0 %v2506, 64
  %v2509 = vpop.permute.xlu0 %2508
  %v2511 = vmul.f32 %v2490, %v2509
  %v2512 = vld [vmem:[%s17] sm:$0xff]
  %v2513 = vld [vmem:[%s17 + $0x8] sm:$0xff]
  %v2514 = vld [vmem:[%s17 + $0x10] sm:$0xff]
  %v2515 = vld [vmem:[%s17 + $0x18] sm:$0xff]
  %v2516 = vld [vmem:[%s18] sm:$0xff]
  %v2517 = vld [vmem:[%s18 + $0x8] sm:$0xff]
  %v2518 = vld [vmem:[%s18 + $0x10] sm:$0xff]
  %v2519 = vld [vmem:[%s18 + $0x18] sm:$0xff]
  %2520 = vmatprep.subr.mxu0 0.0
  %2521 = vmatpush1.msra.mxu0 0.0
  %2522 = vmatprep.subr.mxu0 0.0
  %2523 = vmatpush1.msra.mxu0 0.0
  %2524 = vmatprep.subr.mxu0 0.0
  %2525 = vmatpush1.msra.mxu0 0.0
  %2526 = vmatprep.subr.mxu0 0.0
  %2527 = vmatpush1.msra.mxu0 0.0
  %2528 = vmatprep.subr.mxu0 0.0
  %2529 = vmatpush1.msra.mxu0 0.0
  %2530 = vmatprep.subr.mxu0 0.0
  %2531 = vmatpush1.msra.mxu0 0.0
  %2532 = vmatprep.subr.mxu0 0.0
  %2533 = vmatpush1.msra.mxu0 0.0
  %2534 = vmatprep.subr.mxu0 0.0
  %2535 = vmatpush1.msra.mxu0 0.0
  %2536 = vmatprep.subr.mxu0 0.0
  %2537 = vmatpush1.msra.mxu0 0.0
  %2538 = vmatprep.subr.mxu0 0.0
  %2539 = vmatpush1.msra.mxu0 0.0
  %2540 = vmatprep.subr.mxu0 0.0
  %2541 = vmatpush1.msra.mxu0 0.0
  %2542 = vmatprep.subr.mxu0 0.0
  %2543 = vmatpush1.msra.mxu0 0.0
  %2544 = vmatprep.subr.mxu0 0.0
  %2545 = vmatpush1.msra.mxu0 %v2519
  %2546 = vmatprep.subr.mxu0 0.0
  %2547 = vmatpush1.msra.mxu0 %v2518
  %2548 = vmatprep.subr.mxu0 0.0
  %2549 = vmatpush1.msra.mxu0 %v2517
  %2550 = vmatprep.subr.mxu0 0.0
  %2551 = vmatpush1.msra.mxu0 %v2516
  %2552 = vmatprep.subr.mxu0 0.0
  %2553 = vmatpush2.msra.mxu0 0.0
  %2554 = vmatprep.subr.mxu0 0.0
  %2555 = vmatpush2.msra.mxu0 0.0
  %2556 = vmatprep.subr.mxu0 0.0
  %2557 = vmatpush2.msra.mxu0 0.0
  %2558 = vmatprep.subr.mxu0 0.0
  %2559 = vmatpush2.msra.mxu0 0.0
  %2560 = vmatprep.subr.mxu0 0.0
  %2561 = vmatpush2.msra.mxu0 0.0
  %2562 = vmatprep.subr.mxu0 0.0
  %2563 = vmatpush2.msra.mxu0 0.0
  %2564 = vmatprep.subr.mxu0 0.0
  %2565 = vmatpush2.msra.mxu0 0.0
  %2566 = vmatprep.subr.mxu0 0.0
  %2567 = vmatpush2.msra.mxu0 0.0
  %2568 = vmatprep.subr.mxu0 0.0
  %2569 = vmatpush2.msra.mxu0 0.0
  %2570 = vmatprep.subr.mxu0 0.0
  %2571 = vmatpush2.msra.mxu0 0.0
  %2572 = vmatprep.subr.mxu0 0.0
  %2573 = vmatpush2.msra.mxu0 0.0
  %2574 = vmatprep.subr.mxu0 0.0
  %2575 = vmatpush2.msra.mxu0 0.0
  %2576 = vmatprep.subr.mxu0 0.0
  %2577 = vmatpush2.msra.mxu0 0.0
  %2578 = vmatprep.subr.mxu0 0.0
  %2579 = vmatpush2.msra.mxu0 0.0
  %2580 = vmatprep.subr.mxu0 0.0
  %2581 = vmatpush2.msra.mxu0 0.0
  %2582 = vmatprep.subr.mxu0 0.0
  %2583 = vmatpush2.msra.mxu0 0.0
  %2584 = vmatprep.mubr.f32.mxu0 0.0
  %2585 = vmatmul.mubr.f32.gmra.mxu0 %v2248
  %v2586 = vpop.f32.mrf.mxu0
  %v2587 = vadd.f32 0.0, %v2586
  %v2588 = vpop.f32.mrf.mxu0
  %2589 = vdwg.mxu0
  %v2591 = vrot.slane %v2511, 4
  %2592 = vrot.lane.b32.xlu0 %v2591, 32
  %v2593 = vpop.permute.xlu0 %2592
  %v2594 = vsel %vm87, %v2593, 0
  %2596 = vmatprep.subr.mxu0 0.0
  %2597 = vmatpush1.msra.mxu0 0.0
  %2598 = vmatprep.subr.mxu0 0.0
  %2599 = vmatpush1.msra.mxu0 0.0
  %2600 = vmatprep.subr.mxu0 0.0
  %2601 = vmatpush1.msra.mxu0 0.0
  %2602 = vmatprep.subr.mxu0 0.0
  %2603 = vmatpush1.msra.mxu0 0.0
  %2604 = vmatprep.subr.mxu0 0.0
  %2605 = vmatpush1.msra.mxu0 0.0
  %2606 = vmatprep.subr.mxu0 0.0
  %2607 = vmatpush1.msra.mxu0 0.0
  %2608 = vmatprep.subr.mxu0 0.0
  %2609 = vmatpush1.msra.mxu0 0.0
  %2610 = vmatprep.subr.mxu0 0.0
  %2611 = vmatpush1.msra.mxu0 0.0
  %2612 = vmatprep.subr.mxu0 0.0
  %2613 = vmatpush1.msra.mxu0 0.0
  %2614 = vmatprep.subr.mxu0 0.0
  %2615 = vmatpush1.msra.mxu0 0.0
  %2616 = vmatprep.subr.mxu0 0.0
  %2617 = vmatpush1.msra.mxu0 0.0
  %2618 = vmatprep.subr.mxu0 0.0
  %2619 = vmatpush1.msra.mxu0 0.0
  %2620 = vmatprep.subr.mxu0 0.0
  %2621 = vmatpush1.msra.mxu0 %v2515
  %2622 = vmatprep.subr.mxu0 0.0
  %2623 = vmatpush1.msra.mxu0 %v2514
  %2624 = vmatprep.subr.mxu0 0.0
  %2625 = vmatpush1.msra.mxu0 %v2513
  %2626 = vmatprep.subr.mxu0 0.0
  %2627 = vmatpush1.msra.mxu0 %v2512
  %2628 = vmatprep.subr.mxu0 0.0
  %2629 = vmatpush2.msra.mxu0 0.0
  %2630 = vmatprep.subr.mxu0 0.0
  %2631 = vmatpush2.msra.mxu0 0.0
  %2632 = vmatprep.subr.mxu0 0.0
  %2633 = vmatpush2.msra.mxu0 0.0
  %2634 = vmatprep.subr.mxu0 0.0
  %2635 = vmatpush2.msra.mxu0 0.0
  %2636 = vmatprep.subr.mxu0 0.0
  %2637 = vmatpush2.msra.mxu0 0.0
  %2638 = vmatprep.subr.mxu0 0.0
  %2639 = vmatpush2.msra.mxu0 0.0
  %2640 = vmatprep.subr.mxu0 0.0
  %2641 = vmatpush2.msra.mxu0 0.0
  %2642 = vmatprep.subr.mxu0 0.0
  %2643 = vmatpush2.msra.mxu0 0.0
  %2644 = vmatprep.subr.mxu0 0.0
  %2645 = vmatpush2.msra.mxu0 0.0
  %2646 = vmatprep.subr.mxu0 0.0
  %2647 = vmatpush2.msra.mxu0 0.0
  %2648 = vmatprep.subr.mxu0 0.0
  %2649 = vmatpush2.msra.mxu0 0.0
  %2650 = vmatprep.subr.mxu0 0.0
  %2651 = vmatpush2.msra.mxu0 0.0
  %2652 = vmatprep.subr.mxu0 0.0
  %2653 = vmatpush2.msra.mxu0 0.0
  %2654 = vmatprep.subr.mxu0 0.0
  %2655 = vmatpush2.msra.mxu0 0.0
  %2656 = vmatprep.subr.mxu0 0.0
  %2657 = vmatpush2.msra.mxu0 0.0
  %2658 = vmatprep.subr.mxu0 0.0
  %2659 = vmatpush2.msra.mxu0 0.0
  %2660 = vmatprep.mubr.f32.mxu0 0.0
  %2661 = vmatmul.mubr.f32.gmra.mxu0 %v2594
  %v2662 = vpop.f32.mrf.mxu0
  %v2663 = vadd.f32 %v2587, %v2662
  %v2664 = vpop.f32.mrf.mxu0
  %2665 = vdwg.mxu0
  %v2666 = vld [vmem:[%s19] sm:$0xff]
  %v2667 = vld [vmem:[%s19 + $0x8] sm:$0xff]
  %v2668 = vld [vmem:[%s19 + $0x10] sm:$0xff]
  %v2669 = vld [vmem:[%s19 + $0x18] sm:$0xff]
  %2670 = vmatprep.subr.mxu0 0.0
  %2671 = vmatpush1.msra.mxu0 0.0
  %2672 = vmatprep.subr.mxu0 0.0
  %2673 = vmatpush1.msra.mxu0 0.0
  %2674 = vmatprep.subr.mxu0 0.0
  %2675 = vmatpush1.msra.mxu0 0.0
  %2676 = vmatprep.subr.mxu0 0.0
  %2677 = vmatpush1.msra.mxu0 0.0
  %2678 = vmatprep.subr.mxu0 0.0
  %2679 = vmatpush1.msra.mxu0 0.0
  %2680 = vmatprep.subr.mxu0 0.0
  %2681 = vmatpush1.msra.mxu0 0.0
  %2682 = vmatprep.subr.mxu0 0.0
  %2683 = vmatpush1.msra.mxu0 0.0
  %2684 = vmatprep.subr.mxu0 0.0
  %2685 = vmatpush1.msra.mxu0 0.0
  %2686 = vmatprep.subr.mxu0 0.0
  %2687 = vmatpush1.msra.mxu0 0.0
  %2688 = vmatprep.subr.mxu0 0.0
  %2689 = vmatpush1.msra.mxu0 0.0
  %2690 = vmatprep.subr.mxu0 0.0
  %2691 = vmatpush1.msra.mxu0 0.0
  %2692 = vmatprep.subr.mxu0 0.0
  %2693 = vmatpush1.msra.mxu0 0.0
  %2694 = vmatprep.subr.mxu0 0.0
  %2695 = vmatpush1.msra.mxu0 %v2669
  %2696 = vmatprep.subr.mxu0 0.0
  %2697 = vmatpush1.msra.mxu0 %v2668
  %2698 = vmatprep.subr.mxu0 0.0
  %2699 = vmatpush1.msra.mxu0 %v2667
  %2700 = vmatprep.subr.mxu0 0.0
  %2701 = vmatpush1.msra.mxu0 %v2666
  %2702 = vmatprep.subr.mxu0 0.0
  %2703 = vmatpush2.msra.mxu0 0.0
  %2704 = vmatprep.subr.mxu0 0.0
  %2705 = vmatpush2.msra.mxu0 0.0
  %2706 = vmatprep.subr.mxu0 0.0
  %2707 = vmatpush2.msra.mxu0 0.0
  %2708 = vmatprep.subr.mxu0 0.0
  %2709 = vmatpush2.msra.mxu0 0.0
  %2710 = vmatprep.subr.mxu0 0.0
  %2711 = vmatpush2.msra.mxu0 0.0
  %2712 = vmatprep.subr.mxu0 0.0
  %2713 = vmatpush2.msra.mxu0 0.0
  %2714 = vmatprep.subr.mxu0 0.0
  %2715 = vmatpush2.msra.mxu0 0.0
  %2716 = vmatprep.subr.mxu0 0.0
  %2717 = vmatpush2.msra.mxu0 0.0
  %2718 = vmatprep.subr.mxu0 0.0
  %2719 = vmatpush2.msra.mxu0 0.0
  %2720 = vmatprep.subr.mxu0 0.0
  %2721 = vmatpush2.msra.mxu0 0.0
  %2722 = vmatprep.subr.mxu0 0.0
  %2723 = vmatpush2.msra.mxu0 0.0
  %2724 = vmatprep.subr.mxu0 0.0
  %2725 = vmatpush2.msra.mxu0 0.0
  %2726 = vmatprep.subr.mxu0 0.0
  %2727 = vmatpush2.msra.mxu0 0.0
  %2728 = vmatprep.subr.mxu0 0.0
  %2729 = vmatpush2.msra.mxu0 0.0
  %2730 = vmatprep.subr.mxu0 0.0
  %2731 = vmatpush2.msra.mxu0 0.0
  %2732 = vmatprep.subr.mxu0 0.0
  %2733 = vmatpush2.msra.mxu0 0.0
  %2734 = vmatprep.mubr.f32.mxu0 0.0
  %2735 = vmatmul.mubr.f32.gmra.mxu0 %v2331
  %v2736 = vpop.f32.mrf.mxu0
  %v2737 = vadd.f32 0.0, %v2736
  %v2738 = vpop.f32.mrf.mxu0
  %2739 = vdwg.mxu0
  %v2740 = vadd.f32 %v2663, %v2737
  %v2741 = vld [vmem:[%s20] sm:$0xff]
  %v2742 = vld [vmem:[%s20 + $0x8] sm:$0xff]
  %v2743 = vrot.slane %v259, 4
  %v2744 = vsel %vm270, %v2743, 0
  %2746 = vmatprep.subr.mxu0 0.0
  %2747 = vmatpush1.msra.mxu0 0.0
  %2748 = vmatprep.subr.mxu0 0.0
  %2749 = vmatpush1.msra.mxu0 0.0
  %2750 = vmatprep.subr.mxu0 0.0
  %2751 = vmatpush1.msra.mxu0 0.0
  %2752 = vmatprep.subr.mxu0 0.0
  %2753 = vmatpush1.msra.mxu0 0.0
  %2754 = vmatprep.subr.mxu0 0.0
  %2755 = vmatpush1.msra.mxu0 0.0
  %2756 = vmatprep.subr.mxu0 0.0
  %2757 = vmatpush1.msra.mxu0 0.0
  %2758 = vmatprep.subr.mxu0 0.0
  %2759 = vmatpush1.msra.mxu0 0.0
  %2760 = vmatprep.subr.mxu0 0.0
  %2761 = vmatpush1.msra.mxu0 0.0
  %2762 = vmatprep.subr.mxu0 0.0
  %2763 = vmatpush1.msra.mxu0 0.0
  %2764 = vmatprep.subr.mxu0 0.0
  %2765 = vmatpush1.msra.mxu0 0.0
  %2766 = vmatprep.subr.mxu0 0.0
  %2767 = vmatpush1.msra.mxu0 0.0
  %2768 = vmatprep.subr.mxu0 0.0
  %2769 = vmatpush1.msra.mxu0 0.0
  %2770 = vmatprep.subr.mxu0 0.0
  %2771 = vmatpush1.msra.mxu0 0.0
  %2772 = vmatprep.subr.mxu0 0.0
  %2773 = vmatpush1.msra.mxu0 0.0
  %2774 = vmatprep.subr.mxu0 0.0
  %2775 = vmatpush1.msra.mxu0 %v2742
  %2776 = vmatprep.subr.mxu0 0.0
  %2777 = vmatpush1.msra.mxu0 %v2741
  %2778 = vmatprep.subr.mxu0 0.0
  %2779 = vmatpush2.msra.mxu0 0.0
  %2780 = vmatprep.subr.mxu0 0.0
  %2781 = vmatpush2.msra.mxu0 0.0
  %2782 = vmatprep.subr.mxu0 0.0
  %2783 = vmatpush2.msra.mxu0 0.0
  %2784 = vmatprep.subr.mxu0 0.0
  %2785 = vmatpush2.msra.mxu0 0.0
  %2786 = vmatprep.subr.mxu0 0.0
  %2787 = vmatpush2.msra.mxu0 0.0
  %2788 = vmatprep.subr.mxu0 0.0
  %2789 = vmatpush2.msra.mxu0 0.0
  %2790 = vmatprep.subr.mxu0 0.0
  %2791 = vmatpush2.msra.mxu0 0.0
  %2792 = vmatprep.subr.mxu0 0.0
  %2793 = vmatpush2.msra.mxu0 0.0
  %2794 = vmatprep.subr.mxu0 0.0
  %2795 = vmatpush2.msra.mxu0 0.0
  %2796 = vmatprep.subr.mxu0 0.0
  %2797 = vmatpush2.msra.mxu0 0.0
  %2798 = vmatprep.subr.mxu0 0.0
  %2799 = vmatpush2.msra.mxu0 0.0
  %2800 = vmatprep.subr.mxu0 0.0
  %2801 = vmatpush2.msra.mxu0 0.0
  %2802 = vmatprep.subr.mxu0 0.0
  %2803 = vmatpush2.msra.mxu0 0.0
  %2804 = vmatprep.subr.mxu0 0.0
  %2805 = vmatpush2.msra.mxu0 0.0
  %2806 = vmatprep.subr.mxu0 0.0
  %2807 = vmatpush2.msra.mxu0 0.0
  %2808 = vmatprep.subr.mxu0 0.0
  %2809 = vmatpush2.msra.mxu0 0.0
  %2810 = vmatprep.mubr.f32.mxu0 0.0
  %2811 = vmatmul.mubr.f32.gmra.mxu0 %v2744
  %v2812 = vpop.f32.mrf.mxu0
  %v2813 = vadd.f32 0.0, %v2812
  %v2814 = vpop.f32.mrf.mxu0
  %2815 = vdwg.mxu0
  %v2816 = vadd.f32 %v2740, %v2813
  %v2817 = vld [vmem:[%s21] sm:$0x1]
  %v2819 = vlaneseq
  %v2820 = vshrl.u32 %v2819, 7
  %v2821 = vsub.s32 0, %v2820
  %v2822 = vrot.slane %v2817, %v2821
  %v2824 = vadd.f32 %v2816, %v2822
  %v2827 = vunpack.c.l.s4 1966171168
  %v2828 = vunpack.c.0.s8 %v2827
  %v2829 = vlaneseq
  %v2830 = vshrl.u32 %v2829, 7
  %v2831 = vsub.s32 %v2828, %v2830
  %v2832 = vrot.slane %v2824, %v2831
  %v2833 = vcombine.high %v2832, %v2832
  %v2835 = vunpack.c.l.s4 1966171168
  %v2836 = vunpack.c.0.s8 %v2835
  %v2837 = vlaneseq
  %v2838 = vshrl.u32 %v2837, 7
  %v2839 = vsub.s32 %v2836, %v2838
  %v2840 = vrot.slane %v2832, %v2839
  %v2842 = vunpack.c.l.s4 1966171168
  %v2843 = vunpack.c.0.s8 %v2842
  %v2844 = vlaneseq
  %v2845 = vshrl.u32 %v2844, 7
  %v2846 = vsub.s32 %v2843, %v2845
  %v2847 = vrot.slane %v2833, %v2846
  %2850 = vst [vmem:[%s22 + $0x2] sm:$0x1] %v2840
  %2851 = vst [vmem:[%s22 + $0xa] sm:$0x1] %v2847
  %v2854 = vunpack.c.l.s4 1966171168
  %v2855 = vunpack.c.0.s8 %v2854
  %v2856 = vlaneseq
  %v2857 = vshrl.u32 %v2856, 7
  %v2858 = vsub.s32 %v2855, %v2857
  %v2859 = vrot.slane %v2194, %v2858
  %v2860 = vcombine.high %v2859, %v2859
  %v2862 = vunpack.c.l.s4 1966171168
  %v2863 = vunpack.c.0.s8 %v2862
  %v2864 = vlaneseq
  %v2865 = vshrl.u32 %v2864, 7
  %v2866 = vsub.s32 %v2863, %v2865
  %v2867 = vrot.slane %v2859, %v2866
  %v2869 = vunpack.c.l.s4 1966171168
  %v2870 = vunpack.c.0.s8 %v2869
  %v2871 = vlaneseq
  %v2872 = vshrl.u32 %v2871, 7
  %v2873 = vsub.s32 %v2870, %v2872
  %v2874 = vrot.slane %v2860, %v2873
  %2877 = vst.msk [vmem:[%s23 + $0x2] sm:$0x1] %vm1198, %v2867
  %2878 = vst.msk [vmem:[%s23 + $0xa] sm:$0x1] %vm1198, %v2874
  %v2879 = vld [vmem:[%s9] sm:$0xff]
  %v2880 = vld [vmem:[%s9 + $0x8] sm:$0xff]
  %v2881 = vld [vmem:[%s9 + $0x10] sm:$0xff]
  %v2882 = vld [vmem:[%s9 + $0x18] sm:$0xff]
  %2883 = vmatprep.subr.mxu0 0.0
  %2884 = vmatpush1.msra.mxu0 0.0
  %2885 = vmatprep.subr.mxu0 0.0
  %2886 = vmatpush1.msra.mxu0 0.0
  %2887 = vmatprep.subr.mxu0 0.0
  %2888 = vmatpush1.msra.mxu0 0.0
  %2889 = vmatprep.subr.mxu0 0.0
  %2890 = vmatpush1.msra.mxu0 0.0
  %2891 = vmatprep.subr.mxu0 0.0
  %2892 = vmatpush1.msra.mxu0 0.0
  %2893 = vmatprep.subr.mxu0 0.0
  %2894 = vmatpush1.msra.mxu0 0.0
  %2895 = vmatprep.subr.mxu0 0.0
  %2896 = vmatpush1.msra.mxu0 0.0
  %2897 = vmatprep.subr.mxu0 0.0
  %2898 = vmatpush1.msra.mxu0 0.0
  %2899 = vmatprep.subr.mxu0 0.0
  %2900 = vmatpush1.msra.mxu0 0.0
  %2901 = vmatprep.subr.mxu0 0.0
  %2902 = vmatpush1.msra.mxu0 0.0
  %2903 = vmatprep.subr.mxu0 0.0
  %2904 = vmatpush1.msra.mxu0 0.0
  %2905 = vmatprep.subr.mxu0 0.0
  %2906 = vmatpush1.msra.mxu0 0.0
  %2907 = vmatprep.subr.mxu0 0.0
  %2908 = vmatpush1.msra.mxu0 %v2882
  %2909 = vmatprep.subr.mxu0 0.0
  %2910 = vmatpush1.msra.mxu0 %v2881
  %2911 = vmatprep.subr.mxu0 0.0
  %2912 = vmatpush1.msra.mxu0 %v2880
  %2913 = vmatprep.subr.mxu0 0.0
  %2914 = vmatpush1.msra.mxu0 %v2879
  %2915 = vmatprep.subr.mxu0 0.0
  %2916 = vmatpush2.msra.mxu0 0.0
  %2917 = vmatprep.subr.mxu0 0.0
  %2918 = vmatpush2.msra.mxu0 0.0
  %2919 = vmatprep.subr.mxu0 0.0
  %2920 = vmatpush2.msra.mxu0 0.0
  %2921 = vmatprep.subr.mxu0 0.0
  %2922 = vmatpush2.msra.mxu0 0.0
  %2923 = vmatprep.subr.mxu0 0.0
  %2924 = vmatpush2.msra.mxu0 0.0
  %2925 = vmatprep.subr.mxu0 0.0
  %2926 = vmatpush2.msra.mxu0 0.0
  %2927 = vmatprep.subr.mxu0 0.0
  %2928 = vmatpush2.msra.mxu0 0.0
  %2929 = vmatprep.subr.mxu0 0.0
  %2930 = vmatpush2.msra.mxu0 0.0
  %2931 = vmatprep.subr.mxu0 0.0
  %2932 = vmatpush2.msra.mxu0 0.0
  %2933 = vmatprep.subr.mxu0 0.0
  %2934 = vmatpush2.msra.mxu0 0.0
  %2935 = vmatprep.subr.mxu0 0.0
  %2936 = vmatpush2.msra.mxu0 0.0
  %2937 = vmatprep.subr.mxu0 0.0
  %2938 = vmatpush2.msra.mxu0 0.0
  %2939 = vmatprep.subr.mxu0 0.0
  %2940 = vmatpush2.msra.mxu0 0.0
  %2941 = vmatprep.subr.mxu0 0.0
  %2942 = vmatpush2.msra.mxu0 0.0
  %2943 = vmatprep.subr.mxu0 0.0
  %2944 = vmatpush2.msra.mxu0 0.0
  %2945 = vmatprep.subr.mxu0 0.0
  %2946 = vmatpush2.msra.mxu0 0.0
  %2947 = vmatprep.mubr.f32.mxu0 0.0
  %2948 = vmatmul.mubr.f32.gmra.mxu0 %v2594
  %v2949 = vpop.f32.mrf.mxu0
  %v2950 = vadd.f32 0.0, %v2949
  %v2951 = vpop.f32.mrf.mxu0
  %2952 = vdwg.mxu0
  %v2955 = vunpack.c.l.s4 1966171168
  %v2956 = vunpack.c.0.s8 %v2955
  %v2957 = vlaneseq
  %v2958 = vshrl.u32 %v2957, 7
  %v2959 = vsub.s32 %v2956, %v2958
  %v2960 = vrot.slane %v2950, %v2959
  %v2961 = vcombine.high %v2960, %v2960
  %v2963 = vunpack.c.l.s4 1966171168
  %v2964 = vunpack.c.0.s8 %v2963
  %v2965 = vlaneseq
  %v2966 = vshrl.u32 %v2965, 7
  %v2967 = vsub.s32 %v2964, %v2966
  %v2968 = vrot.slane %v2960, %v2967
  %v2970 = vunpack.c.l.s4 1966171168
  %v2971 = vunpack.c.0.s8 %v2970
  %v2972 = vlaneseq
  %v2973 = vshrl.u32 %v2972, 7
  %v2974 = vsub.s32 %v2971, %v2973
  %v2975 = vrot.slane %v2961, %v2974
  %v2976 = vlaneseq
  %v2977 = vshrl.u32 %v2976, 7
  %v2978 = vsub.s32 0, %v2977
  %v2979 = vrot.slane %v2968, %v2978
  %v2980 = vlaneseq
  %v2981 = vshrl.u32 %v2980, 7
  %v2982 = vsub.s32 0, %v2981
  %v2983 = vrot.slane %v2975, %v2982
  %v2986 = vadd.f32 %v257, %v2979
  %v2987 = vadd.f32 %v258, %v2983
  %v2988 = vtanh.pop %v2986
  %v2989 = vtanh.pop %v2987
  %v2990 = vmul.f32 %v2988, %v480
  %v2991 = vmul.f32 %v2989, %v480
  %v2992 = vsel %vm87, %v2990, 0.0
  %2993 = vadd.xlane.f32.xlu0 %v2992
  %v2994 = vpop.xlane.xlu0 %2993
  %v2995 = vsel %vm87, %v2991, 0.0
  %2996 = vadd.xlane.f32.xlu0 %v2995
  %v2997 = vpop.xlane.xlu0 %2996
  %v2998 = vld [vmem:[#allocation2] sm:$0x1]
  %v3000 = vlaneseq
  %v3001 = vshrl.u32 %v3000, 7
  %v3002 = vsub.s32 0, %v3001
  %v3003 = vrot.slane %v2998, %v3002
  %3004 = vset.pattern.permute.xlu0 0
  %3005 = vperm.xlu0 %3004, %v3003
  %v3006 = vpop.permute.xlu0 %3005
  %v3008 = vadd.f32 %v2994, %v3006
  %v3009 = vadd.f32 %v2997, %v3006
  %v3012 = vlaneseq
  %v3013 = vshrl.u32 %v3012, 7
  %v3014 = vsub.s32 %v353, %v3013
  %v3015 = vrot.slane %v3008, %v3014
  %v3016 = vlaneseq
  %v3017 = vshrl.u32 %v3016, 7
  %v3018 = vsub.s32 %v353, %v3017
  %v3019 = vrot.slane %v3009, %v3018
  %v3020 = vsel %vm512, %v3019, %v3015
  %v3022 = vsel %vm358, %v3020, -1e+10
  %v3023 = vsel %vm516, %v3022, -inf
  %3024 = vmax.xlane.f32.xlu0 %v3023
  %v3025 = vpop.xlane.xlu0 %3024
  %v3026 = vsub.f32 %v3022, %v3025
  %v3027 = vmul.f32 %v3026, 1.442695
  %v3028 = vpow.pop %v3027
  %v3029 = vsel %vm516, %v3028, 0.0
  %3030 = vadd.xlane.f32.xlu0 %v3029
  %v3031 = vpop.xlane.xlu0 %3030
  %v3032 = vrcp.pop %v3031
  %v3033 = vmul.f32 %v3028, %v3032
  %v3034 = vlaneseq
  %v3035 = vshrl.u32 %v3034, 7
  %v3036 = vsub.s32 0, %v3035
  %v3037 = vrot.slane %v3033, %v3036
  %3039 = vbcast.lane.b32.xlu0 %v3037, 256
  %v3040 = vpop.permute.xlu0 %3039
  %v3041 = vlaneseq
  %v3042 = vshrl.u32 %v3041, 7
  %v3043 = vsub.s32 1, %v3042
  %v3044 = vrot.slane %v3033, %v3043
  %3046 = vbcast.lane.b32.xlu0 %v3044, 256
  %v3047 = vpop.permute.xlu0 %3046
  %v3048 = vmul.f32 %v3040, %v75
  %v3049 = vmul.f32 %v3047, %v76
  %v3050 = vsel %vm87, %v3048, 0.0
  %v3051 = vrot.slane %v3050, 4
  %v3052 = vadd.f32 %v3050, %v3051
  %v3053 = vrot.slane %v3052, 2
  %v3054 = vadd.f32 %v3052, %v3053
  %v3055 = vrot.slane %v3054, 1
  %v3056 = vadd.f32 %v3054, %v3055
  %v3057 = vsel %vm87, %v3049, 0.0
  %v3058 = vrot.slane %v3057, 4
  %v3059 = vadd.f32 %v3057, %v3058
  %v3060 = vrot.slane %v3059, 2
  %v3061 = vadd.f32 %v3059, %v3060
  %v3062 = vrot.slane %v3061, 1
  %v3063 = vadd.f32 %v3061, %v3062
  %v3064 = vmul.f32 %v3040, %v77
  %v3065 = vmul.f32 %v3047, %v78
  %v3066 = vsel %vm87, %v3064, 0.0
  %v3067 = vrot.slane %v3066, 4
  %v3068 = vadd.f32 %v3066, %v3067
  %v3069 = vrot.slane %v3068, 2
  %v3070 = vadd.f32 %v3068, %v3069
  %v3071 = vrot.slane %v3070, 1
  %v3072 = vadd.f32 %v3070, %v3071
  %v3073 = vsel %vm87, %v3065, 0.0
  %v3074 = vrot.slane %v3073, 4
  %v3075 = vadd.f32 %v3073, %v3074
  %v3076 = vrot.slane %v3075, 2
  %v3077 = vadd.f32 %v3075, %v3076
  %v3078 = vrot.slane %v3077, 1
  %v3079 = vadd.f32 %v3077, %v3078
  %v3080 = vld [vmem:[%s14] sm:$0xff]
  %v3081 = vld [vmem:[%s14 + $0x8] sm:$0xff]
  %v3082 = vld [vmem:[%s14 + $0x10] sm:$0xff]
  %v3083 = vld [vmem:[%s14 + $0x18] sm:$0xff]
  %v3086 = vsel %vm512, %v3063, %v3056
  %v3087 = vsel %vm87, %v3086, 0
  %3089 = vmatprep.subr.mxu0 0.0
  %3090 = vmatpush1.msra.mxu0 0.0
  %3091 = vmatprep.subr.mxu0 0.0
  %3092 = vmatpush1.msra.mxu0 0.0
  %3093 = vmatprep.subr.mxu0 0.0
  %3094 = vmatpush1.msra.mxu0 0.0
  %3095 = vmatprep.subr.mxu0 0.0
  %3096 = vmatpush1.msra.mxu0 0.0
  %3097 = vmatprep.subr.mxu0 0.0
  %3098 = vmatpush1.msra.mxu0 0.0
  %3099 = vmatprep.subr.mxu0 0.0
  %3100 = vmatpush1.msra.mxu0 0.0
  %3101 = vmatprep.subr.mxu0 0.0
  %3102 = vmatpush1.msra.mxu0 0.0
  %3103 = vmatprep.subr.mxu0 0.0
  %3104 = vmatpush1.msra.mxu0 0.0
  %3105 = vmatprep.subr.mxu0 0.0
  %3106 = vmatpush1.msra.mxu0 0.0
  %3107 = vmatprep.subr.mxu0 0.0
  %3108 = vmatpush1.msra.mxu0 0.0
  %3109 = vmatprep.subr.mxu0 0.0
  %3110 = vmatpush1.msra.mxu0 0.0
  %3111 = vmatprep.subr.mxu0 0.0
  %3112 = vmatpush1.msra.mxu0 0.0
  %3113 = vmatprep.subr.mxu0 0.0
  %3114 = vmatpush1.msra.mxu0 %v3083
  %3115 = vmatprep.subr.mxu0 0.0
  %3116 = vmatpush1.msra.mxu0 %v3082
  %3117 = vmatprep.subr.mxu0 0.0
  %3118 = vmatpush1.msra.mxu0 %v3081
  %3119 = vmatprep.subr.mxu0 0.0
  %3120 = vmatpush1.msra.mxu0 %v3080
  %3121 = vmatprep.subr.mxu0 0.0
  %3122 = vmatpush2.msra.mxu0 0.0
  %3123 = vmatprep.subr.mxu0 0.0
  %3124 = vmatpush2.msra.mxu0 0.0
  %3125 = vmatprep.subr.mxu0 0.0
  %3126 = vmatpush2.msra.mxu0 0.0
  %3127 = vmatprep.subr.mxu0 0.0
  %3128 = vmatpush2.msra.mxu0 0.0
  %3129 = vmatprep.subr.mxu0 0.0
  %3130 = vmatpush2.msra.mxu0 0.0
  %3131 = vmatprep.subr.mxu0 0.0
  %3132 = vmatpush2.msra.mxu0 0.0
  %3133 = vmatprep.subr.mxu0 0.0
  %3134 = vmatpush2.msra.mxu0 0.0
  %3135 = vmatprep.subr.mxu0 0.0
  %3136 = vmatpush2.msra.mxu0 0.0
  %3137 = vmatprep.subr.mxu0 0.0
  %3138 = vmatpush2.msra.mxu0 0.0
  %3139 = vmatprep.subr.mxu0 0.0
  %3140 = vmatpush2.msra.mxu0 0.0
  %3141 = vmatprep.subr.mxu0 0.0
  %3142 = vmatpush2.msra.mxu0 0.0
  %3143 = vmatprep.subr.mxu0 0.0
  %3144 = vmatpush2.msra.mxu0 0.0
  %3145 = vmatprep.subr.mxu0 0.0
  %3146 = vmatpush2.msra.mxu0 0.0
  %3147 = vmatprep.subr.mxu0 0.0
  %3148 = vmatpush2.msra.mxu0 0.0
  %3149 = vmatprep.subr.mxu0 0.0
  %3150 = vmatpush2.msra.mxu0 0.0
  %3151 = vmatprep.subr.mxu0 0.0
  %3152 = vmatpush2.msra.mxu0 0.0
  %3153 = vmatprep.mubr.f32.mxu0 0.0
  %3154 = vmatmul.mubr.f32.gmra.mxu0 %v3087
  %v3155 = vpop.f32.mrf.mxu0
  %v3156 = vadd.f32 0.0, %v3155
  %v3157 = vpop.f32.mrf.mxu0
  %3158 = vdwg.mxu0
  %v3160 = vrot.slane %v3156, 2
  %v3162 = vadd.f32 %v344, %v3160
  %v3163 = vld [vmem:[%s15] sm:$0xff]
  %v3164 = vld [vmem:[%s15 + $0x8] sm:$0xff]
  %v3165 = vld [vmem:[%s15 + $0x10] sm:$0xff]
  %v3166 = vld [vmem:[%s15 + $0x18] sm:$0xff]
  %v3169 = vsel %vm512, %v3079, %v3072
  %v3170 = vsel %vm87, %v3169, 0
  %3172 = vmatprep.subr.mxu0 0.0
  %3173 = vmatpush1.msra.mxu0 0.0
  %3174 = vmatprep.subr.mxu0 0.0
  %3175 = vmatpush1.msra.mxu0 0.0
  %3176 = vmatprep.subr.mxu0 0.0
  %3177 = vmatpush1.msra.mxu0 0.0
  %3178 = vmatprep.subr.mxu0 0.0
  %3179 = vmatpush1.msra.mxu0 0.0
  %3180 = vmatprep.subr.mxu0 0.0
  %3181 = vmatpush1.msra.mxu0 0.0
  %3182 = vmatprep.subr.mxu0 0.0
  %3183 = vmatpush1.msra.mxu0 0.0
  %3184 = vmatprep.subr.mxu0 0.0
  %3185 = vmatpush1.msra.mxu0 0.0
  %3186 = vmatprep.subr.mxu0 0.0
  %3187 = vmatpush1.msra.mxu0 0.0
  %3188 = vmatprep.subr.mxu0 0.0
  %3189 = vmatpush1.msra.mxu0 0.0
  %3190 = vmatprep.subr.mxu0 0.0
  %3191 = vmatpush1.msra.mxu0 0.0
  %3192 = vmatprep.subr.mxu0 0.0
  %3193 = vmatpush1.msra.mxu0 0.0
  %3194 = vmatprep.subr.mxu0 0.0
  %3195 = vmatpush1.msra.mxu0 0.0
  %3196 = vmatprep.subr.mxu0 0.0
  %3197 = vmatpush1.msra.mxu0 %v3166
  %3198 = vmatprep.subr.mxu0 0.0
  %3199 = vmatpush1.msra.mxu0 %v3165
  %3200 = vmatprep.subr.mxu0 0.0
  %3201 = vmatpush1.msra.mxu0 %v3164
  %3202 = vmatprep.subr.mxu0 0.0
  %3203 = vmatpush1.msra.mxu0 %v3163
  %3204 = vmatprep.subr.mxu0 0.0
  %3205 = vmatpush2.msra.mxu0 0.0
  %3206 = vmatprep.subr.mxu0 0.0
  %3207 = vmatpush2.msra.mxu0 0.0
  %3208 = vmatprep.subr.mxu0 0.0
  %3209 = vmatpush2.msra.mxu0 0.0
  %3210 = vmatprep.subr.mxu0 0.0
  %3211 = vmatpush2.msra.mxu0 0.0
  %3212 = vmatprep.subr.mxu0 0.0
  %3213 = vmatpush2.msra.mxu0 0.0
  %3214 = vmatprep.subr.mxu0 0.0
  %3215 = vmatpush2.msra.mxu0 0.0
  %3216 = vmatprep.subr.mxu0 0.0
  %3217 = vmatpush2.msra.mxu0 0.0
  %3218 = vmatprep.subr.mxu0 0.0
  %3219 = vmatpush2.msra.mxu0 0.0
  %3220 = vmatprep.subr.mxu0 0.0
  %3221 = vmatpush2.msra.mxu0 0.0
  %3222 = vmatprep.subr.mxu0 0.0
  %3223 = vmatpush2.msra.mxu0 0.0
  %3224 = vmatprep.subr.mxu0 0.0
  %3225 = vmatpush2.msra.mxu0 0.0
  %3226 = vmatprep.subr.mxu0 0.0
  %3227 = vmatpush2.msra.mxu0 0.0
  %3228 = vmatprep.subr.mxu0 0.0
  %3229 = vmatpush2.msra.mxu0 0.0
  %3230 = vmatprep.subr.mxu0 0.0
  %3231 = vmatpush2.msra.mxu0 0.0
  %3232 = vmatprep.subr.mxu0 0.0
  %3233 = vmatpush2.msra.mxu0 0.0
  %3234 = vmatprep.subr.mxu0 0.0
  %3235 = vmatpush2.msra.mxu0 0.0
  %3236 = vmatprep.mubr.f32.mxu0 0.0
  %3237 = vmatmul.mubr.f32.gmra.mxu0 %v3170
  %v3238 = vpop.f32.mrf.mxu0
  %v3239 = vadd.f32 0.0, %v3238
  %v3240 = vpop.f32.mrf.mxu0
  %3241 = vdwg.mxu0
  %v3243 = vrot.slane %v3239, 2
  %v3245 = vadd.f32 %v3162, %v3243
  %v3246 = vld [vmem:[%s16] sm:$0xff]
  %v3247 = vld [vmem:[%s16 + $0x8] sm:$0xff]
  %v3248 = vld [vmem:[%s16 + $0x10] sm:$0xff]
  %v3249 = vld [vmem:[%s16 + $0x18] sm:$0xff]
  %3250 = vmatprep.subr.mxu0 0.0
  %3251 = vmatpush1.msra.mxu0 0.0
  %3252 = vmatprep.subr.mxu0 0.0
  %3253 = vmatpush1.msra.mxu0 0.0
  %3254 = vmatprep.subr.mxu0 0.0
  %3255 = vmatpush1.msra.mxu0 0.0
  %3256 = vmatprep.subr.mxu0 0.0
  %3257 = vmatpush1.msra.mxu0 0.0
  %3258 = vmatprep.subr.mxu0 0.0
  %3259 = vmatpush1.msra.mxu0 0.0
  %3260 = vmatprep.subr.mxu0 0.0
  %3261 = vmatpush1.msra.mxu0 0.0
  %3262 = vmatprep.subr.mxu0 0.0
  %3263 = vmatpush1.msra.mxu0 0.0
  %3264 = vmatprep.subr.mxu0 0.0
  %3265 = vmatpush1.msra.mxu0 0.0
  %3266 = vmatprep.subr.mxu0 0.0
  %3267 = vmatpush1.msra.mxu0 0.0
  %3268 = vmatprep.subr.mxu0 0.0
  %3269 = vmatpush1.msra.mxu0 0.0
  %3270 = vmatprep.subr.mxu0 0.0
  %3271 = vmatpush1.msra.mxu0 0.0
  %3272 = vmatprep.subr.mxu0 0.0
  %3273 = vmatpush1.msra.mxu0 0.0
  %3274 = vmatprep.subr.mxu0 0.0
  %3275 = vmatpush1.msra.mxu0 %v3249
  %3276 = vmatprep.subr.mxu0 0.0
  %3277 = vmatpush1.msra.mxu0 %v3248
  %3278 = vmatprep.subr.mxu0 0.0
  %3279 = vmatpush1.msra.mxu0 %v3247
  %3280 = vmatprep.subr.mxu0 0.0
  %3281 = vmatpush1.msra.mxu0 %v3246
  %3282 = vmatprep.subr.mxu0 0.0
  %3283 = vmatpush2.msra.mxu0 0.0
  %3284 = vmatprep.subr.mxu0 0.0
  %3285 = vmatpush2.msra.mxu0 0.0
  %3286 = vmatprep.subr.mxu0 0.0
  %3287 = vmatpush2.msra.mxu0 0.0
  %3288 = vmatprep.subr.mxu0 0.0
  %3289 = vmatpush2.msra.mxu0 0.0
  %3290 = vmatprep.subr.mxu0 0.0
  %3291 = vmatpush2.msra.mxu0 0.0
  %3292 = vmatprep.subr.mxu0 0.0
  %3293 = vmatpush2.msra.mxu0 0.0
  %3294 = vmatprep.subr.mxu0 0.0
  %3295 = vmatpush2.msra.mxu0 0.0
  %3296 = vmatprep.subr.mxu0 0.0
  %3297 = vmatpush2.msra.mxu0 0.0
  %3298 = vmatprep.subr.mxu0 0.0
  %3299 = vmatpush2.msra.mxu0 0.0
  %3300 = vmatprep.subr.mxu0 0.0
  %3301 = vmatpush2.msra.mxu0 0.0
  %3302 = vmatprep.subr.mxu0 0.0
  %3303 = vmatpush2.msra.mxu0 0.0
  %3304 = vmatprep.subr.mxu0 0.0
  %3305 = vmatpush2.msra.mxu0 0.0
  %3306 = vmatprep.subr.mxu0 0.0
  %3307 = vmatpush2.msra.mxu0 0.0
  %3308 = vmatprep.subr.mxu0 0.0
  %3309 = vmatpush2.msra.mxu0 0.0
  %3310 = vmatprep.subr.mxu0 0.0
  %3311 = vmatpush2.msra.mxu0 0.0
  %3312 = vmatprep.subr.mxu0 0.0
  %3313 = vmatpush2.msra.mxu0 0.0
  %3314 = vmatprep.mubr.f32.mxu0 0.0
  %3315 = vmatmul.mubr.f32.gmra.mxu0 %v2594
  %v3316 = vpop.f32.mrf.mxu0
  %v3317 = vadd.f32 0.0, %v3316
  %v3318 = vpop.f32.mrf.mxu0
  %3319 = vdwg.mxu0
  %v3321 = vrot.slane %v3317, 2
  %v3323 = vadd.f32 %v3245, %v3321
  %v3324 = vxor.u32 %v3323, 2147483648
  %v3325 = vmul.f32 %v3324, 1.442695
  %v3326 = vpow.pop %v3325
  %v3327 = vadd.f32 %v3326, 1.0
  %v3328 = vrcp.pop %v3327
  %v3329 = vmul.f32 1.0, %v3328
  %v3330 = vtanh.pop %v3323
  %v3332 = vrot.slane %v2505, 6
  %v3334 = vmul.f32 %v3329, %v3332
  %3336 = vrot.lane.b32.xlu0 %v3330, 64
  %v3337 = vpop.permute.xlu0 %3336
  %v3339 = vmul.f32 %v3329, %v3337
  %3341 = vrot.lane.b32.xlu0 %v3339, 32
  %v3342 = vpop.permute.xlu0 %3341
  %v3344 = vadd.f32 %v3334, %v3342
  %v3345 = vtanh.pop %v3344
  %3347 = vrot.lane.b32.xlu0 %v3345, 64
  %v3348 = vpop.permute.xlu0 %3347
  %v3350 = vmul.f32 %v3329, %v3348
  %v3351 = vld [vmem:[%s17] sm:$0xff]
  %v3352 = vld [vmem:[%s17 + $0x8] sm:$0xff]
  %v3353 = vld [vmem:[%s17 + $0x10] sm:$0xff]
  %v3354 = vld [vmem:[%s17 + $0x18] sm:$0xff]
  %v3355 = vld [vmem:[%s18] sm:$0xff]
  %v3356 = vld [vmem:[%s18 + $0x8] sm:$0xff]
  %v3357 = vld [vmem:[%s18 + $0x10] sm:$0xff]
  %v3358 = vld [vmem:[%s18 + $0x18] sm:$0xff]
  %3359 = vmatprep.subr.mxu0 0.0
  %3360 = vmatpush1.msra.mxu0 0.0
  %3361 = vmatprep.subr.mxu0 0.0
  %3362 = vmatpush1.msra.mxu0 0.0
  %3363 = vmatprep.subr.mxu0 0.0
  %3364 = vmatpush1.msra.mxu0 0.0
  %3365 = vmatprep.subr.mxu0 0.0
  %3366 = vmatpush1.msra.mxu0 0.0
  %3367 = vmatprep.subr.mxu0 0.0
  %3368 = vmatpush1.msra.mxu0 0.0
  %3369 = vmatprep.subr.mxu0 0.0
  %3370 = vmatpush1.msra.mxu0 0.0
  %3371 = vmatprep.subr.mxu0 0.0
  %3372 = vmatpush1.msra.mxu0 0.0
  %3373 = vmatprep.subr.mxu0 0.0
  %3374 = vmatpush1.msra.mxu0 0.0
  %3375 = vmatprep.subr.mxu0 0.0
  %3376 = vmatpush1.msra.mxu0 0.0
  %3377 = vmatprep.subr.mxu0 0.0
  %3378 = vmatpush1.msra.mxu0 0.0
  %3379 = vmatprep.subr.mxu0 0.0
  %3380 = vmatpush1.msra.mxu0 0.0
  %3381 = vmatprep.subr.mxu0 0.0
  %3382 = vmatpush1.msra.mxu0 0.0
  %3383 = vmatprep.subr.mxu0 0.0
  %3384 = vmatpush1.msra.mxu0 %v3358
  %3385 = vmatprep.subr.mxu0 0.0
  %3386 = vmatpush1.msra.mxu0 %v3357
  %3387 = vmatprep.subr.mxu0 0.0
  %3388 = vmatpush1.msra.mxu0 %v3356
  %3389 = vmatprep.subr.mxu0 0.0
  %3390 = vmatpush1.msra.mxu0 %v3355
  %3391 = vmatprep.subr.mxu0 0.0
  %3392 = vmatpush2.msra.mxu0 0.0
  %3393 = vmatprep.subr.mxu0 0.0
  %3394 = vmatpush2.msra.mxu0 0.0
  %3395 = vmatprep.subr.mxu0 0.0
  %3396 = vmatpush2.msra.mxu0 0.0
  %3397 = vmatprep.subr.mxu0 0.0
  %3398 = vmatpush2.msra.mxu0 0.0
  %3399 = vmatprep.subr.mxu0 0.0
  %3400 = vmatpush2.msra.mxu0 0.0
  %3401 = vmatprep.subr.mxu0 0.0
  %3402 = vmatpush2.msra.mxu0 0.0
  %3403 = vmatprep.subr.mxu0 0.0
  %3404 = vmatpush2.msra.mxu0 0.0
  %3405 = vmatprep.subr.mxu0 0.0
  %3406 = vmatpush2.msra.mxu0 0.0
  %3407 = vmatprep.subr.mxu0 0.0
  %3408 = vmatpush2.msra.mxu0 0.0
  %3409 = vmatprep.subr.mxu0 0.0
  %3410 = vmatpush2.msra.mxu0 0.0
  %3411 = vmatprep.subr.mxu0 0.0
  %3412 = vmatpush2.msra.mxu0 0.0
  %3413 = vmatprep.subr.mxu0 0.0
  %3414 = vmatpush2.msra.mxu0 0.0
  %3415 = vmatprep.subr.mxu0 0.0
  %3416 = vmatpush2.msra.mxu0 0.0
  %3417 = vmatprep.subr.mxu0 0.0
  %3418 = vmatpush2.msra.mxu0 0.0
  %3419 = vmatprep.subr.mxu0 0.0
  %3420 = vmatpush2.msra.mxu0 0.0
  %3421 = vmatprep.subr.mxu0 0.0
  %3422 = vmatpush2.msra.mxu0 0.0
  %3423 = vmatprep.mubr.f32.mxu0 0.0
  %3424 = vmatmul.mubr.f32.gmra.mxu0 %v3087
  %v3425 = vpop.f32.mrf.mxu0
  %v3426 = vadd.f32 0.0, %v3425
  %v3427 = vpop.f32.mrf.mxu0
  %3428 = vdwg.mxu0
  %v3430 = vrot.slane %v3350, 6
  %3431 = vrot.lane.b32.xlu0 %v3430, 32
  %v3432 = vpop.permute.xlu0 %3431
  %v3433 = vsel %vm87, %v3432, 0
  %3435 = vmatprep.subr.mxu0 0.0
  %3436 = vmatpush1.msra.mxu0 0.0
  %3437 = vmatprep.subr.mxu0 0.0
  %3438 = vmatpush1.msra.mxu0 0.0
  %3439 = vmatprep.subr.mxu0 0.0
  %3440 = vmatpush1.msra.mxu0 0.0
  %3441 = vmatprep.subr.mxu0 0.0
  %3442 = vmatpush1.msra.mxu0 0.0
  %3443 = vmatprep.subr.mxu0 0.0
  %3444 = vmatpush1.msra.mxu0 0.0
  %3445 = vmatprep.subr.mxu0 0.0
  %3446 = vmatpush1.msra.mxu0 0.0
  %3447 = vmatprep.subr.mxu0 0.0
  %3448 = vmatpush1.msra.mxu0 0.0
  %3449 = vmatprep.subr.mxu0 0.0
  %3450 = vmatpush1.msra.mxu0 0.0
  %3451 = vmatprep.subr.mxu0 0.0
  %3452 = vmatpush1.msra.mxu0 0.0
  %3453 = vmatprep.subr.mxu0 0.0
  %3454 = vmatpush1.msra.mxu0 0.0
  %3455 = vmatprep.subr.mxu0 0.0
  %3456 = vmatpush1.msra.mxu0 0.0
  %3457 = vmatprep.subr.mxu0 0.0
  %3458 = vmatpush1.msra.mxu0 0.0
  %3459 = vmatprep.subr.mxu0 0.0
  %3460 = vmatpush1.msra.mxu0 %v3354
  %3461 = vmatprep.subr.mxu0 0.0
  %3462 = vmatpush1.msra.mxu0 %v3353
  %3463 = vmatprep.subr.mxu0 0.0
  %3464 = vmatpush1.msra.mxu0 %v3352
  %3465 = vmatprep.subr.mxu0 0.0
  %3466 = vmatpush1.msra.mxu0 %v3351
  %3467 = vmatprep.subr.mxu0 0.0
  %3468 = vmatpush2.msra.mxu0 0.0
  %3469 = vmatprep.subr.mxu0 0.0
  %3470 = vmatpush2.msra.mxu0 0.0
  %3471 = vmatprep.subr.mxu0 0.0
  %3472 = vmatpush2.msra.mxu0 0.0
  %3473 = vmatprep.subr.mxu0 0.0
  %3474 = vmatpush2.msra.mxu0 0.0
  %3475 = vmatprep.subr.mxu0 0.0
  %3476 = vmatpush2.msra.mxu0 0.0
  %3477 = vmatprep.subr.mxu0 0.0
  %3478 = vmatpush2.msra.mxu0 0.0
  %3479 = vmatprep.subr.mxu0 0.0
  %3480 = vmatpush2.msra.mxu0 0.0
  %3481 = vmatprep.subr.mxu0 0.0
  %3482 = vmatpush2.msra.mxu0 0.0
  %3483 = vmatprep.subr.mxu0 0.0
  %3484 = vmatpush2.msra.mxu0 0.0
  %3485 = vmatprep.subr.mxu0 0.0
  %3486 = vmatpush2.msra.mxu0 0.0
  %3487 = vmatprep.subr.mxu0 0.0
  %3488 = vmatpush2.msra.mxu0 0.0
  %3489 = vmatprep.subr.mxu0 0.0
  %3490 = vmatpush2.msra.mxu0 0.0
  %3491 = vmatprep.subr.mxu0 0.0
  %3492 = vmatpush2.msra.mxu0 0.0
  %3493 = vmatprep.subr.mxu0 0.0
  %3494 = vmatpush2.msra.mxu0 0.0
  %3495 = vmatprep.subr.mxu0 0.0
  %3496 = vmatpush2.msra.mxu0 0.0
  %3497 = vmatprep.subr.mxu0 0.0
  %3498 = vmatpush2.msra.mxu0 0.0
  %3499 = vmatprep.mubr.f32.mxu0 0.0
  %3500 = vmatmul.mubr.f32.gmra.mxu0 %v3433
  %v3501 = vpop.f32.mrf.mxu0
  %v3502 = vadd.f32 %v3426, %v3501
  %v3503 = vpop.f32.mrf.mxu0
  %3504 = vdwg.mxu0
  %v3505 = vld [vmem:[%s19] sm:$0xff]
  %v3506 = vld [vmem:[%s19 + $0x8] sm:$0xff]
  %v3507 = vld [vmem:[%s19 + $0x10] sm:$0xff]
  %v3508 = vld [vmem:[%s19 + $0x18] sm:$0xff]
  %3509 = vmatprep.subr.mxu0 0.0
  %3510 = vmatpush1.msra.mxu0 0.0
  %3511 = vmatprep.subr.mxu0 0.0
  %3512 = vmatpush1.msra.mxu0 0.0
  %3513 = vmatprep.subr.mxu0 0.0
  %3514 = vmatpush1.msra.mxu0 0.0
  %3515 = vmatprep.subr.mxu0 0.0
  %3516 = vmatpush1.msra.mxu0 0.0
  %3517 = vmatprep.subr.mxu0 0.0
  %3518 = vmatpush1.msra.mxu0 0.0
  %3519 = vmatprep.subr.mxu0 0.0
  %3520 = vmatpush1.msra.mxu0 0.0
  %3521 = vmatprep.subr.mxu0 0.0
  %3522 = vmatpush1.msra.mxu0 0.0
  %3523 = vmatprep.subr.mxu0 0.0
  %3524 = vmatpush1.msra.mxu0 0.0
  %3525 = vmatprep.subr.mxu0 0.0
  %3526 = vmatpush1.msra.mxu0 0.0
  %3527 = vmatprep.subr.mxu0 0.0
  %3528 = vmatpush1.msra.mxu0 0.0
  %3529 = vmatprep.subr.mxu0 0.0
  %3530 = vmatpush1.msra.mxu0 0.0
  %3531 = vmatprep.subr.mxu0 0.0
  %3532 = vmatpush1.msra.mxu0 0.0
  %3533 = vmatprep.subr.mxu0 0.0
  %3534 = vmatpush1.msra.mxu0 %v3508
  %3535 = vmatprep.subr.mxu0 0.0
  %3536 = vmatpush1.msra.mxu0 %v3507
  %3537 = vmatprep.subr.mxu0 0.0
  %3538 = vmatpush1.msra.mxu0 %v3506
  %3539 = vmatprep.subr.mxu0 0.0
  %3540 = vmatpush1.msra.mxu0 %v3505
  %3541 = vmatprep.subr.mxu0 0.0
  %3542 = vmatpush2.msra.mxu0 0.0
  %3543 = vmatprep.subr.mxu0 0.0
  %3544 = vmatpush2.msra.mxu0 0.0
  %3545 = vmatprep.subr.mxu0 0.0
  %3546 = vmatpush2.msra.mxu0 0.0
  %3547 = vmatprep.subr.mxu0 0.0
  %3548 = vmatpush2.msra.mxu0 0.0
  %3549 = vmatprep.subr.mxu0 0.0
  %3550 = vmatpush2.msra.mxu0 0.0
  %3551 = vmatprep.subr.mxu0 0.0
  %3552 = vmatpush2.msra.mxu0 0.0
  %3553 = vmatprep.subr.mxu0 0.0
  %3554 = vmatpush2.msra.mxu0 0.0
  %3555 = vmatprep.subr.mxu0 0.0
  %3556 = vmatpush2.msra.mxu0 0.0
  %3557 = vmatprep.subr.mxu0 0.0
  %3558 = vmatpush2.msra.mxu0 0.0
  %3559 = vmatprep.subr.mxu0 0.0
  %3560 = vmatpush2.msra.mxu0 0.0
  %3561 = vmatprep.subr.mxu0 0.0
  %3562 = vmatpush2.msra.mxu0 0.0
  %3563 = vmatprep.subr.mxu0 0.0
  %3564 = vmatpush2.msra.mxu0 0.0
  %3565 = vmatprep.subr.mxu0 0.0
  %3566 = vmatpush2.msra.mxu0 0.0
  %3567 = vmatprep.subr.mxu0 0.0
  %3568 = vmatpush2.msra.mxu0 0.0
  %3569 = vmatprep.subr.mxu0 0.0
  %3570 = vmatpush2.msra.mxu0 0.0
  %3571 = vmatprep.subr.mxu0 0.0
  %3572 = vmatpush2.msra.mxu0 0.0
  %3573 = vmatprep.mubr.f32.mxu0 0.0
  %3574 = vmatmul.mubr.f32.gmra.mxu0 %v3170
  %v3575 = vpop.f32.mrf.mxu0
  %v3576 = vadd.f32 0.0, %v3575
  %v3577 = vpop.f32.mrf.mxu0
  %3578 = vdwg.mxu0
  %v3579 = vadd.f32 %v3502, %v3576
  %v3580 = vld [vmem:[%s20] sm:$0xff]
  %v3581 = vld [vmem:[%s20 + $0x8] sm:$0xff]
  %v3582 = vrot.slane %v259, 6
  %v3583 = vsel %vm270, %v3582, 0
  %3585 = vmatprep.subr.mxu0 0.0
  %3586 = vmatpush1.msra.mxu0 0.0
  %3587 = vmatprep.subr.mxu0 0.0
  %3588 = vmatpush1.msra.mxu0 0.0
  %3589 = vmatprep.subr.mxu0 0.0
  %3590 = vmatpush1.msra.mxu0 0.0
  %3591 = vmatprep.subr.mxu0 0.0
  %3592 = vmatpush1.msra.mxu0 0.0
  %3593 = vmatprep.subr.mxu0 0.0
  %3594 = vmatpush1.msra.mxu0 0.0
  %3595 = vmatprep.subr.mxu0 0.0
  %3596 = vmatpush1.msra.mxu0 0.0
  %3597 = vmatprep.subr.mxu0 0.0
  %3598 = vmatpush1.msra.mxu0 0.0
  %3599 = vmatprep.subr.mxu0 0.0
  %3600 = vmatpush1.msra.mxu0 0.0
  %3601 = vmatprep.subr.mxu0 0.0
  %3602 = vmatpush1.msra.mxu0 0.0
  %3603 = vmatprep.subr.mxu0 0.0
  %3604 = vmatpush1.msra.mxu0 0.0
  %3605 = vmatprep.subr.mxu0 0.0
  %3606 = vmatpush1.msra.mxu0 0.0
  %3607 = vmatprep.subr.mxu0 0.0
  %3608 = vmatpush1.msra.mxu0 0.0
  %3609 = vmatprep.subr.mxu0 0.0
  %3610 = vmatpush1.msra.mxu0 0.0
  %3611 = vmatprep.subr.mxu0 0.0
  %3612 = vmatpush1.msra.mxu0 0.0
  %3613 = vmatprep.subr.mxu0 0.0
  %3614 = vmatpush1.msra.mxu0 %v3581
  %3615 = vmatprep.subr.mxu0 0.0
  %3616 = vmatpush1.msra.mxu0 %v3580
  %3617 = vmatprep.subr.mxu0 0.0
  %3618 = vmatpush2.msra.mxu0 0.0
  %3619 = vmatprep.subr.mxu0 0.0
  %3620 = vmatpush2.msra.mxu0 0.0
  %3621 = vmatprep.subr.mxu0 0.0
  %3622 = vmatpush2.msra.mxu0 0.0
  %3623 = vmatprep.subr.mxu0 0.0
  %3624 = vmatpush2.msra.mxu0 0.0
  %3625 = vmatprep.subr.mxu0 0.0
  %3626 = vmatpush2.msra.mxu0 0.0
  %3627 = vmatprep.subr.mxu0 0.0
  %3628 = vmatpush2.msra.mxu0 0.0
  %3629 = vmatprep.subr.mxu0 0.0
  %3630 = vmatpush2.msra.mxu0 0.0
  %3631 = vmatprep.subr.mxu0 0.0
  %3632 = vmatpush2.msra.mxu0 0.0
  %3633 = vmatprep.subr.mxu0 0.0
  %3634 = vmatpush2.msra.mxu0 0.0
  %3635 = vmatprep.subr.mxu0 0.0
  %3636 = vmatpush2.msra.mxu0 0.0
  %3637 = vmatprep.subr.mxu0 0.0
  %3638 = vmatpush2.msra.mxu0 0.0
  %3639 = vmatprep.subr.mxu0 0.0
  %3640 = vmatpush2.msra.mxu0 0.0
  %3641 = vmatprep.subr.mxu0 0.0
  %3642 = vmatpush2.msra.mxu0 0.0
  %3643 = vmatprep.subr.mxu0 0.0
  %3644 = vmatpush2.msra.mxu0 0.0
  %3645 = vmatprep.subr.mxu0 0.0
  %3646 = vmatpush2.msra.mxu0 0.0
  %3647 = vmatprep.subr.mxu0 0.0
  %3648 = vmatpush2.msra.mxu0 0.0
  %3649 = vmatprep.mubr.f32.mxu0 0.0
  %3650 = vmatmul.mubr.f32.gmra.mxu0 %v3583
  %v3651 = vpop.f32.mrf.mxu0
  %v3652 = vadd.f32 0.0, %v3651
  %v3653 = vpop.f32.mrf.mxu0
  %3654 = vdwg.mxu0
  %v3655 = vadd.f32 %v3579, %v3652
  %v3656 = vld [vmem:[%s21] sm:$0x1]
  %v3658 = vlaneseq
  %v3659 = vshrl.u32 %v3658, 7
  %v3660 = vsub.s32 0, %v3659
  %v3661 = vrot.slane %v3656, %v3660
  %v3663 = vadd.f32 %v3655, %v3661
  %v3666 = vunpack.c.l.s4 1966171168
  %v3667 = vunpack.c.0.s8 %v3666
  %v3668 = vlaneseq
  %v3669 = vshrl.u32 %v3668, 7
  %v3670 = vsub.s32 %v3667, %v3669
  %v3671 = vrot.slane %v3663, %v3670
  %v3672 = vcombine.high %v3671, %v3671
  %v3674 = vunpack.c.l.s4 1966171168
  %v3675 = vunpack.c.0.s8 %v3674
  %v3676 = vlaneseq
  %v3677 = vshrl.u32 %v3676, 7
  %v3678 = vsub.s32 %v3675, %v3677
  %v3679 = vrot.slane %v3671, %v3678
  %v3681 = vunpack.c.l.s4 1966171168
  %v3682 = vunpack.c.0.s8 %v3681
  %v3683 = vlaneseq
  %v3684 = vshrl.u32 %v3683, 7
  %v3685 = vsub.s32 %v3682, %v3684
  %v3686 = vrot.slane %v3672, %v3685
  %3689 = vst [vmem:[%s22 + $0x3] sm:$0x1] %v3679
  %3690 = vst [vmem:[%s22 + $0xb] sm:$0x1] %v3686
  %v3693 = vunpack.c.l.s4 1966171168
  %v3694 = vunpack.c.0.s8 %v3693
  %v3695 = vlaneseq
  %v3696 = vshrl.u32 %v3695, 7
  %v3697 = vsub.s32 %v3694, %v3696
  %v3698 = vrot.slane %v3033, %v3697
  %v3699 = vcombine.high %v3698, %v3698
  %v3701 = vunpack.c.l.s4 1966171168
  %v3702 = vunpack.c.0.s8 %v3701
  %v3703 = vlaneseq
  %v3704 = vshrl.u32 %v3703, 7
  %v3705 = vsub.s32 %v3702, %v3704
  %v3706 = vrot.slane %v3698, %v3705
  %v3708 = vunpack.c.l.s4 1966171168
  %v3709 = vunpack.c.0.s8 %v3708
  %v3710 = vlaneseq
  %v3711 = vshrl.u32 %v3710, 7
  %v3712 = vsub.s32 %v3709, %v3711
  %v3713 = vrot.slane %v3699, %v3712
  %3716 = vst.msk [vmem:[%s23 + $0x3] sm:$0x1] %vm1198, %v3706
  %3717 = vst.msk [vmem:[%s23 + $0xb] sm:$0x1] %vm1198, %v3713
  %v3718 = vld [vmem:[%s9] sm:$0xff]
  %v3719 = vld [vmem:[%s9 + $0x8] sm:$0xff]
  %v3720 = vld [vmem:[%s9 + $0x10] sm:$0xff]
  %v3721 = vld [vmem:[%s9 + $0x18] sm:$0xff]
  %3722 = vmatprep.subr.mxu0 0.0
  %3723 = vmatpush1.msra.mxu0 0.0
  %3724 = vmatprep.subr.mxu0 0.0
  %3725 = vmatpush1.msra.mxu0 0.0
  %3726 = vmatprep.subr.mxu0 0.0
  %3727 = vmatpush1.msra.mxu0 0.0
  %3728 = vmatprep.subr.mxu0 0.0
  %3729 = vmatpush1.msra.mxu0 0.0
  %3730 = vmatprep.subr.mxu0 0.0
  %3731 = vmatpush1.msra.mxu0 0.0
  %3732 = vmatprep.subr.mxu0 0.0
  %3733 = vmatpush1.msra.mxu0 0.0
  %3734 = vmatprep.subr.mxu0 0.0
  %3735 = vmatpush1.msra.mxu0 0.0
  %3736 = vmatprep.subr.mxu0 0.0
  %3737 = vmatpush1.msra.mxu0 0.0
  %3738 = vmatprep.subr.mxu0 0.0
  %3739 = vmatpush1.msra.mxu0 0.0
  %3740 = vmatprep.subr.mxu0 0.0
  %3741 = vmatpush1.msra.mxu0 0.0
  %3742 = vmatprep.subr.mxu0 0.0
  %3743 = vmatpush1.msra.mxu0 0.0
  %3744 = vmatprep.subr.mxu0 0.0
  %3745 = vmatpush1.msra.mxu0 0.0
  %3746 = vmatprep.subr.mxu0 0.0
  %3747 = vmatpush1.msra.mxu0 %v3721
  %3748 = vmatprep.subr.mxu0 0.0
  %3749 = vmatpush1.msra.mxu0 %v3720
  %3750 = vmatprep.subr.mxu0 0.0
  %3751 = vmatpush1.msra.mxu0 %v3719
  %3752 = vmatprep.subr.mxu0 0.0
  %3753 = vmatpush1.msra.mxu0 %v3718
  %3754 = vmatprep.subr.mxu0 0.0
  %3755 = vmatpush2.msra.mxu0 0.0
  %3756 = vmatprep.subr.mxu0 0.0
  %3757 = vmatpush2.msra.mxu0 0.0
  %3758 = vmatprep.subr.mxu0 0.0
  %3759 = vmatpush2.msra.mxu0 0.0
  %3760 = vmatprep.subr.mxu0 0.0
  %3761 = vmatpush2.msra.mxu0 0.0
  %3762 = vmatprep.subr.mxu0 0.0
  %3763 = vmatpush2.msra.mxu0 0.0
  %3764 = vmatprep.subr.mxu0 0.0
  %3765 = vmatpush2.msra.mxu0 0.0
  %3766 = vmatprep.subr.mxu0 0.0
  %3767 = vmatpush2.msra.mxu0 0.0
  %3768 = vmatprep.subr.mxu0 0.0
  %3769 = vmatpush2.msra.mxu0 0.0
  %3770 = vmatprep.subr.mxu0 0.0
  %3771 = vmatpush2.msra.mxu0 0.0
  %3772 = vmatprep.subr.mxu0 0.0
  %3773 = vmatpush2.msra.mxu0 0.0
  %3774 = vmatprep.subr.mxu0 0.0
  %3775 = vmatpush2.msra.mxu0 0.0
  %3776 = vmatprep.subr.mxu0 0.0
  %3777 = vmatpush2.msra.mxu0 0.0
  %3778 = vmatprep.subr.mxu0 0.0
  %3779 = vmatpush2.msra.mxu0 0.0
  %3780 = vmatprep.subr.mxu0 0.0
  %3781 = vmatpush2.msra.mxu0 0.0
  %3782 = vmatprep.subr.mxu0 0.0
  %3783 = vmatpush2.msra.mxu0 0.0
  %3784 = vmatprep.subr.mxu0 0.0
  %3785 = vmatpush2.msra.mxu0 0.0
  %3786 = vmatprep.mubr.f32.mxu0 0.0
  %3787 = vmatmul.mubr.f32.gmra.mxu0 %v3433
  %v3788 = vpop.f32.mrf.mxu0
  %v3789 = vadd.f32 0.0, %v3788
  %v3790 = vpop.f32.mrf.mxu0
  %3791 = vdwg.mxu0
  %v3794 = vunpack.c.l.s4 1966171168
  %v3795 = vunpack.c.0.s8 %v3794
  %v3796 = vlaneseq
  %v3797 = vshrl.u32 %v3796, 7
  %v3798 = vsub.s32 %v3795, %v3797
  %v3799 = vrot.slane %v3789, %v3798
  %v3800 = vcombine.high %v3799, %v3799
  %v3802 = vunpack.c.l.s4 1966171168
  %v3803 = vunpack.c.0.s8 %v3802
  %v3804 = vlaneseq
  %v3805 = vshrl.u32 %v3804, 7
  %v3806 = vsub.s32 %v3803, %v3805
  %v3807 = vrot.slane %v3799, %v3806
  %v3809 = vunpack.c.l.s4 1966171168
  %v3810 = vunpack.c.0.s8 %v3809
  %v3811 = vlaneseq
  %v3812 = vshrl.u32 %v3811, 7
  %v3813 = vsub.s32 %v3810, %v3812
  %v3814 = vrot.slane %v3800, %v3813
  %v3815 = vlaneseq
  %v3816 = vshrl.u32 %v3815, 7
  %v3817 = vsub.s32 0, %v3816
  %v3818 = vrot.slane %v3807, %v3817
  %v3819 = vlaneseq
  %v3820 = vshrl.u32 %v3819, 7
  %v3821 = vsub.s32 0, %v3820
  %v3822 = vrot.slane %v3814, %v3821
  %v3825 = vadd.f32 %v257, %v3818
  %v3826 = vadd.f32 %v258, %v3822
  %v3827 = vtanh.pop %v3825
  %v3828 = vtanh.pop %v3826
  %v3829 = vmul.f32 %v3827, %v480
  %v3830 = vmul.f32 %v3828, %v480
  %v3831 = vsel %vm87, %v3829, 0.0
  %3832 = vadd.xlane.f32.xlu0 %v3831
  %v3833 = vpop.xlane.xlu0 %3832
  %v3834 = vsel %vm87, %v3830, 0.0
  %3835 = vadd.xlane.f32.xlu0 %v3834
  %v3836 = vpop.xlane.xlu0 %3835
  %v3837 = vld [vmem:[#allocation2] sm:$0x1]
  %v3839 = vlaneseq
  %v3840 = vshrl.u32 %v3839, 7
  %v3841 = vsub.s32 0, %v3840
  %v3842 = vrot.slane %v3837, %v3841
  %3843 = vset.pattern.permute.xlu0 0
  %3844 = vperm.xlu0 %3843, %v3842
  %v3845 = vpop.permute.xlu0 %3844
  %v3847 = vadd.f32 %v3833, %v3845
  %v3848 = vadd.f32 %v3836, %v3845
  %v3851 = vlaneseq
  %v3852 = vshrl.u32 %v3851, 7
  %v3853 = vsub.s32 %v353, %v3852
  %v3854 = vrot.slane %v3847, %v3853
  %v3855 = vlaneseq
  %v3856 = vshrl.u32 %v3855, 7
  %v3857 = vsub.s32 %v353, %v3856
  %v3858 = vrot.slane %v3848, %v3857
  %v3859 = vsel %vm512, %v3858, %v3854
  %v3861 = vsel %vm358, %v3859, -1e+10
  %v3862 = vsel %vm516, %v3861, -inf
  %3863 = vmax.xlane.f32.xlu0 %v3862
  %v3864 = vpop.xlane.xlu0 %3863
  %v3865 = vsub.f32 %v3861, %v3864
  %v3866 = vmul.f32 %v3865, 1.442695
  %v3867 = vpow.pop %v3866
  %v3868 = vsel %vm516, %v3867, 0.0
  %3869 = vadd.xlane.f32.xlu0 %v3868
  %v3870 = vpop.xlane.xlu0 %3869
  %v3871 = vrcp.pop %v3870
  %v3872 = vmul.f32 %v3867, %v3871
  %v3873 = vlaneseq
  %v3874 = vshrl.u32 %v3873, 7
  %v3875 = vsub.s32 0, %v3874
  %v3876 = vrot.slane %v3872, %v3875
  %3878 = vbcast.lane.b32.xlu0 %v3876, 256
  %v3879 = vpop.permute.xlu0 %3878
  %v3880 = vlaneseq
  %v3881 = vshrl.u32 %v3880, 7
  %v3882 = vsub.s32 1, %v3881
  %v3883 = vrot.slane %v3872, %v3882
  %3885 = vbcast.lane.b32.xlu0 %v3883, 256
  %v3886 = vpop.permute.xlu0 %3885
  %v3887 = vmul.f32 %v3879, %v75
  %v3888 = vmul.f32 %v3886, %v76
  %v3889 = vsel %vm87, %v3887, 0.0
  %v3890 = vrot.slane %v3889, 4
  %v3891 = vadd.f32 %v3889, %v3890
  %v3892 = vrot.slane %v3891, 2
  %v3893 = vadd.f32 %v3891, %v3892
  %v3894 = vrot.slane %v3893, 1
  %v3895 = vadd.f32 %v3893, %v3894
  %v3896 = vsel %vm87, %v3888, 0.0
  %v3897 = vrot.slane %v3896, 4
  %v3898 = vadd.f32 %v3896, %v3897
  %v3899 = vrot.slane %v3898, 2
  %v3900 = vadd.f32 %v3898, %v3899
  %v3901 = vrot.slane %v3900, 1
  %v3902 = vadd.f32 %v3900, %v3901
  %v3903 = vmul.f32 %v3879, %v77
  %v3904 = vmul.f32 %v3886, %v78
  %v3905 = vsel %vm87, %v3903, 0.0
  %v3906 = vrot.slane %v3905, 4
  %v3907 = vadd.f32 %v3905, %v3906
  %v3908 = vrot.slane %v3907, 2
  %v3909 = vadd.f32 %v3907, %v3908
  %v3910 = vrot.slane %v3909, 1
  %v3911 = vadd.f32 %v3909, %v3910
  %v3912 = vsel %vm87, %v3904, 0.0
  %v3913 = vrot.slane %v3912, 4
  %v3914 = vadd.f32 %v3912, %v3913
  %v3915 = vrot.slane %v3914, 2
  %v3916 = vadd.f32 %v3914, %v3915
  %v3917 = vrot.slane %v3916, 1
  %v3918 = vadd.f32 %v3916, %v3917
  %v3919 = vld [vmem:[%s14] sm:$0xff]
  %v3920 = vld [vmem:[%s14 + $0x8] sm:$0xff]
  %v3921 = vld [vmem:[%s14 + $0x10] sm:$0xff]
  %v3922 = vld [vmem:[%s14 + $0x18] sm:$0xff]
  %v3925 = vsel %vm512, %v3902, %v3895
  %v3926 = vsel %vm87, %v3925, 0
  %3928 = vmatprep.subr.mxu0 0.0
  %3929 = vmatpush1.msra.mxu0 0.0
  %3930 = vmatprep.subr.mxu0 0.0
  %3931 = vmatpush1.msra.mxu0 0.0
  %3932 = vmatprep.subr.mxu0 0.0
  %3933 = vmatpush1.msra.mxu0 0.0
  %3934 = vmatprep.subr.mxu0 0.0
  %3935 = vmatpush1.msra.mxu0 0.0
  %3936 = vmatprep.subr.mxu0 0.0
  %3937 = vmatpush1.msra.mxu0 0.0
  %3938 = vmatprep.subr.mxu0 0.0
  %3939 = vmatpush1.msra.mxu0 0.0
  %3940 = vmatprep.subr.mxu0 0.0
  %3941 = vmatpush1.msra.mxu0 0.0
  %3942 = vmatprep.subr.mxu0 0.0
  %3943 = vmatpush1.msra.mxu0 0.0
  %3944 = vmatprep.subr.mxu0 0.0
  %3945 = vmatpush1.msra.mxu0 0.0
  %3946 = vmatprep.subr.mxu0 0.0
  %3947 = vmatpush1.msra.mxu0 0.0
  %3948 = vmatprep.subr.mxu0 0.0
  %3949 = vmatpush1.msra.mxu0 0.0
  %3950 = vmatprep.subr.mxu0 0.0
  %3951 = vmatpush1.msra.mxu0 0.0
  %3952 = vmatprep.subr.mxu0 0.0
  %3953 = vmatpush1.msra.mxu0 %v3922
  %3954 = vmatprep.subr.mxu0 0.0
  %3955 = vmatpush1.msra.mxu0 %v3921
  %3956 = vmatprep.subr.mxu0 0.0
  %3957 = vmatpush1.msra.mxu0 %v3920
  %3958 = vmatprep.subr.mxu0 0.0
  %3959 = vmatpush1.msra.mxu0 %v3919
  %3960 = vmatprep.subr.mxu0 0.0
  %3961 = vmatpush2.msra.mxu0 0.0
  %3962 = vmatprep.subr.mxu0 0.0
  %3963 = vmatpush2.msra.mxu0 0.0
  %3964 = vmatprep.subr.mxu0 0.0
  %3965 = vmatpush2.msra.mxu0 0.0
  %3966 = vmatprep.subr.mxu0 0.0
  %3967 = vmatpush2.msra.mxu0 0.0
  %3968 = vmatprep.subr.mxu0 0.0
  %3969 = vmatpush2.msra.mxu0 0.0
  %3970 = vmatprep.subr.mxu0 0.0
  %3971 = vmatpush2.msra.mxu0 0.0
  %3972 = vmatprep.subr.mxu0 0.0
  %3973 = vmatpush2.msra.mxu0 0.0
  %3974 = vmatprep.subr.mxu0 0.0
  %3975 = vmatpush2.msra.mxu0 0.0
  %3976 = vmatprep.subr.mxu0 0.0
  %3977 = vmatpush2.msra.mxu0 0.0
  %3978 = vmatprep.subr.mxu0 0.0
  %3979 = vmatpush2.msra.mxu0 0.0
  %3980 = vmatprep.subr.mxu0 0.0
  %3981 = vmatpush2.msra.mxu0 0.0
  %3982 = vmatprep.subr.mxu0 0.0
  %3983 = vmatpush2.msra.mxu0 0.0
  %3984 = vmatprep.subr.mxu0 0.0
  %3985 = vmatpush2.msra.mxu0 0.0
  %3986 = vmatprep.subr.mxu0 0.0
  %3987 = vmatpush2.msra.mxu0 0.0
  %3988 = vmatprep.subr.mxu0 0.0
  %3989 = vmatpush2.msra.mxu0 0.0
  %3990 = vmatprep.subr.mxu0 0.0
  %3991 = vmatpush2.msra.mxu0 0.0
  %3992 = vmatprep.mubr.f32.mxu0 0.0
  %3993 = vmatmul.mubr.f32.gmra.mxu0 %v3926
  %v3994 = vpop.f32.mrf.mxu0
  %v3995 = vadd.f32 0.0, %v3994
  %v3996 = vpop.f32.mrf.mxu0
  %3997 = vdwg.mxu0
  %v3998 = vadd.f32 %v349, %v3995
  %v3999 = vld [vmem:[%s15] sm:$0xff]
  %v4000 = vld [vmem:[%s15 + $0x8] sm:$0xff]
  %v4001 = vld [vmem:[%s15 + $0x10] sm:$0xff]
  %v4002 = vld [vmem:[%s15 + $0x18] sm:$0xff]
  %v4005 = vsel %vm512, %v3918, %v3911
  %v4006 = vsel %vm87, %v4005, 0
  %4008 = vmatprep.subr.mxu0 0.0
  %4009 = vmatpush1.msra.mxu0 0.0
  %4010 = vmatprep.subr.mxu0 0.0
  %4011 = vmatpush1.msra.mxu0 0.0
  %4012 = vmatprep.subr.mxu0 0.0
  %4013 = vmatpush1.msra.mxu0 0.0
  %4014 = vmatprep.subr.mxu0 0.0
  %4015 = vmatpush1.msra.mxu0 0.0
  %4016 = vmatprep.subr.mxu0 0.0
  %4017 = vmatpush1.msra.mxu0 0.0
  %4018 = vmatprep.subr.mxu0 0.0
  %4019 = vmatpush1.msra.mxu0 0.0
  %4020 = vmatprep.subr.mxu0 0.0
  %4021 = vmatpush1.msra.mxu0 0.0
  %4022 = vmatprep.subr.mxu0 0.0
  %4023 = vmatpush1.msra.mxu0 0.0
  %4024 = vmatprep.subr.mxu0 0.0
  %4025 = vmatpush1.msra.mxu0 0.0
  %4026 = vmatprep.subr.mxu0 0.0
  %4027 = vmatpush1.msra.mxu0 0.0
  %4028 = vmatprep.subr.mxu0 0.0
  %4029 = vmatpush1.msra.mxu0 0.0
  %4030 = vmatprep.subr.mxu0 0.0
  %4031 = vmatpush1.msra.mxu0 0.0
  %4032 = vmatprep.subr.mxu0 0.0
  %4033 = vmatpush1.msra.mxu0 %v4002
  %4034 = vmatprep.subr.mxu0 0.0
  %4035 = vmatpush1.msra.mxu0 %v4001
  %4036 = vmatprep.subr.mxu0 0.0
  %4037 = vmatpush1.msra.mxu0 %v4000
  %4038 = vmatprep.subr.mxu0 0.0
  %4039 = vmatpush1.msra.mxu0 %v3999
  %4040 = vmatprep.subr.mxu0 0.0
  %4041 = vmatpush2.msra.mxu0 0.0
  %4042 = vmatprep.subr.mxu0 0.0
  %4043 = vmatpush2.msra.mxu0 0.0
  %4044 = vmatprep.subr.mxu0 0.0
  %4045 = vmatpush2.msra.mxu0 0.0
  %4046 = vmatprep.subr.mxu0 0.0
  %4047 = vmatpush2.msra.mxu0 0.0
  %4048 = vmatprep.subr.mxu0 0.0
  %4049 = vmatpush2.msra.mxu0 0.0
  %4050 = vmatprep.subr.mxu0 0.0
  %4051 = vmatpush2.msra.mxu0 0.0
  %4052 = vmatprep.subr.mxu0 0.0
  %4053 = vmatpush2.msra.mxu0 0.0
  %4054 = vmatprep.subr.mxu0 0.0
  %4055 = vmatpush2.msra.mxu0 0.0
  %4056 = vmatprep.subr.mxu0 0.0
  %4057 = vmatpush2.msra.mxu0 0.0
  %4058 = vmatprep.subr.mxu0 0.0
  %4059 = vmatpush2.msra.mxu0 0.0
  %4060 = vmatprep.subr.mxu0 0.0
  %4061 = vmatpush2.msra.mxu0 0.0
  %4062 = vmatprep.subr.mxu0 0.0
  %4063 = vmatpush2.msra.mxu0 0.0
  %4064 = vmatprep.subr.mxu0 0.0
  %4065 = vmatpush2.msra.mxu0 0.0
  %4066 = vmatprep.subr.mxu0 0.0
  %4067 = vmatpush2.msra.mxu0 0.0
  %4068 = vmatprep.subr.mxu0 0.0
  %4069 = vmatpush2.msra.mxu0 0.0
  %4070 = vmatprep.subr.mxu0 0.0
  %4071 = vmatpush2.msra.mxu0 0.0
  %4072 = vmatprep.mubr.f32.mxu0 0.0
  %4073 = vmatmul.mubr.f32.gmra.mxu0 %v4006
  %v4074 = vpop.f32.mrf.mxu0
  %v4075 = vadd.f32 0.0, %v4074
  %v4076 = vpop.f32.mrf.mxu0
  %4077 = vdwg.mxu0
  %v4078 = vadd.f32 %v3998, %v4075
  %v4079 = vld [vmem:[%s16] sm:$0xff]
  %v4080 = vld [vmem:[%s16 + $0x8] sm:$0xff]
  %v4081 = vld [vmem:[%s16 + $0x10] sm:$0xff]
  %v4082 = vld [vmem:[%s16 + $0x18] sm:$0xff]
  %4083 = vmatprep.subr.mxu0 0.0
  %4084 = vmatpush1.msra.mxu0 0.0
  %4085 = vmatprep.subr.mxu0 0.0
  %4086 = vmatpush1.msra.mxu0 0.0
  %4087 = vmatprep.subr.mxu0 0.0
  %4088 = vmatpush1.msra.mxu0 0.0
  %4089 = vmatprep.subr.mxu0 0.0
  %4090 = vmatpush1.msra.mxu0 0.0
  %4091 = vmatprep.subr.mxu0 0.0
  %4092 = vmatpush1.msra.mxu0 0.0
  %4093 = vmatprep.subr.mxu0 0.0
  %4094 = vmatpush1.msra.mxu0 0.0
  %4095 = vmatprep.subr.mxu0 0.0
  %4096 = vmatpush1.msra.mxu0 0.0
  %4097 = vmatprep.subr.mxu0 0.0
  %4098 = vmatpush1.msra.mxu0 0.0
  %4099 = vmatprep.subr.mxu0 0.0
  %4100 = vmatpush1.msra.mxu0 0.0
  %4101 = vmatprep.subr.mxu0 0.0
  %4102 = vmatpush1.msra.mxu0 0.0
  %4103 = vmatprep.subr.mxu0 0.0
  %4104 = vmatpush1.msra.mxu0 0.0
  %4105 = vmatprep.subr.mxu0 0.0
  %4106 = vmatpush1.msra.mxu0 0.0
  %4107 = vmatprep.subr.mxu0 0.0
  %4108 = vmatpush1.msra.mxu0 %v4082
  %4109 = vmatprep.subr.mxu0 0.0
  %4110 = vmatpush1.msra.mxu0 %v4081
  %4111 = vmatprep.subr.mxu0 0.0
  %4112 = vmatpush1.msra.mxu0 %v4080
  %4113 = vmatprep.subr.mxu0 0.0
  %4114 = vmatpush1.msra.mxu0 %v4079
  %4115 = vmatprep.subr.mxu0 0.0
  %4116 = vmatpush2.msra.mxu0 0.0
  %4117 = vmatprep.subr.mxu0 0.0
  %4118 = vmatpush2.msra.mxu0 0.0
  %4119 = vmatprep.subr.mxu0 0.0
  %4120 = vmatpush2.msra.mxu0 0.0
  %4121 = vmatprep.subr.mxu0 0.0
  %4122 = vmatpush2.msra.mxu0 0.0
  %4123 = vmatprep.subr.mxu0 0.0
  %4124 = vmatpush2.msra.mxu0 0.0
  %4125 = vmatprep.subr.mxu0 0.0
  %4126 = vmatpush2.msra.mxu0 0.0
  %4127 = vmatprep.subr.mxu0 0.0
  %4128 = vmatpush2.msra.mxu0 0.0
  %4129 = vmatprep.subr.mxu0 0.0
  %4130 = vmatpush2.msra.mxu0 0.0
  %4131 = vmatprep.subr.mxu0 0.0
  %4132 = vmatpush2.msra.mxu0 0.0
  %4133 = vmatprep.subr.mxu0 0.0
  %4134 = vmatpush2.msra.mxu0 0.0
  %4135 = vmatprep.subr.mxu0 0.0
  %4136 = vmatpush2.msra.mxu0 0.0
  %4137 = vmatprep.subr.mxu0 0.0
  %4138 = vmatpush2.msra.mxu0 0.0
  %4139 = vmatprep.subr.mxu0 0.0
  %4140 = vmatpush2.msra.mxu0 0.0
  %4141 = vmatprep.subr.mxu0 0.0
  %4142 = vmatpush2.msra.mxu0 0.0
  %4143 = vmatprep.subr.mxu0 0.0
  %4144 = vmatpush2.msra.mxu0 0.0
  %4145 = vmatprep.subr.mxu0 0.0
  %4146 = vmatpush2.msra.mxu0 0.0
  %4147 = vmatprep.mubr.f32.mxu0 0.0
  %4148 = vmatmul.mubr.f32.gmra.mxu0 %v3433
  %v4149 = vpop.f32.mrf.mxu0
  %v4150 = vadd.f32 0.0, %v4149
  %v4151 = vpop.f32.mrf.mxu0
  %4152 = vdwg.mxu0
  %v4153 = vadd.f32 %v4078, %v4150
  %v4154 = vxor.u32 %v4153, 2147483648
  %v4155 = vmul.f32 %v4154, 1.442695
  %v4156 = vpow.pop %v4155
  %v4157 = vadd.f32 %v4156, 1.0
  %v4158 = vrcp.pop %v4157
  %v4159 = vmul.f32 1.0, %v4158
  %v4160 = vtanh.pop %v4153
  %v4162 = vrot.slane %v3344, 6
  %v4164 = vmul.f32 %v4159, %v4162
  %4166 = vrot.lane.b32.xlu0 %v4160, 64
  %v4167 = vpop.permute.xlu0 %4166
  %v4169 = vmul.f32 %v4159, %v4167
  %4171 = vrot.lane.b32.xlu0 %v4169, 32
  %v4172 = vpop.permute.xlu0 %4171
  %v4174 = vadd.f32 %v4164, %v4172
  %v4175 = vtanh.pop %v4174
  %4177 = vrot.lane.b32.xlu0 %v4175, 64
  %v4178 = vpop.permute.xlu0 %4177
  %v4180 = vmul.f32 %v4159, %v4178
  %v4181 = vld [vmem:[%s17] sm:$0xff]
  %v4182 = vld [vmem:[%s17 + $0x8] sm:$0xff]
  %v4183 = vld [vmem:[%s17 + $0x10] sm:$0xff]
  %v4184 = vld [vmem:[%s17 + $0x18] sm:$0xff]
  %v4185 = vld [vmem:[%s18] sm:$0xff]
  %v4186 = vld [vmem:[%s18 + $0x8] sm:$0xff]
  %v4187 = vld [vmem:[%s18 + $0x10] sm:$0xff]
  %v4188 = vld [vmem:[%s18 + $0x18] sm:$0xff]
  %4189 = vmatprep.subr.mxu0 0.0
  %4190 = vmatpush1.msra.mxu0 0.0
  %4191 = vmatprep.subr.mxu0 0.0
  %4192 = vmatpush1.msra.mxu0 0.0
  %4193 = vmatprep.subr.mxu0 0.0
  %4194 = vmatpush1.msra.mxu0 0.0
  %4195 = vmatprep.subr.mxu0 0.0
  %4196 = vmatpush1.msra.mxu0 0.0
  %4197 = vmatprep.subr.mxu0 0.0
  %4198 = vmatpush1.msra.mxu0 0.0
  %4199 = vmatprep.subr.mxu0 0.0
  %4200 = vmatpush1.msra.mxu0 0.0
  %4201 = vmatprep.subr.mxu0 0.0
  %4202 = vmatpush1.msra.mxu0 0.0
  %4203 = vmatprep.subr.mxu0 0.0
  %4204 = vmatpush1.msra.mxu0 0.0
  %4205 = vmatprep.subr.mxu0 0.0
  %4206 = vmatpush1.msra.mxu0 0.0
  %4207 = vmatprep.subr.mxu0 0.0
  %4208 = vmatpush1.msra.mxu0 0.0
  %4209 = vmatprep.subr.mxu0 0.0
  %4210 = vmatpush1.msra.mxu0 0.0
  %4211 = vmatprep.subr.mxu0 0.0
  %4212 = vmatpush1.msra.mxu0 0.0
  %4213 = vmatprep.subr.mxu0 0.0
  %4214 = vmatpush1.msra.mxu0 %v4188
  %4215 = vmatprep.subr.mxu0 0.0
  %4216 = vmatpush1.msra.mxu0 %v4187
  %4217 = vmatprep.subr.mxu0 0.0
  %4218 = vmatpush1.msra.mxu0 %v4186
  %4219 = vmatprep.subr.mxu0 0.0
  %4220 = vmatpush1.msra.mxu0 %v4185
  %4221 = vmatprep.subr.mxu0 0.0
  %4222 = vmatpush2.msra.mxu0 0.0
  %4223 = vmatprep.subr.mxu0 0.0
  %4224 = vmatpush2.msra.mxu0 0.0
  %4225 = vmatprep.subr.mxu0 0.0
  %4226 = vmatpush2.msra.mxu0 0.0
  %4227 = vmatprep.subr.mxu0 0.0
  %4228 = vmatpush2.msra.mxu0 0.0
  %4229 = vmatprep.subr.mxu0 0.0
  %4230 = vmatpush2.msra.mxu0 0.0
  %4231 = vmatprep.subr.mxu0 0.0
  %4232 = vmatpush2.msra.mxu0 0.0
  %4233 = vmatprep.subr.mxu0 0.0
  %4234 = vmatpush2.msra.mxu0 0.0
  %4235 = vmatprep.subr.mxu0 0.0
  %4236 = vmatpush2.msra.mxu0 0.0
  %4237 = vmatprep.subr.mxu0 0.0
  %4238 = vmatpush2.msra.mxu0 0.0
  %4239 = vmatprep.subr.mxu0 0.0
  %4240 = vmatpush2.msra.mxu0 0.0
  %4241 = vmatprep.subr.mxu0 0.0
  %4242 = vmatpush2.msra.mxu0 0.0
  %4243 = vmatprep.subr.mxu0 0.0
  %4244 = vmatpush2.msra.mxu0 0.0
  %4245 = vmatprep.subr.mxu0 0.0
  %4246 = vmatpush2.msra.mxu0 0.0
  %4247 = vmatprep.subr.mxu0 0.0
  %4248 = vmatpush2.msra.mxu0 0.0
  %4249 = vmatprep.subr.mxu0 0.0
  %4250 = vmatpush2.msra.mxu0 0.0
  %4251 = vmatprep.subr.mxu0 0.0
  %4252 = vmatpush2.msra.mxu0 0.0
  %4253 = vmatprep.mubr.f32.mxu0 0.0
  %4254 = vmatmul.mubr.f32.gmra.mxu0 %v3926
  %v4255 = vpop.f32.mrf.mxu0
  %v4256 = vadd.f32 0.0, %v4255
  %v4257 = vpop.f32.mrf.mxu0
  %4258 = vdwg.mxu0
  %4260 = vrot.lane.b32.xlu0 %v4180, 32
  %v4261 = vpop.permute.xlu0 %4260
  %v4262 = vsel %vm87, %v4261, 0
  %4264 = vmatprep.subr.mxu0 0.0
  %4265 = vmatpush1.msra.mxu0 0.0
  %4266 = vmatprep.subr.mxu0 0.0
  %4267 = vmatpush1.msra.mxu0 0.0
  %4268 = vmatprep.subr.mxu0 0.0
  %4269 = vmatpush1.msra.mxu0 0.0
  %4270 = vmatprep.subr.mxu0 0.0
  %4271 = vmatpush1.msra.mxu0 0.0
  %4272 = vmatprep.subr.mxu0 0.0
  %4273 = vmatpush1.msra.mxu0 0.0
  %4274 = vmatprep.subr.mxu0 0.0
  %4275 = vmatpush1.msra.mxu0 0.0
  %4276 = vmatprep.subr.mxu0 0.0
  %4277 = vmatpush1.msra.mxu0 0.0
  %4278 = vmatprep.subr.mxu0 0.0
  %4279 = vmatpush1.msra.mxu0 0.0
  %4280 = vmatprep.subr.mxu0 0.0
  %4281 = vmatpush1.msra.mxu0 0.0
  %4282 = vmatprep.subr.mxu0 0.0
  %4283 = vmatpush1.msra.mxu0 0.0
  %4284 = vmatprep.subr.mxu0 0.0
  %4285 = vmatpush1.msra.mxu0 0.0
  %4286 = vmatprep.subr.mxu0 0.0
  %4287 = vmatpush1.msra.mxu0 0.0
  %4288 = vmatprep.subr.mxu0 0.0
  %4289 = vmatpush1.msra.mxu0 %v4184
  %4290 = vmatprep.subr.mxu0 0.0
  %4291 = vmatpush1.msra.mxu0 %v4183
  %4292 = vmatprep.subr.mxu0 0.0
  %4293 = vmatpush1.msra.mxu0 %v4182
  %4294 = vmatprep.subr.mxu0 0.0
  %4295 = vmatpush1.msra.mxu0 %v4181
  %4296 = vmatprep.subr.mxu0 0.0
  %4297 = vmatpush2.msra.mxu0 0.0
  %4298 = vmatprep.subr.mxu0 0.0
  %4299 = vmatpush2.msra.mxu0 0.0
  %4300 = vmatprep.subr.mxu0 0.0
  %4301 = vmatpush2.msra.mxu0 0.0
  %4302 = vmatprep.subr.mxu0 0.0
  %4303 = vmatpush2.msra.mxu0 0.0
  %4304 = vmatprep.subr.mxu0 0.0
  %4305 = vmatpush2.msra.mxu0 0.0
  %4306 = vmatprep.subr.mxu0 0.0
  %4307 = vmatpush2.msra.mxu0 0.0
  %4308 = vmatprep.subr.mxu0 0.0
  %4309 = vmatpush2.msra.mxu0 0.0
  %4310 = vmatprep.subr.mxu0 0.0
  %4311 = vmatpush2.msra.mxu0 0.0
  %4312 = vmatprep.subr.mxu0 0.0
  %4313 = vmatpush2.msra.mxu0 0.0
  %4314 = vmatprep.subr.mxu0 0.0
  %4315 = vmatpush2.msra.mxu0 0.0
  %4316 = vmatprep.subr.mxu0 0.0
  %4317 = vmatpush2.msra.mxu0 0.0
  %4318 = vmatprep.subr.mxu0 0.0
  %4319 = vmatpush2.msra.mxu0 0.0
  %4320 = vmatprep.subr.mxu0 0.0
  %4321 = vmatpush2.msra.mxu0 0.0
  %4322 = vmatprep.subr.mxu0 0.0
  %4323 = vmatpush2.msra.mxu0 0.0
  %4324 = vmatprep.subr.mxu0 0.0
  %4325 = vmatpush2.msra.mxu0 0.0
  %4326 = vmatprep.subr.mxu0 0.0
  %4327 = vmatpush2.msra.mxu0 0.0
  %4328 = vmatprep.mubr.f32.mxu0 0.0
  %4329 = vmatmul.mubr.f32.gmra.mxu0 %v4262
  %v4330 = vpop.f32.mrf.mxu0
  %v4331 = vadd.f32 %v4256, %v4330
  %v4332 = vpop.f32.mrf.mxu0
  %4333 = vdwg.mxu0
  %v4334 = vld [vmem:[%s19] sm:$0xff]
  %v4335 = vld [vmem:[%s19 + $0x8] sm:$0xff]
  %v4336 = vld [vmem:[%s19 + $0x10] sm:$0xff]
  %v4337 = vld [vmem:[%s19 + $0x18] sm:$0xff]
  %4338 = vmatprep.subr.mxu0 0.0
  %4339 = vmatpush1.msra.mxu0 0.0
  %4340 = vmatprep.subr.mxu0 0.0
  %4341 = vmatpush1.msra.mxu0 0.0
  %4342 = vmatprep.subr.mxu0 0.0
  %4343 = vmatpush1.msra.mxu0 0.0
  %4344 = vmatprep.subr.mxu0 0.0
  %4345 = vmatpush1.msra.mxu0 0.0
  %4346 = vmatprep.subr.mxu0 0.0
  %4347 = vmatpush1.msra.mxu0 0.0
  %4348 = vmatprep.subr.mxu0 0.0
  %4349 = vmatpush1.msra.mxu0 0.0
  %4350 = vmatprep.subr.mxu0 0.0
  %4351 = vmatpush1.msra.mxu0 0.0
  %4352 = vmatprep.subr.mxu0 0.0
  %4353 = vmatpush1.msra.mxu0 0.0
  %4354 = vmatprep.subr.mxu0 0.0
  %4355 = vmatpush1.msra.mxu0 0.0
  %4356 = vmatprep.subr.mxu0 0.0
  %4357 = vmatpush1.msra.mxu0 0.0
  %4358 = vmatprep.subr.mxu0 0.0
  %4359 = vmatpush1.msra.mxu0 0.0
  %4360 = vmatprep.subr.mxu0 0.0
  %4361 = vmatpush1.msra.mxu0 0.0
  %4362 = vmatprep.subr.mxu0 0.0
  %4363 = vmatpush1.msra.mxu0 %v4337
  %4364 = vmatprep.subr.mxu0 0.0
  %4365 = vmatpush1.msra.mxu0 %v4336
  %4366 = vmatprep.subr.mxu0 0.0
  %4367 = vmatpush1.msra.mxu0 %v4335
  %4368 = vmatprep.subr.mxu0 0.0
  %4369 = vmatpush1.msra.mxu0 %v4334
  %4370 = vmatprep.subr.mxu0 0.0
  %4371 = vmatpush2.msra.mxu0 0.0
  %4372 = vmatprep.subr.mxu0 0.0
  %4373 = vmatpush2.msra.mxu0 0.0
  %4374 = vmatprep.subr.mxu0 0.0
  %4375 = vmatpush2.msra.mxu0 0.0
  %4376 = vmatprep.subr.mxu0 0.0
  %4377 = vmatpush2.msra.mxu0 0.0
  %4378 = vmatprep.subr.mxu0 0.0
  %4379 = vmatpush2.msra.mxu0 0.0
  %4380 = vmatprep.subr.mxu0 0.0
  %4381 = vmatpush2.msra.mxu0 0.0
  %4382 = vmatprep.subr.mxu0 0.0
  %4383 = vmatpush2.msra.mxu0 0.0
  %4384 = vmatprep.subr.mxu0 0.0
  %4385 = vmatpush2.msra.mxu0 0.0
  %4386 = vmatprep.subr.mxu0 0.0
  %4387 = vmatpush2.msra.mxu0 0.0
  %4388 = vmatprep.subr.mxu0 0.0
  %4389 = vmatpush2.msra.mxu0 0.0
  %4390 = vmatprep.subr.mxu0 0.0
  %4391 = vmatpush2.msra.mxu0 0.0
  %4392 = vmatprep.subr.mxu0 0.0
  %4393 = vmatpush2.msra.mxu0 0.0
  %4394 = vmatprep.subr.mxu0 0.0
  %4395 = vmatpush2.msra.mxu0 0.0
  %4396 = vmatprep.subr.mxu0 0.0
  %4397 = vmatpush2.msra.mxu0 0.0
  %4398 = vmatprep.subr.mxu0 0.0
  %4399 = vmatpush2.msra.mxu0 0.0
  %4400 = vmatprep.subr.mxu0 0.0
  %4401 = vmatpush2.msra.mxu0 0.0
  %4402 = vmatprep.mubr.f32.mxu0 0.0
  %4403 = vmatmul.mubr.f32.gmra.mxu0 %v4006
  %v4404 = vpop.f32.mrf.mxu0
  %v4405 = vadd.f32 0.0, %v4404
  %v4406 = vpop.f32.mrf.mxu0
  %4407 = vdwg.mxu0
  %v4408 = vadd.f32 %v4331, %v4405
  %v4409 = vld [vmem:[%s20] sm:$0xff]
  %v4410 = vld [vmem:[%s20 + $0x8] sm:$0xff]
  %4411 = vmatprep.subr.mxu0 0.0
  %4412 = vmatpush1.msra.mxu0 0.0
  %4413 = vmatprep.subr.mxu0 0.0
  %4414 = vmatpush1.msra.mxu0 0.0
  %4415 = vmatprep.subr.mxu0 0.0
  %4416 = vmatpush1.msra.mxu0 0.0
  %4417 = vmatprep.subr.mxu0 0.0
  %4418 = vmatpush1.msra.mxu0 0.0
  %4419 = vmatprep.subr.mxu0 0.0
  %4420 = vmatpush1.msra.mxu0 0.0
  %4421 = vmatprep.subr.mxu0 0.0
  %4422 = vmatpush1.msra.mxu0 0.0
  %4423 = vmatprep.subr.mxu0 0.0
  %4424 = vmatpush1.msra.mxu0 0.0
  %4425 = vmatprep.subr.mxu0 0.0
  %4426 = vmatpush1.msra.mxu0 0.0
  %4427 = vmatprep.subr.mxu0 0.0
  %4428 = vmatpush1.msra.mxu0 0.0
  %4429 = vmatprep.subr.mxu0 0.0
  %4430 = vmatpush1.msra.mxu0 0.0
  %4431 = vmatprep.subr.mxu0 0.0
  %4432 = vmatpush1.msra.mxu0 0.0
  %4433 = vmatprep.subr.mxu0 0.0
  %4434 = vmatpush1.msra.mxu0 0.0
  %4435 = vmatprep.subr.mxu0 0.0
  %4436 = vmatpush1.msra.mxu0 0.0
  %4437 = vmatprep.subr.mxu0 0.0
  %4438 = vmatpush1.msra.mxu0 0.0
  %4439 = vmatprep.subr.mxu0 0.0
  %4440 = vmatpush1.msra.mxu0 %v4410
  %4441 = vmatprep.subr.mxu0 0.0
  %4442 = vmatpush1.msra.mxu0 %v4409
  %4443 = vmatprep.subr.mxu0 0.0
  %4444 = vmatpush2.msra.mxu0 0.0
  %4445 = vmatprep.subr.mxu0 0.0
  %4446 = vmatpush2.msra.mxu0 0.0
  %4447 = vmatprep.subr.mxu0 0.0
  %4448 = vmatpush2.msra.mxu0 0.0
  %4449 = vmatprep.subr.mxu0 0.0
  %4450 = vmatpush2.msra.mxu0 0.0
  %4451 = vmatprep.subr.mxu0 0.0
  %4452 = vmatpush2.msra.mxu0 0.0
  %4453 = vmatprep.subr.mxu0 0.0
  %4454 = vmatpush2.msra.mxu0 0.0
  %4455 = vmatprep.subr.mxu0 0.0
  %4456 = vmatpush2.msra.mxu0 0.0
  %4457 = vmatprep.subr.mxu0 0.0
  %4458 = vmatpush2.msra.mxu0 0.0
  %4459 = vmatprep.subr.mxu0 0.0
  %4460 = vmatpush2.msra.mxu0 0.0
  %4461 = vmatprep.subr.mxu0 0.0
  %4462 = vmatpush2.msra.mxu0 0.0
  %4463 = vmatprep.subr.mxu0 0.0
  %4464 = vmatpush2.msra.mxu0 0.0
  %4465 = vmatprep.subr.mxu0 0.0
  %4466 = vmatpush2.msra.mxu0 0.0
  %4467 = vmatprep.subr.mxu0 0.0
  %4468 = vmatpush2.msra.mxu0 0.0
  %4469 = vmatprep.subr.mxu0 0.0
  %4470 = vmatpush2.msra.mxu0 0.0
  %4471 = vmatprep.subr.mxu0 0.0
  %4472 = vmatpush2.msra.mxu0 0.0
  %4473 = vmatprep.subr.mxu0 0.0
  %4474 = vmatpush2.msra.mxu0 0.0
  %4475 = vmatprep.mubr.f32.mxu0 0.0
  %4476 = vmatmul.mubr.f32.gmra.mxu0 %v275
  %v4477 = vpop.f32.mrf.mxu0
  %v4478 = vadd.f32 0.0, %v4477
  %v4479 = vpop.f32.mrf.mxu0
  %4480 = vdwg.mxu0
  %v4481 = vadd.f32 %v4408, %v4478
  %v4482 = vld [vmem:[%s21] sm:$0x1]
  %v4484 = vlaneseq
  %v4485 = vshrl.u32 %v4484, 7
  %v4486 = vsub.s32 0, %v4485
  %v4487 = vrot.slane %v4482, %v4486
  %v4489 = vadd.f32 %v4481, %v4487
  %v4492 = vunpack.c.l.s4 1966171168
  %v4493 = vunpack.c.0.s8 %v4492
  %v4494 = vlaneseq
  %v4495 = vshrl.u32 %v4494, 7
  %v4496 = vsub.s32 %v4493, %v4495
  %v4497 = vrot.slane %v4489, %v4496
  %v4498 = vcombine.high %v4497, %v4497
  %v4500 = vunpack.c.l.s4 1966171168
  %v4501 = vunpack.c.0.s8 %v4500
  %v4502 = vlaneseq
  %v4503 = vshrl.u32 %v4502, 7
  %v4504 = vsub.s32 %v4501, %v4503
  %v4505 = vrot.slane %v4497, %v4504
  %v4507 = vunpack.c.l.s4 1966171168
  %v4508 = vunpack.c.0.s8 %v4507
  %v4509 = vlaneseq
  %v4510 = vshrl.u32 %v4509, 7
  %v4511 = vsub.s32 %v4508, %v4510
  %v4512 = vrot.slane %v4498, %v4511
  %4515 = vst [vmem:[%s22 + $0x4] sm:$0x1] %v4505
  %4516 = vst [vmem:[%s22 + $0xc] sm:$0x1] %v4512
  %v4519 = vunpack.c.l.s4 1966171168
  %v4520 = vunpack.c.0.s8 %v4519
  %v4521 = vlaneseq
  %v4522 = vshrl.u32 %v4521, 7
  %v4523 = vsub.s32 %v4520, %v4522
  %v4524 = vrot.slane %v3872, %v4523
  %v4525 = vcombine.high %v4524, %v4524
  %v4527 = vunpack.c.l.s4 1966171168
  %v4528 = vunpack.c.0.s8 %v4527
  %v4529 = vlaneseq
  %v4530 = vshrl.u32 %v4529, 7
  %v4531 = vsub.s32 %v4528, %v4530
  %v4532 = vrot.slane %v4524, %v4531
  %v4534 = vunpack.c.l.s4 1966171168
  %v4535 = vunpack.c.0.s8 %v4534
  %v4536 = vlaneseq
  %v4537 = vshrl.u32 %v4536, 7
  %v4538 = vsub.s32 %v4535, %v4537
  %v4539 = vrot.slane %v4525, %v4538
  %4542 = vst.msk [vmem:[%s23 + $0x4] sm:$0x1] %vm1198, %v4532
  %4543 = vst.msk [vmem:[%s23 + $0xc] sm:$0x1] %vm1198, %v4539
  // Predicated region
  $region90: #{attention_seq2seq_forward.3} parent=0 // pred_check
    _
  $region91: #{attention_seq2seq_forward.3} parent=0 // pred_check_branch
    %4545 = sbr.rel (0) target = $region93
  $region92: #{attention_seq2seq_forward.3} parent=0 // pred_region
    _
  $region93: #{attention_seq2seq_forward.3} parent=0 // pred_fallthru
    _
  // Predicated region
  $region94: #{attention_seq2seq_forward.3} parent=0 // pred_check
    _
  $region95: #{attention_seq2seq_forward.3} parent=0 // pred_check_branch
    %4547 = sbr.rel (0) target = $region97
  $region96: #{attention_seq2seq_forward.3} parent=0 // pred_region
    _
  $region97: #{attention_seq2seq_forward.3} parent=0 // pred_fallthru
    _
  // Predicated region
  $region98: #{attention_seq2seq_forward.3} parent=0 // pred_check
    _
  $region99: #{attention_seq2seq_forward.3} parent=0 // pred_check_branch
    %4549 = sbr.rel (0) target = $region101
  $region100: #{attention_seq2seq_forward.3} parent=0 // pred_region
    _
  $region101: #{attention_seq2seq_forward.3} parent=0 // pred_fallthru
    _
  // Predicated region
  $region102: #{attention_seq2seq_forward.3} parent=0 // pred_check
    _
  $region103: #{attention_seq2seq_forward.3} parent=0 // pred_check_branch
    %4551 = sbr.rel (0) target = $region105
  $region104: #{attention_seq2seq_forward.3} parent=0 // pred_region
    _
  $region105: #{attention_seq2seq_forward.3} parent=0 // pred_fallthru
    _

</llo_original>
